<compile_context>
chip_gen: v7x
topology: tpu7x:2x2x1
jax: 0.10.0
libtpu: 0.0.40
codegen_flags: <defaults>
</compile_context>

<pallas_src>
import functools
import math

import jax
import jax.numpy as jnp
from jax.experimental import pallas as pl
from jax.experimental.pallas import tpu as pltpu

HP = 128   # per-gate lane slot width (>= hidden_size); one f32 lane tile
BP = 8     # padded batch rows (one f32 sublane tile)


# ---------------------------------------------------------------------------
# Fused kernel
# ---------------------------------------------------------------------------
def _sigmoid(x):
    # Exact sigmoid via tanh (EUP path); avoids relying on lax.logistic lowering.
    return 0.5 * (jnp.tanh(0.5 * x) + 1.0)


def _lstm_cell(gates, c):
    """gates: (rows, 4*HP) in PyTorch gate order [i, f, g, o]; c: (rows, HP)."""
    i = _sigmoid(gates[:, 0 * HP:1 * HP])
    f = _sigmoid(gates[:, 1 * HP:2 * HP])
    g = jnp.tanh(gates[:, 2 * HP:3 * HP])
    o = _sigmoid(gates[:, 3 * HP:4 * HP])
    c_new = f * c + i * g
    h_new = o * jnp.tanh(c_new)
    return h_new, c_new


def _attention_lstm_kernel(x_ref, wih1_ref, whh1_ref, b1_ref,
                           watt_ref, batt_ref,
                           wih2_ref, whh2_ref, b2_ref,
                           wfc_ref, bfc_ref,
                           out_ref,
                           gx_sc, seq_sc, seq2_sc, *, T, B, L):
    f32 = jnp.float32

    # ----- LSTM1 (batch_first=True): recurrence over T timesteps -------------
    for l in range(L):
        # Merged input projection + bias fold for all T steps: ONE MXU matmul,
        # staged in VMEM scratch.  Only h @ whh remains per-step.
        src = x_ref[...] if l == 0 else seq_sc[...]
        gx_sc[...] = (jnp.dot(src, wih1_ref[l], preferred_element_type=f32)
                      + b1_ref[l])
        h = jnp.zeros((BP, HP), f32)
        c = jnp.zeros((BP, HP), f32)
        for t in range(T):
            gates = (gx_sc[pl.ds(t * BP, BP), :]
                     + jnp.dot(h, whh1_ref[l], preferred_element_type=f32))
            h, c = _lstm_cell(gates, c)
            seq_sc[pl.ds(t * BP, BP), :] = h
        # TODO(synk): LSTM inter-layer Dropout(0.25) — identity in eval mode.
    # TODO(synk): self.dropout1 = Dropout(0.25) — identity in eval mode.

    # ----- attention: one matmul for all T scores, softmax over time ---------
    scores_all = (jnp.dot(seq_sc[...], watt_ref[...],
                          preferred_element_type=f32)
                  + batt_ref[...])                              # (T*BP, HP)
    scores = [scores_all[t * BP:(t + 1) * BP, :] for t in range(T)]
    outs = [seq_sc[pl.ds(t * BP, BP), :] for t in range(T)]
    m = scores[0]
    for s in scores[1:]:
        m = jnp.maximum(m, s)
    exps = [jnp.exp(s - m) for s in scores]
    denom = exps[0]
    for e in exps[1:]:
        denom = denom + e
    inv = pl.reciprocal(denom, approx=True)                     # denom >= 1
    ctx = outs[0] * exps[0]
    for o, e in zip(outs[1:], exps[1:]):
        ctx = ctx + o * e
    context = ctx * inv                                         # (BP, HP)

    # ----- LSTM2 (batch_first=False): context viewed as (seq=B, batch=1, H) --
    # State carries across the batch dimension exactly like the PyTorch code.
    seq2_sc[...] = jnp.zeros((BP, HP), f32)
    inp = context
    for l in range(L):
        # Batched input projection for all B "timesteps" + bias: ONE matmul.
        gx2 = (jnp.dot(inp, wih2_ref[l], preferred_element_type=f32)
               + b2_ref[l])                                     # (BP, 4*HP)
        h = jnp.zeros((1, HP), f32)
        c = jnp.zeros((1, HP), f32)
        for s in range(B):
            gates = gx2[s:s + 1, :] + jnp.dot(
                h, whh2_ref[l], preferred_element_type=f32)
            h, c = _lstm_cell(gates, c)
            seq2_sc[pl.ds(s, 1), :] = h
        inp = seq2_sc[...]
        # TODO(synk): LSTM inter-layer Dropout(0.25) — identity in eval mode.
    # TODO(synk): self.dropout2 = Dropout(0.25) — identity in eval mode.

    # ----- fc(out[:, -1, :]) : one batched matmul + one full-tile store ------
    out_ref[...] = (jnp.dot(seq2_sc[...], wfc_ref[...],
                            preferred_element_type=f32) + bfc_ref[...])


# ---------------------------------------------------------------------------
# Host-side packing into the per-gate padded layout
# ---------------------------------------------------------------------------
def _pack_gate_matrix(w, H):
    """PyTorch (4H, in) LSTM weight -> (HP, 4*HP) transposed, gate-slot padded."""
    in_size = w.shape[1]
    assert H <= HP and in_size <= HP
    wt = w.T                                         # (in, 4H)
    out = jnp.zeros((HP, 4 * HP), jnp.float32)
    for g in range(4):
        out = out.at[:in_size, g * HP:g * HP + H].set(wt[:, g * H:(g + 1) * H])
    return out


def _pack_gate_bias(b_ih, b_hh, H):
    b = b_ih + b_hh
    out = jnp.zeros((1, 4 * HP), jnp.float32)
    for g in range(4):
        out = out.at[0, g * HP:g * HP + H].set(b[g * H:(g + 1) * H])
    return out


def _pack_linear(w, b):
    """PyTorch Linear (out, in) -> (HP, HP) W^T and (1, HP) bias, zero padded."""
    o, i = w.shape
    assert o <= HP and i <= HP
    wp = jnp.zeros((HP, HP), jnp.float32).at[:i, :o].set(w.T)
    bp = jnp.zeros((1, HP), jnp.float32).at[0, :o].set(b)
    return wp, bp


def pack_params(params, hidden_size):
    H = hidden_size
    wih1 = jnp.stack([_pack_gate_matrix(w, H) for (w, _, _, _) in params["lstm1"]])
    whh1 = jnp.stack([_pack_gate_matrix(w, H) for (_, w, _, _) in params["lstm1"]])
    b1 = jnp.stack([_pack_gate_bias(bi, bh, H) for (_, _, bi, bh) in params["lstm1"]])
    wih2 = jnp.stack([_pack_gate_matrix(w, H) for (w, _, _, _) in params["lstm2"]])
    whh2 = jnp.stack([_pack_gate_matrix(w, H) for (_, w, _, _) in params["lstm2"]])
    b2 = jnp.stack([_pack_gate_bias(bi, bh, H) for (_, _, bi, bh) in params["lstm2"]])
    watt, batt = _pack_linear(params["w_att"], params["b_att"])
    wfc, bfc = _pack_linear(params["w_fc"], params["b_fc"])
    return dict(wih1=wih1, whh1=whh1, b1=b1, wih2=wih2, whh2=whh2, b2=b2,
                watt=watt, batt=batt, wfc=wfc, bfc=bfc)


def pack_input(x):
    """(B, T, I) batch-first -> time-major, zero-padded, flattened (T*BP, HP)."""
    B, T, I = x.shape
    assert B <= BP and I <= HP
    x_tm = jnp.transpose(x, (1, 0, 2)).astype(jnp.float32)      # (T, B, I)
    x_p = jnp.zeros((T, BP, HP), jnp.float32).at[:, :B, :I].set(x_tm)
    return x_p.reshape(T * BP, HP)


# ---------------------------------------------------------------------------
# Wrapper: single fused pallas_call, everything resident in VMEM
# ---------------------------------------------------------------------------
@functools.partial(jax.jit, static_argnames=("T", "B", "L", "out_size"))
def attention_lstm_forward(packed, x2d, *, T, B, L, out_size):
    vmem = pl.BlockSpec(memory_space=pltpu.MemorySpace.VMEM)
    out = pl.pallas_call(
        functools.partial(_attention_lstm_kernel, T=T, B=B, L=L),
        out_shape=jax.ShapeDtypeStruct((BP, HP), jnp.float32),
        in_specs=[vmem] * 11,
        out_specs=vmem,
        scratch_shapes=[
            pltpu.VMEM((T * BP, 4 * HP), jnp.float32),   # merged gate-proj slab
            pltpu.VMEM((T * BP, HP), jnp.float32),       # LSTM1 output sequence
            pltpu.VMEM((BP, HP), jnp.float32),           # LSTM2 output rows
        ],
    )(x2d, packed["wih1"], packed["whh1"], packed["b1"],
      packed["watt"], packed["batt"],
      packed["wih2"], packed["whh2"], packed["b2"],
      packed["wfc"], packed["bfc"])
    return out[:B, :out_size]


# ---------------------------------------------------------------------------
# Parameter init (PyTorch-style: xavier_normal LSTM weights, zero LSTM biases,
# uniform(-1/sqrt(H), 1/sqrt(H)) for the attention / fc Linears)
# ---------------------------------------------------------------------------
def init_params(key, latent_dim, hidden_size, num_layers,
                full_ivs=False, use_exog=False):
    if full_ivs:
        input_size = 131 if use_exog else 121
        out_size = 121
    else:
        input_size = 3 * (10 + 2 * latent_dim) if use_exog else 2 * latent_dim
        out_size = 2 * latent_dim

    def xavier_normal(k, shape):
        fan_out, fan_in = shape
        std = math.sqrt(2.0 / (fan_in + fan_out))
        return std * jax.random.normal(k, shape, jnp.float32)

    def uniform(k, shape, fan_in):
        b = 1.0 / math.sqrt(fan_in)
        return jax.random.uniform(k, shape, jnp.float32, -b, b)

    H = hidden_size
    keys = iter(jax.random.split(key, 8 * num_layers + 8))

    def lstm_layers(first_in):
        layers = []
        for l in range(num_layers):
            in_l = first_in if l == 0 else H
            layers.append((xavier_normal(next(keys), (4 * H, in_l)),
                           xavier_normal(next(keys), (4 * H, H)),
                           jnp.zeros((4 * H,), jnp.float32),
                           jnp.zeros((4 * H,), jnp.float32)))
        return layers

    params = dict(
        lstm1=lstm_layers(input_size),
        lstm2=lstm_layers(H),
        w_att=uniform(next(keys), (H, H), H),
        b_att=uniform(next(keys), (H,), H),
        w_fc=uniform(next(keys), (out_size, H), H),
        b_fc=uniform(next(keys), (out_size,), H),
    )
    return params, input_size, out_size


# ---------------------------------------------------------------------------
# Pure-JAX reference (matches AttentionLSTM.forward in eval mode)
# ---------------------------------------------------------------------------
def _lstm_ref(x_tm, layers):
    out = x_tm                                   # (T, B, in)
    for (w_ih, w_hh, b_ih, b_hh) in layers:
        H = w_hh.shape[1]
        Tn, Bn, _ = out.shape
        h = jnp.zeros((Bn, H), jnp.float32)
        c = jnp.zeros((Bn, H), jnp.float32)
        ys = []
        for t in range(Tn):
            gates = out[t] @ w_ih.T + b_ih + h @ w_hh.T + b_hh
            i, f, g, o = jnp.split(gates, 4, axis=-1)
            i = jax.nn.sigmoid(i); f = jax.nn.sigmoid(f)
            g = jnp.tanh(g); o = jax.nn.sigmoid(o)
            c = f * c + i * g
            h = o * jnp.tanh(c)
            ys.append(h)
        out = jnp.stack(ys, axis=0)
    return out                                   # (T, B, H)


def attention_lstm_ref(params, x):
    out1 = _lstm_ref(jnp.transpose(x, (1, 0, 2)), params["lstm1"])   # (T, B, H)
    out = jnp.transpose(out1, (1, 0, 2))                             # (B, T, H)
    attn = out @ params["w_att"].T + params["b_att"]
    attn = jax.nn.softmax(attn, axis=1)
    context = jnp.sum(out * attn, axis=1)                            # (B, H)
    out2 = _lstm_ref(context[:, None, :], params["lstm2"])           # (B, 1, H)
    feat = out2[:, -1, :]                                            # (B, H)
    return feat @ params["w_fc"].T + params["b_fc"]


# ---------------------------------------------------------------------------
if __name__ == "__main__":
    latent_dim = 8
    hidden_size = 32
    num_layers = 2
    B, T = 2, 8

    key = jax.random.PRNGKey(0)
    k_param, k_x = jax.random.split(key, 2)
    params, input_size, out_size = init_params(
        k_param, latent_dim, hidden_size, num_layers,
        full_ivs=False, use_exog=False)                 # input_size = 2*latent = 16
    x = jax.random.normal(k_x, (B, T, input_size), jnp.float32)

    packed = pack_params(params, hidden_size)
    x2d = pack_input(x)

    y = attention_lstm_forward(packed, x2d, T=T, B=B, L=num_layers,
                               out_size=out_size)
    y = jax.block_until_ready(y)

    assert y.shape == (B, out_size)
    assert bool(jnp.all(jnp.isfinite(y)))

    y_ref = attention_lstm_ref(params, x)
    max_err = float(jnp.max(jnp.abs(y - y_ref)))
    assert bool(jnp.allclose(y, y_ref, rtol=5e-2, atol=1e-2)), max_err
    print("KERNEL_OK")
</pallas_src>

<mosaic_0001>
module attributes {stable_mosaic.version = 11 : i64} {
  func.func @_attention_lstm_kernel(%arg0: memref<64x128xf32, #tpu.memory_space<vmem>>, %arg1: memref<2x128x512xf32, #tpu.memory_space<vmem>>, %arg2: memref<2x128x512xf32, #tpu.memory_space<vmem>>, %arg3: memref<2x1x512xf32, #tpu.memory_space<vmem>>, %arg4: memref<128x128xf32, #tpu.memory_space<vmem>>, %arg5: memref<1x128xf32, #tpu.memory_space<vmem>>, %arg6: memref<2x128x512xf32, #tpu.memory_space<vmem>>, %arg7: memref<2x128x512xf32, #tpu.memory_space<vmem>>, %arg8: memref<2x1x512xf32, #tpu.memory_space<vmem>>, %arg9: memref<128x128xf32, #tpu.memory_space<vmem>>, %arg10: memref<1x128xf32, #tpu.memory_space<vmem>>, %arg11: memref<8x128xf32, #tpu.memory_space<vmem>>, %arg12: memref<64x512xf32, #tpu.memory_space<vmem>>, %arg13: memref<64x128xf32, #tpu.memory_space<vmem>>, %arg14: memref<8x128xf32, #tpu.memory_space<vmem>>) attributes {dimension_semantics = [], scalar_prefetch = 0 : i64, scratch_operands = 3 : i64, tpu.core_type = #tpu.core_type<tc>} {
    %c0 = arith.constant 0 : index
    %c0_0 = arith.constant 0 : index
    %0 = vector.load %arg0[%c0, %c0_0] : memref<64x128xf32, #tpu.memory_space<vmem>>, vector<64x128xf32>
    %c0_1 = arith.constant 0 : index
    %c0_2 = arith.constant 0 : index
    %c0_3 = arith.constant 0 : index
    %1 = vector.load %arg1[%c0_1, %c0_2, %c0_3] : memref<2x128x512xf32, #tpu.memory_space<vmem>>, vector<1x128x512xf32>
    %2 = vector.shape_cast %1 : vector<1x128x512xf32> to vector<128x512xf32>
    %cst = arith.constant dense<0.000000e+00> : vector<64x512xf32>
    %3 = tpu.matmul %0, %2, %cst {dimension_numbers = #tpu.dot_dimension_numbers<[1], [0], [0], [1], [0, 0, 1, 1], [], []>} : vector<64x128xf32>, vector<128x512xf32>, vector<64x512xf32> -> vector<64x512xf32>
    %c0_4 = arith.constant 0 : index
    %c0_5 = arith.constant 0 : index
    %c0_6 = arith.constant 0 : index
    %4 = vector.load %arg3[%c0_4, %c0_5, %c0_6] : memref<2x1x512xf32, #tpu.memory_space<vmem>>, vector<1x1x512xf32>
    %5 = vector.shape_cast %4 : vector<1x1x512xf32> to vector<1x512xf32>
    %6 = vector.broadcast %5 : vector<1x512xf32> to vector<64x512xf32>
    %7 = arith.addf %3, %6 : vector<64x512xf32>
    %c0_7 = arith.constant 0 : index
    %c0_8 = arith.constant 0 : index
    %8 = vector.load %arg12[%c0_7, %c0_8] : memref<64x512xf32, #tpu.memory_space<vmem>>, vector<64x512xf32>
    tpu.vector_store %arg12[%c0_7, %c0_8], %7 {strides = array<i32>} : memref<64x512xf32, #tpu.memory_space<vmem>>, vector<64x512xf32>,
    %cst_9 = arith.constant 0.000000e+00 : f32
    %9 = vector.broadcast %cst_9 : f32 to vector<8x128xf32>
    %cst_10 = arith.constant 0.000000e+00 : f32
    %10 = vector.broadcast %cst_10 : f32 to vector<8x128xf32>
    %c0_11 = arith.constant 0 : index
    %c0_12 = arith.constant 0 : index
    %11 = vector.load %arg12[%c0_11, %c0_12] : memref<64x512xf32, #tpu.memory_space<vmem>>, vector<8x512xf32>
    %c0_13 = arith.constant 0 : index
    %c0_14 = arith.constant 0 : index
    %c0_15 = arith.constant 0 : index
    %12 = vector.load %arg2[%c0_13, %c0_14, %c0_15] : memref<2x128x512xf32, #tpu.memory_space<vmem>>, vector<1x128x512xf32>
    %13 = vector.shape_cast %12 : vector<1x128x512xf32> to vector<128x512xf32>
    %cst_16 = arith.constant dense<0.000000e+00> : vector<8x512xf32>
    %14 = tpu.matmul %9, %13, %cst_16 {dimension_numbers = #tpu.dot_dimension_numbers<[1], [0], [0], [1], [0, 0, 1, 1], [], []>} : vector<8x128xf32>, vector<128x512xf32>, vector<8x512xf32> -> vector<8x512xf32>
    %15 = arith.addf %11, %14 : vector<8x512xf32>
    %16 = vector.extract_strided_slice %15 {offsets = [0, 0], sizes = [8, 128], strides = [1, 1]} : vector<8x512xf32> to vector<8x128xf32>
    %cst_17 = arith.constant 5.000000e-01 : f32
    %17 = vector.broadcast %cst_17 : f32 to vector<8x128xf32>
    %18 = arith.mulf %17, %16 : vector<8x128xf32>
    %19 = math.tanh %18 : vector<8x128xf32>
    %cst_18 = arith.constant 1.000000e+00 : f32
    %20 = vector.broadcast %cst_18 : f32 to vector<8x128xf32>
    %21 = arith.addf %19, %20 : vector<8x128xf32>
    %cst_19 = arith.constant 5.000000e-01 : f32
    %22 = vector.broadcast %cst_19 : f32 to vector<8x128xf32>
    %23 = arith.mulf %22, %21 : vector<8x128xf32>
    %24 = vector.extract_strided_slice %15 {offsets = [0, 128], sizes = [8, 128], strides = [1, 1]} : vector<8x512xf32> to vector<8x128xf32>
    %cst_20 = arith.constant 5.000000e-01 : f32
    %25 = vector.broadcast %cst_20 : f32 to vector<8x128xf32>
    %26 = arith.mulf %25, %24 : vector<8x128xf32>
    %27 = math.tanh %26 : vector<8x128xf32>
    %cst_21 = arith.constant 1.000000e+00 : f32
    %28 = vector.broadcast %cst_21 : f32 to vector<8x128xf32>
    %29 = arith.addf %27, %28 : vector<8x128xf32>
    %cst_22 = arith.constant 5.000000e-01 : f32
    %30 = vector.broadcast %cst_22 : f32 to vector<8x128xf32>
    %31 = arith.mulf %30, %29 : vector<8x128xf32>
    %32 = vector.extract_strided_slice %15 {offsets = [0, 256], sizes = [8, 128], strides = [1, 1]} : vector<8x512xf32> to vector<8x128xf32>
    %33 = math.tanh %32 : vector<8x128xf32>
    %34 = vector.extract_strided_slice %15 {offsets = [0, 384], sizes = [8, 128], strides = [1, 1]} : vector<8x512xf32> to vector<8x128xf32>
    %cst_23 = arith.constant 5.000000e-01 : f32
    %35 = vector.broadcast %cst_23 : f32 to vector<8x128xf32>
    %36 = arith.mulf %35, %34 : vector<8x128xf32>
    %37 = math.tanh %36 : vector<8x128xf32>
    %cst_24 = arith.constant 1.000000e+00 : f32
    %38 = vector.broadcast %cst_24 : f32 to vector<8x128xf32>
    %39 = arith.addf %37, %38 : vector<8x128xf32>
    %cst_25 = arith.constant 5.000000e-01 : f32
    %40 = vector.broadcast %cst_25 : f32 to vector<8x128xf32>
    %41 = arith.mulf %40, %39 : vector<8x128xf32>
    %42 = arith.mulf %31, %10 : vector<8x128xf32>
    %43 = arith.mulf %23, %33 : vector<8x128xf32>
    %44 = arith.addf %42, %43 : vector<8x128xf32>
    %45 = math.tanh %44 : vector<8x128xf32>
    %46 = arith.mulf %41, %45 : vector<8x128xf32>
    %c0_26 = arith.constant 0 : index
    %c0_27 = arith.constant 0 : index
    %47 = vector.load %arg13[%c0_26, %c0_27] : memref<64x128xf32, #tpu.memory_space<vmem>>, vector<8x128xf32>
    tpu.vector_store %arg13[%c0_26, %c0_27], %46 {strides = array<i32>} : memref<64x128xf32, #tpu.memory_space<vmem>>, vector<8x128xf32>,
    %c8 = arith.constant 8 : index
    %c0_28 = arith.constant 0 : index
    %48 = vector.load %arg12[%c8, %c0_28] : memref<64x512xf32, #tpu.memory_space<vmem>>, vector<8x512xf32>
    %c0_29 = arith.constant 0 : index
    %c0_30 = arith.constant 0 : index
    %c0_31 = arith.constant 0 : index
    %49 = vector.load %arg2[%c0_29, %c0_30, %c0_31] : memref<2x128x512xf32, #tpu.memory_space<vmem>>, vector<1x128x512xf32>
    %50 = vector.shape_cast %49 : vector<1x128x512xf32> to vector<128x512xf32>
    %cst_32 = arith.constant dense<0.000000e+00> : vector<8x512xf32>
    %51 = tpu.matmul %46, %50, %cst_32 {dimension_numbers = #tpu.dot_dimension_numbers<[1], [0], [0], [1], [0, 0, 1, 1], [], []>} : vector<8x128xf32>, vector<128x512xf32>, vector<8x512xf32> -> vector<8x512xf32>
    %52 = arith.addf %48, %51 : vector<8x512xf32>
    %53 = vector.extract_strided_slice %52 {offsets = [0, 0], sizes = [8, 128], strides = [1, 1]} : vector<8x512xf32> to vector<8x128xf32>
    %cst_33 = arith.constant 5.000000e-01 : f32
    %54 = vector.broadcast %cst_33 : f32 to vector<8x128xf32>
    %55 = arith.mulf %54, %53 : vector<8x128xf32>
    %56 = math.tanh %55 : vector<8x128xf32>
    %cst_34 = arith.constant 1.000000e+00 : f32
    %57 = vector.broadcast %cst_34 : f32 to vector<8x128xf32>
    %58 = arith.addf %56, %57 : vector<8x128xf32>
    %cst_35 = arith.constant 5.000000e-01 : f32
    %59 = vector.broadcast %cst_35 : f32 to vector<8x128xf32>
    %60 = arith.mulf %59, %58 : vector<8x128xf32>
    %61 = vector.extract_strided_slice %52 {offsets = [0, 128], sizes = [8, 128], strides = [1, 1]} : vector<8x512xf32> to vector<8x128xf32>
    %cst_36 = arith.constant 5.000000e-01 : f32
    %62 = vector.broadcast %cst_36 : f32 to vector<8x128xf32>
    %63 = arith.mulf %62, %61 : vector<8x128xf32>
    %64 = math.tanh %63 : vector<8x128xf32>
    %cst_37 = arith.constant 1.000000e+00 : f32
    %65 = vector.broadcast %cst_37 : f32 to vector<8x128xf32>
    %66 = arith.addf %64, %65 : vector<8x128xf32>
    %cst_38 = arith.constant 5.000000e-01 : f32
    %67 = vector.broadcast %cst_38 : f32 to vector<8x128xf32>
    %68 = arith.mulf %67, %66 : vector<8x128xf32>
    %69 = vector.extract_strided_slice %52 {offsets = [0, 256], sizes = [8, 128], strides = [1, 1]} : vector<8x512xf32> to vector<8x128xf32>
    %70 = math.tanh %69 : vector<8x128xf32>
    %71 = vector.extract_strided_slice %52 {offsets = [0, 384], sizes = [8, 128], strides = [1, 1]} : vector<8x512xf32> to vector<8x128xf32>
    %cst_39 = arith.constant 5.000000e-01 : f32
    %72 = vector.broadcast %cst_39 : f32 to vector<8x128xf32>
    %73 = arith.mulf %72, %71 : vector<8x128xf32>
    %74 = math.tanh %73 : vector<8x128xf32>
    %cst_40 = arith.constant 1.000000e+00 : f32
    %75 = vector.broadcast %cst_40 : f32 to vector<8x128xf32>
    %76 = arith.addf %74, %75 : vector<8x128xf32>
    %cst_41 = arith.constant 5.000000e-01 : f32
    %77 = vector.broadcast %cst_41 : f32 to vector<8x128xf32>
    %78 = arith.mulf %77, %76 : vector<8x128xf32>
    %79 = arith.mulf %68, %44 : vector<8x128xf32>
    %80 = arith.mulf %60, %70 : vector<8x128xf32>
    %81 = arith.addf %79, %80 : vector<8x128xf32>
    %82 = math.tanh %81 : vector<8x128xf32>
    %83 = arith.mulf %78, %82 : vector<8x128xf32>
    %c8_42 = arith.constant 8 : index
    %c0_43 = arith.constant 0 : index
    %84 = vector.load %arg13[%c8_42, %c0_43] : memref<64x128xf32, #tpu.memory_space<vmem>>, vector<8x128xf32>
    tpu.vector_store %arg13[%c8_42, %c0_43], %83 {strides = array<i32>} : memref<64x128xf32, #tpu.memory_space<vmem>>, vector<8x128xf32>,
    %c16 = arith.constant 16 : index
    %c0_44 = arith.constant 0 : index
    %85 = vector.load %arg12[%c16, %c0_44] : memref<64x512xf32, #tpu.memory_space<vmem>>, vector<8x512xf32>
    %c0_45 = arith.constant 0 : index
    %c0_46 = arith.constant 0 : index
    %c0_47 = arith.constant 0 : index
    %86 = vector.load %arg2[%c0_45, %c0_46, %c0_47] : memref<2x128x512xf32, #tpu.memory_space<vmem>>, vector<1x128x512xf32>
    %87 = vector.shape_cast %86 : vector<1x128x512xf32> to vector<128x512xf32>
    %cst_48 = arith.constant dense<0.000000e+00> : vector<8x512xf32>
    %88 = tpu.matmul %83, %87, %cst_48 {dimension_numbers = #tpu.dot_dimension_numbers<[1], [0], [0], [1], [0, 0, 1, 1], [], []>} : vector<8x128xf32>, vector<128x512xf32>, vector<8x512xf32> -> vector<8x512xf32>
    %89 = arith.addf %85, %88 : vector<8x512xf32>
    %90 = vector.extract_strided_slice %89 {offsets = [0, 0], sizes = [8, 128], strides = [1, 1]} : vector<8x512xf32> to vector<8x128xf32>
    %cst_49 = arith.constant 5.000000e-01 : f32
    %91 = vector.broadcast %cst_49 : f32 to vector<8x128xf32>
    %92 = arith.mulf %91, %90 : vector<8x128xf32>
    %93 = math.tanh %92 : vector<8x128xf32>
    %cst_50 = arith.constant 1.000000e+00 : f32
    %94 = vector.broadcast %cst_50 : f32 to vector<8x128xf32>
    %95 = arith.addf %93, %94 : vector<8x128xf32>
    %cst_51 = arith.constant 5.000000e-01 : f32
    %96 = vector.broadcast %cst_51 : f32 to vector<8x128xf32>
    %97 = arith.mulf %96, %95 : vector<8x128xf32>
    %98 = vector.extract_strided_slice %89 {offsets = [0, 128], sizes = [8, 128], strides = [1, 1]} : vector<8x512xf32> to vector<8x128xf32>
    %cst_52 = arith.constant 5.000000e-01 : f32
    %99 = vector.broadcast %cst_52 : f32 to vector<8x128xf32>
    %100 = arith.mulf %99, %98 : vector<8x128xf32>
    %101 = math.tanh %100 : vector<8x128xf32>
    %cst_53 = arith.constant 1.000000e+00 : f32
    %102 = vector.broadcast %cst_53 : f32 to vector<8x128xf32>
    %103 = arith.addf %101, %102 : vector<8x128xf32>
    %cst_54 = arith.constant 5.000000e-01 : f32
    %104 = vector.broadcast %cst_54 : f32 to vector<8x128xf32>
    %105 = arith.mulf %104, %103 : vector<8x128xf32>
    %106 = vector.extract_strided_slice %89 {offsets = [0, 256], sizes = [8, 128], strides = [1, 1]} : vector<8x512xf32> to vector<8x128xf32>
    %107 = math.tanh %106 : vector<8x128xf32>
    %108 = vector.extract_strided_slice %89 {offsets = [0, 384], sizes = [8, 128], strides = [1, 1]} : vector<8x512xf32> to vector<8x128xf32>
    %cst_55 = arith.constant 5.000000e-01 : f32
    %109 = vector.broadcast %cst_55 : f32 to vector<8x128xf32>
    %110 = arith.mulf %109, %108 : vector<8x128xf32>
    %111 = math.tanh %110 : vector<8x128xf32>
    %cst_56 = arith.constant 1.000000e+00 : f32
    %112 = vector.broadcast %cst_56 : f32 to vector<8x128xf32>
    %113 = arith.addf %111, %112 : vector<8x128xf32>
    %cst_57 = arith.constant 5.000000e-01 : f32
    %114 = vector.broadcast %cst_57 : f32 to vector<8x128xf32>
    %115 = arith.mulf %114, %113 : vector<8x128xf32>
    %116 = arith.mulf %105, %81 : vector<8x128xf32>
    %117 = arith.mulf %97, %107 : vector<8x128xf32>
    %118 = arith.addf %116, %117 : vector<8x128xf32>
    %119 = math.tanh %118 : vector<8x128xf32>
    %120 = arith.mulf %115, %119 : vector<8x128xf32>
    %c16_58 = arith.constant 16 : index
    %c0_59 = arith.constant 0 : index
    %121 = vector.load %arg13[%c16_58, %c0_59] : memref<64x128xf32, #tpu.memory_space<vmem>>, vector<8x128xf32>
    tpu.vector_store %arg13[%c16_58, %c0_59], %120 {strides = array<i32>} : memref<64x128xf32, #tpu.memory_space<vmem>>, vector<8x128xf32>,
    %c24 = arith.constant 24 : index
    %c0_60 = arith.constant 0 : index
    %122 = vector.load %arg12[%c24, %c0_60] : memref<64x512xf32, #tpu.memory_space<vmem>>, vector<8x512xf32>
    %c0_61 = arith.constant 0 : index
    %c0_62 = arith.constant 0 : index
    %c0_63 = arith.constant 0 : index
    %123 = vector.load %arg2[%c0_61, %c0_62, %c0_63] : memref<2x128x512xf32, #tpu.memory_space<vmem>>, vector<1x128x512xf32>
    %124 = vector.shape_cast %123 : vector<1x128x512xf32> to vector<128x512xf32>
    %cst_64 = arith.constant dense<0.000000e+00> : vector<8x512xf32>
    %125 = tpu.matmul %120, %124, %cst_64 {dimension_numbers = #tpu.dot_dimension_numbers<[1], [0], [0], [1], [0, 0, 1, 1], [], []>} : vector<8x128xf32>, vector<128x512xf32>, vector<8x512xf32> -> vector<8x512xf32>
    %126 = arith.addf %122, %125 : vector<8x512xf32>
    %127 = vector.extract_strided_slice %126 {offsets = [0, 0], sizes = [8, 128], strides = [1, 1]} : vector<8x512xf32> to vector<8x128xf32>
    %cst_65 = arith.constant 5.000000e-01 : f32
    %128 = vector.broadcast %cst_65 : f32 to vector<8x128xf32>
    %129 = arith.mulf %128, %127 : vector<8x128xf32>
    %130 = math.tanh %129 : vector<8x128xf32>
    %cst_66 = arith.constant 1.000000e+00 : f32
    %131 = vector.broadcast %cst_66 : f32 to vector<8x128xf32>
    %132 = arith.addf %130, %131 : vector<8x128xf32>
    %cst_67 = arith.constant 5.000000e-01 : f32
    %133 = vector.broadcast %cst_67 : f32 to vector<8x128xf32>
    %134 = arith.mulf %133, %132 : vector<8x128xf32>
    %135 = vector.extract_strided_slice %126 {offsets = [0, 128], sizes = [8, 128], strides = [1, 1]} : vector<8x512xf32> to vector<8x128xf32>
    %cst_68 = arith.constant 5.000000e-01 : f32
    %136 = vector.broadcast %cst_68 : f32 to vector<8x128xf32>
    %137 = arith.mulf %136, %135 : vector<8x128xf32>
    %138 = math.tanh %137 : vector<8x128xf32>
    %cst_69 = arith.constant 1.000000e+00 : f32
    %139 = vector.broadcast %cst_69 : f32 to vector<8x128xf32>
    %140 = arith.addf %138, %139 : vector<8x128xf32>
    %cst_70 = arith.constant 5.000000e-01 : f32
    %141 = vector.broadcast %cst_70 : f32 to vector<8x128xf32>
    %142 = arith.mulf %141, %140 : vector<8x128xf32>
    %143 = vector.extract_strided_slice %126 {offsets = [0, 256], sizes = [8, 128], strides = [1, 1]} : vector<8x512xf32> to vector<8x128xf32>
    %144 = math.tanh %143 : vector<8x128xf32>
    %145 = vector.extract_strided_slice %126 {offsets = [0, 384], sizes = [8, 128], strides = [1, 1]} : vector<8x512xf32> to vector<8x128xf32>
    %cst_71 = arith.constant 5.000000e-01 : f32
    %146 = vector.broadcast %cst_71 : f32 to vector<8x128xf32>
    %147 = arith.mulf %146, %145 : vector<8x128xf32>
    %148 = math.tanh %147 : vector<8x128xf32>
    %cst_72 = arith.constant 1.000000e+00 : f32
    %149 = vector.broadcast %cst_72 : f32 to vector<8x128xf32>
    %150 = arith.addf %148, %149 : vector<8x128xf32>
    %cst_73 = arith.constant 5.000000e-01 : f32
    %151 = vector.broadcast %cst_73 : f32 to vector<8x128xf32>
    %152 = arith.mulf %151, %150 : vector<8x128xf32>
    %153 = arith.mulf %142, %118 : vector<8x128xf32>
    %154 = arith.mulf %134, %144 : vector<8x128xf32>
    %155 = arith.addf %153, %154 : vector<8x128xf32>
    %156 = math.tanh %155 : vector<8x128xf32>
    %157 = arith.mulf %152, %156 : vector<8x128xf32>
    %c24_74 = arith.constant 24 : index
    %c0_75 = arith.constant 0 : index
    %158 = vector.load %arg13[%c24_74, %c0_75] : memref<64x128xf32, #tpu.memory_space<vmem>>, vector<8x128xf32>
    tpu.vector_store %arg13[%c24_74, %c0_75], %157 {strides = array<i32>} : memref<64x128xf32, #tpu.memory_space<vmem>>, vector<8x128xf32>,
    %c32 = arith.constant 32 : index
    %c0_76 = arith.constant 0 : index
    %159 = vector.load %arg12[%c32, %c0_76] : memref<64x512xf32, #tpu.memory_space<vmem>>, vector<8x512xf32>
    %c0_77 = arith.constant 0 : index
    %c0_78 = arith.constant 0 : index
    %c0_79 = arith.constant 0 : index
    %160 = vector.load %arg2[%c0_77, %c0_78, %c0_79] : memref<2x128x512xf32, #tpu.memory_space<vmem>>, vector<1x128x512xf32>
    %161 = vector.shape_cast %160 : vector<1x128x512xf32> to vector<128x512xf32>
    %cst_80 = arith.constant dense<0.000000e+00> : vector<8x512xf32>
    %162 = tpu.matmul %157, %161, %cst_80 {dimension_numbers = #tpu.dot_dimension_numbers<[1], [0], [0], [1], [0, 0, 1, 1], [], []>} : vector<8x128xf32>, vector<128x512xf32>, vector<8x512xf32> -> vector<8x512xf32>
    %163 = arith.addf %159, %162 : vector<8x512xf32>
    %164 = vector.extract_strided_slice %163 {offsets = [0, 0], sizes = [8, 128], strides = [1, 1]} : vector<8x512xf32> to vector<8x128xf32>
    %cst_81 = arith.constant 5.000000e-01 : f32
    %165 = vector.broadcast %cst_81 : f32 to vector<8x128xf32>
    %166 = arith.mulf %165, %164 : vector<8x128xf32>
    %167 = math.tanh %166 : vector<8x128xf32>
    %cst_82 = arith.constant 1.000000e+00 : f32
    %168 = vector.broadcast %cst_82 : f32 to vector<8x128xf32>
    %169 = arith.addf %167, %168 : vector<8x128xf32>
    %cst_83 = arith.constant 5.000000e-01 : f32
    %170 = vector.broadcast %cst_83 : f32 to vector<8x128xf32>
    %171 = arith.mulf %170, %169 : vector<8x128xf32>
    %172 = vector.extract_strided_slice %163 {offsets = [0, 128], sizes = [8, 128], strides = [1, 1]} : vector<8x512xf32> to vector<8x128xf32>
    %cst_84 = arith.constant 5.000000e-01 : f32
    %173 = vector.broadcast %cst_84 : f32 to vector<8x128xf32>
    %174 = arith.mulf %173, %172 : vector<8x128xf32>
    %175 = math.tanh %174 : vector<8x128xf32>
    %cst_85 = arith.constant 1.000000e+00 : f32
    %176 = vector.broadcast %cst_85 : f32 to vector<8x128xf32>
    %177 = arith.addf %175, %176 : vector<8x128xf32>
    %cst_86 = arith.constant 5.000000e-01 : f32
    %178 = vector.broadcast %cst_86 : f32 to vector<8x128xf32>
    %179 = arith.mulf %178, %177 : vector<8x128xf32>
    %180 = vector.extract_strided_slice %163 {offsets = [0, 256], sizes = [8, 128], strides = [1, 1]} : vector<8x512xf32> to vector<8x128xf32>
    %181 = math.tanh %180 : vector<8x128xf32>
    %182 = vector.extract_strided_slice %163 {offsets = [0, 384], sizes = [8, 128], strides = [1, 1]} : vector<8x512xf32> to vector<8x128xf32>
    %cst_87 = arith.constant 5.000000e-01 : f32
    %183 = vector.broadcast %cst_87 : f32 to vector<8x128xf32>
    %184 = arith.mulf %183, %182 : vector<8x128xf32>
    %185 = math.tanh %184 : vector<8x128xf32>
    %cst_88 = arith.constant 1.000000e+00 : f32
    %186 = vector.broadcast %cst_88 : f32 to vector<8x128xf32>
    %187 = arith.addf %185, %186 : vector<8x128xf32>
    %cst_89 = arith.constant 5.000000e-01 : f32
    %188 = vector.broadcast %cst_89 : f32 to vector<8x128xf32>
    %189 = arith.mulf %188, %187 : vector<8x128xf32>
    %190 = arith.mulf %179, %155 : vector<8x128xf32>
    %191 = arith.mulf %171, %181 : vector<8x128xf32>
    %192 = arith.addf %190, %191 : vector<8x128xf32>
    %193 = math.tanh %192 : vector<8x128xf32>
    %194 = arith.mulf %189, %193 : vector<8x128xf32>
    %c32_90 = arith.constant 32 : index
    %c0_91 = arith.constant 0 : index
    %195 = vector.load %arg13[%c32_90, %c0_91] : memref<64x128xf32, #tpu.memory_space<vmem>>, vector<8x128xf32>
    tpu.vector_store %arg13[%c32_90, %c0_91], %194 {strides = array<i32>} : memref<64x128xf32, #tpu.memory_space<vmem>>, vector<8x128xf32>,
    %c40 = arith.constant 40 : index
    %c0_92 = arith.constant 0 : index
    %196 = vector.load %arg12[%c40, %c0_92] : memref<64x512xf32, #tpu.memory_space<vmem>>, vector<8x512xf32>
    %c0_93 = arith.constant 0 : index
    %c0_94 = arith.constant 0 : index
    %c0_95 = arith.constant 0 : index
    %197 = vector.load %arg2[%c0_93, %c0_94, %c0_95] : memref<2x128x512xf32, #tpu.memory_space<vmem>>, vector<1x128x512xf32>
    %198 = vector.shape_cast %197 : vector<1x128x512xf32> to vector<128x512xf32>
    %cst_96 = arith.constant dense<0.000000e+00> : vector<8x512xf32>
    %199 = tpu.matmul %194, %198, %cst_96 {dimension_numbers = #tpu.dot_dimension_numbers<[1], [0], [0], [1], [0, 0, 1, 1], [], []>} : vector<8x128xf32>, vector<128x512xf32>, vector<8x512xf32> -> vector<8x512xf32>
    %200 = arith.addf %196, %199 : vector<8x512xf32>
    %201 = vector.extract_strided_slice %200 {offsets = [0, 0], sizes = [8, 128], strides = [1, 1]} : vector<8x512xf32> to vector<8x128xf32>
    %cst_97 = arith.constant 5.000000e-01 : f32
    %202 = vector.broadcast %cst_97 : f32 to vector<8x128xf32>
    %203 = arith.mulf %202, %201 : vector<8x128xf32>
    %204 = math.tanh %203 : vector<8x128xf32>
    %cst_98 = arith.constant 1.000000e+00 : f32
    %205 = vector.broadcast %cst_98 : f32 to vector<8x128xf32>
    %206 = arith.addf %204, %205 : vector<8x128xf32>
    %cst_99 = arith.constant 5.000000e-01 : f32
    %207 = vector.broadcast %cst_99 : f32 to vector<8x128xf32>
    %208 = arith.mulf %207, %206 : vector<8x128xf32>
    %209 = vector.extract_strided_slice %200 {offsets = [0, 128], sizes = [8, 128], strides = [1, 1]} : vector<8x512xf32> to vector<8x128xf32>
    %cst_100 = arith.constant 5.000000e-01 : f32
    %210 = vector.broadcast %cst_100 : f32 to vector<8x128xf32>
    %211 = arith.mulf %210, %209 : vector<8x128xf32>
    %212 = math.tanh %211 : vector<8x128xf32>
    %cst_101 = arith.constant 1.000000e+00 : f32
    %213 = vector.broadcast %cst_101 : f32 to vector<8x128xf32>
    %214 = arith.addf %212, %213 : vector<8x128xf32>
    %cst_102 = arith.constant 5.000000e-01 : f32
    %215 = vector.broadcast %cst_102 : f32 to vector<8x128xf32>
    %216 = arith.mulf %215, %214 : vector<8x128xf32>
    %217 = vector.extract_strided_slice %200 {offsets = [0, 256], sizes = [8, 128], strides = [1, 1]} : vector<8x512xf32> to vector<8x128xf32>
    %218 = math.tanh %217 : vector<8x128xf32>
    %219 = vector.extract_strided_slice %200 {offsets = [0, 384], sizes = [8, 128], strides = [1, 1]} : vector<8x512xf32> to vector<8x128xf32>
    %cst_103 = arith.constant 5.000000e-01 : f32
    %220 = vector.broadcast %cst_103 : f32 to vector<8x128xf32>
    %221 = arith.mulf %220, %219 : vector<8x128xf32>
    %222 = math.tanh %221 : vector<8x128xf32>
    %cst_104 = arith.constant 1.000000e+00 : f32
    %223 = vector.broadcast %cst_104 : f32 to vector<8x128xf32>
    %224 = arith.addf %222, %223 : vector<8x128xf32>
    %cst_105 = arith.constant 5.000000e-01 : f32
    %225 = vector.broadcast %cst_105 : f32 to vector<8x128xf32>
    %226 = arith.mulf %225, %224 : vector<8x128xf32>
    %227 = arith.mulf %216, %192 : vector<8x128xf32>
    %228 = arith.mulf %208, %218 : vector<8x128xf32>
    %229 = arith.addf %227, %228 : vector<8x128xf32>
    %230 = math.tanh %229 : vector<8x128xf32>
    %231 = arith.mulf %226, %230 : vector<8x128xf32>
    %c40_106 = arith.constant 40 : index
    %c0_107 = arith.constant 0 : index
    %232 = vector.load %arg13[%c40_106, %c0_107] : memref<64x128xf32, #tpu.memory_space<vmem>>, vector<8x128xf32>
    tpu.vector_store %arg13[%c40_106, %c0_107], %231 {strides = array<i32>} : memref<64x128xf32, #tpu.memory_space<vmem>>, vector<8x128xf32>,
    %c48 = arith.constant 48 : index
    %c0_108 = arith.constant 0 : index
    %233 = vector.load %arg12[%c48, %c0_108] : memref<64x512xf32, #tpu.memory_space<vmem>>, vector<8x512xf32>
    %c0_109 = arith.constant 0 : index
    %c0_110 = arith.constant 0 : index
    %c0_111 = arith.constant 0 : index
    %234 = vector.load %arg2[%c0_109, %c0_110, %c0_111] : memref<2x128x512xf32, #tpu.memory_space<vmem>>, vector<1x128x512xf32>
    %235 = vector.shape_cast %234 : vector<1x128x512xf32> to vector<128x512xf32>
    %cst_112 = arith.constant dense<0.000000e+00> : vector<8x512xf32>
    %236 = tpu.matmul %231, %235, %cst_112 {dimension_numbers = #tpu.dot_dimension_numbers<[1], [0], [0], [1], [0, 0, 1, 1], [], []>} : vector<8x128xf32>, vector<128x512xf32>, vector<8x512xf32> -> vector<8x512xf32>
    %237 = arith.addf %233, %236 : vector<8x512xf32>
    %238 = vector.extract_strided_slice %237 {offsets = [0, 0], sizes = [8, 128], strides = [1, 1]} : vector<8x512xf32> to vector<8x128xf32>
    %cst_113 = arith.constant 5.000000e-01 : f32
    %239 = vector.broadcast %cst_113 : f32 to vector<8x128xf32>
    %240 = arith.mulf %239, %238 : vector<8x128xf32>
    %241 = math.tanh %240 : vector<8x128xf32>
    %cst_114 = arith.constant 1.000000e+00 : f32
    %242 = vector.broadcast %cst_114 : f32 to vector<8x128xf32>
    %243 = arith.addf %241, %242 : vector<8x128xf32>
    %cst_115 = arith.constant 5.000000e-01 : f32
    %244 = vector.broadcast %cst_115 : f32 to vector<8x128xf32>
    %245 = arith.mulf %244, %243 : vector<8x128xf32>
    %246 = vector.extract_strided_slice %237 {offsets = [0, 128], sizes = [8, 128], strides = [1, 1]} : vector<8x512xf32> to vector<8x128xf32>
    %cst_116 = arith.constant 5.000000e-01 : f32
    %247 = vector.broadcast %cst_116 : f32 to vector<8x128xf32>
    %248 = arith.mulf %247, %246 : vector<8x128xf32>
    %249 = math.tanh %248 : vector<8x128xf32>
    %cst_117 = arith.constant 1.000000e+00 : f32
    %250 = vector.broadcast %cst_117 : f32 to vector<8x128xf32>
    %251 = arith.addf %249, %250 : vector<8x128xf32>
    %cst_118 = arith.constant 5.000000e-01 : f32
    %252 = vector.broadcast %cst_118 : f32 to vector<8x128xf32>
    %253 = arith.mulf %252, %251 : vector<8x128xf32>
    %254 = vector.extract_strided_slice %237 {offsets = [0, 256], sizes = [8, 128], strides = [1, 1]} : vector<8x512xf32> to vector<8x128xf32>
    %255 = math.tanh %254 : vector<8x128xf32>
    %256 = vector.extract_strided_slice %237 {offsets = [0, 384], sizes = [8, 128], strides = [1, 1]} : vector<8x512xf32> to vector<8x128xf32>
    %cst_119 = arith.constant 5.000000e-01 : f32
    %257 = vector.broadcast %cst_119 : f32 to vector<8x128xf32>
    %258 = arith.mulf %257, %256 : vector<8x128xf32>
    %259 = math.tanh %258 : vector<8x128xf32>
    %cst_120 = arith.constant 1.000000e+00 : f32
    %260 = vector.broadcast %cst_120 : f32 to vector<8x128xf32>
    %261 = arith.addf %259, %260 : vector<8x128xf32>
    %cst_121 = arith.constant 5.000000e-01 : f32
    %262 = vector.broadcast %cst_121 : f32 to vector<8x128xf32>
    %263 = arith.mulf %262, %261 : vector<8x128xf32>
    %264 = arith.mulf %253, %229 : vector<8x128xf32>
    %265 = arith.mulf %245, %255 : vector<8x128xf32>
    %266 = arith.addf %264, %265 : vector<8x128xf32>
    %267 = math.tanh %266 : vector<8x128xf32>
    %268 = arith.mulf %263, %267 : vector<8x128xf32>
    %c48_122 = arith.constant 48 : index
    %c0_123 = arith.constant 0 : index
    %269 = vector.load %arg13[%c48_122, %c0_123] : memref<64x128xf32, #tpu.memory_space<vmem>>, vector<8x128xf32>
    tpu.vector_store %arg13[%c48_122, %c0_123], %268 {strides = array<i32>} : memref<64x128xf32, #tpu.memory_space<vmem>>, vector<8x128xf32>,
    %c56 = arith.constant 56 : index
    %c0_124 = arith.constant 0 : index
    %270 = vector.load %arg12[%c56, %c0_124] : memref<64x512xf32, #tpu.memory_space<vmem>>, vector<8x512xf32>
    %c0_125 = arith.constant 0 : index
    %c0_126 = arith.constant 0 : index
    %c0_127 = arith.constant 0 : index
    %271 = vector.load %arg2[%c0_125, %c0_126, %c0_127] : memref<2x128x512xf32, #tpu.memory_space<vmem>>, vector<1x128x512xf32>
    %272 = vector.shape_cast %271 : vector<1x128x512xf32> to vector<128x512xf32>
    %cst_128 = arith.constant dense<0.000000e+00> : vector<8x512xf32>
    %273 = tpu.matmul %268, %272, %cst_128 {dimension_numbers = #tpu.dot_dimension_numbers<[1], [0], [0], [1], [0, 0, 1, 1], [], []>} : vector<8x128xf32>, vector<128x512xf32>, vector<8x512xf32> -> vector<8x512xf32>
    %274 = arith.addf %270, %273 : vector<8x512xf32>
    %275 = vector.extract_strided_slice %274 {offsets = [0, 0], sizes = [8, 128], strides = [1, 1]} : vector<8x512xf32> to vector<8x128xf32>
    %cst_129 = arith.constant 5.000000e-01 : f32
    %276 = vector.broadcast %cst_129 : f32 to vector<8x128xf32>
    %277 = arith.mulf %276, %275 : vector<8x128xf32>
    %278 = math.tanh %277 : vector<8x128xf32>
    %cst_130 = arith.constant 1.000000e+00 : f32
    %279 = vector.broadcast %cst_130 : f32 to vector<8x128xf32>
    %280 = arith.addf %278, %279 : vector<8x128xf32>
    %cst_131 = arith.constant 5.000000e-01 : f32
    %281 = vector.broadcast %cst_131 : f32 to vector<8x128xf32>
    %282 = arith.mulf %281, %280 : vector<8x128xf32>
    %283 = vector.extract_strided_slice %274 {offsets = [0, 128], sizes = [8, 128], strides = [1, 1]} : vector<8x512xf32> to vector<8x128xf32>
    %cst_132 = arith.constant 5.000000e-01 : f32
    %284 = vector.broadcast %cst_132 : f32 to vector<8x128xf32>
    %285 = arith.mulf %284, %283 : vector<8x128xf32>
    %286 = math.tanh %285 : vector<8x128xf32>
    %cst_133 = arith.constant 1.000000e+00 : f32
    %287 = vector.broadcast %cst_133 : f32 to vector<8x128xf32>
    %288 = arith.addf %286, %287 : vector<8x128xf32>
    %cst_134 = arith.constant 5.000000e-01 : f32
    %289 = vector.broadcast %cst_134 : f32 to vector<8x128xf32>
    %290 = arith.mulf %289, %288 : vector<8x128xf32>
    %291 = vector.extract_strided_slice %274 {offsets = [0, 256], sizes = [8, 128], strides = [1, 1]} : vector<8x512xf32> to vector<8x128xf32>
    %292 = math.tanh %291 : vector<8x128xf32>
    %293 = vector.extract_strided_slice %274 {offsets = [0, 384], sizes = [8, 128], strides = [1, 1]} : vector<8x512xf32> to vector<8x128xf32>
    %cst_135 = arith.constant 5.000000e-01 : f32
    %294 = vector.broadcast %cst_135 : f32 to vector<8x128xf32>
    %295 = arith.mulf %294, %293 : vector<8x128xf32>
    %296 = math.tanh %295 : vector<8x128xf32>
    %cst_136 = arith.constant 1.000000e+00 : f32
    %297 = vector.broadcast %cst_136 : f32 to vector<8x128xf32>
    %298 = arith.addf %296, %297 : vector<8x128xf32>
    %cst_137 = arith.constant 5.000000e-01 : f32
    %299 = vector.broadcast %cst_137 : f32 to vector<8x128xf32>
    %300 = arith.mulf %299, %298 : vector<8x128xf32>
    %301 = arith.mulf %290, %266 : vector<8x128xf32>
    %302 = arith.mulf %282, %292 : vector<8x128xf32>
    %303 = arith.addf %301, %302 : vector<8x128xf32>
    %304 = math.tanh %303 : vector<8x128xf32>
    %305 = arith.mulf %300, %304 : vector<8x128xf32>
    %c56_138 = arith.constant 56 : index
    %c0_139 = arith.constant 0 : index
    %306 = vector.load %arg13[%c56_138, %c0_139] : memref<64x128xf32, #tpu.memory_space<vmem>>, vector<8x128xf32>
    tpu.vector_store %arg13[%c56_138, %c0_139], %305 {strides = array<i32>} : memref<64x128xf32, #tpu.memory_space<vmem>>, vector<8x128xf32>,
    %c0_140 = arith.constant 0 : index
    %c0_141 = arith.constant 0 : index
    %307 = vector.load %arg13[%c0_140, %c0_141] : memref<64x128xf32, #tpu.memory_space<vmem>>, vector<64x128xf32>
    %c1 = arith.constant 1 : index
    %c0_142 = arith.constant 0 : index
    %c0_143 = arith.constant 0 : index
    %308 = vector.load %arg1[%c1, %c0_142, %c0_143] : memref<2x128x512xf32, #tpu.memory_space<vmem>>, vector<1x128x512xf32>
    %309 = vector.shape_cast %308 : vector<1x128x512xf32> to vector<128x512xf32>
    %cst_144 = arith.constant dense<0.000000e+00> : vector<64x512xf32>
    %310 = tpu.matmul %307, %309, %cst_144 {dimension_numbers = #tpu.dot_dimension_numbers<[1], [0], [0], [1], [0, 0, 1, 1], [], []>} : vector<64x128xf32>, vector<128x512xf32>, vector<64x512xf32> -> vector<64x512xf32>
    %c1_145 = arith.constant 1 : index
    %c0_146 = arith.constant 0 : index
    %c0_147 = arith.constant 0 : index
    %311 = vector.load %arg3[%c1_145, %c0_146, %c0_147] : memref<2x1x512xf32, #tpu.memory_space<vmem>>, vector<1x1x512xf32>
    %312 = vector.shape_cast %311 : vector<1x1x512xf32> to vector<1x512xf32>
    %313 = vector.broadcast %312 : vector<1x512xf32> to vector<64x512xf32>
    %314 = arith.addf %310, %313 : vector<64x512xf32>
    %c0_148 = arith.constant 0 : index
    %c0_149 = arith.constant 0 : index
    %315 = vector.load %arg12[%c0_148, %c0_149] : memref<64x512xf32, #tpu.memory_space<vmem>>, vector<64x512xf32>
    tpu.vector_store %arg12[%c0_148, %c0_149], %314 {strides = array<i32>} : memref<64x512xf32, #tpu.memory_space<vmem>>, vector<64x512xf32>,
    %cst_150 = arith.constant 0.000000e+00 : f32
    %316 = vector.broadcast %cst_150 : f32 to vector<8x128xf32>
    %cst_151 = arith.constant 0.000000e+00 : f32
    %317 = vector.broadcast %cst_151 : f32 to vector<8x128xf32>
    %c0_152 = arith.constant 0 : index
    %c0_153 = arith.constant 0 : index
    %318 = vector.load %arg12[%c0_152, %c0_153] : memref<64x512xf32, #tpu.memory_space<vmem>>, vector<8x512xf32>
    %c1_154 = arith.constant 1 : index
    %c0_155 = arith.constant 0 : index
    %c0_156 = arith.constant 0 : index
    %319 = vector.load %arg2[%c1_154, %c0_155, %c0_156] : memref<2x128x512xf32, #tpu.memory_space<vmem>>, vector<1x128x512xf32>
    %320 = vector.shape_cast %319 : vector<1x128x512xf32> to vector<128x512xf32>
    %cst_157 = arith.constant dense<0.000000e+00> : vector<8x512xf32>
    %321 = tpu.matmul %316, %320, %cst_157 {dimension_numbers = #tpu.dot_dimension_numbers<[1], [0], [0], [1], [0, 0, 1, 1], [], []>} : vector<8x128xf32>, vector<128x512xf32>, vector<8x512xf32> -> vector<8x512xf32>
    %322 = arith.addf %318, %321 : vector<8x512xf32>
    %323 = vector.extract_strided_slice %322 {offsets = [0, 0], sizes = [8, 128], strides = [1, 1]} : vector<8x512xf32> to vector<8x128xf32>
    %cst_158 = arith.constant 5.000000e-01 : f32
    %324 = vector.broadcast %cst_158 : f32 to vector<8x128xf32>
    %325 = arith.mulf %324, %323 : vector<8x128xf32>
    %326 = math.tanh %325 : vector<8x128xf32>
    %cst_159 = arith.constant 1.000000e+00 : f32
    %327 = vector.broadcast %cst_159 : f32 to vector<8x128xf32>
    %328 = arith.addf %326, %327 : vector<8x128xf32>
    %cst_160 = arith.constant 5.000000e-01 : f32
    %329 = vector.broadcast %cst_160 : f32 to vector<8x128xf32>
    %330 = arith.mulf %329, %328 : vector<8x128xf32>
    %331 = vector.extract_strided_slice %322 {offsets = [0, 128], sizes = [8, 128], strides = [1, 1]} : vector<8x512xf32> to vector<8x128xf32>
    %cst_161 = arith.constant 5.000000e-01 : f32
    %332 = vector.broadcast %cst_161 : f32 to vector<8x128xf32>
    %333 = arith.mulf %332, %331 : vector<8x128xf32>
    %334 = math.tanh %333 : vector<8x128xf32>
    %cst_162 = arith.constant 1.000000e+00 : f32
    %335 = vector.broadcast %cst_162 : f32 to vector<8x128xf32>
    %336 = arith.addf %334, %335 : vector<8x128xf32>
    %cst_163 = arith.constant 5.000000e-01 : f32
    %337 = vector.broadcast %cst_163 : f32 to vector<8x128xf32>
    %338 = arith.mulf %337, %336 : vector<8x128xf32>
    %339 = vector.extract_strided_slice %322 {offsets = [0, 256], sizes = [8, 128], strides = [1, 1]} : vector<8x512xf32> to vector<8x128xf32>
    %340 = math.tanh %339 : vector<8x128xf32>
    %341 = vector.extract_strided_slice %322 {offsets = [0, 384], sizes = [8, 128], strides = [1, 1]} : vector<8x512xf32> to vector<8x128xf32>
    %cst_164 = arith.constant 5.000000e-01 : f32
    %342 = vector.broadcast %cst_164 : f32 to vector<8x128xf32>
    %343 = arith.mulf %342, %341 : vector<8x128xf32>
    %344 = math.tanh %343 : vector<8x128xf32>
    %cst_165 = arith.constant 1.000000e+00 : f32
    %345 = vector.broadcast %cst_165 : f32 to vector<8x128xf32>
    %346 = arith.addf %344, %345 : vector<8x128xf32>
    %cst_166 = arith.constant 5.000000e-01 : f32
    %347 = vector.broadcast %cst_166 : f32 to vector<8x128xf32>
    %348 = arith.mulf %347, %346 : vector<8x128xf32>
    %349 = arith.mulf %338, %317 : vector<8x128xf32>
    %350 = arith.mulf %330, %340 : vector<8x128xf32>
    %351 = arith.addf %349, %350 : vector<8x128xf32>
    %352 = math.tanh %351 : vector<8x128xf32>
    %353 = arith.mulf %348, %352 : vector<8x128xf32>
    %c0_167 = arith.constant 0 : index
    %c0_168 = arith.constant 0 : index
    %354 = vector.load %arg13[%c0_167, %c0_168] : memref<64x128xf32, #tpu.memory_space<vmem>>, vector<8x128xf32>
    tpu.vector_store %arg13[%c0_167, %c0_168], %353 {strides = array<i32>} : memref<64x128xf32, #tpu.memory_space<vmem>>, vector<8x128xf32>,
    %c8_169 = arith.constant 8 : index
    %c0_170 = arith.constant 0 : index
    %355 = vector.load %arg12[%c8_169, %c0_170] : memref<64x512xf32, #tpu.memory_space<vmem>>, vector<8x512xf32>
    %c1_171 = arith.constant 1 : index
    %c0_172 = arith.constant 0 : index
    %c0_173 = arith.constant 0 : index
    %356 = vector.load %arg2[%c1_171, %c0_172, %c0_173] : memref<2x128x512xf32, #tpu.memory_space<vmem>>, vector<1x128x512xf32>
    %357 = vector.shape_cast %356 : vector<1x128x512xf32> to vector<128x512xf32>
    %cst_174 = arith.constant dense<0.000000e+00> : vector<8x512xf32>
    %358 = tpu.matmul %353, %357, %cst_174 {dimension_numbers = #tpu.dot_dimension_numbers<[1], [0], [0], [1], [0, 0, 1, 1], [], []>} : vector<8x128xf32>, vector<128x512xf32>, vector<8x512xf32> -> vector<8x512xf32>
    %359 = arith.addf %355, %358 : vector<8x512xf32>
    %360 = vector.extract_strided_slice %359 {offsets = [0, 0], sizes = [8, 128], strides = [1, 1]} : vector<8x512xf32> to vector<8x128xf32>
    %cst_175 = arith.constant 5.000000e-01 : f32
    %361 = vector.broadcast %cst_175 : f32 to vector<8x128xf32>
    %362 = arith.mulf %361, %360 : vector<8x128xf32>
    %363 = math.tanh %362 : vector<8x128xf32>
    %cst_176 = arith.constant 1.000000e+00 : f32
    %364 = vector.broadcast %cst_176 : f32 to vector<8x128xf32>
    %365 = arith.addf %363, %364 : vector<8x128xf32>
    %cst_177 = arith.constant 5.000000e-01 : f32
    %366 = vector.broadcast %cst_177 : f32 to vector<8x128xf32>
    %367 = arith.mulf %366, %365 : vector<8x128xf32>
    %368 = vector.extract_strided_slice %359 {offsets = [0, 128], sizes = [8, 128], strides = [1, 1]} : vector<8x512xf32> to vector<8x128xf32>
    %cst_178 = arith.constant 5.000000e-01 : f32
    %369 = vector.broadcast %cst_178 : f32 to vector<8x128xf32>
    %370 = arith.mulf %369, %368 : vector<8x128xf32>
    %371 = math.tanh %370 : vector<8x128xf32>
    %cst_179 = arith.constant 1.000000e+00 : f32
    %372 = vector.broadcast %cst_179 : f32 to vector<8x128xf32>
    %373 = arith.addf %371, %372 : vector<8x128xf32>
    %cst_180 = arith.constant 5.000000e-01 : f32
    %374 = vector.broadcast %cst_180 : f32 to vector<8x128xf32>
    %375 = arith.mulf %374, %373 : vector<8x128xf32>
    %376 = vector.extract_strided_slice %359 {offsets = [0, 256], sizes = [8, 128], strides = [1, 1]} : vector<8x512xf32> to vector<8x128xf32>
    %377 = math.tanh %376 : vector<8x128xf32>
    %378 = vector.extract_strided_slice %359 {offsets = [0, 384], sizes = [8, 128], strides = [1, 1]} : vector<8x512xf32> to vector<8x128xf32>
    %cst_181 = arith.constant 5.000000e-01 : f32
    %379 = vector.broadcast %cst_181 : f32 to vector<8x128xf32>
    %380 = arith.mulf %379, %378 : vector<8x128xf32>
    %381 = math.tanh %380 : vector<8x128xf32>
    %cst_182 = arith.constant 1.000000e+00 : f32
    %382 = vector.broadcast %cst_182 : f32 to vector<8x128xf32>
    %383 = arith.addf %381, %382 : vector<8x128xf32>
    %cst_183 = arith.constant 5.000000e-01 : f32
    %384 = vector.broadcast %cst_183 : f32 to vector<8x128xf32>
    %385 = arith.mulf %384, %383 : vector<8x128xf32>
    %386 = arith.mulf %375, %351 : vector<8x128xf32>
    %387 = arith.mulf %367, %377 : vector<8x128xf32>
    %388 = arith.addf %386, %387 : vector<8x128xf32>
    %389 = math.tanh %388 : vector<8x128xf32>
    %390 = arith.mulf %385, %389 : vector<8x128xf32>
    %c8_184 = arith.constant 8 : index
    %c0_185 = arith.constant 0 : index
    %391 = vector.load %arg13[%c8_184, %c0_185] : memref<64x128xf32, #tpu.memory_space<vmem>>, vector<8x128xf32>
    tpu.vector_store %arg13[%c8_184, %c0_185], %390 {strides = array<i32>} : memref<64x128xf32, #tpu.memory_space<vmem>>, vector<8x128xf32>,
    %c16_186 = arith.constant 16 : index
    %c0_187 = arith.constant 0 : index
    %392 = vector.load %arg12[%c16_186, %c0_187] : memref<64x512xf32, #tpu.memory_space<vmem>>, vector<8x512xf32>
    %c1_188 = arith.constant 1 : index
    %c0_189 = arith.constant 0 : index
    %c0_190 = arith.constant 0 : index
    %393 = vector.load %arg2[%c1_188, %c0_189, %c0_190] : memref<2x128x512xf32, #tpu.memory_space<vmem>>, vector<1x128x512xf32>
    %394 = vector.shape_cast %393 : vector<1x128x512xf32> to vector<128x512xf32>
    %cst_191 = arith.constant dense<0.000000e+00> : vector<8x512xf32>
    %395 = tpu.matmul %390, %394, %cst_191 {dimension_numbers = #tpu.dot_dimension_numbers<[1], [0], [0], [1], [0, 0, 1, 1], [], []>} : vector<8x128xf32>, vector<128x512xf32>, vector<8x512xf32> -> vector<8x512xf32>
    %396 = arith.addf %392, %395 : vector<8x512xf32>
    %397 = vector.extract_strided_slice %396 {offsets = [0, 0], sizes = [8, 128], strides = [1, 1]} : vector<8x512xf32> to vector<8x128xf32>
    %cst_192 = arith.constant 5.000000e-01 : f32
    %398 = vector.broadcast %cst_192 : f32 to vector<8x128xf32>
    %399 = arith.mulf %398, %397 : vector<8x128xf32>
    %400 = math.tanh %399 : vector<8x128xf32>
    %cst_193 = arith.constant 1.000000e+00 : f32
    %401 = vector.broadcast %cst_193 : f32 to vector<8x128xf32>
    %402 = arith.addf %400, %401 : vector<8x128xf32>
    %cst_194 = arith.constant 5.000000e-01 : f32
    %403 = vector.broadcast %cst_194 : f32 to vector<8x128xf32>
    %404 = arith.mulf %403, %402 : vector<8x128xf32>
    %405 = vector.extract_strided_slice %396 {offsets = [0, 128], sizes = [8, 128], strides = [1, 1]} : vector<8x512xf32> to vector<8x128xf32>
    %cst_195 = arith.constant 5.000000e-01 : f32
    %406 = vector.broadcast %cst_195 : f32 to vector<8x128xf32>
    %407 = arith.mulf %406, %405 : vector<8x128xf32>
    %408 = math.tanh %407 : vector<8x128xf32>
    %cst_196 = arith.constant 1.000000e+00 : f32
    %409 = vector.broadcast %cst_196 : f32 to vector<8x128xf32>
    %410 = arith.addf %408, %409 : vector<8x128xf32>
    %cst_197 = arith.constant 5.000000e-01 : f32
    %411 = vector.broadcast %cst_197 : f32 to vector<8x128xf32>
    %412 = arith.mulf %411, %410 : vector<8x128xf32>
    %413 = vector.extract_strided_slice %396 {offsets = [0, 256], sizes = [8, 128], strides = [1, 1]} : vector<8x512xf32> to vector<8x128xf32>
    %414 = math.tanh %413 : vector<8x128xf32>
    %415 = vector.extract_strided_slice %396 {offsets = [0, 384], sizes = [8, 128], strides = [1, 1]} : vector<8x512xf32> to vector<8x128xf32>
    %cst_198 = arith.constant 5.000000e-01 : f32
    %416 = vector.broadcast %cst_198 : f32 to vector<8x128xf32>
    %417 = arith.mulf %416, %415 : vector<8x128xf32>
    %418 = math.tanh %417 : vector<8x128xf32>
    %cst_199 = arith.constant 1.000000e+00 : f32
    %419 = vector.broadcast %cst_199 : f32 to vector<8x128xf32>
    %420 = arith.addf %418, %419 : vector<8x128xf32>
    %cst_200 = arith.constant 5.000000e-01 : f32
    %421 = vector.broadcast %cst_200 : f32 to vector<8x128xf32>
    %422 = arith.mulf %421, %420 : vector<8x128xf32>
    %423 = arith.mulf %412, %388 : vector<8x128xf32>
    %424 = arith.mulf %404, %414 : vector<8x128xf32>
    %425 = arith.addf %423, %424 : vector<8x128xf32>
    %426 = math.tanh %425 : vector<8x128xf32>
    %427 = arith.mulf %422, %426 : vector<8x128xf32>
    %c16_201 = arith.constant 16 : index
    %c0_202 = arith.constant 0 : index
    %428 = vector.load %arg13[%c16_201, %c0_202] : memref<64x128xf32, #tpu.memory_space<vmem>>, vector<8x128xf32>
    tpu.vector_store %arg13[%c16_201, %c0_202], %427 {strides = array<i32>} : memref<64x128xf32, #tpu.memory_space<vmem>>, vector<8x128xf32>,
    %c24_203 = arith.constant 24 : index
    %c0_204 = arith.constant 0 : index
    %429 = vector.load %arg12[%c24_203, %c0_204] : memref<64x512xf32, #tpu.memory_space<vmem>>, vector<8x512xf32>
    %c1_205 = arith.constant 1 : index
    %c0_206 = arith.constant 0 : index
    %c0_207 = arith.constant 0 : index
    %430 = vector.load %arg2[%c1_205, %c0_206, %c0_207] : memref<2x128x512xf32, #tpu.memory_space<vmem>>, vector<1x128x512xf32>
    %431 = vector.shape_cast %430 : vector<1x128x512xf32> to vector<128x512xf32>
    %cst_208 = arith.constant dense<0.000000e+00> : vector<8x512xf32>
    %432 = tpu.matmul %427, %431, %cst_208 {dimension_numbers = #tpu.dot_dimension_numbers<[1], [0], [0], [1], [0, 0, 1, 1], [], []>} : vector<8x128xf32>, vector<128x512xf32>, vector<8x512xf32> -> vector<8x512xf32>
    %433 = arith.addf %429, %432 : vector<8x512xf32>
    %434 = vector.extract_strided_slice %433 {offsets = [0, 0], sizes = [8, 128], strides = [1, 1]} : vector<8x512xf32> to vector<8x128xf32>
    %cst_209 = arith.constant 5.000000e-01 : f32
    %435 = vector.broadcast %cst_209 : f32 to vector<8x128xf32>
    %436 = arith.mulf %435, %434 : vector<8x128xf32>
    %437 = math.tanh %436 : vector<8x128xf32>
    %cst_210 = arith.constant 1.000000e+00 : f32
    %438 = vector.broadcast %cst_210 : f32 to vector<8x128xf32>
    %439 = arith.addf %437, %438 : vector<8x128xf32>
    %cst_211 = arith.constant 5.000000e-01 : f32
    %440 = vector.broadcast %cst_211 : f32 to vector<8x128xf32>
    %441 = arith.mulf %440, %439 : vector<8x128xf32>
    %442 = vector.extract_strided_slice %433 {offsets = [0, 128], sizes = [8, 128], strides = [1, 1]} : vector<8x512xf32> to vector<8x128xf32>
    %cst_212 = arith.constant 5.000000e-01 : f32
    %443 = vector.broadcast %cst_212 : f32 to vector<8x128xf32>
    %444 = arith.mulf %443, %442 : vector<8x128xf32>
    %445 = math.tanh %444 : vector<8x128xf32>
    %cst_213 = arith.constant 1.000000e+00 : f32
    %446 = vector.broadcast %cst_213 : f32 to vector<8x128xf32>
    %447 = arith.addf %445, %446 : vector<8x128xf32>
    %cst_214 = arith.constant 5.000000e-01 : f32
    %448 = vector.broadcast %cst_214 : f32 to vector<8x128xf32>
    %449 = arith.mulf %448, %447 : vector<8x128xf32>
    %450 = vector.extract_strided_slice %433 {offsets = [0, 256], sizes = [8, 128], strides = [1, 1]} : vector<8x512xf32> to vector<8x128xf32>
    %451 = math.tanh %450 : vector<8x128xf32>
    %452 = vector.extract_strided_slice %433 {offsets = [0, 384], sizes = [8, 128], strides = [1, 1]} : vector<8x512xf32> to vector<8x128xf32>
    %cst_215 = arith.constant 5.000000e-01 : f32
    %453 = vector.broadcast %cst_215 : f32 to vector<8x128xf32>
    %454 = arith.mulf %453, %452 : vector<8x128xf32>
    %455 = math.tanh %454 : vector<8x128xf32>
    %cst_216 = arith.constant 1.000000e+00 : f32
    %456 = vector.broadcast %cst_216 : f32 to vector<8x128xf32>
    %457 = arith.addf %455, %456 : vector<8x128xf32>
    %cst_217 = arith.constant 5.000000e-01 : f32
    %458 = vector.broadcast %cst_217 : f32 to vector<8x128xf32>
    %459 = arith.mulf %458, %457 : vector<8x128xf32>
    %460 = arith.mulf %449, %425 : vector<8x128xf32>
    %461 = arith.mulf %441, %451 : vector<8x128xf32>
    %462 = arith.addf %460, %461 : vector<8x128xf32>
    %463 = math.tanh %462 : vector<8x128xf32>
    %464 = arith.mulf %459, %463 : vector<8x128xf32>
    %c24_218 = arith.constant 24 : index
    %c0_219 = arith.constant 0 : index
    %465 = vector.load %arg13[%c24_218, %c0_219] : memref<64x128xf32, #tpu.memory_space<vmem>>, vector<8x128xf32>
    tpu.vector_store %arg13[%c24_218, %c0_219], %464 {strides = array<i32>} : memref<64x128xf32, #tpu.memory_space<vmem>>, vector<8x128xf32>,
    %c32_220 = arith.constant 32 : index
    %c0_221 = arith.constant 0 : index
    %466 = vector.load %arg12[%c32_220, %c0_221] : memref<64x512xf32, #tpu.memory_space<vmem>>, vector<8x512xf32>
    %c1_222 = arith.constant 1 : index
    %c0_223 = arith.constant 0 : index
    %c0_224 = arith.constant 0 : index
    %467 = vector.load %arg2[%c1_222, %c0_223, %c0_224] : memref<2x128x512xf32, #tpu.memory_space<vmem>>, vector<1x128x512xf32>
    %468 = vector.shape_cast %467 : vector<1x128x512xf32> to vector<128x512xf32>
    %cst_225 = arith.constant dense<0.000000e+00> : vector<8x512xf32>
    %469 = tpu.matmul %464, %468, %cst_225 {dimension_numbers = #tpu.dot_dimension_numbers<[1], [0], [0], [1], [0, 0, 1, 1], [], []>} : vector<8x128xf32>, vector<128x512xf32>, vector<8x512xf32> -> vector<8x512xf32>
    %470 = arith.addf %466, %469 : vector<8x512xf32>
    %471 = vector.extract_strided_slice %470 {offsets = [0, 0], sizes = [8, 128], strides = [1, 1]} : vector<8x512xf32> to vector<8x128xf32>
    %cst_226 = arith.constant 5.000000e-01 : f32
    %472 = vector.broadcast %cst_226 : f32 to vector<8x128xf32>
    %473 = arith.mulf %472, %471 : vector<8x128xf32>
    %474 = math.tanh %473 : vector<8x128xf32>
    %cst_227 = arith.constant 1.000000e+00 : f32
    %475 = vector.broadcast %cst_227 : f32 to vector<8x128xf32>
    %476 = arith.addf %474, %475 : vector<8x128xf32>
    %cst_228 = arith.constant 5.000000e-01 : f32
    %477 = vector.broadcast %cst_228 : f32 to vector<8x128xf32>
    %478 = arith.mulf %477, %476 : vector<8x128xf32>
    %479 = vector.extract_strided_slice %470 {offsets = [0, 128], sizes = [8, 128], strides = [1, 1]} : vector<8x512xf32> to vector<8x128xf32>
    %cst_229 = arith.constant 5.000000e-01 : f32
    %480 = vector.broadcast %cst_229 : f32 to vector<8x128xf32>
    %481 = arith.mulf %480, %479 : vector<8x128xf32>
    %482 = math.tanh %481 : vector<8x128xf32>
    %cst_230 = arith.constant 1.000000e+00 : f32
    %483 = vector.broadcast %cst_230 : f32 to vector<8x128xf32>
    %484 = arith.addf %482, %483 : vector<8x128xf32>
    %cst_231 = arith.constant 5.000000e-01 : f32
    %485 = vector.broadcast %cst_231 : f32 to vector<8x128xf32>
    %486 = arith.mulf %485, %484 : vector<8x128xf32>
    %487 = vector.extract_strided_slice %470 {offsets = [0, 256], sizes = [8, 128], strides = [1, 1]} : vector<8x512xf32> to vector<8x128xf32>
    %488 = math.tanh %487 : vector<8x128xf32>
    %489 = vector.extract_strided_slice %470 {offsets = [0, 384], sizes = [8, 128], strides = [1, 1]} : vector<8x512xf32> to vector<8x128xf32>
    %cst_232 = arith.constant 5.000000e-01 : f32
    %490 = vector.broadcast %cst_232 : f32 to vector<8x128xf32>
    %491 = arith.mulf %490, %489 : vector<8x128xf32>
    %492 = math.tanh %491 : vector<8x128xf32>
    %cst_233 = arith.constant 1.000000e+00 : f32
    %493 = vector.broadcast %cst_233 : f32 to vector<8x128xf32>
    %494 = arith.addf %492, %493 : vector<8x128xf32>
    %cst_234 = arith.constant 5.000000e-01 : f32
    %495 = vector.broadcast %cst_234 : f32 to vector<8x128xf32>
    %496 = arith.mulf %495, %494 : vector<8x128xf32>
    %497 = arith.mulf %486, %462 : vector<8x128xf32>
    %498 = arith.mulf %478, %488 : vector<8x128xf32>
    %499 = arith.addf %497, %498 : vector<8x128xf32>
    %500 = math.tanh %499 : vector<8x128xf32>
    %501 = arith.mulf %496, %500 : vector<8x128xf32>
    %c32_235 = arith.constant 32 : index
    %c0_236 = arith.constant 0 : index
    %502 = vector.load %arg13[%c32_235, %c0_236] : memref<64x128xf32, #tpu.memory_space<vmem>>, vector<8x128xf32>
    tpu.vector_store %arg13[%c32_235, %c0_236], %501 {strides = array<i32>} : memref<64x128xf32, #tpu.memory_space<vmem>>, vector<8x128xf32>,
    %c40_237 = arith.constant 40 : index
    %c0_238 = arith.constant 0 : index
    %503 = vector.load %arg12[%c40_237, %c0_238] : memref<64x512xf32, #tpu.memory_space<vmem>>, vector<8x512xf32>
    %c1_239 = arith.constant 1 : index
    %c0_240 = arith.constant 0 : index
    %c0_241 = arith.constant 0 : index
    %504 = vector.load %arg2[%c1_239, %c0_240, %c0_241] : memref<2x128x512xf32, #tpu.memory_space<vmem>>, vector<1x128x512xf32>
    %505 = vector.shape_cast %504 : vector<1x128x512xf32> to vector<128x512xf32>
    %cst_242 = arith.constant dense<0.000000e+00> : vector<8x512xf32>
    %506 = tpu.matmul %501, %505, %cst_242 {dimension_numbers = #tpu.dot_dimension_numbers<[1], [0], [0], [1], [0, 0, 1, 1], [], []>} : vector<8x128xf32>, vector<128x512xf32>, vector<8x512xf32> -> vector<8x512xf32>
    %507 = arith.addf %503, %506 : vector<8x512xf32>
    %508 = vector.extract_strided_slice %507 {offsets = [0, 0], sizes = [8, 128], strides = [1, 1]} : vector<8x512xf32> to vector<8x128xf32>
    %cst_243 = arith.constant 5.000000e-01 : f32
    %509 = vector.broadcast %cst_243 : f32 to vector<8x128xf32>
    %510 = arith.mulf %509, %508 : vector<8x128xf32>
    %511 = math.tanh %510 : vector<8x128xf32>
    %cst_244 = arith.constant 1.000000e+00 : f32
    %512 = vector.broadcast %cst_244 : f32 to vector<8x128xf32>
    %513 = arith.addf %511, %512 : vector<8x128xf32>
    %cst_245 = arith.constant 5.000000e-01 : f32
    %514 = vector.broadcast %cst_245 : f32 to vector<8x128xf32>
    %515 = arith.mulf %514, %513 : vector<8x128xf32>
    %516 = vector.extract_strided_slice %507 {offsets = [0, 128], sizes = [8, 128], strides = [1, 1]} : vector<8x512xf32> to vector<8x128xf32>
    %cst_246 = arith.constant 5.000000e-01 : f32
    %517 = vector.broadcast %cst_246 : f32 to vector<8x128xf32>
    %518 = arith.mulf %517, %516 : vector<8x128xf32>
    %519 = math.tanh %518 : vector<8x128xf32>
    %cst_247 = arith.constant 1.000000e+00 : f32
    %520 = vector.broadcast %cst_247 : f32 to vector<8x128xf32>
    %521 = arith.addf %519, %520 : vector<8x128xf32>
    %cst_248 = arith.constant 5.000000e-01 : f32
    %522 = vector.broadcast %cst_248 : f32 to vector<8x128xf32>
    %523 = arith.mulf %522, %521 : vector<8x128xf32>
    %524 = vector.extract_strided_slice %507 {offsets = [0, 256], sizes = [8, 128], strides = [1, 1]} : vector<8x512xf32> to vector<8x128xf32>
    %525 = math.tanh %524 : vector<8x128xf32>
    %526 = vector.extract_strided_slice %507 {offsets = [0, 384], sizes = [8, 128], strides = [1, 1]} : vector<8x512xf32> to vector<8x128xf32>
    %cst_249 = arith.constant 5.000000e-01 : f32
    %527 = vector.broadcast %cst_249 : f32 to vector<8x128xf32>
    %528 = arith.mulf %527, %526 : vector<8x128xf32>
    %529 = math.tanh %528 : vector<8x128xf32>
    %cst_250 = arith.constant 1.000000e+00 : f32
    %530 = vector.broadcast %cst_250 : f32 to vector<8x128xf32>
    %531 = arith.addf %529, %530 : vector<8x128xf32>
    %cst_251 = arith.constant 5.000000e-01 : f32
    %532 = vector.broadcast %cst_251 : f32 to vector<8x128xf32>
    %533 = arith.mulf %532, %531 : vector<8x128xf32>
    %534 = arith.mulf %523, %499 : vector<8x128xf32>
    %535 = arith.mulf %515, %525 : vector<8x128xf32>
    %536 = arith.addf %534, %535 : vector<8x128xf32>
    %537 = math.tanh %536 : vector<8x128xf32>
    %538 = arith.mulf %533, %537 : vector<8x128xf32>
    %c40_252 = arith.constant 40 : index
    %c0_253 = arith.constant 0 : index
    %539 = vector.load %arg13[%c40_252, %c0_253] : memref<64x128xf32, #tpu.memory_space<vmem>>, vector<8x128xf32>
    tpu.vector_store %arg13[%c40_252, %c0_253], %538 {strides = array<i32>} : memref<64x128xf32, #tpu.memory_space<vmem>>, vector<8x128xf32>,
    %c48_254 = arith.constant 48 : index
    %c0_255 = arith.constant 0 : index
    %540 = vector.load %arg12[%c48_254, %c0_255] : memref<64x512xf32, #tpu.memory_space<vmem>>, vector<8x512xf32>
    %c1_256 = arith.constant 1 : index
    %c0_257 = arith.constant 0 : index
    %c0_258 = arith.constant 0 : index
    %541 = vector.load %arg2[%c1_256, %c0_257, %c0_258] : memref<2x128x512xf32, #tpu.memory_space<vmem>>, vector<1x128x512xf32>
    %542 = vector.shape_cast %541 : vector<1x128x512xf32> to vector<128x512xf32>
    %cst_259 = arith.constant dense<0.000000e+00> : vector<8x512xf32>
    %543 = tpu.matmul %538, %542, %cst_259 {dimension_numbers = #tpu.dot_dimension_numbers<[1], [0], [0], [1], [0, 0, 1, 1], [], []>} : vector<8x128xf32>, vector<128x512xf32>, vector<8x512xf32> -> vector<8x512xf32>
    %544 = arith.addf %540, %543 : vector<8x512xf32>
    %545 = vector.extract_strided_slice %544 {offsets = [0, 0], sizes = [8, 128], strides = [1, 1]} : vector<8x512xf32> to vector<8x128xf32>
    %cst_260 = arith.constant 5.000000e-01 : f32
    %546 = vector.broadcast %cst_260 : f32 to vector<8x128xf32>
    %547 = arith.mulf %546, %545 : vector<8x128xf32>
    %548 = math.tanh %547 : vector<8x128xf32>
    %cst_261 = arith.constant 1.000000e+00 : f32
    %549 = vector.broadcast %cst_261 : f32 to vector<8x128xf32>
    %550 = arith.addf %548, %549 : vector<8x128xf32>
    %cst_262 = arith.constant 5.000000e-01 : f32
    %551 = vector.broadcast %cst_262 : f32 to vector<8x128xf32>
    %552 = arith.mulf %551, %550 : vector<8x128xf32>
    %553 = vector.extract_strided_slice %544 {offsets = [0, 128], sizes = [8, 128], strides = [1, 1]} : vector<8x512xf32> to vector<8x128xf32>
    %cst_263 = arith.constant 5.000000e-01 : f32
    %554 = vector.broadcast %cst_263 : f32 to vector<8x128xf32>
    %555 = arith.mulf %554, %553 : vector<8x128xf32>
    %556 = math.tanh %555 : vector<8x128xf32>
    %cst_264 = arith.constant 1.000000e+00 : f32
    %557 = vector.broadcast %cst_264 : f32 to vector<8x128xf32>
    %558 = arith.addf %556, %557 : vector<8x128xf32>
    %cst_265 = arith.constant 5.000000e-01 : f32
    %559 = vector.broadcast %cst_265 : f32 to vector<8x128xf32>
    %560 = arith.mulf %559, %558 : vector<8x128xf32>
    %561 = vector.extract_strided_slice %544 {offsets = [0, 256], sizes = [8, 128], strides = [1, 1]} : vector<8x512xf32> to vector<8x128xf32>
    %562 = math.tanh %561 : vector<8x128xf32>
    %563 = vector.extract_strided_slice %544 {offsets = [0, 384], sizes = [8, 128], strides = [1, 1]} : vector<8x512xf32> to vector<8x128xf32>
    %cst_266 = arith.constant 5.000000e-01 : f32
    %564 = vector.broadcast %cst_266 : f32 to vector<8x128xf32>
    %565 = arith.mulf %564, %563 : vector<8x128xf32>
    %566 = math.tanh %565 : vector<8x128xf32>
    %cst_267 = arith.constant 1.000000e+00 : f32
    %567 = vector.broadcast %cst_267 : f32 to vector<8x128xf32>
    %568 = arith.addf %566, %567 : vector<8x128xf32>
    %cst_268 = arith.constant 5.000000e-01 : f32
    %569 = vector.broadcast %cst_268 : f32 to vector<8x128xf32>
    %570 = arith.mulf %569, %568 : vector<8x128xf32>
    %571 = arith.mulf %560, %536 : vector<8x128xf32>
    %572 = arith.mulf %552, %562 : vector<8x128xf32>
    %573 = arith.addf %571, %572 : vector<8x128xf32>
    %574 = math.tanh %573 : vector<8x128xf32>
    %575 = arith.mulf %570, %574 : vector<8x128xf32>
    %c48_269 = arith.constant 48 : index
    %c0_270 = arith.constant 0 : index
    %576 = vector.load %arg13[%c48_269, %c0_270] : memref<64x128xf32, #tpu.memory_space<vmem>>, vector<8x128xf32>
    tpu.vector_store %arg13[%c48_269, %c0_270], %575 {strides = array<i32>} : memref<64x128xf32, #tpu.memory_space<vmem>>, vector<8x128xf32>,
    %c56_271 = arith.constant 56 : index
    %c0_272 = arith.constant 0 : index
    %577 = vector.load %arg12[%c56_271, %c0_272] : memref<64x512xf32, #tpu.memory_space<vmem>>, vector<8x512xf32>
    %c1_273 = arith.constant 1 : index
    %c0_274 = arith.constant 0 : index
    %c0_275 = arith.constant 0 : index
    %578 = vector.load %arg2[%c1_273, %c0_274, %c0_275] : memref<2x128x512xf32, #tpu.memory_space<vmem>>, vector<1x128x512xf32>
    %579 = vector.shape_cast %578 : vector<1x128x512xf32> to vector<128x512xf32>
    %cst_276 = arith.constant dense<0.000000e+00> : vector<8x512xf32>
    %580 = tpu.matmul %575, %579, %cst_276 {dimension_numbers = #tpu.dot_dimension_numbers<[1], [0], [0], [1], [0, 0, 1, 1], [], []>} : vector<8x128xf32>, vector<128x512xf32>, vector<8x512xf32> -> vector<8x512xf32>
    %581 = arith.addf %577, %580 : vector<8x512xf32>
    %582 = vector.extract_strided_slice %581 {offsets = [0, 0], sizes = [8, 128], strides = [1, 1]} : vector<8x512xf32> to vector<8x128xf32>
    %cst_277 = arith.constant 5.000000e-01 : f32
    %583 = vector.broadcast %cst_277 : f32 to vector<8x128xf32>
    %584 = arith.mulf %583, %582 : vector<8x128xf32>
    %585 = math.tanh %584 : vector<8x128xf32>
    %cst_278 = arith.constant 1.000000e+00 : f32
    %586 = vector.broadcast %cst_278 : f32 to vector<8x128xf32>
    %587 = arith.addf %585, %586 : vector<8x128xf32>
    %cst_279 = arith.constant 5.000000e-01 : f32
    %588 = vector.broadcast %cst_279 : f32 to vector<8x128xf32>
    %589 = arith.mulf %588, %587 : vector<8x128xf32>
    %590 = vector.extract_strided_slice %581 {offsets = [0, 128], sizes = [8, 128], strides = [1, 1]} : vector<8x512xf32> to vector<8x128xf32>
    %cst_280 = arith.constant 5.000000e-01 : f32
    %591 = vector.broadcast %cst_280 : f32 to vector<8x128xf32>
    %592 = arith.mulf %591, %590 : vector<8x128xf32>
    %593 = math.tanh %592 : vector<8x128xf32>
    %cst_281 = arith.constant 1.000000e+00 : f32
    %594 = vector.broadcast %cst_281 : f32 to vector<8x128xf32>
    %595 = arith.addf %593, %594 : vector<8x128xf32>
    %cst_282 = arith.constant 5.000000e-01 : f32
    %596 = vector.broadcast %cst_282 : f32 to vector<8x128xf32>
    %597 = arith.mulf %596, %595 : vector<8x128xf32>
    %598 = vector.extract_strided_slice %581 {offsets = [0, 256], sizes = [8, 128], strides = [1, 1]} : vector<8x512xf32> to vector<8x128xf32>
    %599 = math.tanh %598 : vector<8x128xf32>
    %600 = vector.extract_strided_slice %581 {offsets = [0, 384], sizes = [8, 128], strides = [1, 1]} : vector<8x512xf32> to vector<8x128xf32>
    %cst_283 = arith.constant 5.000000e-01 : f32
    %601 = vector.broadcast %cst_283 : f32 to vector<8x128xf32>
    %602 = arith.mulf %601, %600 : vector<8x128xf32>
    %603 = math.tanh %602 : vector<8x128xf32>
    %cst_284 = arith.constant 1.000000e+00 : f32
    %604 = vector.broadcast %cst_284 : f32 to vector<8x128xf32>
    %605 = arith.addf %603, %604 : vector<8x128xf32>
    %cst_285 = arith.constant 5.000000e-01 : f32
    %606 = vector.broadcast %cst_285 : f32 to vector<8x128xf32>
    %607 = arith.mulf %606, %605 : vector<8x128xf32>
    %608 = arith.mulf %597, %573 : vector<8x128xf32>
    %609 = arith.mulf %589, %599 : vector<8x128xf32>
    %610 = arith.addf %608, %609 : vector<8x128xf32>
    %611 = math.tanh %610 : vector<8x128xf32>
    %612 = arith.mulf %607, %611 : vector<8x128xf32>
    %c56_286 = arith.constant 56 : index
    %c0_287 = arith.constant 0 : index
    %613 = vector.load %arg13[%c56_286, %c0_287] : memref<64x128xf32, #tpu.memory_space<vmem>>, vector<8x128xf32>
    tpu.vector_store %arg13[%c56_286, %c0_287], %612 {strides = array<i32>} : memref<64x128xf32, #tpu.memory_space<vmem>>, vector<8x128xf32>,
    %c0_288 = arith.constant 0 : index
    %c0_289 = arith.constant 0 : index
    %614 = vector.load %arg13[%c0_288, %c0_289] : memref<64x128xf32, #tpu.memory_space<vmem>>, vector<64x128xf32>
    %c0_290 = arith.constant 0 : index
    %c0_291 = arith.constant 0 : index
    %615 = vector.load %arg4[%c0_290, %c0_291] : memref<128x128xf32, #tpu.memory_space<vmem>>, vector<128x128xf32>
    %cst_292 = arith.constant dense<0.000000e+00> : vector<64x128xf32>
    %616 = tpu.matmul %614, %615, %cst_292 {dimension_numbers = #tpu.dot_dimension_numbers<[1], [0], [0], [1], [0, 0, 1, 1], [], []>} : vector<64x128xf32>, vector<128x128xf32>, vector<64x128xf32> -> vector<64x128xf32>
    %c0_293 = arith.constant 0 : index
    %c0_294 = arith.constant 0 : index
    %617 = vector.load %arg5[%c0_293, %c0_294] : memref<1x128xf32, #tpu.memory_space<vmem>>, vector<1x128xf32>
    %618 = vector.broadcast %617 : vector<1x128xf32> to vector<64x128xf32>
    %619 = arith.addf %616, %618 : vector<64x128xf32>
    %620 = vector.extract_strided_slice %619 {offsets = [0, 0], sizes = [8, 128], strides = [1, 1]} : vector<64x128xf32> to vector<8x128xf32>
    %621 = vector.extract_strided_slice %619 {offsets = [8, 0], sizes = [8, 128], strides = [1, 1]} : vector<64x128xf32> to vector<8x128xf32>
    %622 = vector.extract_strided_slice %619 {offsets = [16, 0], sizes = [8, 128], strides = [1, 1]} : vector<64x128xf32> to vector<8x128xf32>
    %623 = vector.extract_strided_slice %619 {offsets = [24, 0], sizes = [8, 128], strides = [1, 1]} : vector<64x128xf32> to vector<8x128xf32>
    %624 = vector.extract_strided_slice %619 {offsets = [32, 0], sizes = [8, 128], strides = [1, 1]} : vector<64x128xf32> to vector<8x128xf32>
    %625 = vector.extract_strided_slice %619 {offsets = [40, 0], sizes = [8, 128], strides = [1, 1]} : vector<64x128xf32> to vector<8x128xf32>
    %626 = vector.extract_strided_slice %619 {offsets = [48, 0], sizes = [8, 128], strides = [1, 1]} : vector<64x128xf32> to vector<8x128xf32>
    %627 = vector.extract_strided_slice %619 {offsets = [56, 0], sizes = [8, 128], strides = [1, 1]} : vector<64x128xf32> to vector<8x128xf32>
    %c0_295 = arith.constant 0 : index
    %c0_296 = arith.constant 0 : index
    %628 = vector.load %arg13[%c0_295, %c0_296] : memref<64x128xf32, #tpu.memory_space<vmem>>, vector<8x128xf32>
    %c8_297 = arith.constant 8 : index
    %c0_298 = arith.constant 0 : index
    %629 = vector.load %arg13[%c8_297, %c0_298] : memref<64x128xf32, #tpu.memory_space<vmem>>, vector<8x128xf32>
    %c16_299 = arith.constant 16 : index
    %c0_300 = arith.constant 0 : index
    %630 = vector.load %arg13[%c16_299, %c0_300] : memref<64x128xf32, #tpu.memory_space<vmem>>, vector<8x128xf32>
    %c24_301 = arith.constant 24 : index
    %c0_302 = arith.constant 0 : index
    %631 = vector.load %arg13[%c24_301, %c0_302] : memref<64x128xf32, #tpu.memory_space<vmem>>, vector<8x128xf32>
    %c32_303 = arith.constant 32 : index
    %c0_304 = arith.constant 0 : index
    %632 = vector.load %arg13[%c32_303, %c0_304] : memref<64x128xf32, #tpu.memory_space<vmem>>, vector<8x128xf32>
    %c40_305 = arith.constant 40 : index
    %c0_306 = arith.constant 0 : index
    %633 = vector.load %arg13[%c40_305, %c0_306] : memref<64x128xf32, #tpu.memory_space<vmem>>, vector<8x128xf32>
    %c48_307 = arith.constant 48 : index
    %c0_308 = arith.constant 0 : index
    %634 = vector.load %arg13[%c48_307, %c0_308] : memref<64x128xf32, #tpu.memory_space<vmem>>, vector<8x128xf32>
    %c56_309 = arith.constant 56 : index
    %c0_310 = arith.constant 0 : index
    %635 = vector.load %arg13[%c56_309, %c0_310] : memref<64x128xf32, #tpu.memory_space<vmem>>, vector<8x128xf32>
    %636 = arith.maximumf %620, %621 : vector<8x128xf32>
    %637 = arith.maximumf %636, %622 : vector<8x128xf32>
    %638 = arith.maximumf %637, %623 : vector<8x128xf32>
    %639 = arith.maximumf %638, %624 : vector<8x128xf32>
    %640 = arith.maximumf %639, %625 : vector<8x128xf32>
    %641 = arith.maximumf %640, %626 : vector<8x128xf32>
    %642 = arith.maximumf %641, %627 : vector<8x128xf32>
    %643 = arith.subf %620, %642 : vector<8x128xf32>
    %644 = math.exp %643 : vector<8x128xf32>
    %645 = arith.subf %621, %642 : vector<8x128xf32>
    %646 = math.exp %645 : vector<8x128xf32>
    %647 = arith.subf %622, %642 : vector<8x128xf32>
    %648 = math.exp %647 : vector<8x128xf32>
    %649 = arith.subf %623, %642 : vector<8x128xf32>
    %650 = math.exp %649 : vector<8x128xf32>
    %651 = arith.subf %624, %642 : vector<8x128xf32>
    %652 = math.exp %651 : vector<8x128xf32>
    %653 = arith.subf %625, %642 : vector<8x128xf32>
    %654 = math.exp %653 : vector<8x128xf32>
    %655 = arith.subf %626, %642 : vector<8x128xf32>
    %656 = math.exp %655 : vector<8x128xf32>
    %657 = arith.subf %627, %642 : vector<8x128xf32>
    %658 = math.exp %657 : vector<8x128xf32>
    %659 = arith.addf %644, %646 : vector<8x128xf32>
    %660 = arith.addf %659, %648 : vector<8x128xf32>
    %661 = arith.addf %660, %650 : vector<8x128xf32>
    %662 = arith.addf %661, %652 : vector<8x128xf32>
    %663 = arith.addf %662, %654 : vector<8x128xf32>
    %664 = arith.addf %663, %656 : vector<8x128xf32>
    %665 = arith.addf %664, %658 : vector<8x128xf32>
    %666 = tpu.reciprocal %665 {approx = true} : vector<8x128xf32> -> vector<8x128xf32>
    %667 = arith.mulf %628, %644 : vector<8x128xf32>
    %668 = arith.mulf %629, %646 : vector<8x128xf32>
    %669 = arith.addf %667, %668 : vector<8x128xf32>
    %670 = arith.mulf %630, %648 : vector<8x128xf32>
    %671 = arith.addf %669, %670 : vector<8x128xf32>
    %672 = arith.mulf %631, %650 : vector<8x128xf32>
    %673 = arith.addf %671, %672 : vector<8x128xf32>
    %674 = arith.mulf %632, %652 : vector<8x128xf32>
    %675 = arith.addf %673, %674 : vector<8x128xf32>
    %676 = arith.mulf %633, %654 : vector<8x128xf32>
    %677 = arith.addf %675, %676 : vector<8x128xf32>
    %678 = arith.mulf %634, %656 : vector<8x128xf32>
    %679 = arith.addf %677, %678 : vector<8x128xf32>
    %680 = arith.mulf %635, %658 : vector<8x128xf32>
    %681 = arith.addf %679, %680 : vector<8x128xf32>
    %682 = arith.mulf %681, %666 : vector<8x128xf32>
    %cst_311 = arith.constant 0.000000e+00 : f32
    %683 = vector.broadcast %cst_311 : f32 to vector<8x128xf32>
    %c0_312 = arith.constant 0 : index
    %c0_313 = arith.constant 0 : index
    %684 = vector.load %arg14[%c0_312, %c0_313] : memref<8x128xf32, #tpu.memory_space<vmem>>, vector<8x128xf32>
    tpu.vector_store %arg14[%c0_312, %c0_313], %683 {strides = array<i32>} : memref<8x128xf32, #tpu.memory_space<vmem>>, vector<8x128xf32>,
    %c0_314 = arith.constant 0 : index
    %c0_315 = arith.constant 0 : index
    %c0_316 = arith.constant 0 : index
    %685 = vector.load %arg6[%c0_314, %c0_315, %c0_316] : memref<2x128x512xf32, #tpu.memory_space<vmem>>, vector<1x128x512xf32>
    %686 = vector.shape_cast %685 : vector<1x128x512xf32> to vector<128x512xf32>
    %cst_317 = arith.constant dense<0.000000e+00> : vector<8x512xf32>
    %687 = tpu.matmul %682, %686, %cst_317 {dimension_numbers = #tpu.dot_dimension_numbers<[1], [0], [0], [1], [0, 0, 1, 1], [], []>} : vector<8x128xf32>, vector<128x512xf32>, vector<8x512xf32> -> vector<8x512xf32>
    %c0_318 = arith.constant 0 : index
    %c0_319 = arith.constant 0 : index
    %c0_320 = arith.constant 0 : index
    %688 = vector.load %arg8[%c0_318, %c0_319, %c0_320] : memref<2x1x512xf32, #tpu.memory_space<vmem>>, vector<1x1x512xf32>
    %689 = vector.shape_cast %688 : vector<1x1x512xf32> to vector<1x512xf32>
    %690 = vector.broadcast %689 : vector<1x512xf32> to vector<8x512xf32>
    %691 = arith.addf %687, %690 : vector<8x512xf32>
    %cst_321 = arith.constant 0.000000e+00 : f32
    %692 = vector.broadcast %cst_321 : f32 to vector<1x128xf32>
    %cst_322 = arith.constant 0.000000e+00 : f32
    %693 = vector.broadcast %cst_322 : f32 to vector<1x128xf32>
    %694 = vector.extract_strided_slice %691 {offsets = [0, 0], sizes = [1, 512], strides = [1, 1]} : vector<8x512xf32> to vector<1x512xf32>
    %c0_323 = arith.constant 0 : index
    %c0_324 = arith.constant 0 : index
    %c0_325 = arith.constant 0 : index
    %695 = vector.load %arg7[%c0_323, %c0_324, %c0_325] : memref<2x128x512xf32, #tpu.memory_space<vmem>>, vector<1x128x512xf32>
    %696 = vector.shape_cast %695 : vector<1x128x512xf32> to vector<128x512xf32>
    %cst_326 = arith.constant dense<0.000000e+00> : vector<1x512xf32>
    %697 = tpu.matmul %692, %696, %cst_326 {dimension_numbers = #tpu.dot_dimension_numbers<[1], [0], [0], [1], [0, 0, 1, 1], [], []>} : vector<1x128xf32>, vector<128x512xf32>, vector<1x512xf32> -> vector<1x512xf32>
    %698 = arith.addf %694, %697 : vector<1x512xf32>
    %699 = vector.extract_strided_slice %698 {offsets = [0, 0], sizes = [1, 128], strides = [1, 1]} : vector<1x512xf32> to vector<1x128xf32>
    %cst_327 = arith.constant 5.000000e-01 : f32
    %700 = vector.broadcast %cst_327 : f32 to vector<1x128xf32>
    %701 = arith.mulf %700, %699 : vector<1x128xf32>
    %702 = math.tanh %701 : vector<1x128xf32>
    %cst_328 = arith.constant 1.000000e+00 : f32
    %703 = vector.broadcast %cst_328 : f32 to vector<1x128xf32>
    %704 = arith.addf %702, %703 : vector<1x128xf32>
    %cst_329 = arith.constant 5.000000e-01 : f32
    %705 = vector.broadcast %cst_329 : f32 to vector<1x128xf32>
    %706 = arith.mulf %705, %704 : vector<1x128xf32>
    %707 = vector.extract_strided_slice %698 {offsets = [0, 128], sizes = [1, 128], strides = [1, 1]} : vector<1x512xf32> to vector<1x128xf32>
    %cst_330 = arith.constant 5.000000e-01 : f32
    %708 = vector.broadcast %cst_330 : f32 to vector<1x128xf32>
    %709 = arith.mulf %708, %707 : vector<1x128xf32>
    %710 = math.tanh %709 : vector<1x128xf32>
    %cst_331 = arith.constant 1.000000e+00 : f32
    %711 = vector.broadcast %cst_331 : f32 to vector<1x128xf32>
    %712 = arith.addf %710, %711 : vector<1x128xf32>
    %cst_332 = arith.constant 5.000000e-01 : f32
    %713 = vector.broadcast %cst_332 : f32 to vector<1x128xf32>
    %714 = arith.mulf %713, %712 : vector<1x128xf32>
    %715 = vector.extract_strided_slice %698 {offsets = [0, 256], sizes = [1, 128], strides = [1, 1]} : vector<1x512xf32> to vector<1x128xf32>
    %716 = math.tanh %715 : vector<1x128xf32>
    %717 = vector.extract_strided_slice %698 {offsets = [0, 384], sizes = [1, 128], strides = [1, 1]} : vector<1x512xf32> to vector<1x128xf32>
    %cst_333 = arith.constant 5.000000e-01 : f32
    %718 = vector.broadcast %cst_333 : f32 to vector<1x128xf32>
    %719 = arith.mulf %718, %717 : vector<1x128xf32>
    %720 = math.tanh %719 : vector<1x128xf32>
    %cst_334 = arith.constant 1.000000e+00 : f32
    %721 = vector.broadcast %cst_334 : f32 to vector<1x128xf32>
    %722 = arith.addf %720, %721 : vector<1x128xf32>
    %cst_335 = arith.constant 5.000000e-01 : f32
    %723 = vector.broadcast %cst_335 : f32 to vector<1x128xf32>
    %724 = arith.mulf %723, %722 : vector<1x128xf32>
    %725 = arith.mulf %714, %693 : vector<1x128xf32>
    %726 = arith.mulf %706, %716 : vector<1x128xf32>
    %727 = arith.addf %725, %726 : vector<1x128xf32>
    %728 = math.tanh %727 : vector<1x128xf32>
    %729 = arith.mulf %724, %728 : vector<1x128xf32>
    %c0_336 = arith.constant 0 : index
    %c0_337 = arith.constant 0 : index
    %730 = vector.load %arg14[%c0_336, %c0_337] : memref<8x128xf32, #tpu.memory_space<vmem>>, vector<1x128xf32>
    tpu.vector_store %arg14[%c0_336, %c0_337], %729 {strides = array<i32>} : memref<8x128xf32, #tpu.memory_space<vmem>>, vector<1x128xf32>,
    %731 = vector.extract_strided_slice %691 {offsets = [1, 0], sizes = [1, 512], strides = [1, 1]} : vector<8x512xf32> to vector<1x512xf32>
    %c0_338 = arith.constant 0 : index
    %c0_339 = arith.constant 0 : index
    %c0_340 = arith.constant 0 : index
    %732 = vector.load %arg7[%c0_338, %c0_339, %c0_340] : memref<2x128x512xf32, #tpu.memory_space<vmem>>, vector<1x128x512xf32>
    %733 = vector.shape_cast %732 : vector<1x128x512xf32> to vector<128x512xf32>
    %cst_341 = arith.constant dense<0.000000e+00> : vector<1x512xf32>
    %734 = tpu.matmul %729, %733, %cst_341 {dimension_numbers = #tpu.dot_dimension_numbers<[1], [0], [0], [1], [0, 0, 1, 1], [], []>} : vector<1x128xf32>, vector<128x512xf32>, vector<1x512xf32> -> vector<1x512xf32>
    %735 = arith.addf %731, %734 : vector<1x512xf32>
    %736 = vector.extract_strided_slice %735 {offsets = [0, 0], sizes = [1, 128], strides = [1, 1]} : vector<1x512xf32> to vector<1x128xf32>
    %cst_342 = arith.constant 5.000000e-01 : f32
    %737 = vector.broadcast %cst_342 : f32 to vector<1x128xf32>
    %738 = arith.mulf %737, %736 : vector<1x128xf32>
    %739 = math.tanh %738 : vector<1x128xf32>
    %cst_343 = arith.constant 1.000000e+00 : f32
    %740 = vector.broadcast %cst_343 : f32 to vector<1x128xf32>
    %741 = arith.addf %739, %740 : vector<1x128xf32>
    %cst_344 = arith.constant 5.000000e-01 : f32
    %742 = vector.broadcast %cst_344 : f32 to vector<1x128xf32>
    %743 = arith.mulf %742, %741 : vector<1x128xf32>
    %744 = vector.extract_strided_slice %735 {offsets = [0, 128], sizes = [1, 128], strides = [1, 1]} : vector<1x512xf32> to vector<1x128xf32>
    %cst_345 = arith.constant 5.000000e-01 : f32
    %745 = vector.broadcast %cst_345 : f32 to vector<1x128xf32>
    %746 = arith.mulf %745, %744 : vector<1x128xf32>
    %747 = math.tanh %746 : vector<1x128xf32>
    %cst_346 = arith.constant 1.000000e+00 : f32
    %748 = vector.broadcast %cst_346 : f32 to vector<1x128xf32>
    %749 = arith.addf %747, %748 : vector<1x128xf32>
    %cst_347 = arith.constant 5.000000e-01 : f32
    %750 = vector.broadcast %cst_347 : f32 to vector<1x128xf32>
    %751 = arith.mulf %750, %749 : vector<1x128xf32>
    %752 = vector.extract_strided_slice %735 {offsets = [0, 256], sizes = [1, 128], strides = [1, 1]} : vector<1x512xf32> to vector<1x128xf32>
    %753 = math.tanh %752 : vector<1x128xf32>
    %754 = vector.extract_strided_slice %735 {offsets = [0, 384], sizes = [1, 128], strides = [1, 1]} : vector<1x512xf32> to vector<1x128xf32>
    %cst_348 = arith.constant 5.000000e-01 : f32
    %755 = vector.broadcast %cst_348 : f32 to vector<1x128xf32>
    %756 = arith.mulf %755, %754 : vector<1x128xf32>
    %757 = math.tanh %756 : vector<1x128xf32>
    %cst_349 = arith.constant 1.000000e+00 : f32
    %758 = vector.broadcast %cst_349 : f32 to vector<1x128xf32>
    %759 = arith.addf %757, %758 : vector<1x128xf32>
    %cst_350 = arith.constant 5.000000e-01 : f32
    %760 = vector.broadcast %cst_350 : f32 to vector<1x128xf32>
    %761 = arith.mulf %760, %759 : vector<1x128xf32>
    %762 = arith.mulf %751, %727 : vector<1x128xf32>
    %763 = arith.mulf %743, %753 : vector<1x128xf32>
    %764 = arith.addf %762, %763 : vector<1x128xf32>
    %765 = math.tanh %764 : vector<1x128xf32>
    %766 = arith.mulf %761, %765 : vector<1x128xf32>
    %c1_351 = arith.constant 1 : index
    %c0_352 = arith.constant 0 : index
    %767 = vector.load %arg14[%c1_351, %c0_352] : memref<8x128xf32, #tpu.memory_space<vmem>>, vector<1x128xf32>
    tpu.vector_store %arg14[%c1_351, %c0_352], %766 {strides = array<i32>} : memref<8x128xf32, #tpu.memory_space<vmem>>, vector<1x128xf32>,
    %c0_353 = arith.constant 0 : index
    %c0_354 = arith.constant 0 : index
    %768 = vector.load %arg14[%c0_353, %c0_354] : memref<8x128xf32, #tpu.memory_space<vmem>>, vector<8x128xf32>
    %c1_355 = arith.constant 1 : index
    %c0_356 = arith.constant 0 : index
    %c0_357 = arith.constant 0 : index
    %769 = vector.load %arg6[%c1_355, %c0_356, %c0_357] : memref<2x128x512xf32, #tpu.memory_space<vmem>>, vector<1x128x512xf32>
    %770 = vector.shape_cast %769 : vector<1x128x512xf32> to vector<128x512xf32>
    %cst_358 = arith.constant dense<0.000000e+00> : vector<8x512xf32>
    %771 = tpu.matmul %768, %770, %cst_358 {dimension_numbers = #tpu.dot_dimension_numbers<[1], [0], [0], [1], [0, 0, 1, 1], [], []>} : vector<8x128xf32>, vector<128x512xf32>, vector<8x512xf32> -> vector<8x512xf32>
    %c1_359 = arith.constant 1 : index
    %c0_360 = arith.constant 0 : index
    %c0_361 = arith.constant 0 : index
    %772 = vector.load %arg8[%c1_359, %c0_360, %c0_361] : memref<2x1x512xf32, #tpu.memory_space<vmem>>, vector<1x1x512xf32>
    %773 = vector.shape_cast %772 : vector<1x1x512xf32> to vector<1x512xf32>
    %774 = vector.broadcast %773 : vector<1x512xf32> to vector<8x512xf32>
    %775 = arith.addf %771, %774 : vector<8x512xf32>
    %cst_362 = arith.constant 0.000000e+00 : f32
    %776 = vector.broadcast %cst_362 : f32 to vector<1x128xf32>
    %cst_363 = arith.constant 0.000000e+00 : f32
    %777 = vector.broadcast %cst_363 : f32 to vector<1x128xf32>
    %778 = vector.extract_strided_slice %775 {offsets = [0, 0], sizes = [1, 512], strides = [1, 1]} : vector<8x512xf32> to vector<1x512xf32>
    %c1_364 = arith.constant 1 : index
    %c0_365 = arith.constant 0 : index
    %c0_366 = arith.constant 0 : index
    %779 = vector.load %arg7[%c1_364, %c0_365, %c0_366] : memref<2x128x512xf32, #tpu.memory_space<vmem>>, vector<1x128x512xf32>
    %780 = vector.shape_cast %779 : vector<1x128x512xf32> to vector<128x512xf32>
    %cst_367 = arith.constant dense<0.000000e+00> : vector<1x512xf32>
    %781 = tpu.matmul %776, %780, %cst_367 {dimension_numbers = #tpu.dot_dimension_numbers<[1], [0], [0], [1], [0, 0, 1, 1], [], []>} : vector<1x128xf32>, vector<128x512xf32>, vector<1x512xf32> -> vector<1x512xf32>
    %782 = arith.addf %778, %781 : vector<1x512xf32>
    %783 = vector.extract_strided_slice %782 {offsets = [0, 0], sizes = [1, 128], strides = [1, 1]} : vector<1x512xf32> to vector<1x128xf32>
    %cst_368 = arith.constant 5.000000e-01 : f32
    %784 = vector.broadcast %cst_368 : f32 to vector<1x128xf32>
    %785 = arith.mulf %784, %783 : vector<1x128xf32>
    %786 = math.tanh %785 : vector<1x128xf32>
    %cst_369 = arith.constant 1.000000e+00 : f32
    %787 = vector.broadcast %cst_369 : f32 to vector<1x128xf32>
    %788 = arith.addf %786, %787 : vector<1x128xf32>
    %cst_370 = arith.constant 5.000000e-01 : f32
    %789 = vector.broadcast %cst_370 : f32 to vector<1x128xf32>
    %790 = arith.mulf %789, %788 : vector<1x128xf32>
    %791 = vector.extract_strided_slice %782 {offsets = [0, 128], sizes = [1, 128], strides = [1, 1]} : vector<1x512xf32> to vector<1x128xf32>
    %cst_371 = arith.constant 5.000000e-01 : f32
    %792 = vector.broadcast %cst_371 : f32 to vector<1x128xf32>
    %793 = arith.mulf %792, %791 : vector<1x128xf32>
    %794 = math.tanh %793 : vector<1x128xf32>
    %cst_372 = arith.constant 1.000000e+00 : f32
    %795 = vector.broadcast %cst_372 : f32 to vector<1x128xf32>
    %796 = arith.addf %794, %795 : vector<1x128xf32>
    %cst_373 = arith.constant 5.000000e-01 : f32
    %797 = vector.broadcast %cst_373 : f32 to vector<1x128xf32>
    %798 = arith.mulf %797, %796 : vector<1x128xf32>
    %799 = vector.extract_strided_slice %782 {offsets = [0, 256], sizes = [1, 128], strides = [1, 1]} : vector<1x512xf32> to vector<1x128xf32>
    %800 = math.tanh %799 : vector<1x128xf32>
    %801 = vector.extract_strided_slice %782 {offsets = [0, 384], sizes = [1, 128], strides = [1, 1]} : vector<1x512xf32> to vector<1x128xf32>
    %cst_374 = arith.constant 5.000000e-01 : f32
    %802 = vector.broadcast %cst_374 : f32 to vector<1x128xf32>
    %803 = arith.mulf %802, %801 : vector<1x128xf32>
    %804 = math.tanh %803 : vector<1x128xf32>
    %cst_375 = arith.constant 1.000000e+00 : f32
    %805 = vector.broadcast %cst_375 : f32 to vector<1x128xf32>
    %806 = arith.addf %804, %805 : vector<1x128xf32>
    %cst_376 = arith.constant 5.000000e-01 : f32
    %807 = vector.broadcast %cst_376 : f32 to vector<1x128xf32>
    %808 = arith.mulf %807, %806 : vector<1x128xf32>
    %809 = arith.mulf %798, %777 : vector<1x128xf32>
    %810 = arith.mulf %790, %800 : vector<1x128xf32>
    %811 = arith.addf %809, %810 : vector<1x128xf32>
    %812 = math.tanh %811 : vector<1x128xf32>
    %813 = arith.mulf %808, %812 : vector<1x128xf32>
    %c0_377 = arith.constant 0 : index
    %c0_378 = arith.constant 0 : index
    %814 = vector.load %arg14[%c0_377, %c0_378] : memref<8x128xf32, #tpu.memory_space<vmem>>, vector<1x128xf32>
    tpu.vector_store %arg14[%c0_377, %c0_378], %813 {strides = array<i32>} : memref<8x128xf32, #tpu.memory_space<vmem>>, vector<1x128xf32>,
    %815 = vector.extract_strided_slice %775 {offsets = [1, 0], sizes = [1, 512], strides = [1, 1]} : vector<8x512xf32> to vector<1x512xf32>
    %c1_379 = arith.constant 1 : index
    %c0_380 = arith.constant 0 : index
    %c0_381 = arith.constant 0 : index
    %816 = vector.load %arg7[%c1_379, %c0_380, %c0_381] : memref<2x128x512xf32, #tpu.memory_space<vmem>>, vector<1x128x512xf32>
    %817 = vector.shape_cast %816 : vector<1x128x512xf32> to vector<128x512xf32>
    %cst_382 = arith.constant dense<0.000000e+00> : vector<1x512xf32>
    %818 = tpu.matmul %813, %817, %cst_382 {dimension_numbers = #tpu.dot_dimension_numbers<[1], [0], [0], [1], [0, 0, 1, 1], [], []>} : vector<1x128xf32>, vector<128x512xf32>, vector<1x512xf32> -> vector<1x512xf32>
    %819 = arith.addf %815, %818 : vector<1x512xf32>
    %820 = vector.extract_strided_slice %819 {offsets = [0, 0], sizes = [1, 128], strides = [1, 1]} : vector<1x512xf32> to vector<1x128xf32>
    %cst_383 = arith.constant 5.000000e-01 : f32
    %821 = vector.broadcast %cst_383 : f32 to vector<1x128xf32>
    %822 = arith.mulf %821, %820 : vector<1x128xf32>
    %823 = math.tanh %822 : vector<1x128xf32>
    %cst_384 = arith.constant 1.000000e+00 : f32
    %824 = vector.broadcast %cst_384 : f32 to vector<1x128xf32>
    %825 = arith.addf %823, %824 : vector<1x128xf32>
    %cst_385 = arith.constant 5.000000e-01 : f32
    %826 = vector.broadcast %cst_385 : f32 to vector<1x128xf32>
    %827 = arith.mulf %826, %825 : vector<1x128xf32>
    %828 = vector.extract_strided_slice %819 {offsets = [0, 128], sizes = [1, 128], strides = [1, 1]} : vector<1x512xf32> to vector<1x128xf32>
    %cst_386 = arith.constant 5.000000e-01 : f32
    %829 = vector.broadcast %cst_386 : f32 to vector<1x128xf32>
    %830 = arith.mulf %829, %828 : vector<1x128xf32>
    %831 = math.tanh %830 : vector<1x128xf32>
    %cst_387 = arith.constant 1.000000e+00 : f32
    %832 = vector.broadcast %cst_387 : f32 to vector<1x128xf32>
    %833 = arith.addf %831, %832 : vector<1x128xf32>
    %cst_388 = arith.constant 5.000000e-01 : f32
    %834 = vector.broadcast %cst_388 : f32 to vector<1x128xf32>
    %835 = arith.mulf %834, %833 : vector<1x128xf32>
    %836 = vector.extract_strided_slice %819 {offsets = [0, 256], sizes = [1, 128], strides = [1, 1]} : vector<1x512xf32> to vector<1x128xf32>
    %837 = math.tanh %836 : vector<1x128xf32>
    %838 = vector.extract_strided_slice %819 {offsets = [0, 384], sizes = [1, 128], strides = [1, 1]} : vector<1x512xf32> to vector<1x128xf32>
    %cst_389 = arith.constant 5.000000e-01 : f32
    %839 = vector.broadcast %cst_389 : f32 to vector<1x128xf32>
    %840 = arith.mulf %839, %838 : vector<1x128xf32>
    %841 = math.tanh %840 : vector<1x128xf32>
    %cst_390 = arith.constant 1.000000e+00 : f32
    %842 = vector.broadcast %cst_390 : f32 to vector<1x128xf32>
    %843 = arith.addf %841, %842 : vector<1x128xf32>
    %cst_391 = arith.constant 5.000000e-01 : f32
    %844 = vector.broadcast %cst_391 : f32 to vector<1x128xf32>
    %845 = arith.mulf %844, %843 : vector<1x128xf32>
    %846 = arith.mulf %835, %811 : vector<1x128xf32>
    %847 = arith.mulf %827, %837 : vector<1x128xf32>
    %848 = arith.addf %846, %847 : vector<1x128xf32>
    %849 = math.tanh %848 : vector<1x128xf32>
    %850 = arith.mulf %845, %849 : vector<1x128xf32>
    %c1_392 = arith.constant 1 : index
    %c0_393 = arith.constant 0 : index
    %851 = vector.load %arg14[%c1_392, %c0_393] : memref<8x128xf32, #tpu.memory_space<vmem>>, vector<1x128xf32>
    tpu.vector_store %arg14[%c1_392, %c0_393], %850 {strides = array<i32>} : memref<8x128xf32, #tpu.memory_space<vmem>>, vector<1x128xf32>,
    %c0_394 = arith.constant 0 : index
    %c0_395 = arith.constant 0 : index
    %852 = vector.load %arg14[%c0_394, %c0_395] : memref<8x128xf32, #tpu.memory_space<vmem>>, vector<8x128xf32>
    %c0_396 = arith.constant 0 : index
    %c0_397 = arith.constant 0 : index
    %853 = vector.load %arg9[%c0_396, %c0_397] : memref<128x128xf32, #tpu.memory_space<vmem>>, vector<128x128xf32>
    %cst_398 = arith.constant dense<0.000000e+00> : vector<8x128xf32>
    %854 = tpu.matmul %852, %853, %cst_398 {dimension_numbers = #tpu.dot_dimension_numbers<[1], [0], [0], [1], [0, 0, 1, 1], [], []>} : vector<8x128xf32>, vector<128x128xf32>, vector<8x128xf32> -> vector<8x128xf32>
    %c0_399 = arith.constant 0 : index
    %c0_400 = arith.constant 0 : index
    %855 = vector.load %arg10[%c0_399, %c0_400] : memref<1x128xf32, #tpu.memory_space<vmem>>, vector<1x128xf32>
    %856 = vector.broadcast %855 : vector<1x128xf32> to vector<8x128xf32>
    %857 = arith.addf %854, %856 : vector<8x128xf32>
    %c0_401 = arith.constant 0 : index
    %c0_402 = arith.constant 0 : index
    %858 = vector.load %arg11[%c0_401, %c0_402] : memref<8x128xf32, #tpu.memory_space<vmem>>, vector<8x128xf32>
    tpu.vector_store %arg11[%c0_401, %c0_402], %857 {strides = array<i32>} : memref<8x128xf32, #tpu.memory_space<vmem>>, vector<8x128xf32>,
    return
  }
}

</mosaic_0001>

<llo_original>
// kernel: attention_lstm_forward.1
$region0: #{attention_lstm_forward.1}
  #allocation0 [shape = 'u32[]', space=smem, size = 0x4, offset = 0x4, fixed_abs, tag = 'smem constant byte address 0x4 - core index']
  #allocation1 [shape = 'u32[144,128]{1,0:T(1,128)}', space=vmem, size = 0x12000, scoped, tag = 'internal scratch']
  #allocation2 [shape = 'f32[64,512]{1,0:T(8,128)}', space=vmem, size = 0x20000, scoped, tag = 'scratch operand']
  #allocation3 [shape = 'f32[64,128]{1,0:T(8,128)}', space=vmem, size = 0x8000, scoped, tag = 'scratch operand']
  #allocation4 [shape = 'f32[8,128]{1,0:T(8,128)}', space=vmem, size = 0x1000, scoped, tag = 'scratch operand']
  %s0 = inlined_call_operand.hbm [shape: f32[64,128], index: 0, kind: input, shape index: {}]
  %s1 = inlined_call_operand.hbm [shape: f32[2,128,512], index: 1, kind: input, shape index: {}]
  %s2 = inlined_call_operand.hbm [shape: f32[2,128,512], index: 2, kind: input, shape index: {}]
  %s3 = inlined_call_operand.hbm [shape: f32[2,1,512], index: 3, kind: input, shape index: {}]
  %s4 = inlined_call_operand.hbm [shape: f32[128,128], index: 4, kind: input, shape index: {}]
  %s5 = inlined_call_operand.vmem [shape: f32[1,128], index: 5, kind: input, shape index: {}]
  %s6 = inlined_call_operand.hbm [shape: f32[2,128,512], index: 6, kind: input, shape index: {}]
  %s7 = inlined_call_operand.hbm [shape: f32[2,128,512], index: 7, kind: input, shape index: {}]
  %s8 = inlined_call_operand.hbm [shape: f32[2,1,512], index: 8, kind: input, shape index: {}]
  %s9 = inlined_call_operand.hbm [shape: f32[128,128], index: 9, kind: input, shape index: {}]
  %s10 = inlined_call_operand.vmem [shape: f32[1,128], index: 10, kind: input, shape index: {}]
  %s11 = inlined_call_operand.vmem [shape: f32[8,128], index: 11, kind: output, shape index: {}]
  %s12 = sld [smem:[#allocation0]]
  $region90: #{attention_lstm_forward.1} parent=0
    _
  %s14 = ssub.s32 1, %s12
  %s15 = scalar_select 0, %s14, %s12
  $region1: #{attention_lstm_forward.1} parent=0
    #allocation5 [shape = 'u8[32768]{0}', space=vmem, size = 0x8000, scoped, tag = 'input window, operand 0, single buffered']
    #allocation6 [shape = 's32[1]{0}', space=sflag, size = 0x4, scoped, tag = 'scoped memory for attention_lstm_forward.1']
    #allocation7 [shape = 'u8[524288]{0}', space=vmem, size = 0x80000, scoped, tag = 'input window, operand 1, single buffered']
    #allocation8 [shape = 's32[1]{0}', space=sflag, size = 0x4, scoped, tag = 'scoped memory for attention_lstm_forward.1']
    #allocation9 [shape = 'u8[524288]{0}', space=vmem, size = 0x80000, scoped, tag = 'input window, operand 2, single buffered']
    #allocation10 [shape = 'u8[4096]{0}', space=vmem, size = 0x1000, scoped, tag = 'input window, operand 3, single buffered']
    #allocation11 [shape = 's32[1]{0}', space=sflag, size = 0x4, scoped, tag = 'scoped memory for attention_lstm_forward.1']
    #allocation12 [shape = 'u8[65536]{0}', space=vmem, size = 0x10000, scoped, tag = 'input window, operand 4, single buffered']
    #allocation13 [shape = 'u8[524288]{0}', space=vmem, size = 0x80000, scoped, tag = 'input window, operand 6, single buffered']
    #allocation14 [shape = 's32[1]{0}', space=sflag, size = 0x4, scoped, tag = 'scoped memory for attention_lstm_forward.1']
    #allocation15 [shape = 'u8[524288]{0}', space=vmem, size = 0x80000, scoped, tag = 'input window, operand 7, single buffered']
    #allocation16 [shape = 'u8[4096]{0}', space=vmem, size = 0x1000, scoped, tag = 'input window, operand 8, single buffered']
    #allocation17 [shape = 's32[1]{0}', space=sflag, size = 0x4, scoped, tag = 'scoped memory for attention_lstm_forward.1']
    #allocation18 [shape = 'u8[65536]{0}', space=vmem, size = 0x10000, scoped, tag = 'input window, operand 9, single buffered']
    %16 = vsyncpa [#allocation6], 0
    %17 = vsyncpa [#allocation8], 0
    %18 = vsyncpa [#allocation11], 0
    %19 = vsyncpa [#allocation14], 0
    %20 = vsyncpa [#allocation17], 0
    // Predicated region
    $region2: #{attention_lstm_forward.1} parent=1 // pred_check
      _
    $region3: #{attention_lstm_forward.1} parent=1 // pred_check_branch
      %22 = sbr.rel (0) target = $region5
    $region4: #{attention_lstm_forward.1} parent=1 // pred_region
      %s24 = ssub.s32 1024, 1024
      %25 = vsyncadd [#allocation6], %s24
      %s26 = sshll.u32 [#allocation5], 4
      %s27 = int_to_ptr.vmem [resolvable:$true] %s26
      %32 = dma.hbm_to_vmem [thread:$0]  %s0, 1024, %s27, [#allocation6], 128, 128, 8
    $region5: #{attention_lstm_forward.1} parent=1 // pred_fallthru
      _
    // Predicated region
    $region6: #{attention_lstm_forward.1} parent=1 // pred_check
      _
    $region7: #{attention_lstm_forward.1} parent=1 // pred_check_branch
      %34 = sbr.rel (0) target = $region9
    $region8: #{attention_lstm_forward.1} parent=1 // pred_region
      %s36 = ssub.s32 16384, 16384
      %37 = vsyncadd [#allocation8], %s36
      %s38 = sshll.u32 [#allocation7], 4
      %s39 = int_to_ptr.vmem [resolvable:$true] %s38
      %44 = dma.hbm_to_vmem [thread:$0]  %s1, 16384, %s39, [#allocation8], 512, 512, 32
    $region9: #{attention_lstm_forward.1} parent=1 // pred_fallthru
      _
    // Predicated region
    $region10: #{attention_lstm_forward.1} parent=1 // pred_check
      _
    $region11: #{attention_lstm_forward.1} parent=1 // pred_check_branch
      %46 = sbr.rel (0) target = $region13
    $region12: #{attention_lstm_forward.1} parent=1 // pred_region
      %s48 = ssub.s32 16384, 16384
      %49 = vsyncadd [#allocation8], %s48
      %s50 = sshll.u32 [#allocation9], 4
      %s51 = int_to_ptr.vmem [resolvable:$true] %s50
      %56 = dma.hbm_to_vmem [thread:$0]  %s2, 16384, %s51, [#allocation8], 512, 512, 32
    $region13: #{attention_lstm_forward.1} parent=1 // pred_fallthru
      _
    // Predicated region
    $region14: #{attention_lstm_forward.1} parent=1 // pred_check
      _
    $region15: #{attention_lstm_forward.1} parent=1 // pred_check_branch
      %58 = sbr.rel (0) target = $region17
    $region16: #{attention_lstm_forward.1} parent=1 // pred_region
      %s60 = ssub.s32 128, 128
      %61 = vsyncadd [#allocation11], %s60
      %s62 = sshll.u32 [#allocation10], 4
      %s63 = int_to_ptr.vmem [resolvable:$true] %s62
      %68 = dma.hbm_to_vmem [thread:$0]  %s3, 128, %s63, [#allocation11], 64, 64, 4
    $region17: #{attention_lstm_forward.1} parent=1 // pred_fallthru
      _
    // Predicated region
    $region18: #{attention_lstm_forward.1} parent=1 // pred_check
      _
    $region19: #{attention_lstm_forward.1} parent=1 // pred_check_branch
      %70 = sbr.rel (0) target = $region21
    $region20: #{attention_lstm_forward.1} parent=1 // pred_region
      %s72 = ssub.s32 2048, 2048
      %73 = vsyncadd [#allocation11], %s72
      %s74 = sshll.u32 [#allocation12], 4
      %s75 = int_to_ptr.vmem [resolvable:$true] %s74
      %80 = dma.hbm_to_vmem [thread:$0]  %s4, 2048, %s75, [#allocation11], 128, 128, 8
    $region21: #{attention_lstm_forward.1} parent=1 // pred_fallthru
      _
    // Predicated region
    $region22: #{attention_lstm_forward.1} parent=1 // pred_check
      _
    $region23: #{attention_lstm_forward.1} parent=1 // pred_check_branch
      %82 = sbr.rel (0) target = $region25
    $region24: #{attention_lstm_forward.1} parent=1 // pred_region
      _
    $region25: #{attention_lstm_forward.1} parent=1 // pred_fallthru
      _
    // Predicated region
    $region26: #{attention_lstm_forward.1} parent=1 // pred_check
      _
    $region27: #{attention_lstm_forward.1} parent=1 // pred_check_branch
      %84 = sbr.rel (0) target = $region29
    $region28: #{attention_lstm_forward.1} parent=1 // pred_region
      %s86 = ssub.s32 16384, 16384
      %87 = vsyncadd [#allocation14], %s86
      %s88 = sshll.u32 [#allocation13], 4
      %s89 = int_to_ptr.vmem [resolvable:$true] %s88
      %94 = dma.hbm_to_vmem [thread:$0]  %s6, 16384, %s89, [#allocation14], 512, 512, 32
    $region29: #{attention_lstm_forward.1} parent=1 // pred_fallthru
      _
    // Predicated region
    $region30: #{attention_lstm_forward.1} parent=1 // pred_check
      _
    $region31: #{attention_lstm_forward.1} parent=1 // pred_check_branch
      %96 = sbr.rel (0) target = $region33
    $region32: #{attention_lstm_forward.1} parent=1 // pred_region
      %s98 = ssub.s32 16384, 16384
      %99 = vsyncadd [#allocation14], %s98
      %s100 = sshll.u32 [#allocation15], 4
      %s101 = int_to_ptr.vmem [resolvable:$true] %s100
      %106 = dma.hbm_to_vmem [thread:$0]  %s7, 16384, %s101, [#allocation14], 512, 512, 32
    $region33: #{attention_lstm_forward.1} parent=1 // pred_fallthru
      _
    // Predicated region
    $region34: #{attention_lstm_forward.1} parent=1 // pred_check
      _
    $region35: #{attention_lstm_forward.1} parent=1 // pred_check_branch
      %108 = sbr.rel (0) target = $region37
    $region36: #{attention_lstm_forward.1} parent=1 // pred_region
      %s110 = ssub.s32 128, 128
      %111 = vsyncadd [#allocation17], %s110
      %s112 = sshll.u32 [#allocation16], 4
      %s113 = int_to_ptr.vmem [resolvable:$true] %s112
      %118 = dma.hbm_to_vmem [thread:$0]  %s8, 128, %s113, [#allocation17], 64, 64, 4
    $region37: #{attention_lstm_forward.1} parent=1 // pred_fallthru
      _
    // Predicated region
    $region38: #{attention_lstm_forward.1} parent=1 // pred_check
      _
    $region39: #{attention_lstm_forward.1} parent=1 // pred_check_branch
      %120 = sbr.rel (0) target = $region41
    $region40: #{attention_lstm_forward.1} parent=1 // pred_region
      %s122 = ssub.s32 2048, 2048
      %123 = vsyncadd [#allocation17], %s122
      %s124 = sshll.u32 [#allocation18], 4
      %s125 = int_to_ptr.vmem [resolvable:$true] %s124
      %130 = dma.hbm_to_vmem [thread:$0]  %s9, 2048, %s125, [#allocation17], 128, 128, 8
    $region41: #{attention_lstm_forward.1} parent=1 // pred_fallthru
      _
    // Predicated region
    $region42: #{attention_lstm_forward.1} parent=1 // pred_check
      _
    $region43: #{attention_lstm_forward.1} parent=1 // pred_check_branch
      %132 = sbr.rel (0) target = $region45
    $region44: #{attention_lstm_forward.1} parent=1 // pred_region
      _
    $region45: #{attention_lstm_forward.1} parent=1 // pred_fallthru
      _
    // Predicated region
    $region46: #{attention_lstm_forward.1} parent=1 // pred_check
      _
    $region47: #{attention_lstm_forward.1} parent=1 // pred_check_branch
      %134 = sbr.rel (0) target = $region49
    $region48: #{attention_lstm_forward.1} parent=1 // pred_region
      %135 = dma.done [#allocation6], 1024
    $region49: #{attention_lstm_forward.1} parent=1 // pred_fallthru
      _
    // Predicated region
    $region50: #{attention_lstm_forward.1} parent=1 // pred_check
      _
    $region51: #{attention_lstm_forward.1} parent=1 // pred_check_branch
      %137 = sbr.rel (0) target = $region53
    $region52: #{attention_lstm_forward.1} parent=1 // pred_region
      %138 = dma.done [#allocation8], 16384
    $region53: #{attention_lstm_forward.1} parent=1 // pred_fallthru
      _
    // Predicated region
    $region54: #{attention_lstm_forward.1} parent=1 // pred_check
      _
    $region55: #{attention_lstm_forward.1} parent=1 // pred_check_branch
      %140 = sbr.rel (0) target = $region57
    $region56: #{attention_lstm_forward.1} parent=1 // pred_region
      %141 = dma.done [#allocation8], 16384
    $region57: #{attention_lstm_forward.1} parent=1 // pred_fallthru
      _
    // Predicated region
    $region58: #{attention_lstm_forward.1} parent=1 // pred_check
      _
    $region59: #{attention_lstm_forward.1} parent=1 // pred_check_branch
      %143 = sbr.rel (0) target = $region61
    $region60: #{attention_lstm_forward.1} parent=1 // pred_region
      %144 = dma.done [#allocation11], 128
    $region61: #{attention_lstm_forward.1} parent=1 // pred_fallthru
      _
    // Predicated region
    $region62: #{attention_lstm_forward.1} parent=1 // pred_check
      _
    $region63: #{attention_lstm_forward.1} parent=1 // pred_check_branch
      %146 = sbr.rel (0) target = $region65
    $region64: #{attention_lstm_forward.1} parent=1 // pred_region
      %147 = dma.done [#allocation11], 2048
    $region65: #{attention_lstm_forward.1} parent=1 // pred_fallthru
      _
    // Predicated region
    $region66: #{attention_lstm_forward.1} parent=1 // pred_check
      _
    $region67: #{attention_lstm_forward.1} parent=1 // pred_check_branch
      %149 = sbr.rel (0) target = $region69
    $region68: #{attention_lstm_forward.1} parent=1 // pred_region
      %150 = dma.done [#allocation14], 16384
    $region69: #{attention_lstm_forward.1} parent=1 // pred_fallthru
      _
    // Predicated region
    $region70: #{attention_lstm_forward.1} parent=1 // pred_check
      _
    $region71: #{attention_lstm_forward.1} parent=1 // pred_check_branch
      %152 = sbr.rel (0) target = $region73
    $region72: #{attention_lstm_forward.1} parent=1 // pred_region
      %153 = dma.done [#allocation14], 16384
    $region73: #{attention_lstm_forward.1} parent=1 // pred_fallthru
      _
    // Predicated region
    $region74: #{attention_lstm_forward.1} parent=1 // pred_check
      _
    $region75: #{attention_lstm_forward.1} parent=1 // pred_check_branch
      %155 = sbr.rel (0) target = $region77
    $region76: #{attention_lstm_forward.1} parent=1 // pred_region
      %156 = dma.done [#allocation17], 128
    $region77: #{attention_lstm_forward.1} parent=1 // pred_fallthru
      _
    // Predicated region
    $region78: #{attention_lstm_forward.1} parent=1 // pred_check
      _
    $region79: #{attention_lstm_forward.1} parent=1 // pred_check_branch
      %158 = sbr.rel (0) target = $region81
    $region80: #{attention_lstm_forward.1} parent=1 // pred_region
      %159 = dma.done [#allocation17], 2048
    $region81: #{attention_lstm_forward.1} parent=1 // pred_fallthru
      _
    %v160 = vld [vmem:[#allocation5] sm:$0xff]
    %v161 = vld [vmem:[#allocation5 + $0x8] sm:$0xff]
    %v162 = vld [vmem:[#allocation5 + $0x10] sm:$0xff]
    %v163 = vld [vmem:[#allocation5 + $0x18] sm:$0xff]
    %v164 = vld [vmem:[#allocation5 + $0x20] sm:$0xff]
    %v165 = vld [vmem:[#allocation5 + $0x28] sm:$0xff]
    %v166 = vld [vmem:[#allocation5 + $0x30] sm:$0xff]
    %v167 = vld [vmem:[#allocation5 + $0x38] sm:$0xff]
    %v168 = vld [vmem:[#allocation7] sm:$0xff]
    %v169 = vld [vmem:[#allocation7 + $0x8] sm:$0xff]
    %v170 = vld [vmem:[#allocation7 + $0x10] sm:$0xff]
    %v171 = vld [vmem:[#allocation7 + $0x18] sm:$0xff]
    %v172 = vld [vmem:[#allocation7 + $0x20] sm:$0xff]
    %v173 = vld [vmem:[#allocation7 + $0x28] sm:$0xff]
    %v174 = vld [vmem:[#allocation7 + $0x30] sm:$0xff]
    %v175 = vld [vmem:[#allocation7 + $0x38] sm:$0xff]
    %v176 = vld [vmem:[#allocation7 + $0x40] sm:$0xff]
    %v177 = vld [vmem:[#allocation7 + $0x48] sm:$0xff]
    %v178 = vld [vmem:[#allocation7 + $0x50] sm:$0xff]
    %v179 = vld [vmem:[#allocation7 + $0x58] sm:$0xff]
    %v180 = vld [vmem:[#allocation7 + $0x60] sm:$0xff]
    %v181 = vld [vmem:[#allocation7 + $0x68] sm:$0xff]
    %v182 = vld [vmem:[#allocation7 + $0x70] sm:$0xff]
    %v183 = vld [vmem:[#allocation7 + $0x78] sm:$0xff]
    %v184 = vld [vmem:[#allocation7 + $0x80] sm:$0xff]
    %v185 = vld [vmem:[#allocation7 + $0x88] sm:$0xff]
    %v186 = vld [vmem:[#allocation7 + $0x90] sm:$0xff]
    %v187 = vld [vmem:[#allocation7 + $0x98] sm:$0xff]
    %v188 = vld [vmem:[#allocation7 + $0xa0] sm:$0xff]
    %v189 = vld [vmem:[#allocation7 + $0xa8] sm:$0xff]
    %v190 = vld [vmem:[#allocation7 + $0xb0] sm:$0xff]
    %v191 = vld [vmem:[#allocation7 + $0xb8] sm:$0xff]
    %v192 = vld [vmem:[#allocation7 + $0xc0] sm:$0xff]
    %v193 = vld [vmem:[#allocation7 + $0xc8] sm:$0xff]
    %v194 = vld [vmem:[#allocation7 + $0xd0] sm:$0xff]
    %v195 = vld [vmem:[#allocation7 + $0xd8] sm:$0xff]
    %v196 = vld [vmem:[#allocation7 + $0xe0] sm:$0xff]
    %v197 = vld [vmem:[#allocation7 + $0xe8] sm:$0xff]
    %v198 = vld [vmem:[#allocation7 + $0xf0] sm:$0xff]
    %v199 = vld [vmem:[#allocation7 + $0xf8] sm:$0xff]
    %v200 = vld [vmem:[#allocation7 + $0x100] sm:$0xff]
    %v201 = vld [vmem:[#allocation7 + $0x108] sm:$0xff]
    %v202 = vld [vmem:[#allocation7 + $0x110] sm:$0xff]
    %v203 = vld [vmem:[#allocation7 + $0x118] sm:$0xff]
    %v204 = vld [vmem:[#allocation7 + $0x120] sm:$0xff]
    %v205 = vld [vmem:[#allocation7 + $0x128] sm:$0xff]
    %v206 = vld [vmem:[#allocation7 + $0x130] sm:$0xff]
    %v207 = vld [vmem:[#allocation7 + $0x138] sm:$0xff]
    %v208 = vld [vmem:[#allocation7 + $0x140] sm:$0xff]
    %v209 = vld [vmem:[#allocation7 + $0x148] sm:$0xff]
    %v210 = vld [vmem:[#allocation7 + $0x150] sm:$0xff]
    %v211 = vld [vmem:[#allocation7 + $0x158] sm:$0xff]
    %v212 = vld [vmem:[#allocation7 + $0x160] sm:$0xff]
    %v213 = vld [vmem:[#allocation7 + $0x168] sm:$0xff]
    %v214 = vld [vmem:[#allocation7 + $0x170] sm:$0xff]
    %v215 = vld [vmem:[#allocation7 + $0x178] sm:$0xff]
    %v216 = vld [vmem:[#allocation7 + $0x180] sm:$0xff]
    %v217 = vld [vmem:[#allocation7 + $0x188] sm:$0xff]
    %v218 = vld [vmem:[#allocation7 + $0x190] sm:$0xff]
    %v219 = vld [vmem:[#allocation7 + $0x198] sm:$0xff]
    %v220 = vld [vmem:[#allocation7 + $0x1a0] sm:$0xff]
    %v221 = vld [vmem:[#allocation7 + $0x1a8] sm:$0xff]
    %v222 = vld [vmem:[#allocation7 + $0x1b0] sm:$0xff]
    %v223 = vld [vmem:[#allocation7 + $0x1b8] sm:$0xff]
    %v224 = vld [vmem:[#allocation7 + $0x1c0] sm:$0xff]
    %v225 = vld [vmem:[#allocation7 + $0x1c8] sm:$0xff]
    %v226 = vld [vmem:[#allocation7 + $0x1d0] sm:$0xff]
    %v227 = vld [vmem:[#allocation7 + $0x1d8] sm:$0xff]
    %v228 = vld [vmem:[#allocation7 + $0x1e0] sm:$0xff]
    %v229 = vld [vmem:[#allocation7 + $0x1e8] sm:$0xff]
    %v230 = vld [vmem:[#allocation7 + $0x1f0] sm:$0xff]
    %v231 = vld [vmem:[#allocation7 + $0x1f8] sm:$0xff]
    %v232 = vld [vmem:[#allocation10] sm:$0xf]
    %v234 = vlaneseq
    %v235 = vshrl.u32 %v234, 7
    %v236 = vsub.s32 0, %v235
    %v237 = vrot.slane %v232, %v236
    %v238 = vlaneseq
    %v239 = vshrl.u32 %v238, 7
    %v240 = vsub.s32 1, %v239
    %v241 = vrot.slane %v232, %v240
    %v242 = vlaneseq
    %v243 = vshrl.u32 %v242, 7
    %v244 = vsub.s32 2, %v243
    %v245 = vrot.slane %v232, %v244
    %v246 = vlaneseq
    %v247 = vshrl.u32 %v246, 7
    %v248 = vsub.s32 3, %v247
    %v249 = vrot.slane %v232, %v248
    %254 = vmatprep.subr.mxu0 %v169
    %255 = vmatpush1.msra.mxu0 %v168
    %256 = vmatprep.subr.mxu0 %v173
    %257 = vmatpush1.msra.mxu0 %v172
    %258 = vmatprep.subr.mxu0 %v177
    %259 = vmatpush1.msra.mxu0 %v176
    %260 = vmatprep.subr.mxu0 %v181
    %261 = vmatpush1.msra.mxu0 %v180
    %262 = vmatprep.subr.mxu0 %v185
    %263 = vmatpush1.msra.mxu0 %v184
    %264 = vmatprep.subr.mxu0 %v189
    %265 = vmatpush1.msra.mxu0 %v188
    %266 = vmatprep.subr.mxu0 %v193
    %267 = vmatpush1.msra.mxu0 %v192
    %268 = vmatprep.subr.mxu0 %v197
    %269 = vmatpush1.msra.mxu0 %v196
    %270 = vmatprep.subr.mxu0 %v201
    %271 = vmatpush1.msra.mxu0 %v200
    %272 = vmatprep.subr.mxu0 %v205
    %273 = vmatpush1.msra.mxu0 %v204
    %274 = vmatprep.subr.mxu0 %v209
    %275 = vmatpush1.msra.mxu0 %v208
    %276 = vmatprep.subr.mxu0 %v213
    %277 = vmatpush1.msra.mxu0 %v212
    %278 = vmatprep.subr.mxu0 %v217
    %279 = vmatpush1.msra.mxu0 %v216
    %280 = vmatprep.subr.mxu0 %v221
    %281 = vmatpush1.msra.mxu0 %v220
    %282 = vmatprep.subr.mxu0 %v225
    %283 = vmatpush1.msra.mxu0 %v224
    %284 = vmatprep.subr.mxu0 %v229
    %285 = vmatpush1.msra.mxu0 %v228
    %286 = vmatprep.subr.mxu0 0.0
    %287 = vmatpush1.msra.mxu0 0.0
    %288 = vmatprep.subr.mxu0 0.0
    %289 = vmatpush1.msra.mxu0 0.0
    %290 = vmatprep.subr.mxu0 0.0
    %291 = vmatpush1.msra.mxu0 0.0
    %292 = vmatprep.subr.mxu0 0.0
    %293 = vmatpush1.msra.mxu0 0.0
    %294 = vmatprep.subr.mxu0 0.0
    %295 = vmatpush1.msra.mxu0 0.0
    %296 = vmatprep.subr.mxu0 0.0
    %297 = vmatpush1.msra.mxu0 0.0
    %298 = vmatprep.subr.mxu0 0.0
    %299 = vmatpush1.msra.mxu0 0.0
    %300 = vmatprep.subr.mxu0 0.0
    %301 = vmatpush1.msra.mxu0 0.0
    %302 = vmatprep.subr.mxu0 0.0
    %303 = vmatpush1.msra.mxu0 0.0
    %304 = vmatprep.subr.mxu0 0.0
    %305 = vmatpush1.msra.mxu0 0.0
    %306 = vmatprep.subr.mxu0 0.0
    %307 = vmatpush1.msra.mxu0 0.0
    %308 = vmatprep.subr.mxu0 0.0
    %309 = vmatpush1.msra.mxu0 0.0
    %310 = vmatprep.subr.mxu0 0.0
    %311 = vmatpush1.msra.mxu0 0.0
    %312 = vmatprep.subr.mxu0 0.0
    %313 = vmatpush1.msra.mxu0 0.0
    %314 = vmatprep.subr.mxu0 0.0
    %315 = vmatpush1.msra.mxu0 0.0
    %316 = vmatprep.subr.mxu0 0.0
    %317 = vmatpush1.msra.mxu0 0.0
    %318 = vmatprep.mubr.f32.mxu0 0.0
    %319 = vmatmul.mubr.f32.gmra.mrb[0].mxu0 %v160
    %v320 = vpop.f32.mrb[0].mxu0
    %v321 = vadd.f32 %v237, %v320
    %v322 = vpop.f32.mrb[0].mxu0
    %v323 = vadd.f32 %v241, %v322
    %324 = vmatprep.mubr.f32.mxu0 0.0
    %325 = vmatmul.mubr.f32.gmra.mrb[0].mxu0 %v161
    %v326 = vpop.f32.mrb[0].mxu0
    %v327 = vadd.f32 %v237, %v326
    %v328 = vpop.f32.mrb[0].mxu0
    %v329 = vadd.f32 %v241, %v328
    %330 = vmatprep.mubr.f32.mxu0 0.0
    %331 = vmatmul.mubr.f32.gmra.mrb[0].mxu0 %v162
    %v332 = vpop.f32.mrb[0].mxu0
    %v333 = vadd.f32 %v237, %v332
    %v334 = vpop.f32.mrb[0].mxu0
    %v335 = vadd.f32 %v241, %v334
    %336 = vmatprep.mubr.f32.mxu0 0.0
    %337 = vmatmul.mubr.f32.gmra.mrb[0].mxu0 %v163
    %v338 = vpop.f32.mrb[0].mxu0
    %v339 = vadd.f32 %v237, %v338
    %v340 = vpop.f32.mrb[0].mxu0
    %v341 = vadd.f32 %v241, %v340
    %342 = vmatprep.mubr.f32.mxu0 0.0
    %343 = vmatmul.mubr.f32.gmra.mrb[0].mxu0 %v164
    %v344 = vpop.f32.mrb[0].mxu0
    %v345 = vadd.f32 %v237, %v344
    %v346 = vpop.f32.mrb[0].mxu0
    %v347 = vadd.f32 %v241, %v346
    %348 = vmatprep.mubr.f32.mxu0 0.0
    %349 = vmatmul.mubr.f32.gmra.mrb[0].mxu0 %v165
    %v350 = vpop.f32.mrb[0].mxu0
    %v351 = vadd.f32 %v237, %v350
    %v352 = vpop.f32.mrb[0].mxu0
    %v353 = vadd.f32 %v241, %v352
    %354 = vmatprep.mubr.f32.mxu0 0.0
    %355 = vmatmul.mubr.f32.gmra.mrb[0].mxu0 %v166
    %v356 = vpop.f32.mrb[0].mxu0
    %v357 = vadd.f32 %v237, %v356
    %v358 = vpop.f32.mrb[0].mxu0
    %v359 = vadd.f32 %v241, %v358
    %360 = vmatprep.mubr.f32.mxu0 0.0
    %361 = vmatmul.mubr.f32.gmra.mrb[0].mxu0 %v167
    %v362 = vpop.f32.mrb[0].mxu0
    %v363 = vadd.f32 %v237, %v362
    %v364 = vpop.f32.mrb[0].mxu0
    %v365 = vadd.f32 %v241, %v364
    %366 = vdwg.mxu0
    %367 = vmatprep.subr.mxu0 %v171
    %368 = vmatpush1.msra.mxu0 %v170
    %369 = vmatprep.subr.mxu0 %v175
    %370 = vmatpush1.msra.mxu0 %v174
    %371 = vmatprep.subr.mxu0 %v179
    %372 = vmatpush1.msra.mxu0 %v178
    %373 = vmatprep.subr.mxu0 %v183
    %374 = vmatpush1.msra.mxu0 %v182
    %375 = vmatprep.subr.mxu0 %v187
    %376 = vmatpush1.msra.mxu0 %v186
    %377 = vmatprep.subr.mxu0 %v191
    %378 = vmatpush1.msra.mxu0 %v190
    %379 = vmatprep.subr.mxu0 %v195
    %380 = vmatpush1.msra.mxu0 %v194
    %381 = vmatprep.subr.mxu0 %v199
    %382 = vmatpush1.msra.mxu0 %v198
    %383 = vmatprep.subr.mxu0 %v203
    %384 = vmatpush1.msra.mxu0 %v202
    %385 = vmatprep.subr.mxu0 %v207
    %386 = vmatpush1.msra.mxu0 %v206
    %387 = vmatprep.subr.mxu0 %v211
    %388 = vmatpush1.msra.mxu0 %v210
    %389 = vmatprep.subr.mxu0 %v215
    %390 = vmatpush1.msra.mxu0 %v214
    %391 = vmatprep.subr.mxu0 %v219
    %392 = vmatpush1.msra.mxu0 %v218
    %393 = vmatprep.subr.mxu0 %v223
    %394 = vmatpush1.msra.mxu0 %v222
    %395 = vmatprep.subr.mxu0 %v227
    %396 = vmatpush1.msra.mxu0 %v226
    %397 = vmatprep.subr.mxu0 %v231
    %398 = vmatpush1.msra.mxu0 %v230
    %399 = vmatprep.subr.mxu0 0.0
    %400 = vmatpush1.msra.mxu0 0.0
    %401 = vmatprep.subr.mxu0 0.0
    %402 = vmatpush1.msra.mxu0 0.0
    %403 = vmatprep.subr.mxu0 0.0
    %404 = vmatpush1.msra.mxu0 0.0
    %405 = vmatprep.subr.mxu0 0.0
    %406 = vmatpush1.msra.mxu0 0.0
    %407 = vmatprep.subr.mxu0 0.0
    %408 = vmatpush1.msra.mxu0 0.0
    %409 = vmatprep.subr.mxu0 0.0
    %410 = vmatpush1.msra.mxu0 0.0
    %411 = vmatprep.subr.mxu0 0.0
    %412 = vmatpush1.msra.mxu0 0.0
    %413 = vmatprep.subr.mxu0 0.0
    %414 = vmatpush1.msra.mxu0 0.0
    %415 = vmatprep.subr.mxu0 0.0
    %416 = vmatpush1.msra.mxu0 0.0
    %417 = vmatprep.subr.mxu0 0.0
    %418 = vmatpush1.msra.mxu0 0.0
    %419 = vmatprep.subr.mxu0 0.0
    %420 = vmatpush1.msra.mxu0 0.0
    %421 = vmatprep.subr.mxu0 0.0
    %422 = vmatpush1.msra.mxu0 0.0
    %423 = vmatprep.subr.mxu0 0.0
    %424 = vmatpush1.msra.mxu0 0.0
    %425 = vmatprep.subr.mxu0 0.0
    %426 = vmatpush1.msra.mxu0 0.0
    %427 = vmatprep.subr.mxu0 0.0
    %428 = vmatpush1.msra.mxu0 0.0
    %429 = vmatprep.subr.mxu0 0.0
    %430 = vmatpush1.msra.mxu0 0.0
    %431 = vmatprep.mubr.f32.mxu0 0.0
    %432 = vmatmul.mubr.f32.gmra.mrb[0].mxu0 %v160
    %v433 = vpop.f32.mrb[0].mxu0
    %v434 = vadd.f32 %v245, %v433
    %v435 = vpop.f32.mrb[0].mxu0
    %v436 = vadd.f32 %v249, %v435
    %437 = vmatprep.mubr.f32.mxu0 0.0
    %438 = vmatmul.mubr.f32.gmra.mrb[0].mxu0 %v161
    %v439 = vpop.f32.mrb[0].mxu0
    %v440 = vadd.f32 %v245, %v439
    %v441 = vpop.f32.mrb[0].mxu0
    %v442 = vadd.f32 %v249, %v441
    %443 = vmatprep.mubr.f32.mxu0 0.0
    %444 = vmatmul.mubr.f32.gmra.mrb[0].mxu0 %v162
    %v445 = vpop.f32.mrb[0].mxu0
    %v446 = vadd.f32 %v245, %v445
    %v447 = vpop.f32.mrb[0].mxu0
    %v448 = vadd.f32 %v249, %v447
    %449 = vmatprep.mubr.f32.mxu0 0.0
    %450 = vmatmul.mubr.f32.gmra.mrb[0].mxu0 %v163
    %v451 = vpop.f32.mrb[0].mxu0
    %v452 = vadd.f32 %v245, %v451
    %v453 = vpop.f32.mrb[0].mxu0
    %v454 = vadd.f32 %v249, %v453
    %455 = vmatprep.mubr.f32.mxu0 0.0
    %456 = vmatmul.mubr.f32.gmra.mrb[0].mxu0 %v164
    %v457 = vpop.f32.mrb[0].mxu0
    %v458 = vadd.f32 %v245, %v457
    %v459 = vpop.f32.mrb[0].mxu0
    %v460 = vadd.f32 %v249, %v459
    %461 = vmatprep.mubr.f32.mxu0 0.0
    %462 = vmatmul.mubr.f32.gmra.mrb[0].mxu0 %v165
    %v463 = vpop.f32.mrb[0].mxu0
    %v464 = vadd.f32 %v245, %v463
    %v465 = vpop.f32.mrb[0].mxu0
    %v466 = vadd.f32 %v249, %v465
    %467 = vmatprep.mubr.f32.mxu0 0.0
    %468 = vmatmul.mubr.f32.gmra.mrb[0].mxu0 %v166
    %v469 = vpop.f32.mrb[0].mxu0
    %v470 = vadd.f32 %v245, %v469
    %v471 = vpop.f32.mrb[0].mxu0
    %v472 = vadd.f32 %v249, %v471
    %473 = vmatprep.mubr.f32.mxu0 0.0
    %474 = vmatmul.mubr.f32.gmra.mrb[0].mxu0 %v167
    %v475 = vpop.f32.mrb[0].mxu0
    %v476 = vadd.f32 %v245, %v475
    %v477 = vpop.f32.mrb[0].mxu0
    %v478 = vadd.f32 %v249, %v477
    %479 = vdwg.mxu0
    %480 = vst [vmem:[#allocation2] sm:$0xff] %v321
    %481 = vst [vmem:[#allocation2 + $0x8] sm:$0xff] %v323
    %482 = vst [vmem:[#allocation2 + $0x10] sm:$0xff] %v434
    %483 = vst [vmem:[#allocation2 + $0x18] sm:$0xff] %v436
    %484 = vst [vmem:[#allocation2 + $0x20] sm:$0xff] %v327
    %485 = vst [vmem:[#allocation2 + $0x28] sm:$0xff] %v329
    %486 = vst [vmem:[#allocation2 + $0x30] sm:$0xff] %v440
    %487 = vst [vmem:[#allocation2 + $0x38] sm:$0xff] %v442
    %488 = vst [vmem:[#allocation2 + $0x40] sm:$0xff] %v333
    %489 = vst [vmem:[#allocation2 + $0x48] sm:$0xff] %v335
    %490 = vst [vmem:[#allocation2 + $0x50] sm:$0xff] %v446
    %491 = vst [vmem:[#allocation2 + $0x58] sm:$0xff] %v448
    %492 = vst [vmem:[#allocation2 + $0x60] sm:$0xff] %v339
    %493 = vst [vmem:[#allocation2 + $0x68] sm:$0xff] %v341
    %494 = vst [vmem:[#allocation2 + $0x70] sm:$0xff] %v452
    %495 = vst [vmem:[#allocation2 + $0x78] sm:$0xff] %v454
    %496 = vst [vmem:[#allocation2 + $0x80] sm:$0xff] %v345
    %497 = vst [vmem:[#allocation2 + $0x88] sm:$0xff] %v347
    %498 = vst [vmem:[#allocation2 + $0x90] sm:$0xff] %v458
    %499 = vst [vmem:[#allocation2 + $0x98] sm:$0xff] %v460
    %500 = vst [vmem:[#allocation2 + $0xa0] sm:$0xff] %v351
    %501 = vst [vmem:[#allocation2 + $0xa8] sm:$0xff] %v353
    %502 = vst [vmem:[#allocation2 + $0xb0] sm:$0xff] %v464
    %503 = vst [vmem:[#allocation2 + $0xb8] sm:$0xff] %v466
    %504 = vst [vmem:[#allocation2 + $0xc0] sm:$0xff] %v357
    %505 = vst [vmem:[#allocation2 + $0xc8] sm:$0xff] %v359
    %506 = vst [vmem:[#allocation2 + $0xd0] sm:$0xff] %v470
    %507 = vst [vmem:[#allocation2 + $0xd8] sm:$0xff] %v472
    %508 = vst [vmem:[#allocation2 + $0xe0] sm:$0xff] %v363
    %509 = vst [vmem:[#allocation2 + $0xe8] sm:$0xff] %v365
    %510 = vst [vmem:[#allocation2 + $0xf0] sm:$0xff] %v476
    %511 = vst [vmem:[#allocation2 + $0xf8] sm:$0xff] %v478
    %v512 = vld [vmem:[#allocation2] sm:$0xff]
    %v513 = vld [vmem:[#allocation2 + $0x8] sm:$0xff]
    %v514 = vld [vmem:[#allocation2 + $0x10] sm:$0xff]
    %v515 = vld [vmem:[#allocation2 + $0x18] sm:$0xff]
    %v516 = vld [vmem:[#allocation9] sm:$0xff]
    %v517 = vld [vmem:[#allocation9 + $0x8] sm:$0xff]
    %v518 = vld [vmem:[#allocation9 + $0x10] sm:$0xff]
    %v519 = vld [vmem:[#allocation9 + $0x18] sm:$0xff]
    %v520 = vld [vmem:[#allocation9 + $0x20] sm:$0xff]
    %v521 = vld [vmem:[#allocation9 + $0x28] sm:$0xff]
    %v522 = vld [vmem:[#allocation9 + $0x30] sm:$0xff]
    %v523 = vld [vmem:[#allocation9 + $0x38] sm:$0xff]
    %v524 = vld [vmem:[#allocation9 + $0x40] sm:$0xff]
    %v525 = vld [vmem:[#allocation9 + $0x48] sm:$0xff]
    %v526 = vld [vmem:[#allocation9 + $0x50] sm:$0xff]
    %v527 = vld [vmem:[#allocation9 + $0x58] sm:$0xff]
    %v528 = vld [vmem:[#allocation9 + $0x60] sm:$0xff]
    %v529 = vld [vmem:[#allocation9 + $0x68] sm:$0xff]
    %v530 = vld [vmem:[#allocation9 + $0x70] sm:$0xff]
    %v531 = vld [vmem:[#allocation9 + $0x78] sm:$0xff]
    %v532 = vld [vmem:[#allocation9 + $0x80] sm:$0xff]
    %v533 = vld [vmem:[#allocation9 + $0x88] sm:$0xff]
    %v534 = vld [vmem:[#allocation9 + $0x90] sm:$0xff]
    %v535 = vld [vmem:[#allocation9 + $0x98] sm:$0xff]
    %v536 = vld [vmem:[#allocation9 + $0xa0] sm:$0xff]
    %v537 = vld [vmem:[#allocation9 + $0xa8] sm:$0xff]
    %v538 = vld [vmem:[#allocation9 + $0xb0] sm:$0xff]
    %v539 = vld [vmem:[#allocation9 + $0xb8] sm:$0xff]
    %v540 = vld [vmem:[#allocation9 + $0xc0] sm:$0xff]
    %v541 = vld [vmem:[#allocation9 + $0xc8] sm:$0xff]
    %v542 = vld [vmem:[#allocation9 + $0xd0] sm:$0xff]
    %v543 = vld [vmem:[#allocation9 + $0xd8] sm:$0xff]
    %v544 = vld [vmem:[#allocation9 + $0xe0] sm:$0xff]
    %v545 = vld [vmem:[#allocation9 + $0xe8] sm:$0xff]
    %v546 = vld [vmem:[#allocation9 + $0xf0] sm:$0xff]
    %v547 = vld [vmem:[#allocation9 + $0xf8] sm:$0xff]
    %v548 = vld [vmem:[#allocation9 + $0x100] sm:$0xff]
    %v549 = vld [vmem:[#allocation9 + $0x108] sm:$0xff]
    %v550 = vld [vmem:[#allocation9 + $0x110] sm:$0xff]
    %v551 = vld [vmem:[#allocation9 + $0x118] sm:$0xff]
    %v552 = vld [vmem:[#allocation9 + $0x120] sm:$0xff]
    %v553 = vld [vmem:[#allocation9 + $0x128] sm:$0xff]
    %v554 = vld [vmem:[#allocation9 + $0x130] sm:$0xff]
    %v555 = vld [vmem:[#allocation9 + $0x138] sm:$0xff]
    %v556 = vld [vmem:[#allocation9 + $0x140] sm:$0xff]
    %v557 = vld [vmem:[#allocation9 + $0x148] sm:$0xff]
    %v558 = vld [vmem:[#allocation9 + $0x150] sm:$0xff]
    %v559 = vld [vmem:[#allocation9 + $0x158] sm:$0xff]
    %v560 = vld [vmem:[#allocation9 + $0x160] sm:$0xff]
    %v561 = vld [vmem:[#allocation9 + $0x168] sm:$0xff]
    %v562 = vld [vmem:[#allocation9 + $0x170] sm:$0xff]
    %v563 = vld [vmem:[#allocation9 + $0x178] sm:$0xff]
    %v564 = vld [vmem:[#allocation9 + $0x180] sm:$0xff]
    %v565 = vld [vmem:[#allocation9 + $0x188] sm:$0xff]
    %v566 = vld [vmem:[#allocation9 + $0x190] sm:$0xff]
    %v567 = vld [vmem:[#allocation9 + $0x198] sm:$0xff]
    %v568 = vld [vmem:[#allocation9 + $0x1a0] sm:$0xff]
    %v569 = vld [vmem:[#allocation9 + $0x1a8] sm:$0xff]
    %v570 = vld [vmem:[#allocation9 + $0x1b0] sm:$0xff]
    %v571 = vld [vmem:[#allocation9 + $0x1b8] sm:$0xff]
    %v572 = vld [vmem:[#allocation9 + $0x1c0] sm:$0xff]
    %v573 = vld [vmem:[#allocation9 + $0x1c8] sm:$0xff]
    %v574 = vld [vmem:[#allocation9 + $0x1d0] sm:$0xff]
    %v575 = vld [vmem:[#allocation9 + $0x1d8] sm:$0xff]
    %v576 = vld [vmem:[#allocation9 + $0x1e0] sm:$0xff]
    %v577 = vld [vmem:[#allocation9 + $0x1e8] sm:$0xff]
    %v578 = vld [vmem:[#allocation9 + $0x1f0] sm:$0xff]
    %v579 = vld [vmem:[#allocation9 + $0x1f8] sm:$0xff]
    %580 = vmatprep.subr.mxu0 %v517
    %581 = vmatpush1.msra.mxu0 %v516
    %582 = vmatprep.subr.mxu0 %v521
    %583 = vmatpush1.msra.mxu0 %v520
    %584 = vmatprep.subr.mxu0 %v525
    %585 = vmatpush1.msra.mxu0 %v524
    %586 = vmatprep.subr.mxu0 %v529
    %587 = vmatpush1.msra.mxu0 %v528
    %588 = vmatprep.subr.mxu0 %v533
    %589 = vmatpush1.msra.mxu0 %v532
    %590 = vmatprep.subr.mxu0 %v537
    %591 = vmatpush1.msra.mxu0 %v536
    %592 = vmatprep.subr.mxu0 %v541
    %593 = vmatpush1.msra.mxu0 %v540
    %594 = vmatprep.subr.mxu0 %v545
    %595 = vmatpush1.msra.mxu0 %v544
    %596 = vmatprep.subr.mxu0 %v549
    %597 = vmatpush1.msra.mxu0 %v548
    %598 = vmatprep.subr.mxu0 %v553
    %599 = vmatpush1.msra.mxu0 %v552
    %600 = vmatprep.subr.mxu0 %v557
    %601 = vmatpush1.msra.mxu0 %v556
    %602 = vmatprep.subr.mxu0 %v561
    %603 = vmatpush1.msra.mxu0 %v560
    %604 = vmatprep.subr.mxu0 %v565
    %605 = vmatpush1.msra.mxu0 %v564
    %606 = vmatprep.subr.mxu0 %v569
    %607 = vmatpush1.msra.mxu0 %v568
    %608 = vmatprep.subr.mxu0 %v573
    %609 = vmatpush1.msra.mxu0 %v572
    %610 = vmatprep.subr.mxu0 %v577
    %611 = vmatpush1.msra.mxu0 %v576
    %612 = vmatprep.subr.mxu0 0.0
    %613 = vmatpush1.msra.mxu0 0.0
    %614 = vmatprep.subr.mxu0 0.0
    %615 = vmatpush1.msra.mxu0 0.0
    %616 = vmatprep.subr.mxu0 0.0
    %617 = vmatpush1.msra.mxu0 0.0
    %618 = vmatprep.subr.mxu0 0.0
    %619 = vmatpush1.msra.mxu0 0.0
    %620 = vmatprep.subr.mxu0 0.0
    %621 = vmatpush1.msra.mxu0 0.0
    %622 = vmatprep.subr.mxu0 0.0
    %623 = vmatpush1.msra.mxu0 0.0
    %624 = vmatprep.subr.mxu0 0.0
    %625 = vmatpush1.msra.mxu0 0.0
    %626 = vmatprep.subr.mxu0 0.0
    %627 = vmatpush1.msra.mxu0 0.0
    %628 = vmatprep.subr.mxu0 0.0
    %629 = vmatpush1.msra.mxu0 0.0
    %630 = vmatprep.subr.mxu0 0.0
    %631 = vmatpush1.msra.mxu0 0.0
    %632 = vmatprep.subr.mxu0 0.0
    %633 = vmatpush1.msra.mxu0 0.0
    %634 = vmatprep.subr.mxu0 0.0
    %635 = vmatpush1.msra.mxu0 0.0
    %636 = vmatprep.subr.mxu0 0.0
    %637 = vmatpush1.msra.mxu0 0.0
    %638 = vmatprep.subr.mxu0 0.0
    %639 = vmatpush1.msra.mxu0 0.0
    %640 = vmatprep.subr.mxu0 0.0
    %641 = vmatpush1.msra.mxu0 0.0
    %642 = vmatprep.subr.mxu0 0.0
    %643 = vmatpush1.msra.mxu0 0.0
    %644 = vmatprep.mubr.f32.mxu0 0.0
    %645 = vmatmul.mubr.f32.gmra.mrb[0].mxu0 0.0
    %v646 = vpop.f32.mrb[0].mxu0
    %v647 = vadd.f32 0.0, %v646
    %v648 = vpop.f32.mrb[0].mxu0
    %v649 = vadd.f32 0.0, %v648
    %650 = vdwg.mxu0
    %651 = vmatprep.subr.mxu0 %v519
    %652 = vmatpush1.msra.mxu0 %v518
    %653 = vmatprep.subr.mxu0 %v523
    %654 = vmatpush1.msra.mxu0 %v522
    %655 = vmatprep.subr.mxu0 %v527
    %656 = vmatpush1.msra.mxu0 %v526
    %657 = vmatprep.subr.mxu0 %v531
    %658 = vmatpush1.msra.mxu0 %v530
    %659 = vmatprep.subr.mxu0 %v535
    %660 = vmatpush1.msra.mxu0 %v534
    %661 = vmatprep.subr.mxu0 %v539
    %662 = vmatpush1.msra.mxu0 %v538
    %663 = vmatprep.subr.mxu0 %v543
    %664 = vmatpush1.msra.mxu0 %v542
    %665 = vmatprep.subr.mxu0 %v547
    %666 = vmatpush1.msra.mxu0 %v546
    %667 = vmatprep.subr.mxu0 %v551
    %668 = vmatpush1.msra.mxu0 %v550
    %669 = vmatprep.subr.mxu0 %v555
    %670 = vmatpush1.msra.mxu0 %v554
    %671 = vmatprep.subr.mxu0 %v559
    %672 = vmatpush1.msra.mxu0 %v558
    %673 = vmatprep.subr.mxu0 %v563
    %674 = vmatpush1.msra.mxu0 %v562
    %675 = vmatprep.subr.mxu0 %v567
    %676 = vmatpush1.msra.mxu0 %v566
    %677 = vmatprep.subr.mxu0 %v571
    %678 = vmatpush1.msra.mxu0 %v570
    %679 = vmatprep.subr.mxu0 %v575
    %680 = vmatpush1.msra.mxu0 %v574
    %681 = vmatprep.subr.mxu0 %v579
    %682 = vmatpush1.msra.mxu0 %v578
    %683 = vmatprep.subr.mxu0 0.0
    %684 = vmatpush1.msra.mxu0 0.0
    %685 = vmatprep.subr.mxu0 0.0
    %686 = vmatpush1.msra.mxu0 0.0
    %687 = vmatprep.subr.mxu0 0.0
    %688 = vmatpush1.msra.mxu0 0.0
    %689 = vmatprep.subr.mxu0 0.0
    %690 = vmatpush1.msra.mxu0 0.0
    %691 = vmatprep.subr.mxu0 0.0
    %692 = vmatpush1.msra.mxu0 0.0
    %693 = vmatprep.subr.mxu0 0.0
    %694 = vmatpush1.msra.mxu0 0.0
    %695 = vmatprep.subr.mxu0 0.0
    %696 = vmatpush1.msra.mxu0 0.0
    %697 = vmatprep.subr.mxu0 0.0
    %698 = vmatpush1.msra.mxu0 0.0
    %699 = vmatprep.subr.mxu0 0.0
    %700 = vmatpush1.msra.mxu0 0.0
    %701 = vmatprep.subr.mxu0 0.0
    %702 = vmatpush1.msra.mxu0 0.0
    %703 = vmatprep.subr.mxu0 0.0
    %704 = vmatpush1.msra.mxu0 0.0
    %705 = vmatprep.subr.mxu0 0.0
    %706 = vmatpush1.msra.mxu0 0.0
    %707 = vmatprep.subr.mxu0 0.0
    %708 = vmatpush1.msra.mxu0 0.0
    %709 = vmatprep.subr.mxu0 0.0
    %710 = vmatpush1.msra.mxu0 0.0
    %711 = vmatprep.subr.mxu0 0.0
    %712 = vmatpush1.msra.mxu0 0.0
    %713 = vmatprep.subr.mxu0 0.0
    %714 = vmatpush1.msra.mxu0 0.0
    %715 = vmatprep.mubr.f32.mxu0 0.0
    %716 = vmatmul.mubr.f32.gmra.mrb[0].mxu0 0.0
    %v717 = vpop.f32.mrb[0].mxu0
    %v718 = vadd.f32 0.0, %v717
    %v719 = vpop.f32.mrb[0].mxu0
    %v720 = vadd.f32 0.0, %v719
    %721 = vdwg.mxu0
    %v722 = vadd.f32 %v512, %v647
    %v723 = vadd.f32 %v513, %v649
    %v724 = vadd.f32 %v514, %v718
    %v725 = vadd.f32 %v515, %v720
    %v726 = vmul.f32 %v722, 0.5
    %v727 = vtanh.pop %v726
    %v728 = vadd.f32 %v727, 1.0
    %v729 = vmul.f32 %v728, 0.5
    %v730 = vmul.f32 %v723, 0.5
    %v731 = vtanh.pop %v730
    %v732 = vadd.f32 %v731, 1.0
    %v733 = vmul.f32 %v732, 0.5
    %v734 = vtanh.pop %v724
    %v735 = vmul.f32 %v725, 0.5
    %v736 = vtanh.pop %v735
    %v737 = vadd.f32 %v736, 1.0
    %v738 = vmul.f32 %v737, 0.5
    %v739 = vmul.f32 %v733, 0.0
    %v740 = vmul.f32 %v729, %v734
    %v741 = vadd.f32 %v739, %v740
    %v742 = vtanh.pop %v741
    %v743 = vmul.f32 %v738, %v742
    %744 = vst [vmem:[#allocation3] sm:$0xff] %v743
    %v745 = vld [vmem:[#allocation2 + $0x20] sm:$0xff]
    %v746 = vld [vmem:[#allocation2 + $0x28] sm:$0xff]
    %v747 = vld [vmem:[#allocation2 + $0x30] sm:$0xff]
    %v748 = vld [vmem:[#allocation2 + $0x38] sm:$0xff]
    %v749 = vld [vmem:[#allocation9] sm:$0xff]
    %v750 = vld [vmem:[#allocation9 + $0x8] sm:$0xff]
    %v751 = vld [vmem:[#allocation9 + $0x10] sm:$0xff]
    %v752 = vld [vmem:[#allocation9 + $0x18] sm:$0xff]
    %v753 = vld [vmem:[#allocation9 + $0x20] sm:$0xff]
    %v754 = vld [vmem:[#allocation9 + $0x28] sm:$0xff]
    %v755 = vld [vmem:[#allocation9 + $0x30] sm:$0xff]
    %v756 = vld [vmem:[#allocation9 + $0x38] sm:$0xff]
    %v757 = vld [vmem:[#allocation9 + $0x40] sm:$0xff]
    %v758 = vld [vmem:[#allocation9 + $0x48] sm:$0xff]
    %v759 = vld [vmem:[#allocation9 + $0x50] sm:$0xff]
    %v760 = vld [vmem:[#allocation9 + $0x58] sm:$0xff]
    %v761 = vld [vmem:[#allocation9 + $0x60] sm:$0xff]
    %v762 = vld [vmem:[#allocation9 + $0x68] sm:$0xff]
    %v763 = vld [vmem:[#allocation9 + $0x70] sm:$0xff]
    %v764 = vld [vmem:[#allocation9 + $0x78] sm:$0xff]
    %v765 = vld [vmem:[#allocation9 + $0x80] sm:$0xff]
    %v766 = vld [vmem:[#allocation9 + $0x88] sm:$0xff]
    %v767 = vld [vmem:[#allocation9 + $0x90] sm:$0xff]
    %v768 = vld [vmem:[#allocation9 + $0x98] sm:$0xff]
    %v769 = vld [vmem:[#allocation9 + $0xa0] sm:$0xff]
    %v770 = vld [vmem:[#allocation9 + $0xa8] sm:$0xff]
    %v771 = vld [vmem:[#allocation9 + $0xb0] sm:$0xff]
    %v772 = vld [vmem:[#allocation9 + $0xb8] sm:$0xff]
    %v773 = vld [vmem:[#allocation9 + $0xc0] sm:$0xff]
    %v774 = vld [vmem:[#allocation9 + $0xc8] sm:$0xff]
    %v775 = vld [vmem:[#allocation9 + $0xd0] sm:$0xff]
    %v776 = vld [vmem:[#allocation9 + $0xd8] sm:$0xff]
    %v777 = vld [vmem:[#allocation9 + $0xe0] sm:$0xff]
    %v778 = vld [vmem:[#allocation9 + $0xe8] sm:$0xff]
    %v779 = vld [vmem:[#allocation9 + $0xf0] sm:$0xff]
    %v780 = vld [vmem:[#allocation9 + $0xf8] sm:$0xff]
    %v781 = vld [vmem:[#allocation9 + $0x100] sm:$0xff]
    %v782 = vld [vmem:[#allocation9 + $0x108] sm:$0xff]
    %v783 = vld [vmem:[#allocation9 + $0x110] sm:$0xff]
    %v784 = vld [vmem:[#allocation9 + $0x118] sm:$0xff]
    %v785 = vld [vmem:[#allocation9 + $0x120] sm:$0xff]
    %v786 = vld [vmem:[#allocation9 + $0x128] sm:$0xff]
    %v787 = vld [vmem:[#allocation9 + $0x130] sm:$0xff]
    %v788 = vld [vmem:[#allocation9 + $0x138] sm:$0xff]
    %v789 = vld [vmem:[#allocation9 + $0x140] sm:$0xff]
    %v790 = vld [vmem:[#allocation9 + $0x148] sm:$0xff]
    %v791 = vld [vmem:[#allocation9 + $0x150] sm:$0xff]
    %v792 = vld [vmem:[#allocation9 + $0x158] sm:$0xff]
    %v793 = vld [vmem:[#allocation9 + $0x160] sm:$0xff]
    %v794 = vld [vmem:[#allocation9 + $0x168] sm:$0xff]
    %v795 = vld [vmem:[#allocation9 + $0x170] sm:$0xff]
    %v796 = vld [vmem:[#allocation9 + $0x178] sm:$0xff]
    %v797 = vld [vmem:[#allocation9 + $0x180] sm:$0xff]
    %v798 = vld [vmem:[#allocation9 + $0x188] sm:$0xff]
    %v799 = vld [vmem:[#allocation9 + $0x190] sm:$0xff]
    %v800 = vld [vmem:[#allocation9 + $0x198] sm:$0xff]
    %v801 = vld [vmem:[#allocation9 + $0x1a0] sm:$0xff]
    %v802 = vld [vmem:[#allocation9 + $0x1a8] sm:$0xff]
    %v803 = vld [vmem:[#allocation9 + $0x1b0] sm:$0xff]
    %v804 = vld [vmem:[#allocation9 + $0x1b8] sm:$0xff]
    %v805 = vld [vmem:[#allocation9 + $0x1c0] sm:$0xff]
    %v806 = vld [vmem:[#allocation9 + $0x1c8] sm:$0xff]
    %v807 = vld [vmem:[#allocation9 + $0x1d0] sm:$0xff]
    %v808 = vld [vmem:[#allocation9 + $0x1d8] sm:$0xff]
    %v809 = vld [vmem:[#allocation9 + $0x1e0] sm:$0xff]
    %v810 = vld [vmem:[#allocation9 + $0x1e8] sm:$0xff]
    %v811 = vld [vmem:[#allocation9 + $0x1f0] sm:$0xff]
    %v812 = vld [vmem:[#allocation9 + $0x1f8] sm:$0xff]
    %813 = vmatprep.subr.mxu0 %v750
    %814 = vmatpush1.msra.mxu0 %v749
    %815 = vmatprep.subr.mxu0 %v754
    %816 = vmatpush1.msra.mxu0 %v753
    %817 = vmatprep.subr.mxu0 %v758
    %818 = vmatpush1.msra.mxu0 %v757
    %819 = vmatprep.subr.mxu0 %v762
    %820 = vmatpush1.msra.mxu0 %v761
    %821 = vmatprep.subr.mxu0 %v766
    %822 = vmatpush1.msra.mxu0 %v765
    %823 = vmatprep.subr.mxu0 %v770
    %824 = vmatpush1.msra.mxu0 %v769
    %825 = vmatprep.subr.mxu0 %v774
    %826 = vmatpush1.msra.mxu0 %v773
    %827 = vmatprep.subr.mxu0 %v778
    %828 = vmatpush1.msra.mxu0 %v777
    %829 = vmatprep.subr.mxu0 %v782
    %830 = vmatpush1.msra.mxu0 %v781
    %831 = vmatprep.subr.mxu0 %v786
    %832 = vmatpush1.msra.mxu0 %v785
    %833 = vmatprep.subr.mxu0 %v790
    %834 = vmatpush1.msra.mxu0 %v789
    %835 = vmatprep.subr.mxu0 %v794
    %836 = vmatpush1.msra.mxu0 %v793
    %837 = vmatprep.subr.mxu0 %v798
    %838 = vmatpush1.msra.mxu0 %v797
    %839 = vmatprep.subr.mxu0 %v802
    %840 = vmatpush1.msra.mxu0 %v801
    %841 = vmatprep.subr.mxu0 %v806
    %842 = vmatpush1.msra.mxu0 %v805
    %843 = vmatprep.subr.mxu0 %v810
    %844 = vmatpush1.msra.mxu0 %v809
    %845 = vmatprep.subr.mxu0 0.0
    %846 = vmatpush1.msra.mxu0 0.0
    %847 = vmatprep.subr.mxu0 0.0
    %848 = vmatpush1.msra.mxu0 0.0
    %849 = vmatprep.subr.mxu0 0.0
    %850 = vmatpush1.msra.mxu0 0.0
    %851 = vmatprep.subr.mxu0 0.0
    %852 = vmatpush1.msra.mxu0 0.0
    %853 = vmatprep.subr.mxu0 0.0
    %854 = vmatpush1.msra.mxu0 0.0
    %855 = vmatprep.subr.mxu0 0.0
    %856 = vmatpush1.msra.mxu0 0.0
    %857 = vmatprep.subr.mxu0 0.0
    %858 = vmatpush1.msra.mxu0 0.0
    %859 = vmatprep.subr.mxu0 0.0
    %860 = vmatpush1.msra.mxu0 0.0
    %861 = vmatprep.subr.mxu0 0.0
    %862 = vmatpush1.msra.mxu0 0.0
    %863 = vmatprep.subr.mxu0 0.0
    %864 = vmatpush1.msra.mxu0 0.0
    %865 = vmatprep.subr.mxu0 0.0
    %866 = vmatpush1.msra.mxu0 0.0
    %867 = vmatprep.subr.mxu0 0.0
    %868 = vmatpush1.msra.mxu0 0.0
    %869 = vmatprep.subr.mxu0 0.0
    %870 = vmatpush1.msra.mxu0 0.0
    %871 = vmatprep.subr.mxu0 0.0
    %872 = vmatpush1.msra.mxu0 0.0
    %873 = vmatprep.subr.mxu0 0.0
    %874 = vmatpush1.msra.mxu0 0.0
    %875 = vmatprep.subr.mxu0 0.0
    %876 = vmatpush1.msra.mxu0 0.0
    %877 = vmatprep.mubr.f32.mxu0 0.0
    %878 = vmatmul.mubr.f32.gmra.mrb[0].mxu0 %v743
    %v879 = vpop.f32.mrb[0].mxu0
    %v880 = vadd.f32 0.0, %v879
    %v881 = vpop.f32.mrb[0].mxu0
    %v882 = vadd.f32 0.0, %v881
    %883 = vdwg.mxu0
    %884 = vmatprep.subr.mxu0 %v752
    %885 = vmatpush1.msra.mxu0 %v751
    %886 = vmatprep.subr.mxu0 %v756
    %887 = vmatpush1.msra.mxu0 %v755
    %888 = vmatprep.subr.mxu0 %v760
    %889 = vmatpush1.msra.mxu0 %v759
    %890 = vmatprep.subr.mxu0 %v764
    %891 = vmatpush1.msra.mxu0 %v763
    %892 = vmatprep.subr.mxu0 %v768
    %893 = vmatpush1.msra.mxu0 %v767
    %894 = vmatprep.subr.mxu0 %v772
    %895 = vmatpush1.msra.mxu0 %v771
    %896 = vmatprep.subr.mxu0 %v776
    %897 = vmatpush1.msra.mxu0 %v775
    %898 = vmatprep.subr.mxu0 %v780
    %899 = vmatpush1.msra.mxu0 %v779
    %900 = vmatprep.subr.mxu0 %v784
    %901 = vmatpush1.msra.mxu0 %v783
    %902 = vmatprep.subr.mxu0 %v788
    %903 = vmatpush1.msra.mxu0 %v787
    %904 = vmatprep.subr.mxu0 %v792
    %905 = vmatpush1.msra.mxu0 %v791
    %906 = vmatprep.subr.mxu0 %v796
    %907 = vmatpush1.msra.mxu0 %v795
    %908 = vmatprep.subr.mxu0 %v800
    %909 = vmatpush1.msra.mxu0 %v799
    %910 = vmatprep.subr.mxu0 %v804
    %911 = vmatpush1.msra.mxu0 %v803
    %912 = vmatprep.subr.mxu0 %v808
    %913 = vmatpush1.msra.mxu0 %v807
    %914 = vmatprep.subr.mxu0 %v812
    %915 = vmatpush1.msra.mxu0 %v811
    %916 = vmatprep.subr.mxu0 0.0
    %917 = vmatpush1.msra.mxu0 0.0
    %918 = vmatprep.subr.mxu0 0.0
    %919 = vmatpush1.msra.mxu0 0.0
    %920 = vmatprep.subr.mxu0 0.0
    %921 = vmatpush1.msra.mxu0 0.0
    %922 = vmatprep.subr.mxu0 0.0
    %923 = vmatpush1.msra.mxu0 0.0
    %924 = vmatprep.subr.mxu0 0.0
    %925 = vmatpush1.msra.mxu0 0.0
    %926 = vmatprep.subr.mxu0 0.0
    %927 = vmatpush1.msra.mxu0 0.0
    %928 = vmatprep.subr.mxu0 0.0
    %929 = vmatpush1.msra.mxu0 0.0
    %930 = vmatprep.subr.mxu0 0.0
    %931 = vmatpush1.msra.mxu0 0.0
    %932 = vmatprep.subr.mxu0 0.0
    %933 = vmatpush1.msra.mxu0 0.0
    %934 = vmatprep.subr.mxu0 0.0
    %935 = vmatpush1.msra.mxu0 0.0
    %936 = vmatprep.subr.mxu0 0.0
    %937 = vmatpush1.msra.mxu0 0.0
    %938 = vmatprep.subr.mxu0 0.0
    %939 = vmatpush1.msra.mxu0 0.0
    %940 = vmatprep.subr.mxu0 0.0
    %941 = vmatpush1.msra.mxu0 0.0
    %942 = vmatprep.subr.mxu0 0.0
    %943 = vmatpush1.msra.mxu0 0.0
    %944 = vmatprep.subr.mxu0 0.0
    %945 = vmatpush1.msra.mxu0 0.0
    %946 = vmatprep.subr.mxu0 0.0
    %947 = vmatpush1.msra.mxu0 0.0
    %948 = vmatprep.mubr.f32.mxu0 0.0
    %949 = vmatmul.mubr.f32.gmra.mrb[0].mxu0 %v743
    %v950 = vpop.f32.mrb[0].mxu0
    %v951 = vadd.f32 0.0, %v950
    %v952 = vpop.f32.mrb[0].mxu0
    %v953 = vadd.f32 0.0, %v952
    %954 = vdwg.mxu0
    %v955 = vadd.f32 %v745, %v880
    %v956 = vadd.f32 %v746, %v882
    %v957 = vadd.f32 %v747, %v951
    %v958 = vadd.f32 %v748, %v953
    %v959 = vmul.f32 %v955, 0.5
    %v960 = vtanh.pop %v959
    %v961 = vadd.f32 %v960, 1.0
    %v962 = vmul.f32 %v961, 0.5
    %v963 = vmul.f32 %v956, 0.5
    %v964 = vtanh.pop %v963
    %v965 = vadd.f32 %v964, 1.0
    %v966 = vmul.f32 %v965, 0.5
    %v967 = vtanh.pop %v957
    %v968 = vmul.f32 %v958, 0.5
    %v969 = vtanh.pop %v968
    %v970 = vadd.f32 %v969, 1.0
    %v971 = vmul.f32 %v970, 0.5
    %v972 = vmul.f32 %v966, %v741
    %v973 = vmul.f32 %v962, %v967
    %v974 = vadd.f32 %v972, %v973
    %v975 = vtanh.pop %v974
    %v976 = vmul.f32 %v971, %v975
    %977 = vst [vmem:[#allocation3 + $0x8] sm:$0xff] %v976
    %v978 = vld [vmem:[#allocation2 + $0x40] sm:$0xff]
    %v979 = vld [vmem:[#allocation2 + $0x48] sm:$0xff]
    %v980 = vld [vmem:[#allocation2 + $0x50] sm:$0xff]
    %v981 = vld [vmem:[#allocation2 + $0x58] sm:$0xff]
    %v982 = vld [vmem:[#allocation9] sm:$0xff]
    %v983 = vld [vmem:[#allocation9 + $0x8] sm:$0xff]
    %v984 = vld [vmem:[#allocation9 + $0x10] sm:$0xff]
    %v985 = vld [vmem:[#allocation9 + $0x18] sm:$0xff]
    %v986 = vld [vmem:[#allocation9 + $0x20] sm:$0xff]
    %v987 = vld [vmem:[#allocation9 + $0x28] sm:$0xff]
    %v988 = vld [vmem:[#allocation9 + $0x30] sm:$0xff]
    %v989 = vld [vmem:[#allocation9 + $0x38] sm:$0xff]
    %v990 = vld [vmem:[#allocation9 + $0x40] sm:$0xff]
    %v991 = vld [vmem:[#allocation9 + $0x48] sm:$0xff]
    %v992 = vld [vmem:[#allocation9 + $0x50] sm:$0xff]
    %v993 = vld [vmem:[#allocation9 + $0x58] sm:$0xff]
    %v994 = vld [vmem:[#allocation9 + $0x60] sm:$0xff]
    %v995 = vld [vmem:[#allocation9 + $0x68] sm:$0xff]
    %v996 = vld [vmem:[#allocation9 + $0x70] sm:$0xff]
    %v997 = vld [vmem:[#allocation9 + $0x78] sm:$0xff]
    %v998 = vld [vmem:[#allocation9 + $0x80] sm:$0xff]
    %v999 = vld [vmem:[#allocation9 + $0x88] sm:$0xff]
    %v1000 = vld [vmem:[#allocation9 + $0x90] sm:$0xff]
    %v1001 = vld [vmem:[#allocation9 + $0x98] sm:$0xff]
    %v1002 = vld [vmem:[#allocation9 + $0xa0] sm:$0xff]
    %v1003 = vld [vmem:[#allocation9 + $0xa8] sm:$0xff]
    %v1004 = vld [vmem:[#allocation9 + $0xb0] sm:$0xff]
    %v1005 = vld [vmem:[#allocation9 + $0xb8] sm:$0xff]
    %v1006 = vld [vmem:[#allocation9 + $0xc0] sm:$0xff]
    %v1007 = vld [vmem:[#allocation9 + $0xc8] sm:$0xff]
    %v1008 = vld [vmem:[#allocation9 + $0xd0] sm:$0xff]
    %v1009 = vld [vmem:[#allocation9 + $0xd8] sm:$0xff]
    %v1010 = vld [vmem:[#allocation9 + $0xe0] sm:$0xff]
    %v1011 = vld [vmem:[#allocation9 + $0xe8] sm:$0xff]
    %v1012 = vld [vmem:[#allocation9 + $0xf0] sm:$0xff]
    %v1013 = vld [vmem:[#allocation9 + $0xf8] sm:$0xff]
    %v1014 = vld [vmem:[#allocation9 + $0x100] sm:$0xff]
    %v1015 = vld [vmem:[#allocation9 + $0x108] sm:$0xff]
    %v1016 = vld [vmem:[#allocation9 + $0x110] sm:$0xff]
    %v1017 = vld [vmem:[#allocation9 + $0x118] sm:$0xff]
    %v1018 = vld [vmem:[#allocation9 + $0x120] sm:$0xff]
    %v1019 = vld [vmem:[#allocation9 + $0x128] sm:$0xff]
    %v1020 = vld [vmem:[#allocation9 + $0x130] sm:$0xff]
    %v1021 = vld [vmem:[#allocation9 + $0x138] sm:$0xff]
    %v1022 = vld [vmem:[#allocation9 + $0x140] sm:$0xff]
    %v1023 = vld [vmem:[#allocation9 + $0x148] sm:$0xff]
    %v1024 = vld [vmem:[#allocation9 + $0x150] sm:$0xff]
    %v1025 = vld [vmem:[#allocation9 + $0x158] sm:$0xff]
    %v1026 = vld [vmem:[#allocation9 + $0x160] sm:$0xff]
    %v1027 = vld [vmem:[#allocation9 + $0x168] sm:$0xff]
    %v1028 = vld [vmem:[#allocation9 + $0x170] sm:$0xff]
    %v1029 = vld [vmem:[#allocation9 + $0x178] sm:$0xff]
    %v1030 = vld [vmem:[#allocation9 + $0x180] sm:$0xff]
    %v1031 = vld [vmem:[#allocation9 + $0x188] sm:$0xff]
    %v1032 = vld [vmem:[#allocation9 + $0x190] sm:$0xff]
    %v1033 = vld [vmem:[#allocation9 + $0x198] sm:$0xff]
    %v1034 = vld [vmem:[#allocation9 + $0x1a0] sm:$0xff]
    %v1035 = vld [vmem:[#allocation9 + $0x1a8] sm:$0xff]
    %v1036 = vld [vmem:[#allocation9 + $0x1b0] sm:$0xff]
    %v1037 = vld [vmem:[#allocation9 + $0x1b8] sm:$0xff]
    %v1038 = vld [vmem:[#allocation9 + $0x1c0] sm:$0xff]
    %v1039 = vld [vmem:[#allocation9 + $0x1c8] sm:$0xff]
    %v1040 = vld [vmem:[#allocation9 + $0x1d0] sm:$0xff]
    %v1041 = vld [vmem:[#allocation9 + $0x1d8] sm:$0xff]
    %v1042 = vld [vmem:[#allocation9 + $0x1e0] sm:$0xff]
    %v1043 = vld [vmem:[#allocation9 + $0x1e8] sm:$0xff]
    %v1044 = vld [vmem:[#allocation9 + $0x1f0] sm:$0xff]
    %v1045 = vld [vmem:[#allocation9 + $0x1f8] sm:$0xff]
    %1046 = vmatprep.subr.mxu0 %v983
    %1047 = vmatpush1.msra.mxu0 %v982
    %1048 = vmatprep.subr.mxu0 %v987
    %1049 = vmatpush1.msra.mxu0 %v986
    %1050 = vmatprep.subr.mxu0 %v991
    %1051 = vmatpush1.msra.mxu0 %v990
    %1052 = vmatprep.subr.mxu0 %v995
    %1053 = vmatpush1.msra.mxu0 %v994
    %1054 = vmatprep.subr.mxu0 %v999
    %1055 = vmatpush1.msra.mxu0 %v998
    %1056 = vmatprep.subr.mxu0 %v1003
    %1057 = vmatpush1.msra.mxu0 %v1002
    %1058 = vmatprep.subr.mxu0 %v1007
    %1059 = vmatpush1.msra.mxu0 %v1006
    %1060 = vmatprep.subr.mxu0 %v1011
    %1061 = vmatpush1.msra.mxu0 %v1010
    %1062 = vmatprep.subr.mxu0 %v1015
    %1063 = vmatpush1.msra.mxu0 %v1014
    %1064 = vmatprep.subr.mxu0 %v1019
    %1065 = vmatpush1.msra.mxu0 %v1018
    %1066 = vmatprep.subr.mxu0 %v1023
    %1067 = vmatpush1.msra.mxu0 %v1022
    %1068 = vmatprep.subr.mxu0 %v1027
    %1069 = vmatpush1.msra.mxu0 %v1026
    %1070 = vmatprep.subr.mxu0 %v1031
    %1071 = vmatpush1.msra.mxu0 %v1030
    %1072 = vmatprep.subr.mxu0 %v1035
    %1073 = vmatpush1.msra.mxu0 %v1034
    %1074 = vmatprep.subr.mxu0 %v1039
    %1075 = vmatpush1.msra.mxu0 %v1038
    %1076 = vmatprep.subr.mxu0 %v1043
    %1077 = vmatpush1.msra.mxu0 %v1042
    %1078 = vmatprep.subr.mxu0 0.0
    %1079 = vmatpush1.msra.mxu0 0.0
    %1080 = vmatprep.subr.mxu0 0.0
    %1081 = vmatpush1.msra.mxu0 0.0
    %1082 = vmatprep.subr.mxu0 0.0
    %1083 = vmatpush1.msra.mxu0 0.0
    %1084 = vmatprep.subr.mxu0 0.0
    %1085 = vmatpush1.msra.mxu0 0.0
    %1086 = vmatprep.subr.mxu0 0.0
    %1087 = vmatpush1.msra.mxu0 0.0
    %1088 = vmatprep.subr.mxu0 0.0
    %1089 = vmatpush1.msra.mxu0 0.0
    %1090 = vmatprep.subr.mxu0 0.0
    %1091 = vmatpush1.msra.mxu0 0.0
    %1092 = vmatprep.subr.mxu0 0.0
    %1093 = vmatpush1.msra.mxu0 0.0
    %1094 = vmatprep.subr.mxu0 0.0
    %1095 = vmatpush1.msra.mxu0 0.0
    %1096 = vmatprep.subr.mxu0 0.0
    %1097 = vmatpush1.msra.mxu0 0.0
    %1098 = vmatprep.subr.mxu0 0.0
    %1099 = vmatpush1.msra.mxu0 0.0
    %1100 = vmatprep.subr.mxu0 0.0
    %1101 = vmatpush1.msra.mxu0 0.0
    %1102 = vmatprep.subr.mxu0 0.0
    %1103 = vmatpush1.msra.mxu0 0.0
    %1104 = vmatprep.subr.mxu0 0.0
    %1105 = vmatpush1.msra.mxu0 0.0
    %1106 = vmatprep.subr.mxu0 0.0
    %1107 = vmatpush1.msra.mxu0 0.0
    %1108 = vmatprep.subr.mxu0 0.0
    %1109 = vmatpush1.msra.mxu0 0.0
    %1110 = vmatprep.mubr.f32.mxu0 0.0
    %1111 = vmatmul.mubr.f32.gmra.mrb[0].mxu0 %v976
    %v1112 = vpop.f32.mrb[0].mxu0
    %v1113 = vadd.f32 0.0, %v1112
    %v1114 = vpop.f32.mrb[0].mxu0
    %v1115 = vadd.f32 0.0, %v1114
    %1116 = vdwg.mxu0
    %1117 = vmatprep.subr.mxu0 %v985
    %1118 = vmatpush1.msra.mxu0 %v984
    %1119 = vmatprep.subr.mxu0 %v989
    %1120 = vmatpush1.msra.mxu0 %v988
    %1121 = vmatprep.subr.mxu0 %v993
    %1122 = vmatpush1.msra.mxu0 %v992
    %1123 = vmatprep.subr.mxu0 %v997
    %1124 = vmatpush1.msra.mxu0 %v996
    %1125 = vmatprep.subr.mxu0 %v1001
    %1126 = vmatpush1.msra.mxu0 %v1000
    %1127 = vmatprep.subr.mxu0 %v1005
    %1128 = vmatpush1.msra.mxu0 %v1004
    %1129 = vmatprep.subr.mxu0 %v1009
    %1130 = vmatpush1.msra.mxu0 %v1008
    %1131 = vmatprep.subr.mxu0 %v1013
    %1132 = vmatpush1.msra.mxu0 %v1012
    %1133 = vmatprep.subr.mxu0 %v1017
    %1134 = vmatpush1.msra.mxu0 %v1016
    %1135 = vmatprep.subr.mxu0 %v1021
    %1136 = vmatpush1.msra.mxu0 %v1020
    %1137 = vmatprep.subr.mxu0 %v1025
    %1138 = vmatpush1.msra.mxu0 %v1024
    %1139 = vmatprep.subr.mxu0 %v1029
    %1140 = vmatpush1.msra.mxu0 %v1028
    %1141 = vmatprep.subr.mxu0 %v1033
    %1142 = vmatpush1.msra.mxu0 %v1032
    %1143 = vmatprep.subr.mxu0 %v1037
    %1144 = vmatpush1.msra.mxu0 %v1036
    %1145 = vmatprep.subr.mxu0 %v1041
    %1146 = vmatpush1.msra.mxu0 %v1040
    %1147 = vmatprep.subr.mxu0 %v1045
    %1148 = vmatpush1.msra.mxu0 %v1044
    %1149 = vmatprep.subr.mxu0 0.0
    %1150 = vmatpush1.msra.mxu0 0.0
    %1151 = vmatprep.subr.mxu0 0.0
    %1152 = vmatpush1.msra.mxu0 0.0
    %1153 = vmatprep.subr.mxu0 0.0
    %1154 = vmatpush1.msra.mxu0 0.0
    %1155 = vmatprep.subr.mxu0 0.0
    %1156 = vmatpush1.msra.mxu0 0.0
    %1157 = vmatprep.subr.mxu0 0.0
    %1158 = vmatpush1.msra.mxu0 0.0
    %1159 = vmatprep.subr.mxu0 0.0
    %1160 = vmatpush1.msra.mxu0 0.0
    %1161 = vmatprep.subr.mxu0 0.0
    %1162 = vmatpush1.msra.mxu0 0.0
    %1163 = vmatprep.subr.mxu0 0.0
    %1164 = vmatpush1.msra.mxu0 0.0
    %1165 = vmatprep.subr.mxu0 0.0
    %1166 = vmatpush1.msra.mxu0 0.0
    %1167 = vmatprep.subr.mxu0 0.0
    %1168 = vmatpush1.msra.mxu0 0.0
    %1169 = vmatprep.subr.mxu0 0.0
    %1170 = vmatpush1.msra.mxu0 0.0
    %1171 = vmatprep.subr.mxu0 0.0
    %1172 = vmatpush1.msra.mxu0 0.0
    %1173 = vmatprep.subr.mxu0 0.0
    %1174 = vmatpush1.msra.mxu0 0.0
    %1175 = vmatprep.subr.mxu0 0.0
    %1176 = vmatpush1.msra.mxu0 0.0
    %1177 = vmatprep.subr.mxu0 0.0
    %1178 = vmatpush1.msra.mxu0 0.0
    %1179 = vmatprep.subr.mxu0 0.0
    %1180 = vmatpush1.msra.mxu0 0.0
    %1181 = vmatprep.mubr.f32.mxu0 0.0
    %1182 = vmatmul.mubr.f32.gmra.mrb[0].mxu0 %v976
    %v1183 = vpop.f32.mrb[0].mxu0
    %v1184 = vadd.f32 0.0, %v1183
    %v1185 = vpop.f32.mrb[0].mxu0
    %v1186 = vadd.f32 0.0, %v1185
    %1187 = vdwg.mxu0
    %v1188 = vadd.f32 %v978, %v1113
    %v1189 = vadd.f32 %v979, %v1115
    %v1190 = vadd.f32 %v980, %v1184
    %v1191 = vadd.f32 %v981, %v1186
    %v1192 = vmul.f32 %v1188, 0.5
    %v1193 = vtanh.pop %v1192
    %v1194 = vadd.f32 %v1193, 1.0
    %v1195 = vmul.f32 %v1194, 0.5
    %v1196 = vmul.f32 %v1189, 0.5
    %v1197 = vtanh.pop %v1196
    %v1198 = vadd.f32 %v1197, 1.0
    %v1199 = vmul.f32 %v1198, 0.5
    %v1200 = vtanh.pop %v1190
    %v1201 = vmul.f32 %v1191, 0.5
    %v1202 = vtanh.pop %v1201
    %v1203 = vadd.f32 %v1202, 1.0
    %v1204 = vmul.f32 %v1203, 0.5
    %v1205 = vmul.f32 %v1199, %v974
    %v1206 = vmul.f32 %v1195, %v1200
    %v1207 = vadd.f32 %v1205, %v1206
    %v1208 = vtanh.pop %v1207
    %v1209 = vmul.f32 %v1204, %v1208
    %1210 = vst [vmem:[#allocation3 + $0x10] sm:$0xff] %v1209
    %v1211 = vld [vmem:[#allocation2 + $0x60] sm:$0xff]
    %v1212 = vld [vmem:[#allocation2 + $0x68] sm:$0xff]
    %v1213 = vld [vmem:[#allocation2 + $0x70] sm:$0xff]
    %v1214 = vld [vmem:[#allocation2 + $0x78] sm:$0xff]
    %v1215 = vld [vmem:[#allocation9] sm:$0xff]
    %v1216 = vld [vmem:[#allocation9 + $0x8] sm:$0xff]
    %v1217 = vld [vmem:[#allocation9 + $0x10] sm:$0xff]
    %v1218 = vld [vmem:[#allocation9 + $0x18] sm:$0xff]
    %v1219 = vld [vmem:[#allocation9 + $0x20] sm:$0xff]
    %v1220 = vld [vmem:[#allocation9 + $0x28] sm:$0xff]
    %v1221 = vld [vmem:[#allocation9 + $0x30] sm:$0xff]
    %v1222 = vld [vmem:[#allocation9 + $0x38] sm:$0xff]
    %v1223 = vld [vmem:[#allocation9 + $0x40] sm:$0xff]
    %v1224 = vld [vmem:[#allocation9 + $0x48] sm:$0xff]
    %v1225 = vld [vmem:[#allocation9 + $0x50] sm:$0xff]
    %v1226 = vld [vmem:[#allocation9 + $0x58] sm:$0xff]
    %v1227 = vld [vmem:[#allocation9 + $0x60] sm:$0xff]
    %v1228 = vld [vmem:[#allocation9 + $0x68] sm:$0xff]
    %v1229 = vld [vmem:[#allocation9 + $0x70] sm:$0xff]
    %v1230 = vld [vmem:[#allocation9 + $0x78] sm:$0xff]
    %v1231 = vld [vmem:[#allocation9 + $0x80] sm:$0xff]
    %v1232 = vld [vmem:[#allocation9 + $0x88] sm:$0xff]
    %v1233 = vld [vmem:[#allocation9 + $0x90] sm:$0xff]
    %v1234 = vld [vmem:[#allocation9 + $0x98] sm:$0xff]
    %v1235 = vld [vmem:[#allocation9 + $0xa0] sm:$0xff]
    %v1236 = vld [vmem:[#allocation9 + $0xa8] sm:$0xff]
    %v1237 = vld [vmem:[#allocation9 + $0xb0] sm:$0xff]
    %v1238 = vld [vmem:[#allocation9 + $0xb8] sm:$0xff]
    %v1239 = vld [vmem:[#allocation9 + $0xc0] sm:$0xff]
    %v1240 = vld [vmem:[#allocation9 + $0xc8] sm:$0xff]
    %v1241 = vld [vmem:[#allocation9 + $0xd0] sm:$0xff]
    %v1242 = vld [vmem:[#allocation9 + $0xd8] sm:$0xff]
    %v1243 = vld [vmem:[#allocation9 + $0xe0] sm:$0xff]
    %v1244 = vld [vmem:[#allocation9 + $0xe8] sm:$0xff]
    %v1245 = vld [vmem:[#allocation9 + $0xf0] sm:$0xff]
    %v1246 = vld [vmem:[#allocation9 + $0xf8] sm:$0xff]
    %v1247 = vld [vmem:[#allocation9 + $0x100] sm:$0xff]
    %v1248 = vld [vmem:[#allocation9 + $0x108] sm:$0xff]
    %v1249 = vld [vmem:[#allocation9 + $0x110] sm:$0xff]
    %v1250 = vld [vmem:[#allocation9 + $0x118] sm:$0xff]
    %v1251 = vld [vmem:[#allocation9 + $0x120] sm:$0xff]
    %v1252 = vld [vmem:[#allocation9 + $0x128] sm:$0xff]
    %v1253 = vld [vmem:[#allocation9 + $0x130] sm:$0xff]
    %v1254 = vld [vmem:[#allocation9 + $0x138] sm:$0xff]
    %v1255 = vld [vmem:[#allocation9 + $0x140] sm:$0xff]
    %v1256 = vld [vmem:[#allocation9 + $0x148] sm:$0xff]
    %v1257 = vld [vmem:[#allocation9 + $0x150] sm:$0xff]
    %v1258 = vld [vmem:[#allocation9 + $0x158] sm:$0xff]
    %v1259 = vld [vmem:[#allocation9 + $0x160] sm:$0xff]
    %v1260 = vld [vmem:[#allocation9 + $0x168] sm:$0xff]
    %v1261 = vld [vmem:[#allocation9 + $0x170] sm:$0xff]
    %v1262 = vld [vmem:[#allocation9 + $0x178] sm:$0xff]
    %v1263 = vld [vmem:[#allocation9 + $0x180] sm:$0xff]
    %v1264 = vld [vmem:[#allocation9 + $0x188] sm:$0xff]
    %v1265 = vld [vmem:[#allocation9 + $0x190] sm:$0xff]
    %v1266 = vld [vmem:[#allocation9 + $0x198] sm:$0xff]
    %v1267 = vld [vmem:[#allocation9 + $0x1a0] sm:$0xff]
    %v1268 = vld [vmem:[#allocation9 + $0x1a8] sm:$0xff]
    %v1269 = vld [vmem:[#allocation9 + $0x1b0] sm:$0xff]
    %v1270 = vld [vmem:[#allocation9 + $0x1b8] sm:$0xff]
    %v1271 = vld [vmem:[#allocation9 + $0x1c0] sm:$0xff]
    %v1272 = vld [vmem:[#allocation9 + $0x1c8] sm:$0xff]
    %v1273 = vld [vmem:[#allocation9 + $0x1d0] sm:$0xff]
    %v1274 = vld [vmem:[#allocation9 + $0x1d8] sm:$0xff]
    %v1275 = vld [vmem:[#allocation9 + $0x1e0] sm:$0xff]
    %v1276 = vld [vmem:[#allocation9 + $0x1e8] sm:$0xff]
    %v1277 = vld [vmem:[#allocation9 + $0x1f0] sm:$0xff]
    %v1278 = vld [vmem:[#allocation9 + $0x1f8] sm:$0xff]
    %1279 = vmatprep.subr.mxu0 %v1216
    %1280 = vmatpush1.msra.mxu0 %v1215
    %1281 = vmatprep.subr.mxu0 %v1220
    %1282 = vmatpush1.msra.mxu0 %v1219
    %1283 = vmatprep.subr.mxu0 %v1224
    %1284 = vmatpush1.msra.mxu0 %v1223
    %1285 = vmatprep.subr.mxu0 %v1228
    %1286 = vmatpush1.msra.mxu0 %v1227
    %1287 = vmatprep.subr.mxu0 %v1232
    %1288 = vmatpush1.msra.mxu0 %v1231
    %1289 = vmatprep.subr.mxu0 %v1236
    %1290 = vmatpush1.msra.mxu0 %v1235
    %1291 = vmatprep.subr.mxu0 %v1240
    %1292 = vmatpush1.msra.mxu0 %v1239
    %1293 = vmatprep.subr.mxu0 %v1244
    %1294 = vmatpush1.msra.mxu0 %v1243
    %1295 = vmatprep.subr.mxu0 %v1248
    %1296 = vmatpush1.msra.mxu0 %v1247
    %1297 = vmatprep.subr.mxu0 %v1252
    %1298 = vmatpush1.msra.mxu0 %v1251
    %1299 = vmatprep.subr.mxu0 %v1256
    %1300 = vmatpush1.msra.mxu0 %v1255
    %1301 = vmatprep.subr.mxu0 %v1260
    %1302 = vmatpush1.msra.mxu0 %v1259
    %1303 = vmatprep.subr.mxu0 %v1264
    %1304 = vmatpush1.msra.mxu0 %v1263
    %1305 = vmatprep.subr.mxu0 %v1268
    %1306 = vmatpush1.msra.mxu0 %v1267
    %1307 = vmatprep.subr.mxu0 %v1272
    %1308 = vmatpush1.msra.mxu0 %v1271
    %1309 = vmatprep.subr.mxu0 %v1276
    %1310 = vmatpush1.msra.mxu0 %v1275
    %1311 = vmatprep.subr.mxu0 0.0
    %1312 = vmatpush1.msra.mxu0 0.0
    %1313 = vmatprep.subr.mxu0 0.0
    %1314 = vmatpush1.msra.mxu0 0.0
    %1315 = vmatprep.subr.mxu0 0.0
    %1316 = vmatpush1.msra.mxu0 0.0
    %1317 = vmatprep.subr.mxu0 0.0
    %1318 = vmatpush1.msra.mxu0 0.0
    %1319 = vmatprep.subr.mxu0 0.0
    %1320 = vmatpush1.msra.mxu0 0.0
    %1321 = vmatprep.subr.mxu0 0.0
    %1322 = vmatpush1.msra.mxu0 0.0
    %1323 = vmatprep.subr.mxu0 0.0
    %1324 = vmatpush1.msra.mxu0 0.0
    %1325 = vmatprep.subr.mxu0 0.0
    %1326 = vmatpush1.msra.mxu0 0.0
    %1327 = vmatprep.subr.mxu0 0.0
    %1328 = vmatpush1.msra.mxu0 0.0
    %1329 = vmatprep.subr.mxu0 0.0
    %1330 = vmatpush1.msra.mxu0 0.0
    %1331 = vmatprep.subr.mxu0 0.0
    %1332 = vmatpush1.msra.mxu0 0.0
    %1333 = vmatprep.subr.mxu0 0.0
    %1334 = vmatpush1.msra.mxu0 0.0
    %1335 = vmatprep.subr.mxu0 0.0
    %1336 = vmatpush1.msra.mxu0 0.0
    %1337 = vmatprep.subr.mxu0 0.0
    %1338 = vmatpush1.msra.mxu0 0.0
    %1339 = vmatprep.subr.mxu0 0.0
    %1340 = vmatpush1.msra.mxu0 0.0
    %1341 = vmatprep.subr.mxu0 0.0
    %1342 = vmatpush1.msra.mxu0 0.0
    %1343 = vmatprep.mubr.f32.mxu0 0.0
    %1344 = vmatmul.mubr.f32.gmra.mrb[0].mxu0 %v1209
    %v1345 = vpop.f32.mrb[0].mxu0
    %v1346 = vadd.f32 0.0, %v1345
    %v1347 = vpop.f32.mrb[0].mxu0
    %v1348 = vadd.f32 0.0, %v1347
    %1349 = vdwg.mxu0
    %1350 = vmatprep.subr.mxu0 %v1218
    %1351 = vmatpush1.msra.mxu0 %v1217
    %1352 = vmatprep.subr.mxu0 %v1222
    %1353 = vmatpush1.msra.mxu0 %v1221
    %1354 = vmatprep.subr.mxu0 %v1226
    %1355 = vmatpush1.msra.mxu0 %v1225
    %1356 = vmatprep.subr.mxu0 %v1230
    %1357 = vmatpush1.msra.mxu0 %v1229
    %1358 = vmatprep.subr.mxu0 %v1234
    %1359 = vmatpush1.msra.mxu0 %v1233
    %1360 = vmatprep.subr.mxu0 %v1238
    %1361 = vmatpush1.msra.mxu0 %v1237
    %1362 = vmatprep.subr.mxu0 %v1242
    %1363 = vmatpush1.msra.mxu0 %v1241
    %1364 = vmatprep.subr.mxu0 %v1246
    %1365 = vmatpush1.msra.mxu0 %v1245
    %1366 = vmatprep.subr.mxu0 %v1250
    %1367 = vmatpush1.msra.mxu0 %v1249
    %1368 = vmatprep.subr.mxu0 %v1254
    %1369 = vmatpush1.msra.mxu0 %v1253
    %1370 = vmatprep.subr.mxu0 %v1258
    %1371 = vmatpush1.msra.mxu0 %v1257
    %1372 = vmatprep.subr.mxu0 %v1262
    %1373 = vmatpush1.msra.mxu0 %v1261
    %1374 = vmatprep.subr.mxu0 %v1266
    %1375 = vmatpush1.msra.mxu0 %v1265
    %1376 = vmatprep.subr.mxu0 %v1270
    %1377 = vmatpush1.msra.mxu0 %v1269
    %1378 = vmatprep.subr.mxu0 %v1274
    %1379 = vmatpush1.msra.mxu0 %v1273
    %1380 = vmatprep.subr.mxu0 %v1278
    %1381 = vmatpush1.msra.mxu0 %v1277
    %1382 = vmatprep.subr.mxu0 0.0
    %1383 = vmatpush1.msra.mxu0 0.0
    %1384 = vmatprep.subr.mxu0 0.0
    %1385 = vmatpush1.msra.mxu0 0.0
    %1386 = vmatprep.subr.mxu0 0.0
    %1387 = vmatpush1.msra.mxu0 0.0
    %1388 = vmatprep.subr.mxu0 0.0
    %1389 = vmatpush1.msra.mxu0 0.0
    %1390 = vmatprep.subr.mxu0 0.0
    %1391 = vmatpush1.msra.mxu0 0.0
    %1392 = vmatprep.subr.mxu0 0.0
    %1393 = vmatpush1.msra.mxu0 0.0
    %1394 = vmatprep.subr.mxu0 0.0
    %1395 = vmatpush1.msra.mxu0 0.0
    %1396 = vmatprep.subr.mxu0 0.0
    %1397 = vmatpush1.msra.mxu0 0.0
    %1398 = vmatprep.subr.mxu0 0.0
    %1399 = vmatpush1.msra.mxu0 0.0
    %1400 = vmatprep.subr.mxu0 0.0
    %1401 = vmatpush1.msra.mxu0 0.0
    %1402 = vmatprep.subr.mxu0 0.0
    %1403 = vmatpush1.msra.mxu0 0.0
    %1404 = vmatprep.subr.mxu0 0.0
    %1405 = vmatpush1.msra.mxu0 0.0
    %1406 = vmatprep.subr.mxu0 0.0
    %1407 = vmatpush1.msra.mxu0 0.0
    %1408 = vmatprep.subr.mxu0 0.0
    %1409 = vmatpush1.msra.mxu0 0.0
    %1410 = vmatprep.subr.mxu0 0.0
    %1411 = vmatpush1.msra.mxu0 0.0
    %1412 = vmatprep.subr.mxu0 0.0
    %1413 = vmatpush1.msra.mxu0 0.0
    %1414 = vmatprep.mubr.f32.mxu0 0.0
    %1415 = vmatmul.mubr.f32.gmra.mrb[0].mxu0 %v1209
    %v1416 = vpop.f32.mrb[0].mxu0
    %v1417 = vadd.f32 0.0, %v1416
    %v1418 = vpop.f32.mrb[0].mxu0
    %v1419 = vadd.f32 0.0, %v1418
    %1420 = vdwg.mxu0
    %v1421 = vadd.f32 %v1211, %v1346
    %v1422 = vadd.f32 %v1212, %v1348
    %v1423 = vadd.f32 %v1213, %v1417
    %v1424 = vadd.f32 %v1214, %v1419
    %v1425 = vmul.f32 %v1421, 0.5
    %v1426 = vtanh.pop %v1425
    %v1427 = vadd.f32 %v1426, 1.0
    %v1428 = vmul.f32 %v1427, 0.5
    %v1429 = vmul.f32 %v1422, 0.5
    %v1430 = vtanh.pop %v1429
    %v1431 = vadd.f32 %v1430, 1.0
    %v1432 = vmul.f32 %v1431, 0.5
    %v1433 = vtanh.pop %v1423
    %v1434 = vmul.f32 %v1424, 0.5
    %v1435 = vtanh.pop %v1434
    %v1436 = vadd.f32 %v1435, 1.0
    %v1437 = vmul.f32 %v1436, 0.5
    %v1438 = vmul.f32 %v1432, %v1207
    %v1439 = vmul.f32 %v1428, %v1433
    %v1440 = vadd.f32 %v1438, %v1439
    %v1441 = vtanh.pop %v1440
    %v1442 = vmul.f32 %v1437, %v1441
    %1443 = vst [vmem:[#allocation3 + $0x18] sm:$0xff] %v1442
    %v1444 = vld [vmem:[#allocation2 + $0x80] sm:$0xff]
    %v1445 = vld [vmem:[#allocation2 + $0x88] sm:$0xff]
    %v1446 = vld [vmem:[#allocation2 + $0x90] sm:$0xff]
    %v1447 = vld [vmem:[#allocation2 + $0x98] sm:$0xff]
    %v1448 = vld [vmem:[#allocation9] sm:$0xff]
    %v1449 = vld [vmem:[#allocation9 + $0x8] sm:$0xff]
    %v1450 = vld [vmem:[#allocation9 + $0x10] sm:$0xff]
    %v1451 = vld [vmem:[#allocation9 + $0x18] sm:$0xff]
    %v1452 = vld [vmem:[#allocation9 + $0x20] sm:$0xff]
    %v1453 = vld [vmem:[#allocation9 + $0x28] sm:$0xff]
    %v1454 = vld [vmem:[#allocation9 + $0x30] sm:$0xff]
    %v1455 = vld [vmem:[#allocation9 + $0x38] sm:$0xff]
    %v1456 = vld [vmem:[#allocation9 + $0x40] sm:$0xff]
    %v1457 = vld [vmem:[#allocation9 + $0x48] sm:$0xff]
    %v1458 = vld [vmem:[#allocation9 + $0x50] sm:$0xff]
    %v1459 = vld [vmem:[#allocation9 + $0x58] sm:$0xff]
    %v1460 = vld [vmem:[#allocation9 + $0x60] sm:$0xff]
    %v1461 = vld [vmem:[#allocation9 + $0x68] sm:$0xff]
    %v1462 = vld [vmem:[#allocation9 + $0x70] sm:$0xff]
    %v1463 = vld [vmem:[#allocation9 + $0x78] sm:$0xff]
    %v1464 = vld [vmem:[#allocation9 + $0x80] sm:$0xff]
    %v1465 = vld [vmem:[#allocation9 + $0x88] sm:$0xff]
    %v1466 = vld [vmem:[#allocation9 + $0x90] sm:$0xff]
    %v1467 = vld [vmem:[#allocation9 + $0x98] sm:$0xff]
    %v1468 = vld [vmem:[#allocation9 + $0xa0] sm:$0xff]
    %v1469 = vld [vmem:[#allocation9 + $0xa8] sm:$0xff]
    %v1470 = vld [vmem:[#allocation9 + $0xb0] sm:$0xff]
    %v1471 = vld [vmem:[#allocation9 + $0xb8] sm:$0xff]
    %v1472 = vld [vmem:[#allocation9 + $0xc0] sm:$0xff]
    %v1473 = vld [vmem:[#allocation9 + $0xc8] sm:$0xff]
    %v1474 = vld [vmem:[#allocation9 + $0xd0] sm:$0xff]
    %v1475 = vld [vmem:[#allocation9 + $0xd8] sm:$0xff]
    %v1476 = vld [vmem:[#allocation9 + $0xe0] sm:$0xff]
    %v1477 = vld [vmem:[#allocation9 + $0xe8] sm:$0xff]
    %v1478 = vld [vmem:[#allocation9 + $0xf0] sm:$0xff]
    %v1479 = vld [vmem:[#allocation9 + $0xf8] sm:$0xff]
    %v1480 = vld [vmem:[#allocation9 + $0x100] sm:$0xff]
    %v1481 = vld [vmem:[#allocation9 + $0x108] sm:$0xff]
    %v1482 = vld [vmem:[#allocation9 + $0x110] sm:$0xff]
    %v1483 = vld [vmem:[#allocation9 + $0x118] sm:$0xff]
    %v1484 = vld [vmem:[#allocation9 + $0x120] sm:$0xff]
    %v1485 = vld [vmem:[#allocation9 + $0x128] sm:$0xff]
    %v1486 = vld [vmem:[#allocation9 + $0x130] sm:$0xff]
    %v1487 = vld [vmem:[#allocation9 + $0x138] sm:$0xff]
    %v1488 = vld [vmem:[#allocation9 + $0x140] sm:$0xff]
    %v1489 = vld [vmem:[#allocation9 + $0x148] sm:$0xff]
    %v1490 = vld [vmem:[#allocation9 + $0x150] sm:$0xff]
    %v1491 = vld [vmem:[#allocation9 + $0x158] sm:$0xff]
    %v1492 = vld [vmem:[#allocation9 + $0x160] sm:$0xff]
    %v1493 = vld [vmem:[#allocation9 + $0x168] sm:$0xff]
    %v1494 = vld [vmem:[#allocation9 + $0x170] sm:$0xff]
    %v1495 = vld [vmem:[#allocation9 + $0x178] sm:$0xff]
    %v1496 = vld [vmem:[#allocation9 + $0x180] sm:$0xff]
    %v1497 = vld [vmem:[#allocation9 + $0x188] sm:$0xff]
    %v1498 = vld [vmem:[#allocation9 + $0x190] sm:$0xff]
    %v1499 = vld [vmem:[#allocation9 + $0x198] sm:$0xff]
    %v1500 = vld [vmem:[#allocation9 + $0x1a0] sm:$0xff]
    %v1501 = vld [vmem:[#allocation9 + $0x1a8] sm:$0xff]
    %v1502 = vld [vmem:[#allocation9 + $0x1b0] sm:$0xff]
    %v1503 = vld [vmem:[#allocation9 + $0x1b8] sm:$0xff]
    %v1504 = vld [vmem:[#allocation9 + $0x1c0] sm:$0xff]
    %v1505 = vld [vmem:[#allocation9 + $0x1c8] sm:$0xff]
    %v1506 = vld [vmem:[#allocation9 + $0x1d0] sm:$0xff]
    %v1507 = vld [vmem:[#allocation9 + $0x1d8] sm:$0xff]
    %v1508 = vld [vmem:[#allocation9 + $0x1e0] sm:$0xff]
    %v1509 = vld [vmem:[#allocation9 + $0x1e8] sm:$0xff]
    %v1510 = vld [vmem:[#allocation9 + $0x1f0] sm:$0xff]
    %v1511 = vld [vmem:[#allocation9 + $0x1f8] sm:$0xff]
    %1512 = vmatprep.subr.mxu0 %v1449
    %1513 = vmatpush1.msra.mxu0 %v1448
    %1514 = vmatprep.subr.mxu0 %v1453
    %1515 = vmatpush1.msra.mxu0 %v1452
    %1516 = vmatprep.subr.mxu0 %v1457
    %1517 = vmatpush1.msra.mxu0 %v1456
    %1518 = vmatprep.subr.mxu0 %v1461
    %1519 = vmatpush1.msra.mxu0 %v1460
    %1520 = vmatprep.subr.mxu0 %v1465
    %1521 = vmatpush1.msra.mxu0 %v1464
    %1522 = vmatprep.subr.mxu0 %v1469
    %1523 = vmatpush1.msra.mxu0 %v1468
    %1524 = vmatprep.subr.mxu0 %v1473
    %1525 = vmatpush1.msra.mxu0 %v1472
    %1526 = vmatprep.subr.mxu0 %v1477
    %1527 = vmatpush1.msra.mxu0 %v1476
    %1528 = vmatprep.subr.mxu0 %v1481
    %1529 = vmatpush1.msra.mxu0 %v1480
    %1530 = vmatprep.subr.mxu0 %v1485
    %1531 = vmatpush1.msra.mxu0 %v1484
    %1532 = vmatprep.subr.mxu0 %v1489
    %1533 = vmatpush1.msra.mxu0 %v1488
    %1534 = vmatprep.subr.mxu0 %v1493
    %1535 = vmatpush1.msra.mxu0 %v1492
    %1536 = vmatprep.subr.mxu0 %v1497
    %1537 = vmatpush1.msra.mxu0 %v1496
    %1538 = vmatprep.subr.mxu0 %v1501
    %1539 = vmatpush1.msra.mxu0 %v1500
    %1540 = vmatprep.subr.mxu0 %v1505
    %1541 = vmatpush1.msra.mxu0 %v1504
    %1542 = vmatprep.subr.mxu0 %v1509
    %1543 = vmatpush1.msra.mxu0 %v1508
    %1544 = vmatprep.subr.mxu0 0.0
    %1545 = vmatpush1.msra.mxu0 0.0
    %1546 = vmatprep.subr.mxu0 0.0
    %1547 = vmatpush1.msra.mxu0 0.0
    %1548 = vmatprep.subr.mxu0 0.0
    %1549 = vmatpush1.msra.mxu0 0.0
    %1550 = vmatprep.subr.mxu0 0.0
    %1551 = vmatpush1.msra.mxu0 0.0
    %1552 = vmatprep.subr.mxu0 0.0
    %1553 = vmatpush1.msra.mxu0 0.0
    %1554 = vmatprep.subr.mxu0 0.0
    %1555 = vmatpush1.msra.mxu0 0.0
    %1556 = vmatprep.subr.mxu0 0.0
    %1557 = vmatpush1.msra.mxu0 0.0
    %1558 = vmatprep.subr.mxu0 0.0
    %1559 = vmatpush1.msra.mxu0 0.0
    %1560 = vmatprep.subr.mxu0 0.0
    %1561 = vmatpush1.msra.mxu0 0.0
    %1562 = vmatprep.subr.mxu0 0.0
    %1563 = vmatpush1.msra.mxu0 0.0
    %1564 = vmatprep.subr.mxu0 0.0
    %1565 = vmatpush1.msra.mxu0 0.0
    %1566 = vmatprep.subr.mxu0 0.0
    %1567 = vmatpush1.msra.mxu0 0.0
    %1568 = vmatprep.subr.mxu0 0.0
    %1569 = vmatpush1.msra.mxu0 0.0
    %1570 = vmatprep.subr.mxu0 0.0
    %1571 = vmatpush1.msra.mxu0 0.0
    %1572 = vmatprep.subr.mxu0 0.0
    %1573 = vmatpush1.msra.mxu0 0.0
    %1574 = vmatprep.subr.mxu0 0.0
    %1575 = vmatpush1.msra.mxu0 0.0
    %1576 = vmatprep.mubr.f32.mxu0 0.0
    %1577 = vmatmul.mubr.f32.gmra.mrb[0].mxu0 %v1442
    %v1578 = vpop.f32.mrb[0].mxu0
    %v1579 = vadd.f32 0.0, %v1578
    %v1580 = vpop.f32.mrb[0].mxu0
    %v1581 = vadd.f32 0.0, %v1580
    %1582 = vdwg.mxu0
    %1583 = vmatprep.subr.mxu0 %v1451
    %1584 = vmatpush1.msra.mxu0 %v1450
    %1585 = vmatprep.subr.mxu0 %v1455
    %1586 = vmatpush1.msra.mxu0 %v1454
    %1587 = vmatprep.subr.mxu0 %v1459
    %1588 = vmatpush1.msra.mxu0 %v1458
    %1589 = vmatprep.subr.mxu0 %v1463
    %1590 = vmatpush1.msra.mxu0 %v1462
    %1591 = vmatprep.subr.mxu0 %v1467
    %1592 = vmatpush1.msra.mxu0 %v1466
    %1593 = vmatprep.subr.mxu0 %v1471
    %1594 = vmatpush1.msra.mxu0 %v1470
    %1595 = vmatprep.subr.mxu0 %v1475
    %1596 = vmatpush1.msra.mxu0 %v1474
    %1597 = vmatprep.subr.mxu0 %v1479
    %1598 = vmatpush1.msra.mxu0 %v1478
    %1599 = vmatprep.subr.mxu0 %v1483
    %1600 = vmatpush1.msra.mxu0 %v1482
    %1601 = vmatprep.subr.mxu0 %v1487
    %1602 = vmatpush1.msra.mxu0 %v1486
    %1603 = vmatprep.subr.mxu0 %v1491
    %1604 = vmatpush1.msra.mxu0 %v1490
    %1605 = vmatprep.subr.mxu0 %v1495
    %1606 = vmatpush1.msra.mxu0 %v1494
    %1607 = vmatprep.subr.mxu0 %v1499
    %1608 = vmatpush1.msra.mxu0 %v1498
    %1609 = vmatprep.subr.mxu0 %v1503
    %1610 = vmatpush1.msra.mxu0 %v1502
    %1611 = vmatprep.subr.mxu0 %v1507
    %1612 = vmatpush1.msra.mxu0 %v1506
    %1613 = vmatprep.subr.mxu0 %v1511
    %1614 = vmatpush1.msra.mxu0 %v1510
    %1615 = vmatprep.subr.mxu0 0.0
    %1616 = vmatpush1.msra.mxu0 0.0
    %1617 = vmatprep.subr.mxu0 0.0
    %1618 = vmatpush1.msra.mxu0 0.0
    %1619 = vmatprep.subr.mxu0 0.0
    %1620 = vmatpush1.msra.mxu0 0.0
    %1621 = vmatprep.subr.mxu0 0.0
    %1622 = vmatpush1.msra.mxu0 0.0
    %1623 = vmatprep.subr.mxu0 0.0
    %1624 = vmatpush1.msra.mxu0 0.0
    %1625 = vmatprep.subr.mxu0 0.0
    %1626 = vmatpush1.msra.mxu0 0.0
    %1627 = vmatprep.subr.mxu0 0.0
    %1628 = vmatpush1.msra.mxu0 0.0
    %1629 = vmatprep.subr.mxu0 0.0
    %1630 = vmatpush1.msra.mxu0 0.0
    %1631 = vmatprep.subr.mxu0 0.0
    %1632 = vmatpush1.msra.mxu0 0.0
    %1633 = vmatprep.subr.mxu0 0.0
    %1634 = vmatpush1.msra.mxu0 0.0
    %1635 = vmatprep.subr.mxu0 0.0
    %1636 = vmatpush1.msra.mxu0 0.0
    %1637 = vmatprep.subr.mxu0 0.0
    %1638 = vmatpush1.msra.mxu0 0.0
    %1639 = vmatprep.subr.mxu0 0.0
    %1640 = vmatpush1.msra.mxu0 0.0
    %1641 = vmatprep.subr.mxu0 0.0
    %1642 = vmatpush1.msra.mxu0 0.0
    %1643 = vmatprep.subr.mxu0 0.0
    %1644 = vmatpush1.msra.mxu0 0.0
    %1645 = vmatprep.subr.mxu0 0.0
    %1646 = vmatpush1.msra.mxu0 0.0
    %1647 = vmatprep.mubr.f32.mxu0 0.0
    %1648 = vmatmul.mubr.f32.gmra.mrb[0].mxu0 %v1442
    %v1649 = vpop.f32.mrb[0].mxu0
    %v1650 = vadd.f32 0.0, %v1649
    %v1651 = vpop.f32.mrb[0].mxu0
    %v1652 = vadd.f32 0.0, %v1651
    %1653 = vdwg.mxu0
    %v1654 = vadd.f32 %v1444, %v1579
    %v1655 = vadd.f32 %v1445, %v1581
    %v1656 = vadd.f32 %v1446, %v1650
    %v1657 = vadd.f32 %v1447, %v1652
    %v1658 = vmul.f32 %v1654, 0.5
    %v1659 = vtanh.pop %v1658
    %v1660 = vadd.f32 %v1659, 1.0
    %v1661 = vmul.f32 %v1660, 0.5
    %v1662 = vmul.f32 %v1655, 0.5
    %v1663 = vtanh.pop %v1662
    %v1664 = vadd.f32 %v1663, 1.0
    %v1665 = vmul.f32 %v1664, 0.5
    %v1666 = vtanh.pop %v1656
    %v1667 = vmul.f32 %v1657, 0.5
    %v1668 = vtanh.pop %v1667
    %v1669 = vadd.f32 %v1668, 1.0
    %v1670 = vmul.f32 %v1669, 0.5
    %v1671 = vmul.f32 %v1665, %v1440
    %v1672 = vmul.f32 %v1661, %v1666
    %v1673 = vadd.f32 %v1671, %v1672
    %v1674 = vtanh.pop %v1673
    %v1675 = vmul.f32 %v1670, %v1674
    %1676 = vst [vmem:[#allocation3 + $0x20] sm:$0xff] %v1675
    %v1677 = vld [vmem:[#allocation2 + $0xa0] sm:$0xff]
    %v1678 = vld [vmem:[#allocation2 + $0xa8] sm:$0xff]
    %v1679 = vld [vmem:[#allocation2 + $0xb0] sm:$0xff]
    %v1680 = vld [vmem:[#allocation2 + $0xb8] sm:$0xff]
    %v1681 = vld [vmem:[#allocation9] sm:$0xff]
    %v1682 = vld [vmem:[#allocation9 + $0x8] sm:$0xff]
    %v1683 = vld [vmem:[#allocation9 + $0x10] sm:$0xff]
    %v1684 = vld [vmem:[#allocation9 + $0x18] sm:$0xff]
    %v1685 = vld [vmem:[#allocation9 + $0x20] sm:$0xff]
    %v1686 = vld [vmem:[#allocation9 + $0x28] sm:$0xff]
    %v1687 = vld [vmem:[#allocation9 + $0x30] sm:$0xff]
    %v1688 = vld [vmem:[#allocation9 + $0x38] sm:$0xff]
    %v1689 = vld [vmem:[#allocation9 + $0x40] sm:$0xff]
    %v1690 = vld [vmem:[#allocation9 + $0x48] sm:$0xff]
    %v1691 = vld [vmem:[#allocation9 + $0x50] sm:$0xff]
    %v1692 = vld [vmem:[#allocation9 + $0x58] sm:$0xff]
    %v1693 = vld [vmem:[#allocation9 + $0x60] sm:$0xff]
    %v1694 = vld [vmem:[#allocation9 + $0x68] sm:$0xff]
    %v1695 = vld [vmem:[#allocation9 + $0x70] sm:$0xff]
    %v1696 = vld [vmem:[#allocation9 + $0x78] sm:$0xff]
    %v1697 = vld [vmem:[#allocation9 + $0x80] sm:$0xff]
    %v1698 = vld [vmem:[#allocation9 + $0x88] sm:$0xff]
    %v1699 = vld [vmem:[#allocation9 + $0x90] sm:$0xff]
    %v1700 = vld [vmem:[#allocation9 + $0x98] sm:$0xff]
    %v1701 = vld [vmem:[#allocation9 + $0xa0] sm:$0xff]
    %v1702 = vld [vmem:[#allocation9 + $0xa8] sm:$0xff]
    %v1703 = vld [vmem:[#allocation9 + $0xb0] sm:$0xff]
    %v1704 = vld [vmem:[#allocation9 + $0xb8] sm:$0xff]
    %v1705 = vld [vmem:[#allocation9 + $0xc0] sm:$0xff]
    %v1706 = vld [vmem:[#allocation9 + $0xc8] sm:$0xff]
    %v1707 = vld [vmem:[#allocation9 + $0xd0] sm:$0xff]
    %v1708 = vld [vmem:[#allocation9 + $0xd8] sm:$0xff]
    %v1709 = vld [vmem:[#allocation9 + $0xe0] sm:$0xff]
    %v1710 = vld [vmem:[#allocation9 + $0xe8] sm:$0xff]
    %v1711 = vld [vmem:[#allocation9 + $0xf0] sm:$0xff]
    %v1712 = vld [vmem:[#allocation9 + $0xf8] sm:$0xff]
    %v1713 = vld [vmem:[#allocation9 + $0x100] sm:$0xff]
    %v1714 = vld [vmem:[#allocation9 + $0x108] sm:$0xff]
    %v1715 = vld [vmem:[#allocation9 + $0x110] sm:$0xff]
    %v1716 = vld [vmem:[#allocation9 + $0x118] sm:$0xff]
    %v1717 = vld [vmem:[#allocation9 + $0x120] sm:$0xff]
    %v1718 = vld [vmem:[#allocation9 + $0x128] sm:$0xff]
    %v1719 = vld [vmem:[#allocation9 + $0x130] sm:$0xff]
    %v1720 = vld [vmem:[#allocation9 + $0x138] sm:$0xff]
    %v1721 = vld [vmem:[#allocation9 + $0x140] sm:$0xff]
    %v1722 = vld [vmem:[#allocation9 + $0x148] sm:$0xff]
    %v1723 = vld [vmem:[#allocation9 + $0x150] sm:$0xff]
    %v1724 = vld [vmem:[#allocation9 + $0x158] sm:$0xff]
    %v1725 = vld [vmem:[#allocation9 + $0x160] sm:$0xff]
    %v1726 = vld [vmem:[#allocation9 + $0x168] sm:$0xff]
    %v1727 = vld [vmem:[#allocation9 + $0x170] sm:$0xff]
    %v1728 = vld [vmem:[#allocation9 + $0x178] sm:$0xff]
    %v1729 = vld [vmem:[#allocation9 + $0x180] sm:$0xff]
    %v1730 = vld [vmem:[#allocation9 + $0x188] sm:$0xff]
    %v1731 = vld [vmem:[#allocation9 + $0x190] sm:$0xff]
    %v1732 = vld [vmem:[#allocation9 + $0x198] sm:$0xff]
    %v1733 = vld [vmem:[#allocation9 + $0x1a0] sm:$0xff]
    %v1734 = vld [vmem:[#allocation9 + $0x1a8] sm:$0xff]
    %v1735 = vld [vmem:[#allocation9 + $0x1b0] sm:$0xff]
    %v1736 = vld [vmem:[#allocation9 + $0x1b8] sm:$0xff]
    %v1737 = vld [vmem:[#allocation9 + $0x1c0] sm:$0xff]
    %v1738 = vld [vmem:[#allocation9 + $0x1c8] sm:$0xff]
    %v1739 = vld [vmem:[#allocation9 + $0x1d0] sm:$0xff]
    %v1740 = vld [vmem:[#allocation9 + $0x1d8] sm:$0xff]
    %v1741 = vld [vmem:[#allocation9 + $0x1e0] sm:$0xff]
    %v1742 = vld [vmem:[#allocation9 + $0x1e8] sm:$0xff]
    %v1743 = vld [vmem:[#allocation9 + $0x1f0] sm:$0xff]
    %v1744 = vld [vmem:[#allocation9 + $0x1f8] sm:$0xff]
    %1745 = vmatprep.subr.mxu0 %v1682
    %1746 = vmatpush1.msra.mxu0 %v1681
    %1747 = vmatprep.subr.mxu0 %v1686
    %1748 = vmatpush1.msra.mxu0 %v1685
    %1749 = vmatprep.subr.mxu0 %v1690
    %1750 = vmatpush1.msra.mxu0 %v1689
    %1751 = vmatprep.subr.mxu0 %v1694
    %1752 = vmatpush1.msra.mxu0 %v1693
    %1753 = vmatprep.subr.mxu0 %v1698
    %1754 = vmatpush1.msra.mxu0 %v1697
    %1755 = vmatprep.subr.mxu0 %v1702
    %1756 = vmatpush1.msra.mxu0 %v1701
    %1757 = vmatprep.subr.mxu0 %v1706
    %1758 = vmatpush1.msra.mxu0 %v1705
    %1759 = vmatprep.subr.mxu0 %v1710
    %1760 = vmatpush1.msra.mxu0 %v1709
    %1761 = vmatprep.subr.mxu0 %v1714
    %1762 = vmatpush1.msra.mxu0 %v1713
    %1763 = vmatprep.subr.mxu0 %v1718
    %1764 = vmatpush1.msra.mxu0 %v1717
    %1765 = vmatprep.subr.mxu0 %v1722
    %1766 = vmatpush1.msra.mxu0 %v1721
    %1767 = vmatprep.subr.mxu0 %v1726
    %1768 = vmatpush1.msra.mxu0 %v1725
    %1769 = vmatprep.subr.mxu0 %v1730
    %1770 = vmatpush1.msra.mxu0 %v1729
    %1771 = vmatprep.subr.mxu0 %v1734
    %1772 = vmatpush1.msra.mxu0 %v1733
    %1773 = vmatprep.subr.mxu0 %v1738
    %1774 = vmatpush1.msra.mxu0 %v1737
    %1775 = vmatprep.subr.mxu0 %v1742
    %1776 = vmatpush1.msra.mxu0 %v1741
    %1777 = vmatprep.subr.mxu0 0.0
    %1778 = vmatpush1.msra.mxu0 0.0
    %1779 = vmatprep.subr.mxu0 0.0
    %1780 = vmatpush1.msra.mxu0 0.0
    %1781 = vmatprep.subr.mxu0 0.0
    %1782 = vmatpush1.msra.mxu0 0.0
    %1783 = vmatprep.subr.mxu0 0.0
    %1784 = vmatpush1.msra.mxu0 0.0
    %1785 = vmatprep.subr.mxu0 0.0
    %1786 = vmatpush1.msra.mxu0 0.0
    %1787 = vmatprep.subr.mxu0 0.0
    %1788 = vmatpush1.msra.mxu0 0.0
    %1789 = vmatprep.subr.mxu0 0.0
    %1790 = vmatpush1.msra.mxu0 0.0
    %1791 = vmatprep.subr.mxu0 0.0
    %1792 = vmatpush1.msra.mxu0 0.0
    %1793 = vmatprep.subr.mxu0 0.0
    %1794 = vmatpush1.msra.mxu0 0.0
    %1795 = vmatprep.subr.mxu0 0.0
    %1796 = vmatpush1.msra.mxu0 0.0
    %1797 = vmatprep.subr.mxu0 0.0
    %1798 = vmatpush1.msra.mxu0 0.0
    %1799 = vmatprep.subr.mxu0 0.0
    %1800 = vmatpush1.msra.mxu0 0.0
    %1801 = vmatprep.subr.mxu0 0.0
    %1802 = vmatpush1.msra.mxu0 0.0
    %1803 = vmatprep.subr.mxu0 0.0
    %1804 = vmatpush1.msra.mxu0 0.0
    %1805 = vmatprep.subr.mxu0 0.0
    %1806 = vmatpush1.msra.mxu0 0.0
    %1807 = vmatprep.subr.mxu0 0.0
    %1808 = vmatpush1.msra.mxu0 0.0
    %1809 = vmatprep.mubr.f32.mxu0 0.0
    %1810 = vmatmul.mubr.f32.gmra.mrb[0].mxu0 %v1675
    %v1811 = vpop.f32.mrb[0].mxu0
    %v1812 = vadd.f32 0.0, %v1811
    %v1813 = vpop.f32.mrb[0].mxu0
    %v1814 = vadd.f32 0.0, %v1813
    %1815 = vdwg.mxu0
    %1816 = vmatprep.subr.mxu0 %v1684
    %1817 = vmatpush1.msra.mxu0 %v1683
    %1818 = vmatprep.subr.mxu0 %v1688
    %1819 = vmatpush1.msra.mxu0 %v1687
    %1820 = vmatprep.subr.mxu0 %v1692
    %1821 = vmatpush1.msra.mxu0 %v1691
    %1822 = vmatprep.subr.mxu0 %v1696
    %1823 = vmatpush1.msra.mxu0 %v1695
    %1824 = vmatprep.subr.mxu0 %v1700
    %1825 = vmatpush1.msra.mxu0 %v1699
    %1826 = vmatprep.subr.mxu0 %v1704
    %1827 = vmatpush1.msra.mxu0 %v1703
    %1828 = vmatprep.subr.mxu0 %v1708
    %1829 = vmatpush1.msra.mxu0 %v1707
    %1830 = vmatprep.subr.mxu0 %v1712
    %1831 = vmatpush1.msra.mxu0 %v1711
    %1832 = vmatprep.subr.mxu0 %v1716
    %1833 = vmatpush1.msra.mxu0 %v1715
    %1834 = vmatprep.subr.mxu0 %v1720
    %1835 = vmatpush1.msra.mxu0 %v1719
    %1836 = vmatprep.subr.mxu0 %v1724
    %1837 = vmatpush1.msra.mxu0 %v1723
    %1838 = vmatprep.subr.mxu0 %v1728
    %1839 = vmatpush1.msra.mxu0 %v1727
    %1840 = vmatprep.subr.mxu0 %v1732
    %1841 = vmatpush1.msra.mxu0 %v1731
    %1842 = vmatprep.subr.mxu0 %v1736
    %1843 = vmatpush1.msra.mxu0 %v1735
    %1844 = vmatprep.subr.mxu0 %v1740
    %1845 = vmatpush1.msra.mxu0 %v1739
    %1846 = vmatprep.subr.mxu0 %v1744
    %1847 = vmatpush1.msra.mxu0 %v1743
    %1848 = vmatprep.subr.mxu0 0.0
    %1849 = vmatpush1.msra.mxu0 0.0
    %1850 = vmatprep.subr.mxu0 0.0
    %1851 = vmatpush1.msra.mxu0 0.0
    %1852 = vmatprep.subr.mxu0 0.0
    %1853 = vmatpush1.msra.mxu0 0.0
    %1854 = vmatprep.subr.mxu0 0.0
    %1855 = vmatpush1.msra.mxu0 0.0
    %1856 = vmatprep.subr.mxu0 0.0
    %1857 = vmatpush1.msra.mxu0 0.0
    %1858 = vmatprep.subr.mxu0 0.0
    %1859 = vmatpush1.msra.mxu0 0.0
    %1860 = vmatprep.subr.mxu0 0.0
    %1861 = vmatpush1.msra.mxu0 0.0
    %1862 = vmatprep.subr.mxu0 0.0
    %1863 = vmatpush1.msra.mxu0 0.0
    %1864 = vmatprep.subr.mxu0 0.0
    %1865 = vmatpush1.msra.mxu0 0.0
    %1866 = vmatprep.subr.mxu0 0.0
    %1867 = vmatpush1.msra.mxu0 0.0
    %1868 = vmatprep.subr.mxu0 0.0
    %1869 = vmatpush1.msra.mxu0 0.0
    %1870 = vmatprep.subr.mxu0 0.0
    %1871 = vmatpush1.msra.mxu0 0.0
    %1872 = vmatprep.subr.mxu0 0.0
    %1873 = vmatpush1.msra.mxu0 0.0
    %1874 = vmatprep.subr.mxu0 0.0
    %1875 = vmatpush1.msra.mxu0 0.0
    %1876 = vmatprep.subr.mxu0 0.0
    %1877 = vmatpush1.msra.mxu0 0.0
    %1878 = vmatprep.subr.mxu0 0.0
    %1879 = vmatpush1.msra.mxu0 0.0
    %1880 = vmatprep.mubr.f32.mxu0 0.0
    %1881 = vmatmul.mubr.f32.gmra.mrb[0].mxu0 %v1675
    %v1882 = vpop.f32.mrb[0].mxu0
    %v1883 = vadd.f32 0.0, %v1882
    %v1884 = vpop.f32.mrb[0].mxu0
    %v1885 = vadd.f32 0.0, %v1884
    %1886 = vdwg.mxu0
    %v1887 = vadd.f32 %v1677, %v1812
    %v1888 = vadd.f32 %v1678, %v1814
    %v1889 = vadd.f32 %v1679, %v1883
    %v1890 = vadd.f32 %v1680, %v1885
    %v1891 = vmul.f32 %v1887, 0.5
    %v1892 = vtanh.pop %v1891
    %v1893 = vadd.f32 %v1892, 1.0
    %v1894 = vmul.f32 %v1893, 0.5
    %v1895 = vmul.f32 %v1888, 0.5
    %v1896 = vtanh.pop %v1895
    %v1897 = vadd.f32 %v1896, 1.0
    %v1898 = vmul.f32 %v1897, 0.5
    %v1899 = vtanh.pop %v1889
    %v1900 = vmul.f32 %v1890, 0.5
    %v1901 = vtanh.pop %v1900
    %v1902 = vadd.f32 %v1901, 1.0
    %v1903 = vmul.f32 %v1902, 0.5
    %v1904 = vmul.f32 %v1898, %v1673
    %v1905 = vmul.f32 %v1894, %v1899
    %v1906 = vadd.f32 %v1904, %v1905
    %v1907 = vtanh.pop %v1906
    %v1908 = vmul.f32 %v1903, %v1907
    %1909 = vst [vmem:[#allocation3 + $0x28] sm:$0xff] %v1908
    %v1910 = vld [vmem:[#allocation2 + $0xc0] sm:$0xff]
    %v1911 = vld [vmem:[#allocation2 + $0xc8] sm:$0xff]
    %v1912 = vld [vmem:[#allocation2 + $0xd0] sm:$0xff]
    %v1913 = vld [vmem:[#allocation2 + $0xd8] sm:$0xff]
    %v1914 = vld [vmem:[#allocation9] sm:$0xff]
    %v1915 = vld [vmem:[#allocation9 + $0x8] sm:$0xff]
    %v1916 = vld [vmem:[#allocation9 + $0x10] sm:$0xff]
    %v1917 = vld [vmem:[#allocation9 + $0x18] sm:$0xff]
    %v1918 = vld [vmem:[#allocation9 + $0x20] sm:$0xff]
    %v1919 = vld [vmem:[#allocation9 + $0x28] sm:$0xff]
    %v1920 = vld [vmem:[#allocation9 + $0x30] sm:$0xff]
    %v1921 = vld [vmem:[#allocation9 + $0x38] sm:$0xff]
    %v1922 = vld [vmem:[#allocation9 + $0x40] sm:$0xff]
    %v1923 = vld [vmem:[#allocation9 + $0x48] sm:$0xff]
    %v1924 = vld [vmem:[#allocation9 + $0x50] sm:$0xff]
    %v1925 = vld [vmem:[#allocation9 + $0x58] sm:$0xff]
    %v1926 = vld [vmem:[#allocation9 + $0x60] sm:$0xff]
    %v1927 = vld [vmem:[#allocation9 + $0x68] sm:$0xff]
    %v1928 = vld [vmem:[#allocation9 + $0x70] sm:$0xff]
    %v1929 = vld [vmem:[#allocation9 + $0x78] sm:$0xff]
    %v1930 = vld [vmem:[#allocation9 + $0x80] sm:$0xff]
    %v1931 = vld [vmem:[#allocation9 + $0x88] sm:$0xff]
    %v1932 = vld [vmem:[#allocation9 + $0x90] sm:$0xff]
    %v1933 = vld [vmem:[#allocation9 + $0x98] sm:$0xff]
    %v1934 = vld [vmem:[#allocation9 + $0xa0] sm:$0xff]
    %v1935 = vld [vmem:[#allocation9 + $0xa8] sm:$0xff]
    %v1936 = vld [vmem:[#allocation9 + $0xb0] sm:$0xff]
    %v1937 = vld [vmem:[#allocation9 + $0xb8] sm:$0xff]
    %v1938 = vld [vmem:[#allocation9 + $0xc0] sm:$0xff]
    %v1939 = vld [vmem:[#allocation9 + $0xc8] sm:$0xff]
    %v1940 = vld [vmem:[#allocation9 + $0xd0] sm:$0xff]
    %v1941 = vld [vmem:[#allocation9 + $0xd8] sm:$0xff]
    %v1942 = vld [vmem:[#allocation9 + $0xe0] sm:$0xff]
    %v1943 = vld [vmem:[#allocation9 + $0xe8] sm:$0xff]
    %v1944 = vld [vmem:[#allocation9 + $0xf0] sm:$0xff]
    %v1945 = vld [vmem:[#allocation9 + $0xf8] sm:$0xff]
    %v1946 = vld [vmem:[#allocation9 + $0x100] sm:$0xff]
    %v1947 = vld [vmem:[#allocation9 + $0x108] sm:$0xff]
    %v1948 = vld [vmem:[#allocation9 + $0x110] sm:$0xff]
    %v1949 = vld [vmem:[#allocation9 + $0x118] sm:$0xff]
    %v1950 = vld [vmem:[#allocation9 + $0x120] sm:$0xff]
    %v1951 = vld [vmem:[#allocation9 + $0x128] sm:$0xff]
    %v1952 = vld [vmem:[#allocation9 + $0x130] sm:$0xff]
    %v1953 = vld [vmem:[#allocation9 + $0x138] sm:$0xff]
    %v1954 = vld [vmem:[#allocation9 + $0x140] sm:$0xff]
    %v1955 = vld [vmem:[#allocation9 + $0x148] sm:$0xff]
    %v1956 = vld [vmem:[#allocation9 + $0x150] sm:$0xff]
    %v1957 = vld [vmem:[#allocation9 + $0x158] sm:$0xff]
    %v1958 = vld [vmem:[#allocation9 + $0x160] sm:$0xff]
    %v1959 = vld [vmem:[#allocation9 + $0x168] sm:$0xff]
    %v1960 = vld [vmem:[#allocation9 + $0x170] sm:$0xff]
    %v1961 = vld [vmem:[#allocation9 + $0x178] sm:$0xff]
    %v1962 = vld [vmem:[#allocation9 + $0x180] sm:$0xff]
    %v1963 = vld [vmem:[#allocation9 + $0x188] sm:$0xff]
    %v1964 = vld [vmem:[#allocation9 + $0x190] sm:$0xff]
    %v1965 = vld [vmem:[#allocation9 + $0x198] sm:$0xff]
    %v1966 = vld [vmem:[#allocation9 + $0x1a0] sm:$0xff]
    %v1967 = vld [vmem:[#allocation9 + $0x1a8] sm:$0xff]
    %v1968 = vld [vmem:[#allocation9 + $0x1b0] sm:$0xff]
    %v1969 = vld [vmem:[#allocation9 + $0x1b8] sm:$0xff]
    %v1970 = vld [vmem:[#allocation9 + $0x1c0] sm:$0xff]
    %v1971 = vld [vmem:[#allocation9 + $0x1c8] sm:$0xff]
    %v1972 = vld [vmem:[#allocation9 + $0x1d0] sm:$0xff]
    %v1973 = vld [vmem:[#allocation9 + $0x1d8] sm:$0xff]
    %v1974 = vld [vmem:[#allocation9 + $0x1e0] sm:$0xff]
    %v1975 = vld [vmem:[#allocation9 + $0x1e8] sm:$0xff]
    %v1976 = vld [vmem:[#allocation9 + $0x1f0] sm:$0xff]
    %v1977 = vld [vmem:[#allocation9 + $0x1f8] sm:$0xff]
    %1978 = vmatprep.subr.mxu0 %v1915
    %1979 = vmatpush1.msra.mxu0 %v1914
    %1980 = vmatprep.subr.mxu0 %v1919
    %1981 = vmatpush1.msra.mxu0 %v1918
    %1982 = vmatprep.subr.mxu0 %v1923
    %1983 = vmatpush1.msra.mxu0 %v1922
    %1984 = vmatprep.subr.mxu0 %v1927
    %1985 = vmatpush1.msra.mxu0 %v1926
    %1986 = vmatprep.subr.mxu0 %v1931
    %1987 = vmatpush1.msra.mxu0 %v1930
    %1988 = vmatprep.subr.mxu0 %v1935
    %1989 = vmatpush1.msra.mxu0 %v1934
    %1990 = vmatprep.subr.mxu0 %v1939
    %1991 = vmatpush1.msra.mxu0 %v1938
    %1992 = vmatprep.subr.mxu0 %v1943
    %1993 = vmatpush1.msra.mxu0 %v1942
    %1994 = vmatprep.subr.mxu0 %v1947
    %1995 = vmatpush1.msra.mxu0 %v1946
    %1996 = vmatprep.subr.mxu0 %v1951
    %1997 = vmatpush1.msra.mxu0 %v1950
    %1998 = vmatprep.subr.mxu0 %v1955
    %1999 = vmatpush1.msra.mxu0 %v1954
    %2000 = vmatprep.subr.mxu0 %v1959
    %2001 = vmatpush1.msra.mxu0 %v1958
    %2002 = vmatprep.subr.mxu0 %v1963
    %2003 = vmatpush1.msra.mxu0 %v1962
    %2004 = vmatprep.subr.mxu0 %v1967
    %2005 = vmatpush1.msra.mxu0 %v1966
    %2006 = vmatprep.subr.mxu0 %v1971
    %2007 = vmatpush1.msra.mxu0 %v1970
    %2008 = vmatprep.subr.mxu0 %v1975
    %2009 = vmatpush1.msra.mxu0 %v1974
    %2010 = vmatprep.subr.mxu0 0.0
    %2011 = vmatpush1.msra.mxu0 0.0
    %2012 = vmatprep.subr.mxu0 0.0
    %2013 = vmatpush1.msra.mxu0 0.0
    %2014 = vmatprep.subr.mxu0 0.0
    %2015 = vmatpush1.msra.mxu0 0.0
    %2016 = vmatprep.subr.mxu0 0.0
    %2017 = vmatpush1.msra.mxu0 0.0
    %2018 = vmatprep.subr.mxu0 0.0
    %2019 = vmatpush1.msra.mxu0 0.0
    %2020 = vmatprep.subr.mxu0 0.0
    %2021 = vmatpush1.msra.mxu0 0.0
    %2022 = vmatprep.subr.mxu0 0.0
    %2023 = vmatpush1.msra.mxu0 0.0
    %2024 = vmatprep.subr.mxu0 0.0
    %2025 = vmatpush1.msra.mxu0 0.0
    %2026 = vmatprep.subr.mxu0 0.0
    %2027 = vmatpush1.msra.mxu0 0.0
    %2028 = vmatprep.subr.mxu0 0.0
    %2029 = vmatpush1.msra.mxu0 0.0
    %2030 = vmatprep.subr.mxu0 0.0
    %2031 = vmatpush1.msra.mxu0 0.0
    %2032 = vmatprep.subr.mxu0 0.0
    %2033 = vmatpush1.msra.mxu0 0.0
    %2034 = vmatprep.subr.mxu0 0.0
    %2035 = vmatpush1.msra.mxu0 0.0
    %2036 = vmatprep.subr.mxu0 0.0
    %2037 = vmatpush1.msra.mxu0 0.0
    %2038 = vmatprep.subr.mxu0 0.0
    %2039 = vmatpush1.msra.mxu0 0.0
    %2040 = vmatprep.subr.mxu0 0.0
    %2041 = vmatpush1.msra.mxu0 0.0
    %2042 = vmatprep.mubr.f32.mxu0 0.0
    %2043 = vmatmul.mubr.f32.gmra.mrb[0].mxu0 %v1908
    %v2044 = vpop.f32.mrb[0].mxu0
    %v2045 = vadd.f32 0.0, %v2044
    %v2046 = vpop.f32.mrb[0].mxu0
    %v2047 = vadd.f32 0.0, %v2046
    %2048 = vdwg.mxu0
    %2049 = vmatprep.subr.mxu0 %v1917
    %2050 = vmatpush1.msra.mxu0 %v1916
    %2051 = vmatprep.subr.mxu0 %v1921
    %2052 = vmatpush1.msra.mxu0 %v1920
    %2053 = vmatprep.subr.mxu0 %v1925
    %2054 = vmatpush1.msra.mxu0 %v1924
    %2055 = vmatprep.subr.mxu0 %v1929
    %2056 = vmatpush1.msra.mxu0 %v1928
    %2057 = vmatprep.subr.mxu0 %v1933
    %2058 = vmatpush1.msra.mxu0 %v1932
    %2059 = vmatprep.subr.mxu0 %v1937
    %2060 = vmatpush1.msra.mxu0 %v1936
    %2061 = vmatprep.subr.mxu0 %v1941
    %2062 = vmatpush1.msra.mxu0 %v1940
    %2063 = vmatprep.subr.mxu0 %v1945
    %2064 = vmatpush1.msra.mxu0 %v1944
    %2065 = vmatprep.subr.mxu0 %v1949
    %2066 = vmatpush1.msra.mxu0 %v1948
    %2067 = vmatprep.subr.mxu0 %v1953
    %2068 = vmatpush1.msra.mxu0 %v1952
    %2069 = vmatprep.subr.mxu0 %v1957
    %2070 = vmatpush1.msra.mxu0 %v1956
    %2071 = vmatprep.subr.mxu0 %v1961
    %2072 = vmatpush1.msra.mxu0 %v1960
    %2073 = vmatprep.subr.mxu0 %v1965
    %2074 = vmatpush1.msra.mxu0 %v1964
    %2075 = vmatprep.subr.mxu0 %v1969
    %2076 = vmatpush1.msra.mxu0 %v1968
    %2077 = vmatprep.subr.mxu0 %v1973
    %2078 = vmatpush1.msra.mxu0 %v1972
    %2079 = vmatprep.subr.mxu0 %v1977
    %2080 = vmatpush1.msra.mxu0 %v1976
    %2081 = vmatprep.subr.mxu0 0.0
    %2082 = vmatpush1.msra.mxu0 0.0
    %2083 = vmatprep.subr.mxu0 0.0
    %2084 = vmatpush1.msra.mxu0 0.0
    %2085 = vmatprep.subr.mxu0 0.0
    %2086 = vmatpush1.msra.mxu0 0.0
    %2087 = vmatprep.subr.mxu0 0.0
    %2088 = vmatpush1.msra.mxu0 0.0
    %2089 = vmatprep.subr.mxu0 0.0
    %2090 = vmatpush1.msra.mxu0 0.0
    %2091 = vmatprep.subr.mxu0 0.0
    %2092 = vmatpush1.msra.mxu0 0.0
    %2093 = vmatprep.subr.mxu0 0.0
    %2094 = vmatpush1.msra.mxu0 0.0
    %2095 = vmatprep.subr.mxu0 0.0
    %2096 = vmatpush1.msra.mxu0 0.0
    %2097 = vmatprep.subr.mxu0 0.0
    %2098 = vmatpush1.msra.mxu0 0.0
    %2099 = vmatprep.subr.mxu0 0.0
    %2100 = vmatpush1.msra.mxu0 0.0
    %2101 = vmatprep.subr.mxu0 0.0
    %2102 = vmatpush1.msra.mxu0 0.0
    %2103 = vmatprep.subr.mxu0 0.0
    %2104 = vmatpush1.msra.mxu0 0.0
    %2105 = vmatprep.subr.mxu0 0.0
    %2106 = vmatpush1.msra.mxu0 0.0
    %2107 = vmatprep.subr.mxu0 0.0
    %2108 = vmatpush1.msra.mxu0 0.0
    %2109 = vmatprep.subr.mxu0 0.0
    %2110 = vmatpush1.msra.mxu0 0.0
    %2111 = vmatprep.subr.mxu0 0.0
    %2112 = vmatpush1.msra.mxu0 0.0
    %2113 = vmatprep.mubr.f32.mxu0 0.0
    %2114 = vmatmul.mubr.f32.gmra.mrb[0].mxu0 %v1908
    %v2115 = vpop.f32.mrb[0].mxu0
    %v2116 = vadd.f32 0.0, %v2115
    %v2117 = vpop.f32.mrb[0].mxu0
    %v2118 = vadd.f32 0.0, %v2117
    %2119 = vdwg.mxu0
    %v2120 = vadd.f32 %v1910, %v2045
    %v2121 = vadd.f32 %v1911, %v2047
    %v2122 = vadd.f32 %v1912, %v2116
    %v2123 = vadd.f32 %v1913, %v2118
    %v2124 = vmul.f32 %v2120, 0.5
    %v2125 = vtanh.pop %v2124
    %v2126 = vadd.f32 %v2125, 1.0
    %v2127 = vmul.f32 %v2126, 0.5
    %v2128 = vmul.f32 %v2121, 0.5
    %v2129 = vtanh.pop %v2128
    %v2130 = vadd.f32 %v2129, 1.0
    %v2131 = vmul.f32 %v2130, 0.5
    %v2132 = vtanh.pop %v2122
    %v2133 = vmul.f32 %v2123, 0.5
    %v2134 = vtanh.pop %v2133
    %v2135 = vadd.f32 %v2134, 1.0
    %v2136 = vmul.f32 %v2135, 0.5
    %v2137 = vmul.f32 %v2131, %v1906
    %v2138 = vmul.f32 %v2127, %v2132
    %v2139 = vadd.f32 %v2137, %v2138
    %v2140 = vtanh.pop %v2139
    %v2141 = vmul.f32 %v2136, %v2140
    %2142 = vst [vmem:[#allocation3 + $0x30] sm:$0xff] %v2141
    %v2143 = vld [vmem:[#allocation2 + $0xe0] sm:$0xff]
    %v2144 = vld [vmem:[#allocation2 + $0xe8] sm:$0xff]
    %v2145 = vld [vmem:[#allocation2 + $0xf0] sm:$0xff]
    %v2146 = vld [vmem:[#allocation2 + $0xf8] sm:$0xff]
    %v2147 = vld [vmem:[#allocation9] sm:$0xff]
    %v2148 = vld [vmem:[#allocation9 + $0x8] sm:$0xff]
    %v2149 = vld [vmem:[#allocation9 + $0x10] sm:$0xff]
    %v2150 = vld [vmem:[#allocation9 + $0x18] sm:$0xff]
    %v2151 = vld [vmem:[#allocation9 + $0x20] sm:$0xff]
    %v2152 = vld [vmem:[#allocation9 + $0x28] sm:$0xff]
    %v2153 = vld [vmem:[#allocation9 + $0x30] sm:$0xff]
    %v2154 = vld [vmem:[#allocation9 + $0x38] sm:$0xff]
    %v2155 = vld [vmem:[#allocation9 + $0x40] sm:$0xff]
    %v2156 = vld [vmem:[#allocation9 + $0x48] sm:$0xff]
    %v2157 = vld [vmem:[#allocation9 + $0x50] sm:$0xff]
    %v2158 = vld [vmem:[#allocation9 + $0x58] sm:$0xff]
    %v2159 = vld [vmem:[#allocation9 + $0x60] sm:$0xff]
    %v2160 = vld [vmem:[#allocation9 + $0x68] sm:$0xff]
    %v2161 = vld [vmem:[#allocation9 + $0x70] sm:$0xff]
    %v2162 = vld [vmem:[#allocation9 + $0x78] sm:$0xff]
    %v2163 = vld [vmem:[#allocation9 + $0x80] sm:$0xff]
    %v2164 = vld [vmem:[#allocation9 + $0x88] sm:$0xff]
    %v2165 = vld [vmem:[#allocation9 + $0x90] sm:$0xff]
    %v2166 = vld [vmem:[#allocation9 + $0x98] sm:$0xff]
    %v2167 = vld [vmem:[#allocation9 + $0xa0] sm:$0xff]
    %v2168 = vld [vmem:[#allocation9 + $0xa8] sm:$0xff]
    %v2169 = vld [vmem:[#allocation9 + $0xb0] sm:$0xff]
    %v2170 = vld [vmem:[#allocation9 + $0xb8] sm:$0xff]
    %v2171 = vld [vmem:[#allocation9 + $0xc0] sm:$0xff]
    %v2172 = vld [vmem:[#allocation9 + $0xc8] sm:$0xff]
    %v2173 = vld [vmem:[#allocation9 + $0xd0] sm:$0xff]
    %v2174 = vld [vmem:[#allocation9 + $0xd8] sm:$0xff]
    %v2175 = vld [vmem:[#allocation9 + $0xe0] sm:$0xff]
    %v2176 = vld [vmem:[#allocation9 + $0xe8] sm:$0xff]
    %v2177 = vld [vmem:[#allocation9 + $0xf0] sm:$0xff]
    %v2178 = vld [vmem:[#allocation9 + $0xf8] sm:$0xff]
    %v2179 = vld [vmem:[#allocation9 + $0x100] sm:$0xff]
    %v2180 = vld [vmem:[#allocation9 + $0x108] sm:$0xff]
    %v2181 = vld [vmem:[#allocation9 + $0x110] sm:$0xff]
    %v2182 = vld [vmem:[#allocation9 + $0x118] sm:$0xff]
    %v2183 = vld [vmem:[#allocation9 + $0x120] sm:$0xff]
    %v2184 = vld [vmem:[#allocation9 + $0x128] sm:$0xff]
    %v2185 = vld [vmem:[#allocation9 + $0x130] sm:$0xff]
    %v2186 = vld [vmem:[#allocation9 + $0x138] sm:$0xff]
    %v2187 = vld [vmem:[#allocation9 + $0x140] sm:$0xff]
    %v2188 = vld [vmem:[#allocation9 + $0x148] sm:$0xff]
    %v2189 = vld [vmem:[#allocation9 + $0x150] sm:$0xff]
    %v2190 = vld [vmem:[#allocation9 + $0x158] sm:$0xff]
    %v2191 = vld [vmem:[#allocation9 + $0x160] sm:$0xff]
    %v2192 = vld [vmem:[#allocation9 + $0x168] sm:$0xff]
    %v2193 = vld [vmem:[#allocation9 + $0x170] sm:$0xff]
    %v2194 = vld [vmem:[#allocation9 + $0x178] sm:$0xff]
    %v2195 = vld [vmem:[#allocation9 + $0x180] sm:$0xff]
    %v2196 = vld [vmem:[#allocation9 + $0x188] sm:$0xff]
    %v2197 = vld [vmem:[#allocation9 + $0x190] sm:$0xff]
    %v2198 = vld [vmem:[#allocation9 + $0x198] sm:$0xff]
    %v2199 = vld [vmem:[#allocation9 + $0x1a0] sm:$0xff]
    %v2200 = vld [vmem:[#allocation9 + $0x1a8] sm:$0xff]
    %v2201 = vld [vmem:[#allocation9 + $0x1b0] sm:$0xff]
    %v2202 = vld [vmem:[#allocation9 + $0x1b8] sm:$0xff]
    %v2203 = vld [vmem:[#allocation9 + $0x1c0] sm:$0xff]
    %v2204 = vld [vmem:[#allocation9 + $0x1c8] sm:$0xff]
    %v2205 = vld [vmem:[#allocation9 + $0x1d0] sm:$0xff]
    %v2206 = vld [vmem:[#allocation9 + $0x1d8] sm:$0xff]
    %v2207 = vld [vmem:[#allocation9 + $0x1e0] sm:$0xff]
    %v2208 = vld [vmem:[#allocation9 + $0x1e8] sm:$0xff]
    %v2209 = vld [vmem:[#allocation9 + $0x1f0] sm:$0xff]
    %v2210 = vld [vmem:[#allocation9 + $0x1f8] sm:$0xff]
    %2211 = vmatprep.subr.mxu0 %v2148
    %2212 = vmatpush1.msra.mxu0 %v2147
    %2213 = vmatprep.subr.mxu0 %v2152
    %2214 = vmatpush1.msra.mxu0 %v2151
    %2215 = vmatprep.subr.mxu0 %v2156
    %2216 = vmatpush1.msra.mxu0 %v2155
    %2217 = vmatprep.subr.mxu0 %v2160
    %2218 = vmatpush1.msra.mxu0 %v2159
    %2219 = vmatprep.subr.mxu0 %v2164
    %2220 = vmatpush1.msra.mxu0 %v2163
    %2221 = vmatprep.subr.mxu0 %v2168
    %2222 = vmatpush1.msra.mxu0 %v2167
    %2223 = vmatprep.subr.mxu0 %v2172
    %2224 = vmatpush1.msra.mxu0 %v2171
    %2225 = vmatprep.subr.mxu0 %v2176
    %2226 = vmatpush1.msra.mxu0 %v2175
    %2227 = vmatprep.subr.mxu0 %v2180
    %2228 = vmatpush1.msra.mxu0 %v2179
    %2229 = vmatprep.subr.mxu0 %v2184
    %2230 = vmatpush1.msra.mxu0 %v2183
    %2231 = vmatprep.subr.mxu0 %v2188
    %2232 = vmatpush1.msra.mxu0 %v2187
    %2233 = vmatprep.subr.mxu0 %v2192
    %2234 = vmatpush1.msra.mxu0 %v2191
    %2235 = vmatprep.subr.mxu0 %v2196
    %2236 = vmatpush1.msra.mxu0 %v2195
    %2237 = vmatprep.subr.mxu0 %v2200
    %2238 = vmatpush1.msra.mxu0 %v2199
    %2239 = vmatprep.subr.mxu0 %v2204
    %2240 = vmatpush1.msra.mxu0 %v2203
    %2241 = vmatprep.subr.mxu0 %v2208
    %2242 = vmatpush1.msra.mxu0 %v2207
    %2243 = vmatprep.subr.mxu0 0.0
    %2244 = vmatpush1.msra.mxu0 0.0
    %2245 = vmatprep.subr.mxu0 0.0
    %2246 = vmatpush1.msra.mxu0 0.0
    %2247 = vmatprep.subr.mxu0 0.0
    %2248 = vmatpush1.msra.mxu0 0.0
    %2249 = vmatprep.subr.mxu0 0.0
    %2250 = vmatpush1.msra.mxu0 0.0
    %2251 = vmatprep.subr.mxu0 0.0
    %2252 = vmatpush1.msra.mxu0 0.0
    %2253 = vmatprep.subr.mxu0 0.0
    %2254 = vmatpush1.msra.mxu0 0.0
    %2255 = vmatprep.subr.mxu0 0.0
    %2256 = vmatpush1.msra.mxu0 0.0
    %2257 = vmatprep.subr.mxu0 0.0
    %2258 = vmatpush1.msra.mxu0 0.0
    %2259 = vmatprep.subr.mxu0 0.0
    %2260 = vmatpush1.msra.mxu0 0.0
    %2261 = vmatprep.subr.mxu0 0.0
    %2262 = vmatpush1.msra.mxu0 0.0
    %2263 = vmatprep.subr.mxu0 0.0
    %2264 = vmatpush1.msra.mxu0 0.0
    %2265 = vmatprep.subr.mxu0 0.0
    %2266 = vmatpush1.msra.mxu0 0.0
    %2267 = vmatprep.subr.mxu0 0.0
    %2268 = vmatpush1.msra.mxu0 0.0
    %2269 = vmatprep.subr.mxu0 0.0
    %2270 = vmatpush1.msra.mxu0 0.0
    %2271 = vmatprep.subr.mxu0 0.0
    %2272 = vmatpush1.msra.mxu0 0.0
    %2273 = vmatprep.subr.mxu0 0.0
    %2274 = vmatpush1.msra.mxu0 0.0
    %2275 = vmatprep.mubr.f32.mxu0 0.0
    %2276 = vmatmul.mubr.f32.gmra.mrb[0].mxu0 %v2141
    %v2277 = vpop.f32.mrb[0].mxu0
    %v2278 = vadd.f32 0.0, %v2277
    %v2279 = vpop.f32.mrb[0].mxu0
    %v2280 = vadd.f32 0.0, %v2279
    %2281 = vdwg.mxu0
    %2282 = vmatprep.subr.mxu0 %v2150
    %2283 = vmatpush1.msra.mxu0 %v2149
    %2284 = vmatprep.subr.mxu0 %v2154
    %2285 = vmatpush1.msra.mxu0 %v2153
    %2286 = vmatprep.subr.mxu0 %v2158
    %2287 = vmatpush1.msra.mxu0 %v2157
    %2288 = vmatprep.subr.mxu0 %v2162
    %2289 = vmatpush1.msra.mxu0 %v2161
    %2290 = vmatprep.subr.mxu0 %v2166
    %2291 = vmatpush1.msra.mxu0 %v2165
    %2292 = vmatprep.subr.mxu0 %v2170
    %2293 = vmatpush1.msra.mxu0 %v2169
    %2294 = vmatprep.subr.mxu0 %v2174
    %2295 = vmatpush1.msra.mxu0 %v2173
    %2296 = vmatprep.subr.mxu0 %v2178
    %2297 = vmatpush1.msra.mxu0 %v2177
    %2298 = vmatprep.subr.mxu0 %v2182
    %2299 = vmatpush1.msra.mxu0 %v2181
    %2300 = vmatprep.subr.mxu0 %v2186
    %2301 = vmatpush1.msra.mxu0 %v2185
    %2302 = vmatprep.subr.mxu0 %v2190
    %2303 = vmatpush1.msra.mxu0 %v2189
    %2304 = vmatprep.subr.mxu0 %v2194
    %2305 = vmatpush1.msra.mxu0 %v2193
    %2306 = vmatprep.subr.mxu0 %v2198
    %2307 = vmatpush1.msra.mxu0 %v2197
    %2308 = vmatprep.subr.mxu0 %v2202
    %2309 = vmatpush1.msra.mxu0 %v2201
    %2310 = vmatprep.subr.mxu0 %v2206
    %2311 = vmatpush1.msra.mxu0 %v2205
    %2312 = vmatprep.subr.mxu0 %v2210
    %2313 = vmatpush1.msra.mxu0 %v2209
    %2314 = vmatprep.subr.mxu0 0.0
    %2315 = vmatpush1.msra.mxu0 0.0
    %2316 = vmatprep.subr.mxu0 0.0
    %2317 = vmatpush1.msra.mxu0 0.0
    %2318 = vmatprep.subr.mxu0 0.0
    %2319 = vmatpush1.msra.mxu0 0.0
    %2320 = vmatprep.subr.mxu0 0.0
    %2321 = vmatpush1.msra.mxu0 0.0
    %2322 = vmatprep.subr.mxu0 0.0
    %2323 = vmatpush1.msra.mxu0 0.0
    %2324 = vmatprep.subr.mxu0 0.0
    %2325 = vmatpush1.msra.mxu0 0.0
    %2326 = vmatprep.subr.mxu0 0.0
    %2327 = vmatpush1.msra.mxu0 0.0
    %2328 = vmatprep.subr.mxu0 0.0
    %2329 = vmatpush1.msra.mxu0 0.0
    %2330 = vmatprep.subr.mxu0 0.0
    %2331 = vmatpush1.msra.mxu0 0.0
    %2332 = vmatprep.subr.mxu0 0.0
    %2333 = vmatpush1.msra.mxu0 0.0
    %2334 = vmatprep.subr.mxu0 0.0
    %2335 = vmatpush1.msra.mxu0 0.0
    %2336 = vmatprep.subr.mxu0 0.0
    %2337 = vmatpush1.msra.mxu0 0.0
    %2338 = vmatprep.subr.mxu0 0.0
    %2339 = vmatpush1.msra.mxu0 0.0
    %2340 = vmatprep.subr.mxu0 0.0
    %2341 = vmatpush1.msra.mxu0 0.0
    %2342 = vmatprep.subr.mxu0 0.0
    %2343 = vmatpush1.msra.mxu0 0.0
    %2344 = vmatprep.subr.mxu0 0.0
    %2345 = vmatpush1.msra.mxu0 0.0
    %2346 = vmatprep.mubr.f32.mxu0 0.0
    %2347 = vmatmul.mubr.f32.gmra.mrb[0].mxu0 %v2141
    %v2348 = vpop.f32.mrb[0].mxu0
    %v2349 = vadd.f32 0.0, %v2348
    %v2350 = vpop.f32.mrb[0].mxu0
    %v2351 = vadd.f32 0.0, %v2350
    %2352 = vdwg.mxu0
    %v2353 = vadd.f32 %v2143, %v2278
    %v2354 = vadd.f32 %v2144, %v2280
    %v2355 = vadd.f32 %v2145, %v2349
    %v2356 = vadd.f32 %v2146, %v2351
    %v2357 = vmul.f32 %v2353, 0.5
    %v2358 = vtanh.pop %v2357
    %v2359 = vadd.f32 %v2358, 1.0
    %v2360 = vmul.f32 %v2359, 0.5
    %v2361 = vmul.f32 %v2354, 0.5
    %v2362 = vtanh.pop %v2361
    %v2363 = vadd.f32 %v2362, 1.0
    %v2364 = vmul.f32 %v2363, 0.5
    %v2365 = vtanh.pop %v2355
    %v2366 = vmul.f32 %v2356, 0.5
    %v2367 = vtanh.pop %v2366
    %v2368 = vadd.f32 %v2367, 1.0
    %v2369 = vmul.f32 %v2368, 0.5
    %v2370 = vmul.f32 %v2364, %v2139
    %v2371 = vmul.f32 %v2360, %v2365
    %v2372 = vadd.f32 %v2370, %v2371
    %v2373 = vtanh.pop %v2372
    %v2374 = vmul.f32 %v2369, %v2373
    %2375 = vst [vmem:[#allocation3 + $0x38] sm:$0xff] %v2374
    %v2376 = vld [vmem:[#allocation3] sm:$0xff]
    %v2377 = vld [vmem:[#allocation3 + $0x8] sm:$0xff]
    %v2378 = vld [vmem:[#allocation3 + $0x10] sm:$0xff]
    %v2379 = vld [vmem:[#allocation3 + $0x18] sm:$0xff]
    %v2380 = vld [vmem:[#allocation3 + $0x20] sm:$0xff]
    %v2381 = vld [vmem:[#allocation3 + $0x28] sm:$0xff]
    %v2382 = vld [vmem:[#allocation3 + $0x30] sm:$0xff]
    %v2383 = vld [vmem:[#allocation3 + $0x38] sm:$0xff]
    %s2384 = scalar_lea.vmem [#allocation7], 512
    %v2385 = vld [vmem:[%s2384] sm:$0xff]
    %v2386 = vld [vmem:[%s2384 + $0x8] sm:$0xff]
    %v2387 = vld [vmem:[%s2384 + $0x10] sm:$0xff]
    %v2388 = vld [vmem:[%s2384 + $0x18] sm:$0xff]
    %v2389 = vld [vmem:[%s2384 + $0x20] sm:$0xff]
    %v2390 = vld [vmem:[%s2384 + $0x28] sm:$0xff]
    %v2391 = vld [vmem:[%s2384 + $0x30] sm:$0xff]
    %v2392 = vld [vmem:[%s2384 + $0x38] sm:$0xff]
    %v2393 = vld [vmem:[%s2384 + $0x40] sm:$0xff]
    %v2394 = vld [vmem:[%s2384 + $0x48] sm:$0xff]
    %v2395 = vld [vmem:[%s2384 + $0x50] sm:$0xff]
    %v2396 = vld [vmem:[%s2384 + $0x58] sm:$0xff]
    %v2397 = vld [vmem:[%s2384 + $0x60] sm:$0xff]
    %v2398 = vld [vmem:[%s2384 + $0x68] sm:$0xff]
    %v2399 = vld [vmem:[%s2384 + $0x70] sm:$0xff]
    %v2400 = vld [vmem:[%s2384 + $0x78] sm:$0xff]
    %v2401 = vld [vmem:[%s2384 + $0x80] sm:$0xff]
    %v2402 = vld [vmem:[%s2384 + $0x88] sm:$0xff]
    %v2403 = vld [vmem:[%s2384 + $0x90] sm:$0xff]
    %v2404 = vld [vmem:[%s2384 + $0x98] sm:$0xff]
    %v2405 = vld [vmem:[%s2384 + $0xa0] sm:$0xff]
    %v2406 = vld [vmem:[%s2384 + $0xa8] sm:$0xff]
    %v2407 = vld [vmem:[%s2384 + $0xb0] sm:$0xff]
    %v2408 = vld [vmem:[%s2384 + $0xb8] sm:$0xff]
    %v2409 = vld [vmem:[%s2384 + $0xc0] sm:$0xff]
    %v2410 = vld [vmem:[%s2384 + $0xc8] sm:$0xff]
    %v2411 = vld [vmem:[%s2384 + $0xd0] sm:$0xff]
    %v2412 = vld [vmem:[%s2384 + $0xd8] sm:$0xff]
    %v2413 = vld [vmem:[%s2384 + $0xe0] sm:$0xff]
    %v2414 = vld [vmem:[%s2384 + $0xe8] sm:$0xff]
    %v2415 = vld [vmem:[%s2384 + $0xf0] sm:$0xff]
    %v2416 = vld [vmem:[%s2384 + $0xf8] sm:$0xff]
    %v2417 = vld [vmem:[%s2384 + $0x100] sm:$0xff]
    %v2418 = vld [vmem:[%s2384 + $0x108] sm:$0xff]
    %v2419 = vld [vmem:[%s2384 + $0x110] sm:$0xff]
    %v2420 = vld [vmem:[%s2384 + $0x118] sm:$0xff]
    %v2421 = vld [vmem:[%s2384 + $0x120] sm:$0xff]
    %v2422 = vld [vmem:[%s2384 + $0x128] sm:$0xff]
    %v2423 = vld [vmem:[%s2384 + $0x130] sm:$0xff]
    %v2424 = vld [vmem:[%s2384 + $0x138] sm:$0xff]
    %v2425 = vld [vmem:[%s2384 + $0x140] sm:$0xff]
    %v2426 = vld [vmem:[%s2384 + $0x148] sm:$0xff]
    %v2427 = vld [vmem:[%s2384 + $0x150] sm:$0xff]
    %v2428 = vld [vmem:[%s2384 + $0x158] sm:$0xff]
    %v2429 = vld [vmem:[%s2384 + $0x160] sm:$0xff]
    %v2430 = vld [vmem:[%s2384 + $0x168] sm:$0xff]
    %v2431 = vld [vmem:[%s2384 + $0x170] sm:$0xff]
    %v2432 = vld [vmem:[%s2384 + $0x178] sm:$0xff]
    %v2433 = vld [vmem:[%s2384 + $0x180] sm:$0xff]
    %v2434 = vld [vmem:[%s2384 + $0x188] sm:$0xff]
    %v2435 = vld [vmem:[%s2384 + $0x190] sm:$0xff]
    %v2436 = vld [vmem:[%s2384 + $0x198] sm:$0xff]
    %v2437 = vld [vmem:[%s2384 + $0x1a0] sm:$0xff]
    %v2438 = vld [vmem:[%s2384 + $0x1a8] sm:$0xff]
    %v2439 = vld [vmem:[%s2384 + $0x1b0] sm:$0xff]
    %v2440 = vld [vmem:[%s2384 + $0x1b8] sm:$0xff]
    %v2441 = vld [vmem:[%s2384 + $0x1c0] sm:$0xff]
    %v2442 = vld [vmem:[%s2384 + $0x1c8] sm:$0xff]
    %v2443 = vld [vmem:[%s2384 + $0x1d0] sm:$0xff]
    %v2444 = vld [vmem:[%s2384 + $0x1d8] sm:$0xff]
    %v2445 = vld [vmem:[%s2384 + $0x1e0] sm:$0xff]
    %v2446 = vld [vmem:[%s2384 + $0x1e8] sm:$0xff]
    %v2447 = vld [vmem:[%s2384 + $0x1f0] sm:$0xff]
    %v2448 = vld [vmem:[%s2384 + $0x1f8] sm:$0xff]
    %s2449 = scalar_lea.vmem [#allocation10], 4
    %v2450 = vld [vmem:[%s2449] sm:$0xf]
    %v2452 = vlaneseq
    %v2453 = vshrl.u32 %v2452, 7
    %v2454 = vsub.s32 0, %v2453
    %v2455 = vrot.slane %v2450, %v2454
    %v2456 = vlaneseq
    %v2457 = vshrl.u32 %v2456, 7
    %v2458 = vsub.s32 1, %v2457
    %v2459 = vrot.slane %v2450, %v2458
    %v2460 = vlaneseq
    %v2461 = vshrl.u32 %v2460, 7
    %v2462 = vsub.s32 2, %v2461
    %v2463 = vrot.slane %v2450, %v2462
    %v2464 = vlaneseq
    %v2465 = vshrl.u32 %v2464, 7
    %v2466 = vsub.s32 3, %v2465
    %v2467 = vrot.slane %v2450, %v2466
    %2472 = vmatprep.subr.mxu0 %v2386
    %2473 = vmatpush1.msra.mxu0 %v2385
    %2474 = vmatprep.subr.mxu0 %v2390
    %2475 = vmatpush1.msra.mxu0 %v2389
    %2476 = vmatprep.subr.mxu0 %v2394
    %2477 = vmatpush1.msra.mxu0 %v2393
    %2478 = vmatprep.subr.mxu0 %v2398
    %2479 = vmatpush1.msra.mxu0 %v2397
    %2480 = vmatprep.subr.mxu0 %v2402
    %2481 = vmatpush1.msra.mxu0 %v2401
    %2482 = vmatprep.subr.mxu0 %v2406
    %2483 = vmatpush1.msra.mxu0 %v2405
    %2484 = vmatprep.subr.mxu0 %v2410
    %2485 = vmatpush1.msra.mxu0 %v2409
    %2486 = vmatprep.subr.mxu0 %v2414
    %2487 = vmatpush1.msra.mxu0 %v2413
    %2488 = vmatprep.subr.mxu0 %v2418
    %2489 = vmatpush1.msra.mxu0 %v2417
    %2490 = vmatprep.subr.mxu0 %v2422
    %2491 = vmatpush1.msra.mxu0 %v2421
    %2492 = vmatprep.subr.mxu0 %v2426
    %2493 = vmatpush1.msra.mxu0 %v2425
    %2494 = vmatprep.subr.mxu0 %v2430
    %2495 = vmatpush1.msra.mxu0 %v2429
    %2496 = vmatprep.subr.mxu0 %v2434
    %2497 = vmatpush1.msra.mxu0 %v2433
    %2498 = vmatprep.subr.mxu0 %v2438
    %2499 = vmatpush1.msra.mxu0 %v2437
    %2500 = vmatprep.subr.mxu0 %v2442
    %2501 = vmatpush1.msra.mxu0 %v2441
    %2502 = vmatprep.subr.mxu0 %v2446
    %2503 = vmatpush1.msra.mxu0 %v2445
    %2504 = vmatprep.subr.mxu0 0.0
    %2505 = vmatpush1.msra.mxu0 0.0
    %2506 = vmatprep.subr.mxu0 0.0
    %2507 = vmatpush1.msra.mxu0 0.0
    %2508 = vmatprep.subr.mxu0 0.0
    %2509 = vmatpush1.msra.mxu0 0.0
    %2510 = vmatprep.subr.mxu0 0.0
    %2511 = vmatpush1.msra.mxu0 0.0
    %2512 = vmatprep.subr.mxu0 0.0
    %2513 = vmatpush1.msra.mxu0 0.0
    %2514 = vmatprep.subr.mxu0 0.0
    %2515 = vmatpush1.msra.mxu0 0.0
    %2516 = vmatprep.subr.mxu0 0.0
    %2517 = vmatpush1.msra.mxu0 0.0
    %2518 = vmatprep.subr.mxu0 0.0
    %2519 = vmatpush1.msra.mxu0 0.0
    %2520 = vmatprep.subr.mxu0 0.0
    %2521 = vmatpush1.msra.mxu0 0.0
    %2522 = vmatprep.subr.mxu0 0.0
    %2523 = vmatpush1.msra.mxu0 0.0
    %2524 = vmatprep.subr.mxu0 0.0
    %2525 = vmatpush1.msra.mxu0 0.0
    %2526 = vmatprep.subr.mxu0 0.0
    %2527 = vmatpush1.msra.mxu0 0.0
    %2528 = vmatprep.subr.mxu0 0.0
    %2529 = vmatpush1.msra.mxu0 0.0
    %2530 = vmatprep.subr.mxu0 0.0
    %2531 = vmatpush1.msra.mxu0 0.0
    %2532 = vmatprep.subr.mxu0 0.0
    %2533 = vmatpush1.msra.mxu0 0.0
    %2534 = vmatprep.subr.mxu0 0.0
    %2535 = vmatpush1.msra.mxu0 0.0
    %2536 = vmatprep.mubr.f32.mxu0 0.0
    %2537 = vmatmul.mubr.f32.gmra.mrb[0].mxu0 %v2376
    %v2538 = vpop.f32.mrb[0].mxu0
    %v2539 = vadd.f32 %v2455, %v2538
    %v2540 = vpop.f32.mrb[0].mxu0
    %v2541 = vadd.f32 %v2459, %v2540
    %2542 = vmatprep.mubr.f32.mxu0 0.0
    %2543 = vmatmul.mubr.f32.gmra.mrb[0].mxu0 %v2377
    %v2544 = vpop.f32.mrb[0].mxu0
    %v2545 = vadd.f32 %v2455, %v2544
    %v2546 = vpop.f32.mrb[0].mxu0
    %v2547 = vadd.f32 %v2459, %v2546
    %2548 = vmatprep.mubr.f32.mxu0 0.0
    %2549 = vmatmul.mubr.f32.gmra.mrb[0].mxu0 %v2378
    %v2550 = vpop.f32.mrb[0].mxu0
    %v2551 = vadd.f32 %v2455, %v2550
    %v2552 = vpop.f32.mrb[0].mxu0
    %v2553 = vadd.f32 %v2459, %v2552
    %2554 = vmatprep.mubr.f32.mxu0 0.0
    %2555 = vmatmul.mubr.f32.gmra.mrb[0].mxu0 %v2379
    %v2556 = vpop.f32.mrb[0].mxu0
    %v2557 = vadd.f32 %v2455, %v2556
    %v2558 = vpop.f32.mrb[0].mxu0
    %v2559 = vadd.f32 %v2459, %v2558
    %2560 = vmatprep.mubr.f32.mxu0 0.0
    %2561 = vmatmul.mubr.f32.gmra.mrb[0].mxu0 %v2380
    %v2562 = vpop.f32.mrb[0].mxu0
    %v2563 = vadd.f32 %v2455, %v2562
    %v2564 = vpop.f32.mrb[0].mxu0
    %v2565 = vadd.f32 %v2459, %v2564
    %2566 = vmatprep.mubr.f32.mxu0 0.0
    %2567 = vmatmul.mubr.f32.gmra.mrb[0].mxu0 %v2381
    %v2568 = vpop.f32.mrb[0].mxu0
    %v2569 = vadd.f32 %v2455, %v2568
    %v2570 = vpop.f32.mrb[0].mxu0
    %v2571 = vadd.f32 %v2459, %v2570
    %2572 = vmatprep.mubr.f32.mxu0 0.0
    %2573 = vmatmul.mubr.f32.gmra.mrb[0].mxu0 %v2382
    %v2574 = vpop.f32.mrb[0].mxu0
    %v2575 = vadd.f32 %v2455, %v2574
    %v2576 = vpop.f32.mrb[0].mxu0
    %v2577 = vadd.f32 %v2459, %v2576
    %2578 = vmatprep.mubr.f32.mxu0 0.0
    %2579 = vmatmul.mubr.f32.gmra.mrb[0].mxu0 %v2383
    %v2580 = vpop.f32.mrb[0].mxu0
    %v2581 = vadd.f32 %v2455, %v2580
    %v2582 = vpop.f32.mrb[0].mxu0
    %v2583 = vadd.f32 %v2459, %v2582
    %2584 = vdwg.mxu0
    %2585 = vmatprep.subr.mxu0 %v2388
    %2586 = vmatpush1.msra.mxu0 %v2387
    %2587 = vmatprep.subr.mxu0 %v2392
    %2588 = vmatpush1.msra.mxu0 %v2391
    %2589 = vmatprep.subr.mxu0 %v2396
    %2590 = vmatpush1.msra.mxu0 %v2395
    %2591 = vmatprep.subr.mxu0 %v2400
    %2592 = vmatpush1.msra.mxu0 %v2399
    %2593 = vmatprep.subr.mxu0 %v2404
    %2594 = vmatpush1.msra.mxu0 %v2403
    %2595 = vmatprep.subr.mxu0 %v2408
    %2596 = vmatpush1.msra.mxu0 %v2407
    %2597 = vmatprep.subr.mxu0 %v2412
    %2598 = vmatpush1.msra.mxu0 %v2411
    %2599 = vmatprep.subr.mxu0 %v2416
    %2600 = vmatpush1.msra.mxu0 %v2415
    %2601 = vmatprep.subr.mxu0 %v2420
    %2602 = vmatpush1.msra.mxu0 %v2419
    %2603 = vmatprep.subr.mxu0 %v2424
    %2604 = vmatpush1.msra.mxu0 %v2423
    %2605 = vmatprep.subr.mxu0 %v2428
    %2606 = vmatpush1.msra.mxu0 %v2427
    %2607 = vmatprep.subr.mxu0 %v2432
    %2608 = vmatpush1.msra.mxu0 %v2431
    %2609 = vmatprep.subr.mxu0 %v2436
    %2610 = vmatpush1.msra.mxu0 %v2435
    %2611 = vmatprep.subr.mxu0 %v2440
    %2612 = vmatpush1.msra.mxu0 %v2439
    %2613 = vmatprep.subr.mxu0 %v2444
    %2614 = vmatpush1.msra.mxu0 %v2443
    %2615 = vmatprep.subr.mxu0 %v2448
    %2616 = vmatpush1.msra.mxu0 %v2447
    %2617 = vmatprep.subr.mxu0 0.0
    %2618 = vmatpush1.msra.mxu0 0.0
    %2619 = vmatprep.subr.mxu0 0.0
    %2620 = vmatpush1.msra.mxu0 0.0
    %2621 = vmatprep.subr.mxu0 0.0
    %2622 = vmatpush1.msra.mxu0 0.0
    %2623 = vmatprep.subr.mxu0 0.0
    %2624 = vmatpush1.msra.mxu0 0.0
    %2625 = vmatprep.subr.mxu0 0.0
    %2626 = vmatpush1.msra.mxu0 0.0
    %2627 = vmatprep.subr.mxu0 0.0
    %2628 = vmatpush1.msra.mxu0 0.0
    %2629 = vmatprep.subr.mxu0 0.0
    %2630 = vmatpush1.msra.mxu0 0.0
    %2631 = vmatprep.subr.mxu0 0.0
    %2632 = vmatpush1.msra.mxu0 0.0
    %2633 = vmatprep.subr.mxu0 0.0
    %2634 = vmatpush1.msra.mxu0 0.0
    %2635 = vmatprep.subr.mxu0 0.0
    %2636 = vmatpush1.msra.mxu0 0.0
    %2637 = vmatprep.subr.mxu0 0.0
    %2638 = vmatpush1.msra.mxu0 0.0
    %2639 = vmatprep.subr.mxu0 0.0
    %2640 = vmatpush1.msra.mxu0 0.0
    %2641 = vmatprep.subr.mxu0 0.0
    %2642 = vmatpush1.msra.mxu0 0.0
    %2643 = vmatprep.subr.mxu0 0.0
    %2644 = vmatpush1.msra.mxu0 0.0
    %2645 = vmatprep.subr.mxu0 0.0
    %2646 = vmatpush1.msra.mxu0 0.0
    %2647 = vmatprep.subr.mxu0 0.0
    %2648 = vmatpush1.msra.mxu0 0.0
    %2649 = vmatprep.mubr.f32.mxu0 0.0
    %2650 = vmatmul.mubr.f32.gmra.mrb[0].mxu0 %v2376
    %v2651 = vpop.f32.mrb[0].mxu0
    %v2652 = vadd.f32 %v2463, %v2651
    %v2653 = vpop.f32.mrb[0].mxu0
    %v2654 = vadd.f32 %v2467, %v2653
    %2655 = vmatprep.mubr.f32.mxu0 0.0
    %2656 = vmatmul.mubr.f32.gmra.mrb[0].mxu0 %v2377
    %v2657 = vpop.f32.mrb[0].mxu0
    %v2658 = vadd.f32 %v2463, %v2657
    %v2659 = vpop.f32.mrb[0].mxu0
    %v2660 = vadd.f32 %v2467, %v2659
    %2661 = vmatprep.mubr.f32.mxu0 0.0
    %2662 = vmatmul.mubr.f32.gmra.mrb[0].mxu0 %v2378
    %v2663 = vpop.f32.mrb[0].mxu0
    %v2664 = vadd.f32 %v2463, %v2663
    %v2665 = vpop.f32.mrb[0].mxu0
    %v2666 = vadd.f32 %v2467, %v2665
    %2667 = vmatprep.mubr.f32.mxu0 0.0
    %2668 = vmatmul.mubr.f32.gmra.mrb[0].mxu0 %v2379
    %v2669 = vpop.f32.mrb[0].mxu0
    %v2670 = vadd.f32 %v2463, %v2669
    %v2671 = vpop.f32.mrb[0].mxu0
    %v2672 = vadd.f32 %v2467, %v2671
    %2673 = vmatprep.mubr.f32.mxu0 0.0
    %2674 = vmatmul.mubr.f32.gmra.mrb[0].mxu0 %v2380
    %v2675 = vpop.f32.mrb[0].mxu0
    %v2676 = vadd.f32 %v2463, %v2675
    %v2677 = vpop.f32.mrb[0].mxu0
    %v2678 = vadd.f32 %v2467, %v2677
    %2679 = vmatprep.mubr.f32.mxu0 0.0
    %2680 = vmatmul.mubr.f32.gmra.mrb[0].mxu0 %v2381
    %v2681 = vpop.f32.mrb[0].mxu0
    %v2682 = vadd.f32 %v2463, %v2681
    %v2683 = vpop.f32.mrb[0].mxu0
    %v2684 = vadd.f32 %v2467, %v2683
    %2685 = vmatprep.mubr.f32.mxu0 0.0
    %2686 = vmatmul.mubr.f32.gmra.mrb[0].mxu0 %v2382
    %v2687 = vpop.f32.mrb[0].mxu0
    %v2688 = vadd.f32 %v2463, %v2687
    %v2689 = vpop.f32.mrb[0].mxu0
    %v2690 = vadd.f32 %v2467, %v2689
    %2691 = vmatprep.mubr.f32.mxu0 0.0
    %2692 = vmatmul.mubr.f32.gmra.mrb[0].mxu0 %v2383
    %v2693 = vpop.f32.mrb[0].mxu0
    %v2694 = vadd.f32 %v2463, %v2693
    %v2695 = vpop.f32.mrb[0].mxu0
    %v2696 = vadd.f32 %v2467, %v2695
    %2697 = vdwg.mxu0
    %2698 = vst [vmem:[#allocation2] sm:$0xff] %v2539
    %2699 = vst [vmem:[#allocation2 + $0x8] sm:$0xff] %v2541
    %2700 = vst [vmem:[#allocation2 + $0x10] sm:$0xff] %v2652
    %2701 = vst [vmem:[#allocation2 + $0x18] sm:$0xff] %v2654
    %2702 = vst [vmem:[#allocation2 + $0x20] sm:$0xff] %v2545
    %2703 = vst [vmem:[#allocation2 + $0x28] sm:$0xff] %v2547
    %2704 = vst [vmem:[#allocation2 + $0x30] sm:$0xff] %v2658
    %2705 = vst [vmem:[#allocation2 + $0x38] sm:$0xff] %v2660
    %2706 = vst [vmem:[#allocation2 + $0x40] sm:$0xff] %v2551
    %2707 = vst [vmem:[#allocation2 + $0x48] sm:$0xff] %v2553
    %2708 = vst [vmem:[#allocation2 + $0x50] sm:$0xff] %v2664
    %2709 = vst [vmem:[#allocation2 + $0x58] sm:$0xff] %v2666
    %2710 = vst [vmem:[#allocation2 + $0x60] sm:$0xff] %v2557
    %2711 = vst [vmem:[#allocation2 + $0x68] sm:$0xff] %v2559
    %2712 = vst [vmem:[#allocation2 + $0x70] sm:$0xff] %v2670
    %2713 = vst [vmem:[#allocation2 + $0x78] sm:$0xff] %v2672
    %2714 = vst [vmem:[#allocation2 + $0x80] sm:$0xff] %v2563
    %2715 = vst [vmem:[#allocation2 + $0x88] sm:$0xff] %v2565
    %2716 = vst [vmem:[#allocation2 + $0x90] sm:$0xff] %v2676
    %2717 = vst [vmem:[#allocation2 + $0x98] sm:$0xff] %v2678
    %2718 = vst [vmem:[#allocation2 + $0xa0] sm:$0xff] %v2569
    %2719 = vst [vmem:[#allocation2 + $0xa8] sm:$0xff] %v2571
    %2720 = vst [vmem:[#allocation2 + $0xb0] sm:$0xff] %v2682
    %2721 = vst [vmem:[#allocation2 + $0xb8] sm:$0xff] %v2684
    %2722 = vst [vmem:[#allocation2 + $0xc0] sm:$0xff] %v2575
    %2723 = vst [vmem:[#allocation2 + $0xc8] sm:$0xff] %v2577
    %2724 = vst [vmem:[#allocation2 + $0xd0] sm:$0xff] %v2688
    %2725 = vst [vmem:[#allocation2 + $0xd8] sm:$0xff] %v2690
    %2726 = vst [vmem:[#allocation2 + $0xe0] sm:$0xff] %v2581
    %2727 = vst [vmem:[#allocation2 + $0xe8] sm:$0xff] %v2583
    %2728 = vst [vmem:[#allocation2 + $0xf0] sm:$0xff] %v2694
    %2729 = vst [vmem:[#allocation2 + $0xf8] sm:$0xff] %v2696
    %v2730 = vld [vmem:[#allocation2] sm:$0xff]
    %v2731 = vld [vmem:[#allocation2 + $0x8] sm:$0xff]
    %v2732 = vld [vmem:[#allocation2 + $0x10] sm:$0xff]
    %v2733 = vld [vmem:[#allocation2 + $0x18] sm:$0xff]
    %s2734 = scalar_lea.vmem [#allocation9], 512
    %v2735 = vld [vmem:[%s2734] sm:$0xff]
    %v2736 = vld [vmem:[%s2734 + $0x8] sm:$0xff]
    %v2737 = vld [vmem:[%s2734 + $0x10] sm:$0xff]
    %v2738 = vld [vmem:[%s2734 + $0x18] sm:$0xff]
    %v2739 = vld [vmem:[%s2734 + $0x20] sm:$0xff]
    %v2740 = vld [vmem:[%s2734 + $0x28] sm:$0xff]
    %v2741 = vld [vmem:[%s2734 + $0x30] sm:$0xff]
    %v2742 = vld [vmem:[%s2734 + $0x38] sm:$0xff]
    %v2743 = vld [vmem:[%s2734 + $0x40] sm:$0xff]
    %v2744 = vld [vmem:[%s2734 + $0x48] sm:$0xff]
    %v2745 = vld [vmem:[%s2734 + $0x50] sm:$0xff]
    %v2746 = vld [vmem:[%s2734 + $0x58] sm:$0xff]
    %v2747 = vld [vmem:[%s2734 + $0x60] sm:$0xff]
    %v2748 = vld [vmem:[%s2734 + $0x68] sm:$0xff]
    %v2749 = vld [vmem:[%s2734 + $0x70] sm:$0xff]
    %v2750 = vld [vmem:[%s2734 + $0x78] sm:$0xff]
    %v2751 = vld [vmem:[%s2734 + $0x80] sm:$0xff]
    %v2752 = vld [vmem:[%s2734 + $0x88] sm:$0xff]
    %v2753 = vld [vmem:[%s2734 + $0x90] sm:$0xff]
    %v2754 = vld [vmem:[%s2734 + $0x98] sm:$0xff]
    %v2755 = vld [vmem:[%s2734 + $0xa0] sm:$0xff]
    %v2756 = vld [vmem:[%s2734 + $0xa8] sm:$0xff]
    %v2757 = vld [vmem:[%s2734 + $0xb0] sm:$0xff]
    %v2758 = vld [vmem:[%s2734 + $0xb8] sm:$0xff]
    %v2759 = vld [vmem:[%s2734 + $0xc0] sm:$0xff]
    %v2760 = vld [vmem:[%s2734 + $0xc8] sm:$0xff]
    %v2761 = vld [vmem:[%s2734 + $0xd0] sm:$0xff]
    %v2762 = vld [vmem:[%s2734 + $0xd8] sm:$0xff]
    %v2763 = vld [vmem:[%s2734 + $0xe0] sm:$0xff]
    %v2764 = vld [vmem:[%s2734 + $0xe8] sm:$0xff]
    %v2765 = vld [vmem:[%s2734 + $0xf0] sm:$0xff]
    %v2766 = vld [vmem:[%s2734 + $0xf8] sm:$0xff]
    %v2767 = vld [vmem:[%s2734 + $0x100] sm:$0xff]
    %v2768 = vld [vmem:[%s2734 + $0x108] sm:$0xff]
    %v2769 = vld [vmem:[%s2734 + $0x110] sm:$0xff]
    %v2770 = vld [vmem:[%s2734 + $0x118] sm:$0xff]
    %v2771 = vld [vmem:[%s2734 + $0x120] sm:$0xff]
    %v2772 = vld [vmem:[%s2734 + $0x128] sm:$0xff]
    %v2773 = vld [vmem:[%s2734 + $0x130] sm:$0xff]
    %v2774 = vld [vmem:[%s2734 + $0x138] sm:$0xff]
    %v2775 = vld [vmem:[%s2734 + $0x140] sm:$0xff]
    %v2776 = vld [vmem:[%s2734 + $0x148] sm:$0xff]
    %v2777 = vld [vmem:[%s2734 + $0x150] sm:$0xff]
    %v2778 = vld [vmem:[%s2734 + $0x158] sm:$0xff]
    %v2779 = vld [vmem:[%s2734 + $0x160] sm:$0xff]
    %v2780 = vld [vmem:[%s2734 + $0x168] sm:$0xff]
    %v2781 = vld [vmem:[%s2734 + $0x170] sm:$0xff]
    %v2782 = vld [vmem:[%s2734 + $0x178] sm:$0xff]
    %v2783 = vld [vmem:[%s2734 + $0x180] sm:$0xff]
    %v2784 = vld [vmem:[%s2734 + $0x188] sm:$0xff]
    %v2785 = vld [vmem:[%s2734 + $0x190] sm:$0xff]
    %v2786 = vld [vmem:[%s2734 + $0x198] sm:$0xff]
    %v2787 = vld [vmem:[%s2734 + $0x1a0] sm:$0xff]
    %v2788 = vld [vmem:[%s2734 + $0x1a8] sm:$0xff]
    %v2789 = vld [vmem:[%s2734 + $0x1b0] sm:$0xff]
    %v2790 = vld [vmem:[%s2734 + $0x1b8] sm:$0xff]
    %v2791 = vld [vmem:[%s2734 + $0x1c0] sm:$0xff]
    %v2792 = vld [vmem:[%s2734 + $0x1c8] sm:$0xff]
    %v2793 = vld [vmem:[%s2734 + $0x1d0] sm:$0xff]
    %v2794 = vld [vmem:[%s2734 + $0x1d8] sm:$0xff]
    %v2795 = vld [vmem:[%s2734 + $0x1e0] sm:$0xff]
    %v2796 = vld [vmem:[%s2734 + $0x1e8] sm:$0xff]
    %v2797 = vld [vmem:[%s2734 + $0x1f0] sm:$0xff]
    %v2798 = vld [vmem:[%s2734 + $0x1f8] sm:$0xff]
    %2799 = vmatprep.subr.mxu0 %v2736
    %2800 = vmatpush1.msra.mxu0 %v2735
    %2801 = vmatprep.subr.mxu0 %v2740
    %2802 = vmatpush1.msra.mxu0 %v2739
    %2803 = vmatprep.subr.mxu0 %v2744
    %2804 = vmatpush1.msra.mxu0 %v2743
    %2805 = vmatprep.subr.mxu0 %v2748
    %2806 = vmatpush1.msra.mxu0 %v2747
    %2807 = vmatprep.subr.mxu0 %v2752
    %2808 = vmatpush1.msra.mxu0 %v2751
    %2809 = vmatprep.subr.mxu0 %v2756
    %2810 = vmatpush1.msra.mxu0 %v2755
    %2811 = vmatprep.subr.mxu0 %v2760
    %2812 = vmatpush1.msra.mxu0 %v2759
    %2813 = vmatprep.subr.mxu0 %v2764
    %2814 = vmatpush1.msra.mxu0 %v2763
    %2815 = vmatprep.subr.mxu0 %v2768
    %2816 = vmatpush1.msra.mxu0 %v2767
    %2817 = vmatprep.subr.mxu0 %v2772
    %2818 = vmatpush1.msra.mxu0 %v2771
    %2819 = vmatprep.subr.mxu0 %v2776
    %2820 = vmatpush1.msra.mxu0 %v2775
    %2821 = vmatprep.subr.mxu0 %v2780
    %2822 = vmatpush1.msra.mxu0 %v2779
    %2823 = vmatprep.subr.mxu0 %v2784
    %2824 = vmatpush1.msra.mxu0 %v2783
    %2825 = vmatprep.subr.mxu0 %v2788
    %2826 = vmatpush1.msra.mxu0 %v2787
    %2827 = vmatprep.subr.mxu0 %v2792
    %2828 = vmatpush1.msra.mxu0 %v2791
    %2829 = vmatprep.subr.mxu0 %v2796
    %2830 = vmatpush1.msra.mxu0 %v2795
    %2831 = vmatprep.subr.mxu0 0.0
    %2832 = vmatpush1.msra.mxu0 0.0
    %2833 = vmatprep.subr.mxu0 0.0
    %2834 = vmatpush1.msra.mxu0 0.0
    %2835 = vmatprep.subr.mxu0 0.0
    %2836 = vmatpush1.msra.mxu0 0.0
    %2837 = vmatprep.subr.mxu0 0.0
    %2838 = vmatpush1.msra.mxu0 0.0
    %2839 = vmatprep.subr.mxu0 0.0
    %2840 = vmatpush1.msra.mxu0 0.0
    %2841 = vmatprep.subr.mxu0 0.0
    %2842 = vmatpush1.msra.mxu0 0.0
    %2843 = vmatprep.subr.mxu0 0.0
    %2844 = vmatpush1.msra.mxu0 0.0
    %2845 = vmatprep.subr.mxu0 0.0
    %2846 = vmatpush1.msra.mxu0 0.0
    %2847 = vmatprep.subr.mxu0 0.0
    %2848 = vmatpush1.msra.mxu0 0.0
    %2849 = vmatprep.subr.mxu0 0.0
    %2850 = vmatpush1.msra.mxu0 0.0
    %2851 = vmatprep.subr.mxu0 0.0
    %2852 = vmatpush1.msra.mxu0 0.0
    %2853 = vmatprep.subr.mxu0 0.0
    %2854 = vmatpush1.msra.mxu0 0.0
    %2855 = vmatprep.subr.mxu0 0.0
    %2856 = vmatpush1.msra.mxu0 0.0
    %2857 = vmatprep.subr.mxu0 0.0
    %2858 = vmatpush1.msra.mxu0 0.0
    %2859 = vmatprep.subr.mxu0 0.0
    %2860 = vmatpush1.msra.mxu0 0.0
    %2861 = vmatprep.subr.mxu0 0.0
    %2862 = vmatpush1.msra.mxu0 0.0
    %2863 = vmatprep.mubr.f32.mxu0 0.0
    %2864 = vmatmul.mubr.f32.gmra.mrb[0].mxu0 0.0
    %v2865 = vpop.f32.mrb[0].mxu0
    %v2866 = vadd.f32 0.0, %v2865
    %v2867 = vpop.f32.mrb[0].mxu0
    %v2868 = vadd.f32 0.0, %v2867
    %2869 = vdwg.mxu0
    %2870 = vmatprep.subr.mxu0 %v2738
    %2871 = vmatpush1.msra.mxu0 %v2737
    %2872 = vmatprep.subr.mxu0 %v2742
    %2873 = vmatpush1.msra.mxu0 %v2741
    %2874 = vmatprep.subr.mxu0 %v2746
    %2875 = vmatpush1.msra.mxu0 %v2745
    %2876 = vmatprep.subr.mxu0 %v2750
    %2877 = vmatpush1.msra.mxu0 %v2749
    %2878 = vmatprep.subr.mxu0 %v2754
    %2879 = vmatpush1.msra.mxu0 %v2753
    %2880 = vmatprep.subr.mxu0 %v2758
    %2881 = vmatpush1.msra.mxu0 %v2757
    %2882 = vmatprep.subr.mxu0 %v2762
    %2883 = vmatpush1.msra.mxu0 %v2761
    %2884 = vmatprep.subr.mxu0 %v2766
    %2885 = vmatpush1.msra.mxu0 %v2765
    %2886 = vmatprep.subr.mxu0 %v2770
    %2887 = vmatpush1.msra.mxu0 %v2769
    %2888 = vmatprep.subr.mxu0 %v2774
    %2889 = vmatpush1.msra.mxu0 %v2773
    %2890 = vmatprep.subr.mxu0 %v2778
    %2891 = vmatpush1.msra.mxu0 %v2777
    %2892 = vmatprep.subr.mxu0 %v2782
    %2893 = vmatpush1.msra.mxu0 %v2781
    %2894 = vmatprep.subr.mxu0 %v2786
    %2895 = vmatpush1.msra.mxu0 %v2785
    %2896 = vmatprep.subr.mxu0 %v2790
    %2897 = vmatpush1.msra.mxu0 %v2789
    %2898 = vmatprep.subr.mxu0 %v2794
    %2899 = vmatpush1.msra.mxu0 %v2793
    %2900 = vmatprep.subr.mxu0 %v2798
    %2901 = vmatpush1.msra.mxu0 %v2797
    %2902 = vmatprep.subr.mxu0 0.0
    %2903 = vmatpush1.msra.mxu0 0.0
    %2904 = vmatprep.subr.mxu0 0.0
    %2905 = vmatpush1.msra.mxu0 0.0
    %2906 = vmatprep.subr.mxu0 0.0
    %2907 = vmatpush1.msra.mxu0 0.0
    %2908 = vmatprep.subr.mxu0 0.0
    %2909 = vmatpush1.msra.mxu0 0.0
    %2910 = vmatprep.subr.mxu0 0.0
    %2911 = vmatpush1.msra.mxu0 0.0
    %2912 = vmatprep.subr.mxu0 0.0
    %2913 = vmatpush1.msra.mxu0 0.0
    %2914 = vmatprep.subr.mxu0 0.0
    %2915 = vmatpush1.msra.mxu0 0.0
    %2916 = vmatprep.subr.mxu0 0.0
    %2917 = vmatpush1.msra.mxu0 0.0
    %2918 = vmatprep.subr.mxu0 0.0
    %2919 = vmatpush1.msra.mxu0 0.0
    %2920 = vmatprep.subr.mxu0 0.0
    %2921 = vmatpush1.msra.mxu0 0.0
    %2922 = vmatprep.subr.mxu0 0.0
    %2923 = vmatpush1.msra.mxu0 0.0
    %2924 = vmatprep.subr.mxu0 0.0
    %2925 = vmatpush1.msra.mxu0 0.0
    %2926 = vmatprep.subr.mxu0 0.0
    %2927 = vmatpush1.msra.mxu0 0.0
    %2928 = vmatprep.subr.mxu0 0.0
    %2929 = vmatpush1.msra.mxu0 0.0
    %2930 = vmatprep.subr.mxu0 0.0
    %2931 = vmatpush1.msra.mxu0 0.0
    %2932 = vmatprep.subr.mxu0 0.0
    %2933 = vmatpush1.msra.mxu0 0.0
    %2934 = vmatprep.mubr.f32.mxu0 0.0
    %2935 = vmatmul.mubr.f32.gmra.mrb[0].mxu0 0.0
    %v2936 = vpop.f32.mrb[0].mxu0
    %v2937 = vadd.f32 0.0, %v2936
    %v2938 = vpop.f32.mrb[0].mxu0
    %v2939 = vadd.f32 0.0, %v2938
    %2940 = vdwg.mxu0
    %v2941 = vadd.f32 %v2730, %v2866
    %v2942 = vadd.f32 %v2731, %v2868
    %v2943 = vadd.f32 %v2732, %v2937
    %v2944 = vadd.f32 %v2733, %v2939
    %v2945 = vmul.f32 %v2941, 0.5
    %v2946 = vtanh.pop %v2945
    %v2947 = vadd.f32 %v2946, 1.0
    %v2948 = vmul.f32 %v2947, 0.5
    %v2949 = vmul.f32 %v2942, 0.5
    %v2950 = vtanh.pop %v2949
    %v2951 = vadd.f32 %v2950, 1.0
    %v2952 = vmul.f32 %v2951, 0.5
    %v2953 = vtanh.pop %v2943
    %v2954 = vmul.f32 %v2944, 0.5
    %v2955 = vtanh.pop %v2954
    %v2956 = vadd.f32 %v2955, 1.0
    %v2957 = vmul.f32 %v2956, 0.5
    %v2958 = vmul.f32 %v2952, 0.0
    %v2959 = vmul.f32 %v2948, %v2953
    %v2960 = vadd.f32 %v2958, %v2959
    %v2961 = vtanh.pop %v2960
    %v2962 = vmul.f32 %v2957, %v2961
    %2963 = vst [vmem:[#allocation3] sm:$0xff] %v2962
    %v2964 = vld [vmem:[#allocation2 + $0x20] sm:$0xff]
    %v2965 = vld [vmem:[#allocation2 + $0x28] sm:$0xff]
    %v2966 = vld [vmem:[#allocation2 + $0x30] sm:$0xff]
    %v2967 = vld [vmem:[#allocation2 + $0x38] sm:$0xff]
    %v2968 = vld [vmem:[%s2734] sm:$0xff]
    %v2969 = vld [vmem:[%s2734 + $0x8] sm:$0xff]
    %v2970 = vld [vmem:[%s2734 + $0x10] sm:$0xff]
    %v2971 = vld [vmem:[%s2734 + $0x18] sm:$0xff]
    %v2972 = vld [vmem:[%s2734 + $0x20] sm:$0xff]
    %v2973 = vld [vmem:[%s2734 + $0x28] sm:$0xff]
    %v2974 = vld [vmem:[%s2734 + $0x30] sm:$0xff]
    %v2975 = vld [vmem:[%s2734 + $0x38] sm:$0xff]
    %v2976 = vld [vmem:[%s2734 + $0x40] sm:$0xff]
    %v2977 = vld [vmem:[%s2734 + $0x48] sm:$0xff]
    %v2978 = vld [vmem:[%s2734 + $0x50] sm:$0xff]
    %v2979 = vld [vmem:[%s2734 + $0x58] sm:$0xff]
    %v2980 = vld [vmem:[%s2734 + $0x60] sm:$0xff]
    %v2981 = vld [vmem:[%s2734 + $0x68] sm:$0xff]
    %v2982 = vld [vmem:[%s2734 + $0x70] sm:$0xff]
    %v2983 = vld [vmem:[%s2734 + $0x78] sm:$0xff]
    %v2984 = vld [vmem:[%s2734 + $0x80] sm:$0xff]
    %v2985 = vld [vmem:[%s2734 + $0x88] sm:$0xff]
    %v2986 = vld [vmem:[%s2734 + $0x90] sm:$0xff]
    %v2987 = vld [vmem:[%s2734 + $0x98] sm:$0xff]
    %v2988 = vld [vmem:[%s2734 + $0xa0] sm:$0xff]
    %v2989 = vld [vmem:[%s2734 + $0xa8] sm:$0xff]
    %v2990 = vld [vmem:[%s2734 + $0xb0] sm:$0xff]
    %v2991 = vld [vmem:[%s2734 + $0xb8] sm:$0xff]
    %v2992 = vld [vmem:[%s2734 + $0xc0] sm:$0xff]
    %v2993 = vld [vmem:[%s2734 + $0xc8] sm:$0xff]
    %v2994 = vld [vmem:[%s2734 + $0xd0] sm:$0xff]
    %v2995 = vld [vmem:[%s2734 + $0xd8] sm:$0xff]
    %v2996 = vld [vmem:[%s2734 + $0xe0] sm:$0xff]
    %v2997 = vld [vmem:[%s2734 + $0xe8] sm:$0xff]
    %v2998 = vld [vmem:[%s2734 + $0xf0] sm:$0xff]
    %v2999 = vld [vmem:[%s2734 + $0xf8] sm:$0xff]
    %v3000 = vld [vmem:[%s2734 + $0x100] sm:$0xff]
    %v3001 = vld [vmem:[%s2734 + $0x108] sm:$0xff]
    %v3002 = vld [vmem:[%s2734 + $0x110] sm:$0xff]
    %v3003 = vld [vmem:[%s2734 + $0x118] sm:$0xff]
    %v3004 = vld [vmem:[%s2734 + $0x120] sm:$0xff]
    %v3005 = vld [vmem:[%s2734 + $0x128] sm:$0xff]
    %v3006 = vld [vmem:[%s2734 + $0x130] sm:$0xff]
    %v3007 = vld [vmem:[%s2734 + $0x138] sm:$0xff]
    %v3008 = vld [vmem:[%s2734 + $0x140] sm:$0xff]
    %v3009 = vld [vmem:[%s2734 + $0x148] sm:$0xff]
    %v3010 = vld [vmem:[%s2734 + $0x150] sm:$0xff]
    %v3011 = vld [vmem:[%s2734 + $0x158] sm:$0xff]
    %v3012 = vld [vmem:[%s2734 + $0x160] sm:$0xff]
    %v3013 = vld [vmem:[%s2734 + $0x168] sm:$0xff]
    %v3014 = vld [vmem:[%s2734 + $0x170] sm:$0xff]
    %v3015 = vld [vmem:[%s2734 + $0x178] sm:$0xff]
    %v3016 = vld [vmem:[%s2734 + $0x180] sm:$0xff]
    %v3017 = vld [vmem:[%s2734 + $0x188] sm:$0xff]
    %v3018 = vld [vmem:[%s2734 + $0x190] sm:$0xff]
    %v3019 = vld [vmem:[%s2734 + $0x198] sm:$0xff]
    %v3020 = vld [vmem:[%s2734 + $0x1a0] sm:$0xff]
    %v3021 = vld [vmem:[%s2734 + $0x1a8] sm:$0xff]
    %v3022 = vld [vmem:[%s2734 + $0x1b0] sm:$0xff]
    %v3023 = vld [vmem:[%s2734 + $0x1b8] sm:$0xff]
    %v3024 = vld [vmem:[%s2734 + $0x1c0] sm:$0xff]
    %v3025 = vld [vmem:[%s2734 + $0x1c8] sm:$0xff]
    %v3026 = vld [vmem:[%s2734 + $0x1d0] sm:$0xff]
    %v3027 = vld [vmem:[%s2734 + $0x1d8] sm:$0xff]
    %v3028 = vld [vmem:[%s2734 + $0x1e0] sm:$0xff]
    %v3029 = vld [vmem:[%s2734 + $0x1e8] sm:$0xff]
    %v3030 = vld [vmem:[%s2734 + $0x1f0] sm:$0xff]
    %v3031 = vld [vmem:[%s2734 + $0x1f8] sm:$0xff]
    %3032 = vmatprep.subr.mxu0 %v2969
    %3033 = vmatpush1.msra.mxu0 %v2968
    %3034 = vmatprep.subr.mxu0 %v2973
    %3035 = vmatpush1.msra.mxu0 %v2972
    %3036 = vmatprep.subr.mxu0 %v2977
    %3037 = vmatpush1.msra.mxu0 %v2976
    %3038 = vmatprep.subr.mxu0 %v2981
    %3039 = vmatpush1.msra.mxu0 %v2980
    %3040 = vmatprep.subr.mxu0 %v2985
    %3041 = vmatpush1.msra.mxu0 %v2984
    %3042 = vmatprep.subr.mxu0 %v2989
    %3043 = vmatpush1.msra.mxu0 %v2988
    %3044 = vmatprep.subr.mxu0 %v2993
    %3045 = vmatpush1.msra.mxu0 %v2992
    %3046 = vmatprep.subr.mxu0 %v2997
    %3047 = vmatpush1.msra.mxu0 %v2996
    %3048 = vmatprep.subr.mxu0 %v3001
    %3049 = vmatpush1.msra.mxu0 %v3000
    %3050 = vmatprep.subr.mxu0 %v3005
    %3051 = vmatpush1.msra.mxu0 %v3004
    %3052 = vmatprep.subr.mxu0 %v3009
    %3053 = vmatpush1.msra.mxu0 %v3008
    %3054 = vmatprep.subr.mxu0 %v3013
    %3055 = vmatpush1.msra.mxu0 %v3012
    %3056 = vmatprep.subr.mxu0 %v3017
    %3057 = vmatpush1.msra.mxu0 %v3016
    %3058 = vmatprep.subr.mxu0 %v3021
    %3059 = vmatpush1.msra.mxu0 %v3020
    %3060 = vmatprep.subr.mxu0 %v3025
    %3061 = vmatpush1.msra.mxu0 %v3024
    %3062 = vmatprep.subr.mxu0 %v3029
    %3063 = vmatpush1.msra.mxu0 %v3028
    %3064 = vmatprep.subr.mxu0 0.0
    %3065 = vmatpush1.msra.mxu0 0.0
    %3066 = vmatprep.subr.mxu0 0.0
    %3067 = vmatpush1.msra.mxu0 0.0
    %3068 = vmatprep.subr.mxu0 0.0
    %3069 = vmatpush1.msra.mxu0 0.0
    %3070 = vmatprep.subr.mxu0 0.0
    %3071 = vmatpush1.msra.mxu0 0.0
    %3072 = vmatprep.subr.mxu0 0.0
    %3073 = vmatpush1.msra.mxu0 0.0
    %3074 = vmatprep.subr.mxu0 0.0
    %3075 = vmatpush1.msra.mxu0 0.0
    %3076 = vmatprep.subr.mxu0 0.0
    %3077 = vmatpush1.msra.mxu0 0.0
    %3078 = vmatprep.subr.mxu0 0.0
    %3079 = vmatpush1.msra.mxu0 0.0
    %3080 = vmatprep.subr.mxu0 0.0
    %3081 = vmatpush1.msra.mxu0 0.0
    %3082 = vmatprep.subr.mxu0 0.0
    %3083 = vmatpush1.msra.mxu0 0.0
    %3084 = vmatprep.subr.mxu0 0.0
    %3085 = vmatpush1.msra.mxu0 0.0
    %3086 = vmatprep.subr.mxu0 0.0
    %3087 = vmatpush1.msra.mxu0 0.0
    %3088 = vmatprep.subr.mxu0 0.0
    %3089 = vmatpush1.msra.mxu0 0.0
    %3090 = vmatprep.subr.mxu0 0.0
    %3091 = vmatpush1.msra.mxu0 0.0
    %3092 = vmatprep.subr.mxu0 0.0
    %3093 = vmatpush1.msra.mxu0 0.0
    %3094 = vmatprep.subr.mxu0 0.0
    %3095 = vmatpush1.msra.mxu0 0.0
    %3096 = vmatprep.mubr.f32.mxu0 0.0
    %3097 = vmatmul.mubr.f32.gmra.mrb[0].mxu0 %v2962
    %v3098 = vpop.f32.mrb[0].mxu0
    %v3099 = vadd.f32 0.0, %v3098
    %v3100 = vpop.f32.mrb[0].mxu0
    %v3101 = vadd.f32 0.0, %v3100
    %3102 = vdwg.mxu0
    %3103 = vmatprep.subr.mxu0 %v2971
    %3104 = vmatpush1.msra.mxu0 %v2970
    %3105 = vmatprep.subr.mxu0 %v2975
    %3106 = vmatpush1.msra.mxu0 %v2974
    %3107 = vmatprep.subr.mxu0 %v2979
    %3108 = vmatpush1.msra.mxu0 %v2978
    %3109 = vmatprep.subr.mxu0 %v2983
    %3110 = vmatpush1.msra.mxu0 %v2982
    %3111 = vmatprep.subr.mxu0 %v2987
    %3112 = vmatpush1.msra.mxu0 %v2986
    %3113 = vmatprep.subr.mxu0 %v2991
    %3114 = vmatpush1.msra.mxu0 %v2990
    %3115 = vmatprep.subr.mxu0 %v2995
    %3116 = vmatpush1.msra.mxu0 %v2994
    %3117 = vmatprep.subr.mxu0 %v2999
    %3118 = vmatpush1.msra.mxu0 %v2998
    %3119 = vmatprep.subr.mxu0 %v3003
    %3120 = vmatpush1.msra.mxu0 %v3002
    %3121 = vmatprep.subr.mxu0 %v3007
    %3122 = vmatpush1.msra.mxu0 %v3006
    %3123 = vmatprep.subr.mxu0 %v3011
    %3124 = vmatpush1.msra.mxu0 %v3010
    %3125 = vmatprep.subr.mxu0 %v3015
    %3126 = vmatpush1.msra.mxu0 %v3014
    %3127 = vmatprep.subr.mxu0 %v3019
    %3128 = vmatpush1.msra.mxu0 %v3018
    %3129 = vmatprep.subr.mxu0 %v3023
    %3130 = vmatpush1.msra.mxu0 %v3022
    %3131 = vmatprep.subr.mxu0 %v3027
    %3132 = vmatpush1.msra.mxu0 %v3026
    %3133 = vmatprep.subr.mxu0 %v3031
    %3134 = vmatpush1.msra.mxu0 %v3030
    %3135 = vmatprep.subr.mxu0 0.0
    %3136 = vmatpush1.msra.mxu0 0.0
    %3137 = vmatprep.subr.mxu0 0.0
    %3138 = vmatpush1.msra.mxu0 0.0
    %3139 = vmatprep.subr.mxu0 0.0
    %3140 = vmatpush1.msra.mxu0 0.0
    %3141 = vmatprep.subr.mxu0 0.0
    %3142 = vmatpush1.msra.mxu0 0.0
    %3143 = vmatprep.subr.mxu0 0.0
    %3144 = vmatpush1.msra.mxu0 0.0
    %3145 = vmatprep.subr.mxu0 0.0
    %3146 = vmatpush1.msra.mxu0 0.0
    %3147 = vmatprep.subr.mxu0 0.0
    %3148 = vmatpush1.msra.mxu0 0.0
    %3149 = vmatprep.subr.mxu0 0.0
    %3150 = vmatpush1.msra.mxu0 0.0
    %3151 = vmatprep.subr.mxu0 0.0
    %3152 = vmatpush1.msra.mxu0 0.0
    %3153 = vmatprep.subr.mxu0 0.0
    %3154 = vmatpush1.msra.mxu0 0.0
    %3155 = vmatprep.subr.mxu0 0.0
    %3156 = vmatpush1.msra.mxu0 0.0
    %3157 = vmatprep.subr.mxu0 0.0
    %3158 = vmatpush1.msra.mxu0 0.0
    %3159 = vmatprep.subr.mxu0 0.0
    %3160 = vmatpush1.msra.mxu0 0.0
    %3161 = vmatprep.subr.mxu0 0.0
    %3162 = vmatpush1.msra.mxu0 0.0
    %3163 = vmatprep.subr.mxu0 0.0
    %3164 = vmatpush1.msra.mxu0 0.0
    %3165 = vmatprep.subr.mxu0 0.0
    %3166 = vmatpush1.msra.mxu0 0.0
    %3167 = vmatprep.mubr.f32.mxu0 0.0
    %3168 = vmatmul.mubr.f32.gmra.mrb[0].mxu0 %v2962
    %v3169 = vpop.f32.mrb[0].mxu0
    %v3170 = vadd.f32 0.0, %v3169
    %v3171 = vpop.f32.mrb[0].mxu0
    %v3172 = vadd.f32 0.0, %v3171
    %3173 = vdwg.mxu0
    %v3174 = vadd.f32 %v2964, %v3099
    %v3175 = vadd.f32 %v2965, %v3101
    %v3176 = vadd.f32 %v2966, %v3170
    %v3177 = vadd.f32 %v2967, %v3172
    %v3178 = vmul.f32 %v3174, 0.5
    %v3179 = vtanh.pop %v3178
    %v3180 = vadd.f32 %v3179, 1.0
    %v3181 = vmul.f32 %v3180, 0.5
    %v3182 = vmul.f32 %v3175, 0.5
    %v3183 = vtanh.pop %v3182
    %v3184 = vadd.f32 %v3183, 1.0
    %v3185 = vmul.f32 %v3184, 0.5
    %v3186 = vtanh.pop %v3176
    %v3187 = vmul.f32 %v3177, 0.5
    %v3188 = vtanh.pop %v3187
    %v3189 = vadd.f32 %v3188, 1.0
    %v3190 = vmul.f32 %v3189, 0.5
    %v3191 = vmul.f32 %v3185, %v2960
    %v3192 = vmul.f32 %v3181, %v3186
    %v3193 = vadd.f32 %v3191, %v3192
    %v3194 = vtanh.pop %v3193
    %v3195 = vmul.f32 %v3190, %v3194
    %3196 = vst [vmem:[#allocation3 + $0x8] sm:$0xff] %v3195
    %v3197 = vld [vmem:[#allocation2 + $0x40] sm:$0xff]
    %v3198 = vld [vmem:[#allocation2 + $0x48] sm:$0xff]
    %v3199 = vld [vmem:[#allocation2 + $0x50] sm:$0xff]
    %v3200 = vld [vmem:[#allocation2 + $0x58] sm:$0xff]
    %v3201 = vld [vmem:[%s2734] sm:$0xff]
    %v3202 = vld [vmem:[%s2734 + $0x8] sm:$0xff]
    %v3203 = vld [vmem:[%s2734 + $0x10] sm:$0xff]
    %v3204 = vld [vmem:[%s2734 + $0x18] sm:$0xff]
    %v3205 = vld [vmem:[%s2734 + $0x20] sm:$0xff]
    %v3206 = vld [vmem:[%s2734 + $0x28] sm:$0xff]
    %v3207 = vld [vmem:[%s2734 + $0x30] sm:$0xff]
    %v3208 = vld [vmem:[%s2734 + $0x38] sm:$0xff]
    %v3209 = vld [vmem:[%s2734 + $0x40] sm:$0xff]
    %v3210 = vld [vmem:[%s2734 + $0x48] sm:$0xff]
    %v3211 = vld [vmem:[%s2734 + $0x50] sm:$0xff]
    %v3212 = vld [vmem:[%s2734 + $0x58] sm:$0xff]
    %v3213 = vld [vmem:[%s2734 + $0x60] sm:$0xff]
    %v3214 = vld [vmem:[%s2734 + $0x68] sm:$0xff]
    %v3215 = vld [vmem:[%s2734 + $0x70] sm:$0xff]
    %v3216 = vld [vmem:[%s2734 + $0x78] sm:$0xff]
    %v3217 = vld [vmem:[%s2734 + $0x80] sm:$0xff]
    %v3218 = vld [vmem:[%s2734 + $0x88] sm:$0xff]
    %v3219 = vld [vmem:[%s2734 + $0x90] sm:$0xff]
    %v3220 = vld [vmem:[%s2734 + $0x98] sm:$0xff]
    %v3221 = vld [vmem:[%s2734 + $0xa0] sm:$0xff]
    %v3222 = vld [vmem:[%s2734 + $0xa8] sm:$0xff]
    %v3223 = vld [vmem:[%s2734 + $0xb0] sm:$0xff]
    %v3224 = vld [vmem:[%s2734 + $0xb8] sm:$0xff]
    %v3225 = vld [vmem:[%s2734 + $0xc0] sm:$0xff]
    %v3226 = vld [vmem:[%s2734 + $0xc8] sm:$0xff]
    %v3227 = vld [vmem:[%s2734 + $0xd0] sm:$0xff]
    %v3228 = vld [vmem:[%s2734 + $0xd8] sm:$0xff]
    %v3229 = vld [vmem:[%s2734 + $0xe0] sm:$0xff]
    %v3230 = vld [vmem:[%s2734 + $0xe8] sm:$0xff]
    %v3231 = vld [vmem:[%s2734 + $0xf0] sm:$0xff]
    %v3232 = vld [vmem:[%s2734 + $0xf8] sm:$0xff]
    %v3233 = vld [vmem:[%s2734 + $0x100] sm:$0xff]
    %v3234 = vld [vmem:[%s2734 + $0x108] sm:$0xff]
    %v3235 = vld [vmem:[%s2734 + $0x110] sm:$0xff]
    %v3236 = vld [vmem:[%s2734 + $0x118] sm:$0xff]
    %v3237 = vld [vmem:[%s2734 + $0x120] sm:$0xff]
    %v3238 = vld [vmem:[%s2734 + $0x128] sm:$0xff]
    %v3239 = vld [vmem:[%s2734 + $0x130] sm:$0xff]
    %v3240 = vld [vmem:[%s2734 + $0x138] sm:$0xff]
    %v3241 = vld [vmem:[%s2734 + $0x140] sm:$0xff]
    %v3242 = vld [vmem:[%s2734 + $0x148] sm:$0xff]
    %v3243 = vld [vmem:[%s2734 + $0x150] sm:$0xff]
    %v3244 = vld [vmem:[%s2734 + $0x158] sm:$0xff]
    %v3245 = vld [vmem:[%s2734 + $0x160] sm:$0xff]
    %v3246 = vld [vmem:[%s2734 + $0x168] sm:$0xff]
    %v3247 = vld [vmem:[%s2734 + $0x170] sm:$0xff]
    %v3248 = vld [vmem:[%s2734 + $0x178] sm:$0xff]
    %v3249 = vld [vmem:[%s2734 + $0x180] sm:$0xff]
    %v3250 = vld [vmem:[%s2734 + $0x188] sm:$0xff]
    %v3251 = vld [vmem:[%s2734 + $0x190] sm:$0xff]
    %v3252 = vld [vmem:[%s2734 + $0x198] sm:$0xff]
    %v3253 = vld [vmem:[%s2734 + $0x1a0] sm:$0xff]
    %v3254 = vld [vmem:[%s2734 + $0x1a8] sm:$0xff]
    %v3255 = vld [vmem:[%s2734 + $0x1b0] sm:$0xff]
    %v3256 = vld [vmem:[%s2734 + $0x1b8] sm:$0xff]
    %v3257 = vld [vmem:[%s2734 + $0x1c0] sm:$0xff]
    %v3258 = vld [vmem:[%s2734 + $0x1c8] sm:$0xff]
    %v3259 = vld [vmem:[%s2734 + $0x1d0] sm:$0xff]
    %v3260 = vld [vmem:[%s2734 + $0x1d8] sm:$0xff]
    %v3261 = vld [vmem:[%s2734 + $0x1e0] sm:$0xff]
    %v3262 = vld [vmem:[%s2734 + $0x1e8] sm:$0xff]
    %v3263 = vld [vmem:[%s2734 + $0x1f0] sm:$0xff]
    %v3264 = vld [vmem:[%s2734 + $0x1f8] sm:$0xff]
    %3265 = vmatprep.subr.mxu0 %v3202
    %3266 = vmatpush1.msra.mxu0 %v3201
    %3267 = vmatprep.subr.mxu0 %v3206
    %3268 = vmatpush1.msra.mxu0 %v3205
    %3269 = vmatprep.subr.mxu0 %v3210
    %3270 = vmatpush1.msra.mxu0 %v3209
    %3271 = vmatprep.subr.mxu0 %v3214
    %3272 = vmatpush1.msra.mxu0 %v3213
    %3273 = vmatprep.subr.mxu0 %v3218
    %3274 = vmatpush1.msra.mxu0 %v3217
    %3275 = vmatprep.subr.mxu0 %v3222
    %3276 = vmatpush1.msra.mxu0 %v3221
    %3277 = vmatprep.subr.mxu0 %v3226
    %3278 = vmatpush1.msra.mxu0 %v3225
    %3279 = vmatprep.subr.mxu0 %v3230
    %3280 = vmatpush1.msra.mxu0 %v3229
    %3281 = vmatprep.subr.mxu0 %v3234
    %3282 = vmatpush1.msra.mxu0 %v3233
    %3283 = vmatprep.subr.mxu0 %v3238
    %3284 = vmatpush1.msra.mxu0 %v3237
    %3285 = vmatprep.subr.mxu0 %v3242
    %3286 = vmatpush1.msra.mxu0 %v3241
    %3287 = vmatprep.subr.mxu0 %v3246
    %3288 = vmatpush1.msra.mxu0 %v3245
    %3289 = vmatprep.subr.mxu0 %v3250
    %3290 = vmatpush1.msra.mxu0 %v3249
    %3291 = vmatprep.subr.mxu0 %v3254
    %3292 = vmatpush1.msra.mxu0 %v3253
    %3293 = vmatprep.subr.mxu0 %v3258
    %3294 = vmatpush1.msra.mxu0 %v3257
    %3295 = vmatprep.subr.mxu0 %v3262
    %3296 = vmatpush1.msra.mxu0 %v3261
    %3297 = vmatprep.subr.mxu0 0.0
    %3298 = vmatpush1.msra.mxu0 0.0
    %3299 = vmatprep.subr.mxu0 0.0
    %3300 = vmatpush1.msra.mxu0 0.0
    %3301 = vmatprep.subr.mxu0 0.0
    %3302 = vmatpush1.msra.mxu0 0.0
    %3303 = vmatprep.subr.mxu0 0.0
    %3304 = vmatpush1.msra.mxu0 0.0
    %3305 = vmatprep.subr.mxu0 0.0
    %3306 = vmatpush1.msra.mxu0 0.0
    %3307 = vmatprep.subr.mxu0 0.0
    %3308 = vmatpush1.msra.mxu0 0.0
    %3309 = vmatprep.subr.mxu0 0.0
    %3310 = vmatpush1.msra.mxu0 0.0
    %3311 = vmatprep.subr.mxu0 0.0
    %3312 = vmatpush1.msra.mxu0 0.0
    %3313 = vmatprep.subr.mxu0 0.0
    %3314 = vmatpush1.msra.mxu0 0.0
    %3315 = vmatprep.subr.mxu0 0.0
    %3316 = vmatpush1.msra.mxu0 0.0
    %3317 = vmatprep.subr.mxu0 0.0
    %3318 = vmatpush1.msra.mxu0 0.0
    %3319 = vmatprep.subr.mxu0 0.0
    %3320 = vmatpush1.msra.mxu0 0.0
    %3321 = vmatprep.subr.mxu0 0.0
    %3322 = vmatpush1.msra.mxu0 0.0
    %3323 = vmatprep.subr.mxu0 0.0
    %3324 = vmatpush1.msra.mxu0 0.0
    %3325 = vmatprep.subr.mxu0 0.0
    %3326 = vmatpush1.msra.mxu0 0.0
    %3327 = vmatprep.subr.mxu0 0.0
    %3328 = vmatpush1.msra.mxu0 0.0
    %3329 = vmatprep.mubr.f32.mxu0 0.0
    %3330 = vmatmul.mubr.f32.gmra.mrb[0].mxu0 %v3195
    %v3331 = vpop.f32.mrb[0].mxu0
    %v3332 = vadd.f32 0.0, %v3331
    %v3333 = vpop.f32.mrb[0].mxu0
    %v3334 = vadd.f32 0.0, %v3333
    %3335 = vdwg.mxu0
    %3336 = vmatprep.subr.mxu0 %v3204
    %3337 = vmatpush1.msra.mxu0 %v3203
    %3338 = vmatprep.subr.mxu0 %v3208
    %3339 = vmatpush1.msra.mxu0 %v3207
    %3340 = vmatprep.subr.mxu0 %v3212
    %3341 = vmatpush1.msra.mxu0 %v3211
    %3342 = vmatprep.subr.mxu0 %v3216
    %3343 = vmatpush1.msra.mxu0 %v3215
    %3344 = vmatprep.subr.mxu0 %v3220
    %3345 = vmatpush1.msra.mxu0 %v3219
    %3346 = vmatprep.subr.mxu0 %v3224
    %3347 = vmatpush1.msra.mxu0 %v3223
    %3348 = vmatprep.subr.mxu0 %v3228
    %3349 = vmatpush1.msra.mxu0 %v3227
    %3350 = vmatprep.subr.mxu0 %v3232
    %3351 = vmatpush1.msra.mxu0 %v3231
    %3352 = vmatprep.subr.mxu0 %v3236
    %3353 = vmatpush1.msra.mxu0 %v3235
    %3354 = vmatprep.subr.mxu0 %v3240
    %3355 = vmatpush1.msra.mxu0 %v3239
    %3356 = vmatprep.subr.mxu0 %v3244
    %3357 = vmatpush1.msra.mxu0 %v3243
    %3358 = vmatprep.subr.mxu0 %v3248
    %3359 = vmatpush1.msra.mxu0 %v3247
    %3360 = vmatprep.subr.mxu0 %v3252
    %3361 = vmatpush1.msra.mxu0 %v3251
    %3362 = vmatprep.subr.mxu0 %v3256
    %3363 = vmatpush1.msra.mxu0 %v3255
    %3364 = vmatprep.subr.mxu0 %v3260
    %3365 = vmatpush1.msra.mxu0 %v3259
    %3366 = vmatprep.subr.mxu0 %v3264
    %3367 = vmatpush1.msra.mxu0 %v3263
    %3368 = vmatprep.subr.mxu0 0.0
    %3369 = vmatpush1.msra.mxu0 0.0
    %3370 = vmatprep.subr.mxu0 0.0
    %3371 = vmatpush1.msra.mxu0 0.0
    %3372 = vmatprep.subr.mxu0 0.0
    %3373 = vmatpush1.msra.mxu0 0.0
    %3374 = vmatprep.subr.mxu0 0.0
    %3375 = vmatpush1.msra.mxu0 0.0
    %3376 = vmatprep.subr.mxu0 0.0
    %3377 = vmatpush1.msra.mxu0 0.0
    %3378 = vmatprep.subr.mxu0 0.0
    %3379 = vmatpush1.msra.mxu0 0.0
    %3380 = vmatprep.subr.mxu0 0.0
    %3381 = vmatpush1.msra.mxu0 0.0
    %3382 = vmatprep.subr.mxu0 0.0
    %3383 = vmatpush1.msra.mxu0 0.0
    %3384 = vmatprep.subr.mxu0 0.0
    %3385 = vmatpush1.msra.mxu0 0.0
    %3386 = vmatprep.subr.mxu0 0.0
    %3387 = vmatpush1.msra.mxu0 0.0
    %3388 = vmatprep.subr.mxu0 0.0
    %3389 = vmatpush1.msra.mxu0 0.0
    %3390 = vmatprep.subr.mxu0 0.0
    %3391 = vmatpush1.msra.mxu0 0.0
    %3392 = vmatprep.subr.mxu0 0.0
    %3393 = vmatpush1.msra.mxu0 0.0
    %3394 = vmatprep.subr.mxu0 0.0
    %3395 = vmatpush1.msra.mxu0 0.0
    %3396 = vmatprep.subr.mxu0 0.0
    %3397 = vmatpush1.msra.mxu0 0.0
    %3398 = vmatprep.subr.mxu0 0.0
    %3399 = vmatpush1.msra.mxu0 0.0
    %3400 = vmatprep.mubr.f32.mxu0 0.0
    %3401 = vmatmul.mubr.f32.gmra.mrb[0].mxu0 %v3195
    %v3402 = vpop.f32.mrb[0].mxu0
    %v3403 = vadd.f32 0.0, %v3402
    %v3404 = vpop.f32.mrb[0].mxu0
    %v3405 = vadd.f32 0.0, %v3404
    %3406 = vdwg.mxu0
    %v3407 = vadd.f32 %v3197, %v3332
    %v3408 = vadd.f32 %v3198, %v3334
    %v3409 = vadd.f32 %v3199, %v3403
    %v3410 = vadd.f32 %v3200, %v3405
    %v3411 = vmul.f32 %v3407, 0.5
    %v3412 = vtanh.pop %v3411
    %v3413 = vadd.f32 %v3412, 1.0
    %v3414 = vmul.f32 %v3413, 0.5
    %v3415 = vmul.f32 %v3408, 0.5
    %v3416 = vtanh.pop %v3415
    %v3417 = vadd.f32 %v3416, 1.0
    %v3418 = vmul.f32 %v3417, 0.5
    %v3419 = vtanh.pop %v3409
    %v3420 = vmul.f32 %v3410, 0.5
    %v3421 = vtanh.pop %v3420
    %v3422 = vadd.f32 %v3421, 1.0
    %v3423 = vmul.f32 %v3422, 0.5
    %v3424 = vmul.f32 %v3418, %v3193
    %v3425 = vmul.f32 %v3414, %v3419
    %v3426 = vadd.f32 %v3424, %v3425
    %v3427 = vtanh.pop %v3426
    %v3428 = vmul.f32 %v3423, %v3427
    %3429 = vst [vmem:[#allocation3 + $0x10] sm:$0xff] %v3428
    %v3430 = vld [vmem:[#allocation2 + $0x60] sm:$0xff]
    %v3431 = vld [vmem:[#allocation2 + $0x68] sm:$0xff]
    %v3432 = vld [vmem:[#allocation2 + $0x70] sm:$0xff]
    %v3433 = vld [vmem:[#allocation2 + $0x78] sm:$0xff]
    %v3434 = vld [vmem:[%s2734] sm:$0xff]
    %v3435 = vld [vmem:[%s2734 + $0x8] sm:$0xff]
    %v3436 = vld [vmem:[%s2734 + $0x10] sm:$0xff]
    %v3437 = vld [vmem:[%s2734 + $0x18] sm:$0xff]
    %v3438 = vld [vmem:[%s2734 + $0x20] sm:$0xff]
    %v3439 = vld [vmem:[%s2734 + $0x28] sm:$0xff]
    %v3440 = vld [vmem:[%s2734 + $0x30] sm:$0xff]
    %v3441 = vld [vmem:[%s2734 + $0x38] sm:$0xff]
    %v3442 = vld [vmem:[%s2734 + $0x40] sm:$0xff]
    %v3443 = vld [vmem:[%s2734 + $0x48] sm:$0xff]
    %v3444 = vld [vmem:[%s2734 + $0x50] sm:$0xff]
    %v3445 = vld [vmem:[%s2734 + $0x58] sm:$0xff]
    %v3446 = vld [vmem:[%s2734 + $0x60] sm:$0xff]
    %v3447 = vld [vmem:[%s2734 + $0x68] sm:$0xff]
    %v3448 = vld [vmem:[%s2734 + $0x70] sm:$0xff]
    %v3449 = vld [vmem:[%s2734 + $0x78] sm:$0xff]
    %v3450 = vld [vmem:[%s2734 + $0x80] sm:$0xff]
    %v3451 = vld [vmem:[%s2734 + $0x88] sm:$0xff]
    %v3452 = vld [vmem:[%s2734 + $0x90] sm:$0xff]
    %v3453 = vld [vmem:[%s2734 + $0x98] sm:$0xff]
    %v3454 = vld [vmem:[%s2734 + $0xa0] sm:$0xff]
    %v3455 = vld [vmem:[%s2734 + $0xa8] sm:$0xff]
    %v3456 = vld [vmem:[%s2734 + $0xb0] sm:$0xff]
    %v3457 = vld [vmem:[%s2734 + $0xb8] sm:$0xff]
    %v3458 = vld [vmem:[%s2734 + $0xc0] sm:$0xff]
    %v3459 = vld [vmem:[%s2734 + $0xc8] sm:$0xff]
    %v3460 = vld [vmem:[%s2734 + $0xd0] sm:$0xff]
    %v3461 = vld [vmem:[%s2734 + $0xd8] sm:$0xff]
    %v3462 = vld [vmem:[%s2734 + $0xe0] sm:$0xff]
    %v3463 = vld [vmem:[%s2734 + $0xe8] sm:$0xff]
    %v3464 = vld [vmem:[%s2734 + $0xf0] sm:$0xff]
    %v3465 = vld [vmem:[%s2734 + $0xf8] sm:$0xff]
    %v3466 = vld [vmem:[%s2734 + $0x100] sm:$0xff]
    %v3467 = vld [vmem:[%s2734 + $0x108] sm:$0xff]
    %v3468 = vld [vmem:[%s2734 + $0x110] sm:$0xff]
    %v3469 = vld [vmem:[%s2734 + $0x118] sm:$0xff]
    %v3470 = vld [vmem:[%s2734 + $0x120] sm:$0xff]
    %v3471 = vld [vmem:[%s2734 + $0x128] sm:$0xff]
    %v3472 = vld [vmem:[%s2734 + $0x130] sm:$0xff]
    %v3473 = vld [vmem:[%s2734 + $0x138] sm:$0xff]
    %v3474 = vld [vmem:[%s2734 + $0x140] sm:$0xff]
    %v3475 = vld [vmem:[%s2734 + $0x148] sm:$0xff]
    %v3476 = vld [vmem:[%s2734 + $0x150] sm:$0xff]
    %v3477 = vld [vmem:[%s2734 + $0x158] sm:$0xff]
    %v3478 = vld [vmem:[%s2734 + $0x160] sm:$0xff]
    %v3479 = vld [vmem:[%s2734 + $0x168] sm:$0xff]
    %v3480 = vld [vmem:[%s2734 + $0x170] sm:$0xff]
    %v3481 = vld [vmem:[%s2734 + $0x178] sm:$0xff]
    %v3482 = vld [vmem:[%s2734 + $0x180] sm:$0xff]
    %v3483 = vld [vmem:[%s2734 + $0x188] sm:$0xff]
    %v3484 = vld [vmem:[%s2734 + $0x190] sm:$0xff]
    %v3485 = vld [vmem:[%s2734 + $0x198] sm:$0xff]
    %v3486 = vld [vmem:[%s2734 + $0x1a0] sm:$0xff]
    %v3487 = vld [vmem:[%s2734 + $0x1a8] sm:$0xff]
    %v3488 = vld [vmem:[%s2734 + $0x1b0] sm:$0xff]
    %v3489 = vld [vmem:[%s2734 + $0x1b8] sm:$0xff]
    %v3490 = vld [vmem:[%s2734 + $0x1c0] sm:$0xff]
    %v3491 = vld [vmem:[%s2734 + $0x1c8] sm:$0xff]
    %v3492 = vld [vmem:[%s2734 + $0x1d0] sm:$0xff]
    %v3493 = vld [vmem:[%s2734 + $0x1d8] sm:$0xff]
    %v3494 = vld [vmem:[%s2734 + $0x1e0] sm:$0xff]
    %v3495 = vld [vmem:[%s2734 + $0x1e8] sm:$0xff]
    %v3496 = vld [vmem:[%s2734 + $0x1f0] sm:$0xff]
    %v3497 = vld [vmem:[%s2734 + $0x1f8] sm:$0xff]
    %3498 = vmatprep.subr.mxu0 %v3435
    %3499 = vmatpush1.msra.mxu0 %v3434
    %3500 = vmatprep.subr.mxu0 %v3439
    %3501 = vmatpush1.msra.mxu0 %v3438
    %3502 = vmatprep.subr.mxu0 %v3443
    %3503 = vmatpush1.msra.mxu0 %v3442
    %3504 = vmatprep.subr.mxu0 %v3447
    %3505 = vmatpush1.msra.mxu0 %v3446
    %3506 = vmatprep.subr.mxu0 %v3451
    %3507 = vmatpush1.msra.mxu0 %v3450
    %3508 = vmatprep.subr.mxu0 %v3455
    %3509 = vmatpush1.msra.mxu0 %v3454
    %3510 = vmatprep.subr.mxu0 %v3459
    %3511 = vmatpush1.msra.mxu0 %v3458
    %3512 = vmatprep.subr.mxu0 %v3463
    %3513 = vmatpush1.msra.mxu0 %v3462
    %3514 = vmatprep.subr.mxu0 %v3467
    %3515 = vmatpush1.msra.mxu0 %v3466
    %3516 = vmatprep.subr.mxu0 %v3471
    %3517 = vmatpush1.msra.mxu0 %v3470
    %3518 = vmatprep.subr.mxu0 %v3475
    %3519 = vmatpush1.msra.mxu0 %v3474
    %3520 = vmatprep.subr.mxu0 %v3479
    %3521 = vmatpush1.msra.mxu0 %v3478
    %3522 = vmatprep.subr.mxu0 %v3483
    %3523 = vmatpush1.msra.mxu0 %v3482
    %3524 = vmatprep.subr.mxu0 %v3487
    %3525 = vmatpush1.msra.mxu0 %v3486
    %3526 = vmatprep.subr.mxu0 %v3491
    %3527 = vmatpush1.msra.mxu0 %v3490
    %3528 = vmatprep.subr.mxu0 %v3495
    %3529 = vmatpush1.msra.mxu0 %v3494
    %3530 = vmatprep.subr.mxu0 0.0
    %3531 = vmatpush1.msra.mxu0 0.0
    %3532 = vmatprep.subr.mxu0 0.0
    %3533 = vmatpush1.msra.mxu0 0.0
    %3534 = vmatprep.subr.mxu0 0.0
    %3535 = vmatpush1.msra.mxu0 0.0
    %3536 = vmatprep.subr.mxu0 0.0
    %3537 = vmatpush1.msra.mxu0 0.0
    %3538 = vmatprep.subr.mxu0 0.0
    %3539 = vmatpush1.msra.mxu0 0.0
    %3540 = vmatprep.subr.mxu0 0.0
    %3541 = vmatpush1.msra.mxu0 0.0
    %3542 = vmatprep.subr.mxu0 0.0
    %3543 = vmatpush1.msra.mxu0 0.0
    %3544 = vmatprep.subr.mxu0 0.0
    %3545 = vmatpush1.msra.mxu0 0.0
    %3546 = vmatprep.subr.mxu0 0.0
    %3547 = vmatpush1.msra.mxu0 0.0
    %3548 = vmatprep.subr.mxu0 0.0
    %3549 = vmatpush1.msra.mxu0 0.0
    %3550 = vmatprep.subr.mxu0 0.0
    %3551 = vmatpush1.msra.mxu0 0.0
    %3552 = vmatprep.subr.mxu0 0.0
    %3553 = vmatpush1.msra.mxu0 0.0
    %3554 = vmatprep.subr.mxu0 0.0
    %3555 = vmatpush1.msra.mxu0 0.0
    %3556 = vmatprep.subr.mxu0 0.0
    %3557 = vmatpush1.msra.mxu0 0.0
    %3558 = vmatprep.subr.mxu0 0.0
    %3559 = vmatpush1.msra.mxu0 0.0
    %3560 = vmatprep.subr.mxu0 0.0
    %3561 = vmatpush1.msra.mxu0 0.0
    %3562 = vmatprep.mubr.f32.mxu0 0.0
    %3563 = vmatmul.mubr.f32.gmra.mrb[0].mxu0 %v3428
    %v3564 = vpop.f32.mrb[0].mxu0
    %v3565 = vadd.f32 0.0, %v3564
    %v3566 = vpop.f32.mrb[0].mxu0
    %v3567 = vadd.f32 0.0, %v3566
    %3568 = vdwg.mxu0
    %3569 = vmatprep.subr.mxu0 %v3437
    %3570 = vmatpush1.msra.mxu0 %v3436
    %3571 = vmatprep.subr.mxu0 %v3441
    %3572 = vmatpush1.msra.mxu0 %v3440
    %3573 = vmatprep.subr.mxu0 %v3445
    %3574 = vmatpush1.msra.mxu0 %v3444
    %3575 = vmatprep.subr.mxu0 %v3449
    %3576 = vmatpush1.msra.mxu0 %v3448
    %3577 = vmatprep.subr.mxu0 %v3453
    %3578 = vmatpush1.msra.mxu0 %v3452
    %3579 = vmatprep.subr.mxu0 %v3457
    %3580 = vmatpush1.msra.mxu0 %v3456
    %3581 = vmatprep.subr.mxu0 %v3461
    %3582 = vmatpush1.msra.mxu0 %v3460
    %3583 = vmatprep.subr.mxu0 %v3465
    %3584 = vmatpush1.msra.mxu0 %v3464
    %3585 = vmatprep.subr.mxu0 %v3469
    %3586 = vmatpush1.msra.mxu0 %v3468
    %3587 = vmatprep.subr.mxu0 %v3473
    %3588 = vmatpush1.msra.mxu0 %v3472
    %3589 = vmatprep.subr.mxu0 %v3477
    %3590 = vmatpush1.msra.mxu0 %v3476
    %3591 = vmatprep.subr.mxu0 %v3481
    %3592 = vmatpush1.msra.mxu0 %v3480
    %3593 = vmatprep.subr.mxu0 %v3485
    %3594 = vmatpush1.msra.mxu0 %v3484
    %3595 = vmatprep.subr.mxu0 %v3489
    %3596 = vmatpush1.msra.mxu0 %v3488
    %3597 = vmatprep.subr.mxu0 %v3493
    %3598 = vmatpush1.msra.mxu0 %v3492
    %3599 = vmatprep.subr.mxu0 %v3497
    %3600 = vmatpush1.msra.mxu0 %v3496
    %3601 = vmatprep.subr.mxu0 0.0
    %3602 = vmatpush1.msra.mxu0 0.0
    %3603 = vmatprep.subr.mxu0 0.0
    %3604 = vmatpush1.msra.mxu0 0.0
    %3605 = vmatprep.subr.mxu0 0.0
    %3606 = vmatpush1.msra.mxu0 0.0
    %3607 = vmatprep.subr.mxu0 0.0
    %3608 = vmatpush1.msra.mxu0 0.0
    %3609 = vmatprep.subr.mxu0 0.0
    %3610 = vmatpush1.msra.mxu0 0.0
    %3611 = vmatprep.subr.mxu0 0.0
    %3612 = vmatpush1.msra.mxu0 0.0
    %3613 = vmatprep.subr.mxu0 0.0
    %3614 = vmatpush1.msra.mxu0 0.0
    %3615 = vmatprep.subr.mxu0 0.0
    %3616 = vmatpush1.msra.mxu0 0.0
    %3617 = vmatprep.subr.mxu0 0.0
    %3618 = vmatpush1.msra.mxu0 0.0
    %3619 = vmatprep.subr.mxu0 0.0
    %3620 = vmatpush1.msra.mxu0 0.0
    %3621 = vmatprep.subr.mxu0 0.0
    %3622 = vmatpush1.msra.mxu0 0.0
    %3623 = vmatprep.subr.mxu0 0.0
    %3624 = vmatpush1.msra.mxu0 0.0
    %3625 = vmatprep.subr.mxu0 0.0
    %3626 = vmatpush1.msra.mxu0 0.0
    %3627 = vmatprep.subr.mxu0 0.0
    %3628 = vmatpush1.msra.mxu0 0.0
    %3629 = vmatprep.subr.mxu0 0.0
    %3630 = vmatpush1.msra.mxu0 0.0
    %3631 = vmatprep.subr.mxu0 0.0
    %3632 = vmatpush1.msra.mxu0 0.0
    %3633 = vmatprep.mubr.f32.mxu0 0.0
    %3634 = vmatmul.mubr.f32.gmra.mrb[0].mxu0 %v3428
    %v3635 = vpop.f32.mrb[0].mxu0
    %v3636 = vadd.f32 0.0, %v3635
    %v3637 = vpop.f32.mrb[0].mxu0
    %v3638 = vadd.f32 0.0, %v3637
    %3639 = vdwg.mxu0
    %v3640 = vadd.f32 %v3430, %v3565
    %v3641 = vadd.f32 %v3431, %v3567
    %v3642 = vadd.f32 %v3432, %v3636
    %v3643 = vadd.f32 %v3433, %v3638
    %v3644 = vmul.f32 %v3640, 0.5
    %v3645 = vtanh.pop %v3644
    %v3646 = vadd.f32 %v3645, 1.0
    %v3647 = vmul.f32 %v3646, 0.5
    %v3648 = vmul.f32 %v3641, 0.5
    %v3649 = vtanh.pop %v3648
    %v3650 = vadd.f32 %v3649, 1.0
    %v3651 = vmul.f32 %v3650, 0.5
    %v3652 = vtanh.pop %v3642
    %v3653 = vmul.f32 %v3643, 0.5
    %v3654 = vtanh.pop %v3653
    %v3655 = vadd.f32 %v3654, 1.0
    %v3656 = vmul.f32 %v3655, 0.5
    %v3657 = vmul.f32 %v3651, %v3426
    %v3658 = vmul.f32 %v3647, %v3652
    %v3659 = vadd.f32 %v3657, %v3658
    %v3660 = vtanh.pop %v3659
    %v3661 = vmul.f32 %v3656, %v3660
    %3662 = vst [vmem:[#allocation3 + $0x18] sm:$0xff] %v3661
    %v3663 = vld [vmem:[#allocation2 + $0x80] sm:$0xff]
    %v3664 = vld [vmem:[#allocation2 + $0x88] sm:$0xff]
    %v3665 = vld [vmem:[#allocation2 + $0x90] sm:$0xff]
    %v3666 = vld [vmem:[#allocation2 + $0x98] sm:$0xff]
    %v3667 = vld [vmem:[%s2734] sm:$0xff]
    %v3668 = vld [vmem:[%s2734 + $0x8] sm:$0xff]
    %v3669 = vld [vmem:[%s2734 + $0x10] sm:$0xff]
    %v3670 = vld [vmem:[%s2734 + $0x18] sm:$0xff]
    %v3671 = vld [vmem:[%s2734 + $0x20] sm:$0xff]
    %v3672 = vld [vmem:[%s2734 + $0x28] sm:$0xff]
    %v3673 = vld [vmem:[%s2734 + $0x30] sm:$0xff]
    %v3674 = vld [vmem:[%s2734 + $0x38] sm:$0xff]
    %v3675 = vld [vmem:[%s2734 + $0x40] sm:$0xff]
    %v3676 = vld [vmem:[%s2734 + $0x48] sm:$0xff]
    %v3677 = vld [vmem:[%s2734 + $0x50] sm:$0xff]
    %v3678 = vld [vmem:[%s2734 + $0x58] sm:$0xff]
    %v3679 = vld [vmem:[%s2734 + $0x60] sm:$0xff]
    %v3680 = vld [vmem:[%s2734 + $0x68] sm:$0xff]
    %v3681 = vld [vmem:[%s2734 + $0x70] sm:$0xff]
    %v3682 = vld [vmem:[%s2734 + $0x78] sm:$0xff]
    %v3683 = vld [vmem:[%s2734 + $0x80] sm:$0xff]
    %v3684 = vld [vmem:[%s2734 + $0x88] sm:$0xff]
    %v3685 = vld [vmem:[%s2734 + $0x90] sm:$0xff]
    %v3686 = vld [vmem:[%s2734 + $0x98] sm:$0xff]
    %v3687 = vld [vmem:[%s2734 + $0xa0] sm:$0xff]
    %v3688 = vld [vmem:[%s2734 + $0xa8] sm:$0xff]
    %v3689 = vld [vmem:[%s2734 + $0xb0] sm:$0xff]
    %v3690 = vld [vmem:[%s2734 + $0xb8] sm:$0xff]
    %v3691 = vld [vmem:[%s2734 + $0xc0] sm:$0xff]
    %v3692 = vld [vmem:[%s2734 + $0xc8] sm:$0xff]
    %v3693 = vld [vmem:[%s2734 + $0xd0] sm:$0xff]
    %v3694 = vld [vmem:[%s2734 + $0xd8] sm:$0xff]
    %v3695 = vld [vmem:[%s2734 + $0xe0] sm:$0xff]
    %v3696 = vld [vmem:[%s2734 + $0xe8] sm:$0xff]
    %v3697 = vld [vmem:[%s2734 + $0xf0] sm:$0xff]
    %v3698 = vld [vmem:[%s2734 + $0xf8] sm:$0xff]
    %v3699 = vld [vmem:[%s2734 + $0x100] sm:$0xff]
    %v3700 = vld [vmem:[%s2734 + $0x108] sm:$0xff]
    %v3701 = vld [vmem:[%s2734 + $0x110] sm:$0xff]
    %v3702 = vld [vmem:[%s2734 + $0x118] sm:$0xff]
    %v3703 = vld [vmem:[%s2734 + $0x120] sm:$0xff]
    %v3704 = vld [vmem:[%s2734 + $0x128] sm:$0xff]
    %v3705 = vld [vmem:[%s2734 + $0x130] sm:$0xff]
    %v3706 = vld [vmem:[%s2734 + $0x138] sm:$0xff]
    %v3707 = vld [vmem:[%s2734 + $0x140] sm:$0xff]
    %v3708 = vld [vmem:[%s2734 + $0x148] sm:$0xff]
    %v3709 = vld [vmem:[%s2734 + $0x150] sm:$0xff]
    %v3710 = vld [vmem:[%s2734 + $0x158] sm:$0xff]
    %v3711 = vld [vmem:[%s2734 + $0x160] sm:$0xff]
    %v3712 = vld [vmem:[%s2734 + $0x168] sm:$0xff]
    %v3713 = vld [vmem:[%s2734 + $0x170] sm:$0xff]
    %v3714 = vld [vmem:[%s2734 + $0x178] sm:$0xff]
    %v3715 = vld [vmem:[%s2734 + $0x180] sm:$0xff]
    %v3716 = vld [vmem:[%s2734 + $0x188] sm:$0xff]
    %v3717 = vld [vmem:[%s2734 + $0x190] sm:$0xff]
    %v3718 = vld [vmem:[%s2734 + $0x198] sm:$0xff]
    %v3719 = vld [vmem:[%s2734 + $0x1a0] sm:$0xff]
    %v3720 = vld [vmem:[%s2734 + $0x1a8] sm:$0xff]
    %v3721 = vld [vmem:[%s2734 + $0x1b0] sm:$0xff]
    %v3722 = vld [vmem:[%s2734 + $0x1b8] sm:$0xff]
    %v3723 = vld [vmem:[%s2734 + $0x1c0] sm:$0xff]
    %v3724 = vld [vmem:[%s2734 + $0x1c8] sm:$0xff]
    %v3725 = vld [vmem:[%s2734 + $0x1d0] sm:$0xff]
    %v3726 = vld [vmem:[%s2734 + $0x1d8] sm:$0xff]
    %v3727 = vld [vmem:[%s2734 + $0x1e0] sm:$0xff]
    %v3728 = vld [vmem:[%s2734 + $0x1e8] sm:$0xff]
    %v3729 = vld [vmem:[%s2734 + $0x1f0] sm:$0xff]
    %v3730 = vld [vmem:[%s2734 + $0x1f8] sm:$0xff]
    %3731 = vmatprep.subr.mxu0 %v3668
    %3732 = vmatpush1.msra.mxu0 %v3667
    %3733 = vmatprep.subr.mxu0 %v3672
    %3734 = vmatpush1.msra.mxu0 %v3671
    %3735 = vmatprep.subr.mxu0 %v3676
    %3736 = vmatpush1.msra.mxu0 %v3675
    %3737 = vmatprep.subr.mxu0 %v3680
    %3738 = vmatpush1.msra.mxu0 %v3679
    %3739 = vmatprep.subr.mxu0 %v3684
    %3740 = vmatpush1.msra.mxu0 %v3683
    %3741 = vmatprep.subr.mxu0 %v3688
    %3742 = vmatpush1.msra.mxu0 %v3687
    %3743 = vmatprep.subr.mxu0 %v3692
    %3744 = vmatpush1.msra.mxu0 %v3691
    %3745 = vmatprep.subr.mxu0 %v3696
    %3746 = vmatpush1.msra.mxu0 %v3695
    %3747 = vmatprep.subr.mxu0 %v3700
    %3748 = vmatpush1.msra.mxu0 %v3699
    %3749 = vmatprep.subr.mxu0 %v3704
    %3750 = vmatpush1.msra.mxu0 %v3703
    %3751 = vmatprep.subr.mxu0 %v3708
    %3752 = vmatpush1.msra.mxu0 %v3707
    %3753 = vmatprep.subr.mxu0 %v3712
    %3754 = vmatpush1.msra.mxu0 %v3711
    %3755 = vmatprep.subr.mxu0 %v3716
    %3756 = vmatpush1.msra.mxu0 %v3715
    %3757 = vmatprep.subr.mxu0 %v3720
    %3758 = vmatpush1.msra.mxu0 %v3719
    %3759 = vmatprep.subr.mxu0 %v3724
    %3760 = vmatpush1.msra.mxu0 %v3723
    %3761 = vmatprep.subr.mxu0 %v3728
    %3762 = vmatpush1.msra.mxu0 %v3727
    %3763 = vmatprep.subr.mxu0 0.0
    %3764 = vmatpush1.msra.mxu0 0.0
    %3765 = vmatprep.subr.mxu0 0.0
    %3766 = vmatpush1.msra.mxu0 0.0
    %3767 = vmatprep.subr.mxu0 0.0
    %3768 = vmatpush1.msra.mxu0 0.0
    %3769 = vmatprep.subr.mxu0 0.0
    %3770 = vmatpush1.msra.mxu0 0.0
    %3771 = vmatprep.subr.mxu0 0.0
    %3772 = vmatpush1.msra.mxu0 0.0
    %3773 = vmatprep.subr.mxu0 0.0
    %3774 = vmatpush1.msra.mxu0 0.0
    %3775 = vmatprep.subr.mxu0 0.0
    %3776 = vmatpush1.msra.mxu0 0.0
    %3777 = vmatprep.subr.mxu0 0.0
    %3778 = vmatpush1.msra.mxu0 0.0
    %3779 = vmatprep.subr.mxu0 0.0
    %3780 = vmatpush1.msra.mxu0 0.0
    %3781 = vmatprep.subr.mxu0 0.0
    %3782 = vmatpush1.msra.mxu0 0.0
    %3783 = vmatprep.subr.mxu0 0.0
    %3784 = vmatpush1.msra.mxu0 0.0
    %3785 = vmatprep.subr.mxu0 0.0
    %3786 = vmatpush1.msra.mxu0 0.0
    %3787 = vmatprep.subr.mxu0 0.0
    %3788 = vmatpush1.msra.mxu0 0.0
    %3789 = vmatprep.subr.mxu0 0.0
    %3790 = vmatpush1.msra.mxu0 0.0
    %3791 = vmatprep.subr.mxu0 0.0
    %3792 = vmatpush1.msra.mxu0 0.0
    %3793 = vmatprep.subr.mxu0 0.0
    %3794 = vmatpush1.msra.mxu0 0.0
    %3795 = vmatprep.mubr.f32.mxu0 0.0
    %3796 = vmatmul.mubr.f32.gmra.mrb[0].mxu0 %v3661
    %v3797 = vpop.f32.mrb[0].mxu0
    %v3798 = vadd.f32 0.0, %v3797
    %v3799 = vpop.f32.mrb[0].mxu0
    %v3800 = vadd.f32 0.0, %v3799
    %3801 = vdwg.mxu0
    %3802 = vmatprep.subr.mxu0 %v3670
    %3803 = vmatpush1.msra.mxu0 %v3669
    %3804 = vmatprep.subr.mxu0 %v3674
    %3805 = vmatpush1.msra.mxu0 %v3673
    %3806 = vmatprep.subr.mxu0 %v3678
    %3807 = vmatpush1.msra.mxu0 %v3677
    %3808 = vmatprep.subr.mxu0 %v3682
    %3809 = vmatpush1.msra.mxu0 %v3681
    %3810 = vmatprep.subr.mxu0 %v3686
    %3811 = vmatpush1.msra.mxu0 %v3685
    %3812 = vmatprep.subr.mxu0 %v3690
    %3813 = vmatpush1.msra.mxu0 %v3689
    %3814 = vmatprep.subr.mxu0 %v3694
    %3815 = vmatpush1.msra.mxu0 %v3693
    %3816 = vmatprep.subr.mxu0 %v3698
    %3817 = vmatpush1.msra.mxu0 %v3697
    %3818 = vmatprep.subr.mxu0 %v3702
    %3819 = vmatpush1.msra.mxu0 %v3701
    %3820 = vmatprep.subr.mxu0 %v3706
    %3821 = vmatpush1.msra.mxu0 %v3705
    %3822 = vmatprep.subr.mxu0 %v3710
    %3823 = vmatpush1.msra.mxu0 %v3709
    %3824 = vmatprep.subr.mxu0 %v3714
    %3825 = vmatpush1.msra.mxu0 %v3713
    %3826 = vmatprep.subr.mxu0 %v3718
    %3827 = vmatpush1.msra.mxu0 %v3717
    %3828 = vmatprep.subr.mxu0 %v3722
    %3829 = vmatpush1.msra.mxu0 %v3721
    %3830 = vmatprep.subr.mxu0 %v3726
    %3831 = vmatpush1.msra.mxu0 %v3725
    %3832 = vmatprep.subr.mxu0 %v3730
    %3833 = vmatpush1.msra.mxu0 %v3729
    %3834 = vmatprep.subr.mxu0 0.0
    %3835 = vmatpush1.msra.mxu0 0.0
    %3836 = vmatprep.subr.mxu0 0.0
    %3837 = vmatpush1.msra.mxu0 0.0
    %3838 = vmatprep.subr.mxu0 0.0
    %3839 = vmatpush1.msra.mxu0 0.0
    %3840 = vmatprep.subr.mxu0 0.0
    %3841 = vmatpush1.msra.mxu0 0.0
    %3842 = vmatprep.subr.mxu0 0.0
    %3843 = vmatpush1.msra.mxu0 0.0
    %3844 = vmatprep.subr.mxu0 0.0
    %3845 = vmatpush1.msra.mxu0 0.0
    %3846 = vmatprep.subr.mxu0 0.0
    %3847 = vmatpush1.msra.mxu0 0.0
    %3848 = vmatprep.subr.mxu0 0.0
    %3849 = vmatpush1.msra.mxu0 0.0
    %3850 = vmatprep.subr.mxu0 0.0
    %3851 = vmatpush1.msra.mxu0 0.0
    %3852 = vmatprep.subr.mxu0 0.0
    %3853 = vmatpush1.msra.mxu0 0.0
    %3854 = vmatprep.subr.mxu0 0.0
    %3855 = vmatpush1.msra.mxu0 0.0
    %3856 = vmatprep.subr.mxu0 0.0
    %3857 = vmatpush1.msra.mxu0 0.0
    %3858 = vmatprep.subr.mxu0 0.0
    %3859 = vmatpush1.msra.mxu0 0.0
    %3860 = vmatprep.subr.mxu0 0.0
    %3861 = vmatpush1.msra.mxu0 0.0
    %3862 = vmatprep.subr.mxu0 0.0
    %3863 = vmatpush1.msra.mxu0 0.0
    %3864 = vmatprep.subr.mxu0 0.0
    %3865 = vmatpush1.msra.mxu0 0.0
    %3866 = vmatprep.mubr.f32.mxu0 0.0
    %3867 = vmatmul.mubr.f32.gmra.mrb[0].mxu0 %v3661
    %v3868 = vpop.f32.mrb[0].mxu0
    %v3869 = vadd.f32 0.0, %v3868
    %v3870 = vpop.f32.mrb[0].mxu0
    %v3871 = vadd.f32 0.0, %v3870
    %3872 = vdwg.mxu0
    %v3873 = vadd.f32 %v3663, %v3798
    %v3874 = vadd.f32 %v3664, %v3800
    %v3875 = vadd.f32 %v3665, %v3869
    %v3876 = vadd.f32 %v3666, %v3871
    %v3877 = vmul.f32 %v3873, 0.5
    %v3878 = vtanh.pop %v3877
    %v3879 = vadd.f32 %v3878, 1.0
    %v3880 = vmul.f32 %v3879, 0.5
    %v3881 = vmul.f32 %v3874, 0.5
    %v3882 = vtanh.pop %v3881
    %v3883 = vadd.f32 %v3882, 1.0
    %v3884 = vmul.f32 %v3883, 0.5
    %v3885 = vtanh.pop %v3875
    %v3886 = vmul.f32 %v3876, 0.5
    %v3887 = vtanh.pop %v3886
    %v3888 = vadd.f32 %v3887, 1.0
    %v3889 = vmul.f32 %v3888, 0.5
    %v3890 = vmul.f32 %v3884, %v3659
    %v3891 = vmul.f32 %v3880, %v3885
    %v3892 = vadd.f32 %v3890, %v3891
    %v3893 = vtanh.pop %v3892
    %v3894 = vmul.f32 %v3889, %v3893
    %3895 = vst [vmem:[#allocation3 + $0x20] sm:$0xff] %v3894
    %v3896 = vld [vmem:[#allocation2 + $0xa0] sm:$0xff]
    %v3897 = vld [vmem:[#allocation2 + $0xa8] sm:$0xff]
    %v3898 = vld [vmem:[#allocation2 + $0xb0] sm:$0xff]
    %v3899 = vld [vmem:[#allocation2 + $0xb8] sm:$0xff]
    %v3900 = vld [vmem:[%s2734] sm:$0xff]
    %v3901 = vld [vmem:[%s2734 + $0x8] sm:$0xff]
    %v3902 = vld [vmem:[%s2734 + $0x10] sm:$0xff]
    %v3903 = vld [vmem:[%s2734 + $0x18] sm:$0xff]
    %v3904 = vld [vmem:[%s2734 + $0x20] sm:$0xff]
    %v3905 = vld [vmem:[%s2734 + $0x28] sm:$0xff]
    %v3906 = vld [vmem:[%s2734 + $0x30] sm:$0xff]
    %v3907 = vld [vmem:[%s2734 + $0x38] sm:$0xff]
    %v3908 = vld [vmem:[%s2734 + $0x40] sm:$0xff]
    %v3909 = vld [vmem:[%s2734 + $0x48] sm:$0xff]
    %v3910 = vld [vmem:[%s2734 + $0x50] sm:$0xff]
    %v3911 = vld [vmem:[%s2734 + $0x58] sm:$0xff]
    %v3912 = vld [vmem:[%s2734 + $0x60] sm:$0xff]
    %v3913 = vld [vmem:[%s2734 + $0x68] sm:$0xff]
    %v3914 = vld [vmem:[%s2734 + $0x70] sm:$0xff]
    %v3915 = vld [vmem:[%s2734 + $0x78] sm:$0xff]
    %v3916 = vld [vmem:[%s2734 + $0x80] sm:$0xff]
    %v3917 = vld [vmem:[%s2734 + $0x88] sm:$0xff]
    %v3918 = vld [vmem:[%s2734 + $0x90] sm:$0xff]
    %v3919 = vld [vmem:[%s2734 + $0x98] sm:$0xff]
    %v3920 = vld [vmem:[%s2734 + $0xa0] sm:$0xff]
    %v3921 = vld [vmem:[%s2734 + $0xa8] sm:$0xff]
    %v3922 = vld [vmem:[%s2734 + $0xb0] sm:$0xff]
    %v3923 = vld [vmem:[%s2734 + $0xb8] sm:$0xff]
    %v3924 = vld [vmem:[%s2734 + $0xc0] sm:$0xff]
    %v3925 = vld [vmem:[%s2734 + $0xc8] sm:$0xff]
    %v3926 = vld [vmem:[%s2734 + $0xd0] sm:$0xff]
    %v3927 = vld [vmem:[%s2734 + $0xd8] sm:$0xff]
    %v3928 = vld [vmem:[%s2734 + $0xe0] sm:$0xff]
    %v3929 = vld [vmem:[%s2734 + $0xe8] sm:$0xff]
    %v3930 = vld [vmem:[%s2734 + $0xf0] sm:$0xff]
    %v3931 = vld [vmem:[%s2734 + $0xf8] sm:$0xff]
    %v3932 = vld [vmem:[%s2734 + $0x100] sm:$0xff]
    %v3933 = vld [vmem:[%s2734 + $0x108] sm:$0xff]
    %v3934 = vld [vmem:[%s2734 + $0x110] sm:$0xff]
    %v3935 = vld [vmem:[%s2734 + $0x118] sm:$0xff]
    %v3936 = vld [vmem:[%s2734 + $0x120] sm:$0xff]
    %v3937 = vld [vmem:[%s2734 + $0x128] sm:$0xff]
    %v3938 = vld [vmem:[%s2734 + $0x130] sm:$0xff]
    %v3939 = vld [vmem:[%s2734 + $0x138] sm:$0xff]
    %v3940 = vld [vmem:[%s2734 + $0x140] sm:$0xff]
    %v3941 = vld [vmem:[%s2734 + $0x148] sm:$0xff]
    %v3942 = vld [vmem:[%s2734 + $0x150] sm:$0xff]
    %v3943 = vld [vmem:[%s2734 + $0x158] sm:$0xff]
    %v3944 = vld [vmem:[%s2734 + $0x160] sm:$0xff]
    %v3945 = vld [vmem:[%s2734 + $0x168] sm:$0xff]
    %v3946 = vld [vmem:[%s2734 + $0x170] sm:$0xff]
    %v3947 = vld [vmem:[%s2734 + $0x178] sm:$0xff]
    %v3948 = vld [vmem:[%s2734 + $0x180] sm:$0xff]
    %v3949 = vld [vmem:[%s2734 + $0x188] sm:$0xff]
    %v3950 = vld [vmem:[%s2734 + $0x190] sm:$0xff]
    %v3951 = vld [vmem:[%s2734 + $0x198] sm:$0xff]
    %v3952 = vld [vmem:[%s2734 + $0x1a0] sm:$0xff]
    %v3953 = vld [vmem:[%s2734 + $0x1a8] sm:$0xff]
    %v3954 = vld [vmem:[%s2734 + $0x1b0] sm:$0xff]
    %v3955 = vld [vmem:[%s2734 + $0x1b8] sm:$0xff]
    %v3956 = vld [vmem:[%s2734 + $0x1c0] sm:$0xff]
    %v3957 = vld [vmem:[%s2734 + $0x1c8] sm:$0xff]
    %v3958 = vld [vmem:[%s2734 + $0x1d0] sm:$0xff]
    %v3959 = vld [vmem:[%s2734 + $0x1d8] sm:$0xff]
    %v3960 = vld [vmem:[%s2734 + $0x1e0] sm:$0xff]
    %v3961 = vld [vmem:[%s2734 + $0x1e8] sm:$0xff]
    %v3962 = vld [vmem:[%s2734 + $0x1f0] sm:$0xff]
    %v3963 = vld [vmem:[%s2734 + $0x1f8] sm:$0xff]
    %3964 = vmatprep.subr.mxu0 %v3901
    %3965 = vmatpush1.msra.mxu0 %v3900
    %3966 = vmatprep.subr.mxu0 %v3905
    %3967 = vmatpush1.msra.mxu0 %v3904
    %3968 = vmatprep.subr.mxu0 %v3909
    %3969 = vmatpush1.msra.mxu0 %v3908
    %3970 = vmatprep.subr.mxu0 %v3913
    %3971 = vmatpush1.msra.mxu0 %v3912
    %3972 = vmatprep.subr.mxu0 %v3917
    %3973 = vmatpush1.msra.mxu0 %v3916
    %3974 = vmatprep.subr.mxu0 %v3921
    %3975 = vmatpush1.msra.mxu0 %v3920
    %3976 = vmatprep.subr.mxu0 %v3925
    %3977 = vmatpush1.msra.mxu0 %v3924
    %3978 = vmatprep.subr.mxu0 %v3929
    %3979 = vmatpush1.msra.mxu0 %v3928
    %3980 = vmatprep.subr.mxu0 %v3933
    %3981 = vmatpush1.msra.mxu0 %v3932
    %3982 = vmatprep.subr.mxu0 %v3937
    %3983 = vmatpush1.msra.mxu0 %v3936
    %3984 = vmatprep.subr.mxu0 %v3941
    %3985 = vmatpush1.msra.mxu0 %v3940
    %3986 = vmatprep.subr.mxu0 %v3945
    %3987 = vmatpush1.msra.mxu0 %v3944
    %3988 = vmatprep.subr.mxu0 %v3949
    %3989 = vmatpush1.msra.mxu0 %v3948
    %3990 = vmatprep.subr.mxu0 %v3953
    %3991 = vmatpush1.msra.mxu0 %v3952
    %3992 = vmatprep.subr.mxu0 %v3957
    %3993 = vmatpush1.msra.mxu0 %v3956
    %3994 = vmatprep.subr.mxu0 %v3961
    %3995 = vmatpush1.msra.mxu0 %v3960
    %3996 = vmatprep.subr.mxu0 0.0
    %3997 = vmatpush1.msra.mxu0 0.0
    %3998 = vmatprep.subr.mxu0 0.0
    %3999 = vmatpush1.msra.mxu0 0.0
    %4000 = vmatprep.subr.mxu0 0.0
    %4001 = vmatpush1.msra.mxu0 0.0
    %4002 = vmatprep.subr.mxu0 0.0
    %4003 = vmatpush1.msra.mxu0 0.0
    %4004 = vmatprep.subr.mxu0 0.0
    %4005 = vmatpush1.msra.mxu0 0.0
    %4006 = vmatprep.subr.mxu0 0.0
    %4007 = vmatpush1.msra.mxu0 0.0
    %4008 = vmatprep.subr.mxu0 0.0
    %4009 = vmatpush1.msra.mxu0 0.0
    %4010 = vmatprep.subr.mxu0 0.0
    %4011 = vmatpush1.msra.mxu0 0.0
    %4012 = vmatprep.subr.mxu0 0.0
    %4013 = vmatpush1.msra.mxu0 0.0
    %4014 = vmatprep.subr.mxu0 0.0
    %4015 = vmatpush1.msra.mxu0 0.0
    %4016 = vmatprep.subr.mxu0 0.0
    %4017 = vmatpush1.msra.mxu0 0.0
    %4018 = vmatprep.subr.mxu0 0.0
    %4019 = vmatpush1.msra.mxu0 0.0
    %4020 = vmatprep.subr.mxu0 0.0
    %4021 = vmatpush1.msra.mxu0 0.0
    %4022 = vmatprep.subr.mxu0 0.0
    %4023 = vmatpush1.msra.mxu0 0.0
    %4024 = vmatprep.subr.mxu0 0.0
    %4025 = vmatpush1.msra.mxu0 0.0
    %4026 = vmatprep.subr.mxu0 0.0
    %4027 = vmatpush1.msra.mxu0 0.0
    %4028 = vmatprep.mubr.f32.mxu0 0.0
    %4029 = vmatmul.mubr.f32.gmra.mrb[0].mxu0 %v3894
    %v4030 = vpop.f32.mrb[0].mxu0
    %v4031 = vadd.f32 0.0, %v4030
    %v4032 = vpop.f32.mrb[0].mxu0
    %v4033 = vadd.f32 0.0, %v4032
    %4034 = vdwg.mxu0
    %4035 = vmatprep.subr.mxu0 %v3903
    %4036 = vmatpush1.msra.mxu0 %v3902
    %4037 = vmatprep.subr.mxu0 %v3907
    %4038 = vmatpush1.msra.mxu0 %v3906
    %4039 = vmatprep.subr.mxu0 %v3911
    %4040 = vmatpush1.msra.mxu0 %v3910
    %4041 = vmatprep.subr.mxu0 %v3915
    %4042 = vmatpush1.msra.mxu0 %v3914
    %4043 = vmatprep.subr.mxu0 %v3919
    %4044 = vmatpush1.msra.mxu0 %v3918
    %4045 = vmatprep.subr.mxu0 %v3923
    %4046 = vmatpush1.msra.mxu0 %v3922
    %4047 = vmatprep.subr.mxu0 %v3927
    %4048 = vmatpush1.msra.mxu0 %v3926
    %4049 = vmatprep.subr.mxu0 %v3931
    %4050 = vmatpush1.msra.mxu0 %v3930
    %4051 = vmatprep.subr.mxu0 %v3935
    %4052 = vmatpush1.msra.mxu0 %v3934
    %4053 = vmatprep.subr.mxu0 %v3939
    %4054 = vmatpush1.msra.mxu0 %v3938
    %4055 = vmatprep.subr.mxu0 %v3943
    %4056 = vmatpush1.msra.mxu0 %v3942
    %4057 = vmatprep.subr.mxu0 %v3947
    %4058 = vmatpush1.msra.mxu0 %v3946
    %4059 = vmatprep.subr.mxu0 %v3951
    %4060 = vmatpush1.msra.mxu0 %v3950
    %4061 = vmatprep.subr.mxu0 %v3955
    %4062 = vmatpush1.msra.mxu0 %v3954
    %4063 = vmatprep.subr.mxu0 %v3959
    %4064 = vmatpush1.msra.mxu0 %v3958
    %4065 = vmatprep.subr.mxu0 %v3963
    %4066 = vmatpush1.msra.mxu0 %v3962
    %4067 = vmatprep.subr.mxu0 0.0
    %4068 = vmatpush1.msra.mxu0 0.0
    %4069 = vmatprep.subr.mxu0 0.0
    %4070 = vmatpush1.msra.mxu0 0.0
    %4071 = vmatprep.subr.mxu0 0.0
    %4072 = vmatpush1.msra.mxu0 0.0
    %4073 = vmatprep.subr.mxu0 0.0
    %4074 = vmatpush1.msra.mxu0 0.0
    %4075 = vmatprep.subr.mxu0 0.0
    %4076 = vmatpush1.msra.mxu0 0.0
    %4077 = vmatprep.subr.mxu0 0.0
    %4078 = vmatpush1.msra.mxu0 0.0
    %4079 = vmatprep.subr.mxu0 0.0
    %4080 = vmatpush1.msra.mxu0 0.0
    %4081 = vmatprep.subr.mxu0 0.0
    %4082 = vmatpush1.msra.mxu0 0.0
    %4083 = vmatprep.subr.mxu0 0.0
    %4084 = vmatpush1.msra.mxu0 0.0
    %4085 = vmatprep.subr.mxu0 0.0
    %4086 = vmatpush1.msra.mxu0 0.0
    %4087 = vmatprep.subr.mxu0 0.0
    %4088 = vmatpush1.msra.mxu0 0.0
    %4089 = vmatprep.subr.mxu0 0.0
    %4090 = vmatpush1.msra.mxu0 0.0
    %4091 = vmatprep.subr.mxu0 0.0
    %4092 = vmatpush1.msra.mxu0 0.0
    %4093 = vmatprep.subr.mxu0 0.0
    %4094 = vmatpush1.msra.mxu0 0.0
    %4095 = vmatprep.subr.mxu0 0.0
    %4096 = vmatpush1.msra.mxu0 0.0
    %4097 = vmatprep.subr.mxu0 0.0
    %4098 = vmatpush1.msra.mxu0 0.0
    %4099 = vmatprep.mubr.f32.mxu0 0.0
    %4100 = vmatmul.mubr.f32.gmra.mrb[0].mxu0 %v3894
    %v4101 = vpop.f32.mrb[0].mxu0
    %v4102 = vadd.f32 0.0, %v4101
    %v4103 = vpop.f32.mrb[0].mxu0
    %v4104 = vadd.f32 0.0, %v4103
    %4105 = vdwg.mxu0
    %v4106 = vadd.f32 %v3896, %v4031
    %v4107 = vadd.f32 %v3897, %v4033
    %v4108 = vadd.f32 %v3898, %v4102
    %v4109 = vadd.f32 %v3899, %v4104
    %v4110 = vmul.f32 %v4106, 0.5
    %v4111 = vtanh.pop %v4110
    %v4112 = vadd.f32 %v4111, 1.0
    %v4113 = vmul.f32 %v4112, 0.5
    %v4114 = vmul.f32 %v4107, 0.5
    %v4115 = vtanh.pop %v4114
    %v4116 = vadd.f32 %v4115, 1.0
    %v4117 = vmul.f32 %v4116, 0.5
    %v4118 = vtanh.pop %v4108
    %v4119 = vmul.f32 %v4109, 0.5
    %v4120 = vtanh.pop %v4119
    %v4121 = vadd.f32 %v4120, 1.0
    %v4122 = vmul.f32 %v4121, 0.5
    %v4123 = vmul.f32 %v4117, %v3892
    %v4124 = vmul.f32 %v4113, %v4118
    %v4125 = vadd.f32 %v4123, %v4124
    %v4126 = vtanh.pop %v4125
    %v4127 = vmul.f32 %v4122, %v4126
    %4128 = vst [vmem:[#allocation3 + $0x28] sm:$0xff] %v4127
    %v4129 = vld [vmem:[#allocation2 + $0xc0] sm:$0xff]
    %v4130 = vld [vmem:[#allocation2 + $0xc8] sm:$0xff]
    %v4131 = vld [vmem:[#allocation2 + $0xd0] sm:$0xff]
    %v4132 = vld [vmem:[#allocation2 + $0xd8] sm:$0xff]
    %v4133 = vld [vmem:[%s2734] sm:$0xff]
    %v4134 = vld [vmem:[%s2734 + $0x8] sm:$0xff]
    %v4135 = vld [vmem:[%s2734 + $0x10] sm:$0xff]
    %v4136 = vld [vmem:[%s2734 + $0x18] sm:$0xff]
    %v4137 = vld [vmem:[%s2734 + $0x20] sm:$0xff]
    %v4138 = vld [vmem:[%s2734 + $0x28] sm:$0xff]
    %v4139 = vld [vmem:[%s2734 + $0x30] sm:$0xff]
    %v4140 = vld [vmem:[%s2734 + $0x38] sm:$0xff]
    %v4141 = vld [vmem:[%s2734 + $0x40] sm:$0xff]
    %v4142 = vld [vmem:[%s2734 + $0x48] sm:$0xff]
    %v4143 = vld [vmem:[%s2734 + $0x50] sm:$0xff]
    %v4144 = vld [vmem:[%s2734 + $0x58] sm:$0xff]
    %v4145 = vld [vmem:[%s2734 + $0x60] sm:$0xff]
    %v4146 = vld [vmem:[%s2734 + $0x68] sm:$0xff]
    %v4147 = vld [vmem:[%s2734 + $0x70] sm:$0xff]
    %v4148 = vld [vmem:[%s2734 + $0x78] sm:$0xff]
    %v4149 = vld [vmem:[%s2734 + $0x80] sm:$0xff]
    %v4150 = vld [vmem:[%s2734 + $0x88] sm:$0xff]
    %v4151 = vld [vmem:[%s2734 + $0x90] sm:$0xff]
    %v4152 = vld [vmem:[%s2734 + $0x98] sm:$0xff]
    %v4153 = vld [vmem:[%s2734 + $0xa0] sm:$0xff]
    %v4154 = vld [vmem:[%s2734 + $0xa8] sm:$0xff]
    %v4155 = vld [vmem:[%s2734 + $0xb0] sm:$0xff]
    %v4156 = vld [vmem:[%s2734 + $0xb8] sm:$0xff]
    %v4157 = vld [vmem:[%s2734 + $0xc0] sm:$0xff]
    %v4158 = vld [vmem:[%s2734 + $0xc8] sm:$0xff]
    %v4159 = vld [vmem:[%s2734 + $0xd0] sm:$0xff]
    %v4160 = vld [vmem:[%s2734 + $0xd8] sm:$0xff]
    %v4161 = vld [vmem:[%s2734 + $0xe0] sm:$0xff]
    %v4162 = vld [vmem:[%s2734 + $0xe8] sm:$0xff]
    %v4163 = vld [vmem:[%s2734 + $0xf0] sm:$0xff]
    %v4164 = vld [vmem:[%s2734 + $0xf8] sm:$0xff]
    %v4165 = vld [vmem:[%s2734 + $0x100] sm:$0xff]
    %v4166 = vld [vmem:[%s2734 + $0x108] sm:$0xff]
    %v4167 = vld [vmem:[%s2734 + $0x110] sm:$0xff]
    %v4168 = vld [vmem:[%s2734 + $0x118] sm:$0xff]
    %v4169 = vld [vmem:[%s2734 + $0x120] sm:$0xff]
    %v4170 = vld [vmem:[%s2734 + $0x128] sm:$0xff]
    %v4171 = vld [vmem:[%s2734 + $0x130] sm:$0xff]
    %v4172 = vld [vmem:[%s2734 + $0x138] sm:$0xff]
    %v4173 = vld [vmem:[%s2734 + $0x140] sm:$0xff]
    %v4174 = vld [vmem:[%s2734 + $0x148] sm:$0xff]
    %v4175 = vld [vmem:[%s2734 + $0x150] sm:$0xff]
    %v4176 = vld [vmem:[%s2734 + $0x158] sm:$0xff]
    %v4177 = vld [vmem:[%s2734 + $0x160] sm:$0xff]
    %v4178 = vld [vmem:[%s2734 + $0x168] sm:$0xff]
    %v4179 = vld [vmem:[%s2734 + $0x170] sm:$0xff]
    %v4180 = vld [vmem:[%s2734 + $0x178] sm:$0xff]
    %v4181 = vld [vmem:[%s2734 + $0x180] sm:$0xff]
    %v4182 = vld [vmem:[%s2734 + $0x188] sm:$0xff]
    %v4183 = vld [vmem:[%s2734 + $0x190] sm:$0xff]
    %v4184 = vld [vmem:[%s2734 + $0x198] sm:$0xff]
    %v4185 = vld [vmem:[%s2734 + $0x1a0] sm:$0xff]
    %v4186 = vld [vmem:[%s2734 + $0x1a8] sm:$0xff]
    %v4187 = vld [vmem:[%s2734 + $0x1b0] sm:$0xff]
    %v4188 = vld [vmem:[%s2734 + $0x1b8] sm:$0xff]
    %v4189 = vld [vmem:[%s2734 + $0x1c0] sm:$0xff]
    %v4190 = vld [vmem:[%s2734 + $0x1c8] sm:$0xff]
    %v4191 = vld [vmem:[%s2734 + $0x1d0] sm:$0xff]
    %v4192 = vld [vmem:[%s2734 + $0x1d8] sm:$0xff]
    %v4193 = vld [vmem:[%s2734 + $0x1e0] sm:$0xff]
    %v4194 = vld [vmem:[%s2734 + $0x1e8] sm:$0xff]
    %v4195 = vld [vmem:[%s2734 + $0x1f0] sm:$0xff]
    %v4196 = vld [vmem:[%s2734 + $0x1f8] sm:$0xff]
    %4197 = vmatprep.subr.mxu0 %v4134
    %4198 = vmatpush1.msra.mxu0 %v4133
    %4199 = vmatprep.subr.mxu0 %v4138
    %4200 = vmatpush1.msra.mxu0 %v4137
    %4201 = vmatprep.subr.mxu0 %v4142
    %4202 = vmatpush1.msra.mxu0 %v4141
    %4203 = vmatprep.subr.mxu0 %v4146
    %4204 = vmatpush1.msra.mxu0 %v4145
    %4205 = vmatprep.subr.mxu0 %v4150
    %4206 = vmatpush1.msra.mxu0 %v4149
    %4207 = vmatprep.subr.mxu0 %v4154
    %4208 = vmatpush1.msra.mxu0 %v4153
    %4209 = vmatprep.subr.mxu0 %v4158
    %4210 = vmatpush1.msra.mxu0 %v4157
    %4211 = vmatprep.subr.mxu0 %v4162
    %4212 = vmatpush1.msra.mxu0 %v4161
    %4213 = vmatprep.subr.mxu0 %v4166
    %4214 = vmatpush1.msra.mxu0 %v4165
    %4215 = vmatprep.subr.mxu0 %v4170
    %4216 = vmatpush1.msra.mxu0 %v4169
    %4217 = vmatprep.subr.mxu0 %v4174
    %4218 = vmatpush1.msra.mxu0 %v4173
    %4219 = vmatprep.subr.mxu0 %v4178
    %4220 = vmatpush1.msra.mxu0 %v4177
    %4221 = vmatprep.subr.mxu0 %v4182
    %4222 = vmatpush1.msra.mxu0 %v4181
    %4223 = vmatprep.subr.mxu0 %v4186
    %4224 = vmatpush1.msra.mxu0 %v4185
    %4225 = vmatprep.subr.mxu0 %v4190
    %4226 = vmatpush1.msra.mxu0 %v4189
    %4227 = vmatprep.subr.mxu0 %v4194
    %4228 = vmatpush1.msra.mxu0 %v4193
    %4229 = vmatprep.subr.mxu0 0.0
    %4230 = vmatpush1.msra.mxu0 0.0
    %4231 = vmatprep.subr.mxu0 0.0
    %4232 = vmatpush1.msra.mxu0 0.0
    %4233 = vmatprep.subr.mxu0 0.0
    %4234 = vmatpush1.msra.mxu0 0.0
    %4235 = vmatprep.subr.mxu0 0.0
    %4236 = vmatpush1.msra.mxu0 0.0
    %4237 = vmatprep.subr.mxu0 0.0
    %4238 = vmatpush1.msra.mxu0 0.0
    %4239 = vmatprep.subr.mxu0 0.0
    %4240 = vmatpush1.msra.mxu0 0.0
    %4241 = vmatprep.subr.mxu0 0.0
    %4242 = vmatpush1.msra.mxu0 0.0
    %4243 = vmatprep.subr.mxu0 0.0
    %4244 = vmatpush1.msra.mxu0 0.0
    %4245 = vmatprep.subr.mxu0 0.0
    %4246 = vmatpush1.msra.mxu0 0.0
    %4247 = vmatprep.subr.mxu0 0.0
    %4248 = vmatpush1.msra.mxu0 0.0
    %4249 = vmatprep.subr.mxu0 0.0
    %4250 = vmatpush1.msra.mxu0 0.0
    %4251 = vmatprep.subr.mxu0 0.0
    %4252 = vmatpush1.msra.mxu0 0.0
    %4253 = vmatprep.subr.mxu0 0.0
    %4254 = vmatpush1.msra.mxu0 0.0
    %4255 = vmatprep.subr.mxu0 0.0
    %4256 = vmatpush1.msra.mxu0 0.0
    %4257 = vmatprep.subr.mxu0 0.0
    %4258 = vmatpush1.msra.mxu0 0.0
    %4259 = vmatprep.subr.mxu0 0.0
    %4260 = vmatpush1.msra.mxu0 0.0
    %4261 = vmatprep.mubr.f32.mxu0 0.0
    %4262 = vmatmul.mubr.f32.gmra.mrb[0].mxu0 %v4127
    %v4263 = vpop.f32.mrb[0].mxu0
    %v4264 = vadd.f32 0.0, %v4263
    %v4265 = vpop.f32.mrb[0].mxu0
    %v4266 = vadd.f32 0.0, %v4265
    %4267 = vdwg.mxu0
    %4268 = vmatprep.subr.mxu0 %v4136
    %4269 = vmatpush1.msra.mxu0 %v4135
    %4270 = vmatprep.subr.mxu0 %v4140
    %4271 = vmatpush1.msra.mxu0 %v4139
    %4272 = vmatprep.subr.mxu0 %v4144
    %4273 = vmatpush1.msra.mxu0 %v4143
    %4274 = vmatprep.subr.mxu0 %v4148
    %4275 = vmatpush1.msra.mxu0 %v4147
    %4276 = vmatprep.subr.mxu0 %v4152
    %4277 = vmatpush1.msra.mxu0 %v4151
    %4278 = vmatprep.subr.mxu0 %v4156
    %4279 = vmatpush1.msra.mxu0 %v4155
    %4280 = vmatprep.subr.mxu0 %v4160
    %4281 = vmatpush1.msra.mxu0 %v4159
    %4282 = vmatprep.subr.mxu0 %v4164
    %4283 = vmatpush1.msra.mxu0 %v4163
    %4284 = vmatprep.subr.mxu0 %v4168
    %4285 = vmatpush1.msra.mxu0 %v4167
    %4286 = vmatprep.subr.mxu0 %v4172
    %4287 = vmatpush1.msra.mxu0 %v4171
    %4288 = vmatprep.subr.mxu0 %v4176
    %4289 = vmatpush1.msra.mxu0 %v4175
    %4290 = vmatprep.subr.mxu0 %v4180
    %4291 = vmatpush1.msra.mxu0 %v4179
    %4292 = vmatprep.subr.mxu0 %v4184
    %4293 = vmatpush1.msra.mxu0 %v4183
    %4294 = vmatprep.subr.mxu0 %v4188
    %4295 = vmatpush1.msra.mxu0 %v4187
    %4296 = vmatprep.subr.mxu0 %v4192
    %4297 = vmatpush1.msra.mxu0 %v4191
    %4298 = vmatprep.subr.mxu0 %v4196
    %4299 = vmatpush1.msra.mxu0 %v4195
    %4300 = vmatprep.subr.mxu0 0.0
    %4301 = vmatpush1.msra.mxu0 0.0
    %4302 = vmatprep.subr.mxu0 0.0
    %4303 = vmatpush1.msra.mxu0 0.0
    %4304 = vmatprep.subr.mxu0 0.0
    %4305 = vmatpush1.msra.mxu0 0.0
    %4306 = vmatprep.subr.mxu0 0.0
    %4307 = vmatpush1.msra.mxu0 0.0
    %4308 = vmatprep.subr.mxu0 0.0
    %4309 = vmatpush1.msra.mxu0 0.0
    %4310 = vmatprep.subr.mxu0 0.0
    %4311 = vmatpush1.msra.mxu0 0.0
    %4312 = vmatprep.subr.mxu0 0.0
    %4313 = vmatpush1.msra.mxu0 0.0
    %4314 = vmatprep.subr.mxu0 0.0
    %4315 = vmatpush1.msra.mxu0 0.0
    %4316 = vmatprep.subr.mxu0 0.0
    %4317 = vmatpush1.msra.mxu0 0.0
    %4318 = vmatprep.subr.mxu0 0.0
    %4319 = vmatpush1.msra.mxu0 0.0
    %4320 = vmatprep.subr.mxu0 0.0
    %4321 = vmatpush1.msra.mxu0 0.0
    %4322 = vmatprep.subr.mxu0 0.0
    %4323 = vmatpush1.msra.mxu0 0.0
    %4324 = vmatprep.subr.mxu0 0.0
    %4325 = vmatpush1.msra.mxu0 0.0
    %4326 = vmatprep.subr.mxu0 0.0
    %4327 = vmatpush1.msra.mxu0 0.0
    %4328 = vmatprep.subr.mxu0 0.0
    %4329 = vmatpush1.msra.mxu0 0.0
    %4330 = vmatprep.subr.mxu0 0.0
    %4331 = vmatpush1.msra.mxu0 0.0
    %4332 = vmatprep.mubr.f32.mxu0 0.0
    %4333 = vmatmul.mubr.f32.gmra.mrb[0].mxu0 %v4127
    %v4334 = vpop.f32.mrb[0].mxu0
    %v4335 = vadd.f32 0.0, %v4334
    %v4336 = vpop.f32.mrb[0].mxu0
    %v4337 = vadd.f32 0.0, %v4336
    %4338 = vdwg.mxu0
    %v4339 = vadd.f32 %v4129, %v4264
    %v4340 = vadd.f32 %v4130, %v4266
    %v4341 = vadd.f32 %v4131, %v4335
    %v4342 = vadd.f32 %v4132, %v4337
    %v4343 = vmul.f32 %v4339, 0.5
    %v4344 = vtanh.pop %v4343
    %v4345 = vadd.f32 %v4344, 1.0
    %v4346 = vmul.f32 %v4345, 0.5
    %v4347 = vmul.f32 %v4340, 0.5
    %v4348 = vtanh.pop %v4347
    %v4349 = vadd.f32 %v4348, 1.0
    %v4350 = vmul.f32 %v4349, 0.5
    %v4351 = vtanh.pop %v4341
    %v4352 = vmul.f32 %v4342, 0.5
    %v4353 = vtanh.pop %v4352
    %v4354 = vadd.f32 %v4353, 1.0
    %v4355 = vmul.f32 %v4354, 0.5
    %v4356 = vmul.f32 %v4350, %v4125
    %v4357 = vmul.f32 %v4346, %v4351
    %v4358 = vadd.f32 %v4356, %v4357
    %v4359 = vtanh.pop %v4358
    %v4360 = vmul.f32 %v4355, %v4359
    %4361 = vst [vmem:[#allocation3 + $0x30] sm:$0xff] %v4360
    %v4362 = vld [vmem:[#allocation2 + $0xe0] sm:$0xff]
    %v4363 = vld [vmem:[#allocation2 + $0xe8] sm:$0xff]
    %v4364 = vld [vmem:[#allocation2 + $0xf0] sm:$0xff]
    %v4365 = vld [vmem:[#allocation2 + $0xf8] sm:$0xff]
    %v4366 = vld [vmem:[%s2734] sm:$0xff]
    %v4367 = vld [vmem:[%s2734 + $0x8] sm:$0xff]
    %v4368 = vld [vmem:[%s2734 + $0x10] sm:$0xff]
    %v4369 = vld [vmem:[%s2734 + $0x18] sm:$0xff]
    %v4370 = vld [vmem:[%s2734 + $0x20] sm:$0xff]
    %v4371 = vld [vmem:[%s2734 + $0x28] sm:$0xff]
    %v4372 = vld [vmem:[%s2734 + $0x30] sm:$0xff]
    %v4373 = vld [vmem:[%s2734 + $0x38] sm:$0xff]
    %v4374 = vld [vmem:[%s2734 + $0x40] sm:$0xff]
    %v4375 = vld [vmem:[%s2734 + $0x48] sm:$0xff]
    %v4376 = vld [vmem:[%s2734 + $0x50] sm:$0xff]
    %v4377 = vld [vmem:[%s2734 + $0x58] sm:$0xff]
    %v4378 = vld [vmem:[%s2734 + $0x60] sm:$0xff]
    %v4379 = vld [vmem:[%s2734 + $0x68] sm:$0xff]
    %v4380 = vld [vmem:[%s2734 + $0x70] sm:$0xff]
    %v4381 = vld [vmem:[%s2734 + $0x78] sm:$0xff]
    %v4382 = vld [vmem:[%s2734 + $0x80] sm:$0xff]
    %v4383 = vld [vmem:[%s2734 + $0x88] sm:$0xff]
    %v4384 = vld [vmem:[%s2734 + $0x90] sm:$0xff]
    %v4385 = vld [vmem:[%s2734 + $0x98] sm:$0xff]
    %v4386 = vld [vmem:[%s2734 + $0xa0] sm:$0xff]
    %v4387 = vld [vmem:[%s2734 + $0xa8] sm:$0xff]
    %v4388 = vld [vmem:[%s2734 + $0xb0] sm:$0xff]
    %v4389 = vld [vmem:[%s2734 + $0xb8] sm:$0xff]
    %v4390 = vld [vmem:[%s2734 + $0xc0] sm:$0xff]
    %v4391 = vld [vmem:[%s2734 + $0xc8] sm:$0xff]
    %v4392 = vld [vmem:[%s2734 + $0xd0] sm:$0xff]
    %v4393 = vld [vmem:[%s2734 + $0xd8] sm:$0xff]
    %v4394 = vld [vmem:[%s2734 + $0xe0] sm:$0xff]
    %v4395 = vld [vmem:[%s2734 + $0xe8] sm:$0xff]
    %v4396 = vld [vmem:[%s2734 + $0xf0] sm:$0xff]
    %v4397 = vld [vmem:[%s2734 + $0xf8] sm:$0xff]
    %v4398 = vld [vmem:[%s2734 + $0x100] sm:$0xff]
    %v4399 = vld [vmem:[%s2734 + $0x108] sm:$0xff]
    %v4400 = vld [vmem:[%s2734 + $0x110] sm:$0xff]
    %v4401 = vld [vmem:[%s2734 + $0x118] sm:$0xff]
    %v4402 = vld [vmem:[%s2734 + $0x120] sm:$0xff]
    %v4403 = vld [vmem:[%s2734 + $0x128] sm:$0xff]
    %v4404 = vld [vmem:[%s2734 + $0x130] sm:$0xff]
    %v4405 = vld [vmem:[%s2734 + $0x138] sm:$0xff]
    %v4406 = vld [vmem:[%s2734 + $0x140] sm:$0xff]
    %v4407 = vld [vmem:[%s2734 + $0x148] sm:$0xff]
    %v4408 = vld [vmem:[%s2734 + $0x150] sm:$0xff]
    %v4409 = vld [vmem:[%s2734 + $0x158] sm:$0xff]
    %v4410 = vld [vmem:[%s2734 + $0x160] sm:$0xff]
    %v4411 = vld [vmem:[%s2734 + $0x168] sm:$0xff]
    %v4412 = vld [vmem:[%s2734 + $0x170] sm:$0xff]
    %v4413 = vld [vmem:[%s2734 + $0x178] sm:$0xff]
    %v4414 = vld [vmem:[%s2734 + $0x180] sm:$0xff]
    %v4415 = vld [vmem:[%s2734 + $0x188] sm:$0xff]
    %v4416 = vld [vmem:[%s2734 + $0x190] sm:$0xff]
    %v4417 = vld [vmem:[%s2734 + $0x198] sm:$0xff]
    %v4418 = vld [vmem:[%s2734 + $0x1a0] sm:$0xff]
    %v4419 = vld [vmem:[%s2734 + $0x1a8] sm:$0xff]
    %v4420 = vld [vmem:[%s2734 + $0x1b0] sm:$0xff]
    %v4421 = vld [vmem:[%s2734 + $0x1b8] sm:$0xff]
    %v4422 = vld [vmem:[%s2734 + $0x1c0] sm:$0xff]
    %v4423 = vld [vmem:[%s2734 + $0x1c8] sm:$0xff]
    %v4424 = vld [vmem:[%s2734 + $0x1d0] sm:$0xff]
    %v4425 = vld [vmem:[%s2734 + $0x1d8] sm:$0xff]
    %v4426 = vld [vmem:[%s2734 + $0x1e0] sm:$0xff]
    %v4427 = vld [vmem:[%s2734 + $0x1e8] sm:$0xff]
    %v4428 = vld [vmem:[%s2734 + $0x1f0] sm:$0xff]
    %v4429 = vld [vmem:[%s2734 + $0x1f8] sm:$0xff]
    %4430 = vmatprep.subr.mxu0 %v4367
    %4431 = vmatpush1.msra.mxu0 %v4366
    %4432 = vmatprep.subr.mxu0 %v4371
    %4433 = vmatpush1.msra.mxu0 %v4370
    %4434 = vmatprep.subr.mxu0 %v4375
    %4435 = vmatpush1.msra.mxu0 %v4374
    %4436 = vmatprep.subr.mxu0 %v4379
    %4437 = vmatpush1.msra.mxu0 %v4378
    %4438 = vmatprep.subr.mxu0 %v4383
    %4439 = vmatpush1.msra.mxu0 %v4382
    %4440 = vmatprep.subr.mxu0 %v4387
    %4441 = vmatpush1.msra.mxu0 %v4386
    %4442 = vmatprep.subr.mxu0 %v4391
    %4443 = vmatpush1.msra.mxu0 %v4390
    %4444 = vmatprep.subr.mxu0 %v4395
    %4445 = vmatpush1.msra.mxu0 %v4394
    %4446 = vmatprep.subr.mxu0 %v4399
    %4447 = vmatpush1.msra.mxu0 %v4398
    %4448 = vmatprep.subr.mxu0 %v4403
    %4449 = vmatpush1.msra.mxu0 %v4402
    %4450 = vmatprep.subr.mxu0 %v4407
    %4451 = vmatpush1.msra.mxu0 %v4406
    %4452 = vmatprep.subr.mxu0 %v4411
    %4453 = vmatpush1.msra.mxu0 %v4410
    %4454 = vmatprep.subr.mxu0 %v4415
    %4455 = vmatpush1.msra.mxu0 %v4414
    %4456 = vmatprep.subr.mxu0 %v4419
    %4457 = vmatpush1.msra.mxu0 %v4418
    %4458 = vmatprep.subr.mxu0 %v4423
    %4459 = vmatpush1.msra.mxu0 %v4422
    %4460 = vmatprep.subr.mxu0 %v4427
    %4461 = vmatpush1.msra.mxu0 %v4426
    %4462 = vmatprep.subr.mxu0 0.0
    %4463 = vmatpush1.msra.mxu0 0.0
    %4464 = vmatprep.subr.mxu0 0.0
    %4465 = vmatpush1.msra.mxu0 0.0
    %4466 = vmatprep.subr.mxu0 0.0
    %4467 = vmatpush1.msra.mxu0 0.0
    %4468 = vmatprep.subr.mxu0 0.0
    %4469 = vmatpush1.msra.mxu0 0.0
    %4470 = vmatprep.subr.mxu0 0.0
    %4471 = vmatpush1.msra.mxu0 0.0
    %4472 = vmatprep.subr.mxu0 0.0
    %4473 = vmatpush1.msra.mxu0 0.0
    %4474 = vmatprep.subr.mxu0 0.0
    %4475 = vmatpush1.msra.mxu0 0.0
    %4476 = vmatprep.subr.mxu0 0.0
    %4477 = vmatpush1.msra.mxu0 0.0
    %4478 = vmatprep.subr.mxu0 0.0
    %4479 = vmatpush1.msra.mxu0 0.0
    %4480 = vmatprep.subr.mxu0 0.0
    %4481 = vmatpush1.msra.mxu0 0.0
    %4482 = vmatprep.subr.mxu0 0.0
    %4483 = vmatpush1.msra.mxu0 0.0
    %4484 = vmatprep.subr.mxu0 0.0
    %4485 = vmatpush1.msra.mxu0 0.0
    %4486 = vmatprep.subr.mxu0 0.0
    %4487 = vmatpush1.msra.mxu0 0.0
    %4488 = vmatprep.subr.mxu0 0.0
    %4489 = vmatpush1.msra.mxu0 0.0
    %4490 = vmatprep.subr.mxu0 0.0
    %4491 = vmatpush1.msra.mxu0 0.0
    %4492 = vmatprep.subr.mxu0 0.0
    %4493 = vmatpush1.msra.mxu0 0.0
    %4494 = vmatprep.mubr.f32.mxu0 0.0
    %4495 = vmatmul.mubr.f32.gmra.mrb[0].mxu0 %v4360
    %v4496 = vpop.f32.mrb[0].mxu0
    %v4497 = vadd.f32 0.0, %v4496
    %v4498 = vpop.f32.mrb[0].mxu0
    %v4499 = vadd.f32 0.0, %v4498
    %4500 = vdwg.mxu0
    %4501 = vmatprep.subr.mxu0 %v4369
    %4502 = vmatpush1.msra.mxu0 %v4368
    %4503 = vmatprep.subr.mxu0 %v4373
    %4504 = vmatpush1.msra.mxu0 %v4372
    %4505 = vmatprep.subr.mxu0 %v4377
    %4506 = vmatpush1.msra.mxu0 %v4376
    %4507 = vmatprep.subr.mxu0 %v4381
    %4508 = vmatpush1.msra.mxu0 %v4380
    %4509 = vmatprep.subr.mxu0 %v4385
    %4510 = vmatpush1.msra.mxu0 %v4384
    %4511 = vmatprep.subr.mxu0 %v4389
    %4512 = vmatpush1.msra.mxu0 %v4388
    %4513 = vmatprep.subr.mxu0 %v4393
    %4514 = vmatpush1.msra.mxu0 %v4392
    %4515 = vmatprep.subr.mxu0 %v4397
    %4516 = vmatpush1.msra.mxu0 %v4396
    %4517 = vmatprep.subr.mxu0 %v4401
    %4518 = vmatpush1.msra.mxu0 %v4400
    %4519 = vmatprep.subr.mxu0 %v4405
    %4520 = vmatpush1.msra.mxu0 %v4404
    %4521 = vmatprep.subr.mxu0 %v4409
    %4522 = vmatpush1.msra.mxu0 %v4408
    %4523 = vmatprep.subr.mxu0 %v4413
    %4524 = vmatpush1.msra.mxu0 %v4412
    %4525 = vmatprep.subr.mxu0 %v4417
    %4526 = vmatpush1.msra.mxu0 %v4416
    %4527 = vmatprep.subr.mxu0 %v4421
    %4528 = vmatpush1.msra.mxu0 %v4420
    %4529 = vmatprep.subr.mxu0 %v4425
    %4530 = vmatpush1.msra.mxu0 %v4424
    %4531 = vmatprep.subr.mxu0 %v4429
    %4532 = vmatpush1.msra.mxu0 %v4428
    %4533 = vmatprep.subr.mxu0 0.0
    %4534 = vmatpush1.msra.mxu0 0.0
    %4535 = vmatprep.subr.mxu0 0.0
    %4536 = vmatpush1.msra.mxu0 0.0
    %4537 = vmatprep.subr.mxu0 0.0
    %4538 = vmatpush1.msra.mxu0 0.0
    %4539 = vmatprep.subr.mxu0 0.0
    %4540 = vmatpush1.msra.mxu0 0.0
    %4541 = vmatprep.subr.mxu0 0.0
    %4542 = vmatpush1.msra.mxu0 0.0
    %4543 = vmatprep.subr.mxu0 0.0
    %4544 = vmatpush1.msra.mxu0 0.0
    %4545 = vmatprep.subr.mxu0 0.0
    %4546 = vmatpush1.msra.mxu0 0.0
    %4547 = vmatprep.subr.mxu0 0.0
    %4548 = vmatpush1.msra.mxu0 0.0
    %4549 = vmatprep.subr.mxu0 0.0
    %4550 = vmatpush1.msra.mxu0 0.0
    %4551 = vmatprep.subr.mxu0 0.0
    %4552 = vmatpush1.msra.mxu0 0.0
    %4553 = vmatprep.subr.mxu0 0.0
    %4554 = vmatpush1.msra.mxu0 0.0
    %4555 = vmatprep.subr.mxu0 0.0
    %4556 = vmatpush1.msra.mxu0 0.0
    %4557 = vmatprep.subr.mxu0 0.0
    %4558 = vmatpush1.msra.mxu0 0.0
    %4559 = vmatprep.subr.mxu0 0.0
    %4560 = vmatpush1.msra.mxu0 0.0
    %4561 = vmatprep.subr.mxu0 0.0
    %4562 = vmatpush1.msra.mxu0 0.0
    %4563 = vmatprep.subr.mxu0 0.0
    %4564 = vmatpush1.msra.mxu0 0.0
    %4565 = vmatprep.mubr.f32.mxu0 0.0
    %4566 = vmatmul.mubr.f32.gmra.mrb[0].mxu0 %v4360
    %v4567 = vpop.f32.mrb[0].mxu0
    %v4568 = vadd.f32 0.0, %v4567
    %v4569 = vpop.f32.mrb[0].mxu0
    %v4570 = vadd.f32 0.0, %v4569
    %4571 = vdwg.mxu0
    %v4572 = vadd.f32 %v4362, %v4497
    %v4573 = vadd.f32 %v4363, %v4499
    %v4574 = vadd.f32 %v4364, %v4568
    %v4575 = vadd.f32 %v4365, %v4570
    %v4576 = vmul.f32 %v4572, 0.5
    %v4577 = vtanh.pop %v4576
    %v4578 = vadd.f32 %v4577, 1.0
    %v4579 = vmul.f32 %v4578, 0.5
    %v4580 = vmul.f32 %v4573, 0.5
    %v4581 = vtanh.pop %v4580
    %v4582 = vadd.f32 %v4581, 1.0
    %v4583 = vmul.f32 %v4582, 0.5
    %v4584 = vtanh.pop %v4574
    %v4585 = vmul.f32 %v4575, 0.5
    %v4586 = vtanh.pop %v4585
    %v4587 = vadd.f32 %v4586, 1.0
    %v4588 = vmul.f32 %v4587, 0.5
    %v4589 = vmul.f32 %v4583, %v4358
    %v4590 = vmul.f32 %v4579, %v4584
    %v4591 = vadd.f32 %v4589, %v4590
    %v4592 = vtanh.pop %v4591
    %v4593 = vmul.f32 %v4588, %v4592
    %4594 = vst [vmem:[#allocation3 + $0x38] sm:$0xff] %v4593
    %v4595 = vld [vmem:[#allocation3] sm:$0xff]
    %v4596 = vld [vmem:[#allocation3 + $0x8] sm:$0xff]
    %v4597 = vld [vmem:[#allocation3 + $0x10] sm:$0xff]
    %v4598 = vld [vmem:[#allocation3 + $0x18] sm:$0xff]
    %v4599 = vld [vmem:[#allocation3 + $0x20] sm:$0xff]
    %v4600 = vld [vmem:[#allocation3 + $0x28] sm:$0xff]
    %v4601 = vld [vmem:[#allocation3 + $0x30] sm:$0xff]
    %v4602 = vld [vmem:[#allocation3 + $0x38] sm:$0xff]
    %v4603 = vld [vmem:[#allocation12] sm:$0xff]
    %v4604 = vld [vmem:[#allocation12 + $0x8] sm:$0xff]
    %v4605 = vld [vmem:[#allocation12 + $0x10] sm:$0xff]
    %v4606 = vld [vmem:[#allocation12 + $0x18] sm:$0xff]
    %v4607 = vld [vmem:[#allocation12 + $0x20] sm:$0xff]
    %v4608 = vld [vmem:[#allocation12 + $0x28] sm:$0xff]
    %v4609 = vld [vmem:[#allocation12 + $0x30] sm:$0xff]
    %v4610 = vld [vmem:[#allocation12 + $0x38] sm:$0xff]
    %v4611 = vld [vmem:[#allocation12 + $0x40] sm:$0xff]
    %v4612 = vld [vmem:[#allocation12 + $0x48] sm:$0xff]
    %v4613 = vld [vmem:[#allocation12 + $0x50] sm:$0xff]
    %v4614 = vld [vmem:[#allocation12 + $0x58] sm:$0xff]
    %v4615 = vld [vmem:[#allocation12 + $0x60] sm:$0xff]
    %v4616 = vld [vmem:[#allocation12 + $0x68] sm:$0xff]
    %v4617 = vld [vmem:[#allocation12 + $0x70] sm:$0xff]
    %v4618 = vld [vmem:[#allocation12 + $0x78] sm:$0xff]
    %v4619 = vld [vmem:[%s5] sm:$0x1]
    %v4621 = vlaneseq
    %v4622 = vshrl.u32 %v4621, 7
    %v4623 = vsub.s32 0, %v4622
    %v4624 = vrot.slane %v4619, %v4623
    %4626 = vmatprep.subr.mxu0 0.0
    %4627 = vmatpush1.msra.mxu0 %v4603
    %4628 = vmatprep.subr.mxu0 0.0
    %4629 = vmatpush1.msra.mxu0 %v4604
    %4630 = vmatprep.subr.mxu0 0.0
    %4631 = vmatpush1.msra.mxu0 %v4605
    %4632 = vmatprep.subr.mxu0 0.0
    %4633 = vmatpush1.msra.mxu0 %v4606
    %4634 = vmatprep.subr.mxu0 0.0
    %4635 = vmatpush1.msra.mxu0 %v4607
    %4636 = vmatprep.subr.mxu0 0.0
    %4637 = vmatpush1.msra.mxu0 %v4608
    %4638 = vmatprep.subr.mxu0 0.0
    %4639 = vmatpush1.msra.mxu0 %v4609
    %4640 = vmatprep.subr.mxu0 0.0
    %4641 = vmatpush1.msra.mxu0 %v4610
    %4642 = vmatprep.subr.mxu0 0.0
    %4643 = vmatpush1.msra.mxu0 %v4611
    %4644 = vmatprep.subr.mxu0 0.0
    %4645 = vmatpush1.msra.mxu0 %v4612
    %4646 = vmatprep.subr.mxu0 0.0
    %4647 = vmatpush1.msra.mxu0 %v4613
    %4648 = vmatprep.subr.mxu0 0.0
    %4649 = vmatpush1.msra.mxu0 %v4614
    %4650 = vmatprep.subr.mxu0 0.0
    %4651 = vmatpush1.msra.mxu0 %v4615
    %4652 = vmatprep.subr.mxu0 0.0
    %4653 = vmatpush1.msra.mxu0 %v4616
    %4654 = vmatprep.subr.mxu0 0.0
    %4655 = vmatpush1.msra.mxu0 %v4617
    %4656 = vmatprep.subr.mxu0 0.0
    %4657 = vmatpush1.msra.mxu0 %v4618
    %4658 = vmatprep.subr.mxu0 0.0
    %4659 = vmatpush1.msra.mxu0 0.0
    %4660 = vmatprep.subr.mxu0 0.0
    %4661 = vmatpush1.msra.mxu0 0.0
    %4662 = vmatprep.subr.mxu0 0.0
    %4663 = vmatpush1.msra.mxu0 0.0
    %4664 = vmatprep.subr.mxu0 0.0
    %4665 = vmatpush1.msra.mxu0 0.0
    %4666 = vmatprep.subr.mxu0 0.0
    %4667 = vmatpush1.msra.mxu0 0.0
    %4668 = vmatprep.subr.mxu0 0.0
    %4669 = vmatpush1.msra.mxu0 0.0
    %4670 = vmatprep.subr.mxu0 0.0
    %4671 = vmatpush1.msra.mxu0 0.0
    %4672 = vmatprep.subr.mxu0 0.0
    %4673 = vmatpush1.msra.mxu0 0.0
    %4674 = vmatprep.subr.mxu0 0.0
    %4675 = vmatpush1.msra.mxu0 0.0
    %4676 = vmatprep.subr.mxu0 0.0
    %4677 = vmatpush1.msra.mxu0 0.0
    %4678 = vmatprep.subr.mxu0 0.0
    %4679 = vmatpush1.msra.mxu0 0.0
    %4680 = vmatprep.subr.mxu0 0.0
    %4681 = vmatpush1.msra.mxu0 0.0
    %4682 = vmatprep.subr.mxu0 0.0
    %4683 = vmatpush1.msra.mxu0 0.0
    %4684 = vmatprep.subr.mxu0 0.0
    %4685 = vmatpush1.msra.mxu0 0.0
    %4686 = vmatprep.subr.mxu0 0.0
    %4687 = vmatpush1.msra.mxu0 0.0
    %4688 = vmatprep.subr.mxu0 0.0
    %4689 = vmatpush1.msra.mxu0 0.0
    %4690 = vmatprep.mubr.f32.mxu0 0.0
    %4691 = vmatmul.mubr.f32.gmra.mrb[0].mxu0 %v4595
    %v4692 = vpop.f32.mrb[0].mxu0
    %v4693 = vadd.f32 %v4624, %v4692
    %v4694 = vpop.f32.mrb[0].mxu0
    %4695 = vmatprep.mubr.f32.mxu0 0.0
    %4696 = vmatmul.mubr.f32.gmra.mrb[0].mxu0 %v4596
    %v4697 = vpop.f32.mrb[0].mxu0
    %v4698 = vadd.f32 %v4624, %v4697
    %v4699 = vpop.f32.mrb[0].mxu0
    %4700 = vmatprep.mubr.f32.mxu0 0.0
    %4701 = vmatmul.mubr.f32.gmra.mrb[0].mxu0 %v4597
    %v4702 = vpop.f32.mrb[0].mxu0
    %v4703 = vadd.f32 %v4624, %v4702
    %v4704 = vpop.f32.mrb[0].mxu0
    %4705 = vmatprep.mubr.f32.mxu0 0.0
    %4706 = vmatmul.mubr.f32.gmra.mrb[0].mxu0 %v4598
    %v4707 = vpop.f32.mrb[0].mxu0
    %v4708 = vadd.f32 %v4624, %v4707
    %v4709 = vpop.f32.mrb[0].mxu0
    %4710 = vmatprep.mubr.f32.mxu0 0.0
    %4711 = vmatmul.mubr.f32.gmra.mrb[0].mxu0 %v4599
    %v4712 = vpop.f32.mrb[0].mxu0
    %v4713 = vadd.f32 %v4624, %v4712
    %v4714 = vpop.f32.mrb[0].mxu0
    %4715 = vmatprep.mubr.f32.mxu0 0.0
    %4716 = vmatmul.mubr.f32.gmra.mrb[0].mxu0 %v4600
    %v4717 = vpop.f32.mrb[0].mxu0
    %v4718 = vadd.f32 %v4624, %v4717
    %v4719 = vpop.f32.mrb[0].mxu0
    %4720 = vmatprep.mubr.f32.mxu0 0.0
    %4721 = vmatmul.mubr.f32.gmra.mrb[0].mxu0 %v4601
    %v4722 = vpop.f32.mrb[0].mxu0
    %v4723 = vadd.f32 %v4624, %v4722
    %v4724 = vpop.f32.mrb[0].mxu0
    %4725 = vmatprep.mubr.f32.mxu0 0.0
    %4726 = vmatmul.mubr.f32.gmra.mrb[0].mxu0 %v4602
    %v4727 = vpop.f32.mrb[0].mxu0
    %v4728 = vadd.f32 %v4624, %v4727
    %v4729 = vpop.f32.mrb[0].mxu0
    %4730 = vdwg.mxu0
    %v4731 = vld [vmem:[#allocation3] sm:$0xff]
    %v4732 = vld [vmem:[#allocation3 + $0x8] sm:$0xff]
    %v4733 = vld [vmem:[#allocation3 + $0x10] sm:$0xff]
    %v4734 = vld [vmem:[#allocation3 + $0x18] sm:$0xff]
    %v4735 = vld [vmem:[#allocation3 + $0x20] sm:$0xff]
    %v4736 = vld [vmem:[#allocation3 + $0x28] sm:$0xff]
    %v4737 = vld [vmem:[#allocation3 + $0x30] sm:$0xff]
    %v4738 = vmax.f32 %v4693, %v4698
    %v4739 = vmax.f32 %v4738, %v4703
    %v4740 = vmax.f32 %v4739, %v4708
    %v4741 = vmax.f32 %v4740, %v4713
    %v4742 = vmax.f32 %v4741, %v4718
    %v4743 = vmax.f32 %v4742, %v4723
    %v4744 = vmax.f32 %v4743, %v4728
    %v4745 = vsub.f32 %v4693, %v4744
    %v4746 = vmul.f32 %v4745, 1.442695
    %v4747 = vpow.pop %v4746
    %v4748 = vsub.f32 %v4698, %v4744
    %v4749 = vmul.f32 %v4748, 1.442695
    %v4750 = vpow.pop %v4749
    %v4751 = vsub.f32 %v4703, %v4744
    %v4752 = vmul.f32 %v4751, 1.442695
    %v4753 = vpow.pop %v4752
    %v4754 = vsub.f32 %v4708, %v4744
    %v4755 = vmul.f32 %v4754, 1.442695
    %v4756 = vpow.pop %v4755
    %v4757 = vsub.f32 %v4713, %v4744
    %v4758 = vmul.f32 %v4757, 1.442695
    %v4759 = vpow.pop %v4758
    %v4760 = vsub.f32 %v4718, %v4744
    %v4761 = vmul.f32 %v4760, 1.442695
    %v4762 = vpow.pop %v4761
    %v4763 = vsub.f32 %v4723, %v4744
    %v4764 = vmul.f32 %v4763, 1.442695
    %v4765 = vpow.pop %v4764
    %v4766 = vsub.f32 %v4728, %v4744
    %v4767 = vmul.f32 %v4766, 1.442695
    %v4768 = vpow.pop %v4767
    %v4769 = vadd.f32 %v4747, %v4750
    %v4770 = vadd.f32 %v4769, %v4753
    %v4771 = vadd.f32 %v4770, %v4756
    %v4772 = vadd.f32 %v4771, %v4759
    %v4773 = vadd.f32 %v4772, %v4762
    %v4774 = vadd.f32 %v4773, %v4765
    %v4775 = vadd.f32 %v4774, %v4768
    %v4776 = vrcp.pop %v4775
    %v4777 = vmul.f32 %v4731, %v4747
    %v4778 = vmul.f32 %v4732, %v4750
    %v4779 = vadd.f32 %v4777, %v4778
    %v4780 = vmul.f32 %v4733, %v4753
    %v4781 = vadd.f32 %v4779, %v4780
    %v4782 = vmul.f32 %v4734, %v4756
    %v4783 = vadd.f32 %v4781, %v4782
    %v4784 = vmul.f32 %v4735, %v4759
    %v4785 = vadd.f32 %v4783, %v4784
    %v4786 = vmul.f32 %v4736, %v4762
    %v4787 = vadd.f32 %v4785, %v4786
    %v4788 = vmul.f32 %v4737, %v4765
    %v4789 = vadd.f32 %v4787, %v4788
    %v4790 = vmul.f32 %v4602, %v4768
    %v4791 = vadd.f32 %v4789, %v4790
    %v4792 = vmul.f32 %v4791, %v4776
    %4793 = vst [vmem:[#allocation4] sm:$0xff] 0.0
    %v4794 = vld [vmem:[#allocation13] sm:$0xff]
    %v4795 = vld [vmem:[#allocation13 + $0x8] sm:$0xff]
    %v4796 = vld [vmem:[#allocation13 + $0x10] sm:$0xff]
    %v4797 = vld [vmem:[#allocation13 + $0x18] sm:$0xff]
    %v4798 = vld [vmem:[#allocation13 + $0x20] sm:$0xff]
    %v4799 = vld [vmem:[#allocation13 + $0x28] sm:$0xff]
    %v4800 = vld [vmem:[#allocation13 + $0x30] sm:$0xff]
    %v4801 = vld [vmem:[#allocation13 + $0x38] sm:$0xff]
    %v4802 = vld [vmem:[#allocation13 + $0x40] sm:$0xff]
    %v4803 = vld [vmem:[#allocation13 + $0x48] sm:$0xff]
    %v4804 = vld [vmem:[#allocation13 + $0x50] sm:$0xff]
    %v4805 = vld [vmem:[#allocation13 + $0x58] sm:$0xff]
    %v4806 = vld [vmem:[#allocation13 + $0x60] sm:$0xff]
    %v4807 = vld [vmem:[#allocation13 + $0x68] sm:$0xff]
    %v4808 = vld [vmem:[#allocation13 + $0x70] sm:$0xff]
    %v4809 = vld [vmem:[#allocation13 + $0x78] sm:$0xff]
    %v4810 = vld [vmem:[#allocation13 + $0x80] sm:$0xff]
    %v4811 = vld [vmem:[#allocation13 + $0x88] sm:$0xff]
    %v4812 = vld [vmem:[#allocation13 + $0x90] sm:$0xff]
    %v4813 = vld [vmem:[#allocation13 + $0x98] sm:$0xff]
    %v4814 = vld [vmem:[#allocation13 + $0xa0] sm:$0xff]
    %v4815 = vld [vmem:[#allocation13 + $0xa8] sm:$0xff]
    %v4816 = vld [vmem:[#allocation13 + $0xb0] sm:$0xff]
    %v4817 = vld [vmem:[#allocation13 + $0xb8] sm:$0xff]
    %v4818 = vld [vmem:[#allocation13 + $0xc0] sm:$0xff]
    %v4819 = vld [vmem:[#allocation13 + $0xc8] sm:$0xff]
    %v4820 = vld [vmem:[#allocation13 + $0xd0] sm:$0xff]
    %v4821 = vld [vmem:[#allocation13 + $0xd8] sm:$0xff]
    %v4822 = vld [vmem:[#allocation13 + $0xe0] sm:$0xff]
    %v4823 = vld [vmem:[#allocation13 + $0xe8] sm:$0xff]
    %v4824 = vld [vmem:[#allocation13 + $0xf0] sm:$0xff]
    %v4825 = vld [vmem:[#allocation13 + $0xf8] sm:$0xff]
    %v4826 = vld [vmem:[#allocation13 + $0x100] sm:$0xff]
    %v4827 = vld [vmem:[#allocation13 + $0x108] sm:$0xff]
    %v4828 = vld [vmem:[#allocation13 + $0x110] sm:$0xff]
    %v4829 = vld [vmem:[#allocation13 + $0x118] sm:$0xff]
    %v4830 = vld [vmem:[#allocation13 + $0x120] sm:$0xff]
    %v4831 = vld [vmem:[#allocation13 + $0x128] sm:$0xff]
    %v4832 = vld [vmem:[#allocation13 + $0x130] sm:$0xff]
    %v4833 = vld [vmem:[#allocation13 + $0x138] sm:$0xff]
    %v4834 = vld [vmem:[#allocation13 + $0x140] sm:$0xff]
    %v4835 = vld [vmem:[#allocation13 + $0x148] sm:$0xff]
    %v4836 = vld [vmem:[#allocation13 + $0x150] sm:$0xff]
    %v4837 = vld [vmem:[#allocation13 + $0x158] sm:$0xff]
    %v4838 = vld [vmem:[#allocation13 + $0x160] sm:$0xff]
    %v4839 = vld [vmem:[#allocation13 + $0x168] sm:$0xff]
    %v4840 = vld [vmem:[#allocation13 + $0x170] sm:$0xff]
    %v4841 = vld [vmem:[#allocation13 + $0x178] sm:$0xff]
    %v4842 = vld [vmem:[#allocation13 + $0x180] sm:$0xff]
    %v4843 = vld [vmem:[#allocation13 + $0x188] sm:$0xff]
    %v4844 = vld [vmem:[#allocation13 + $0x190] sm:$0xff]
    %v4845 = vld [vmem:[#allocation13 + $0x198] sm:$0xff]
    %v4846 = vld [vmem:[#allocation13 + $0x1a0] sm:$0xff]
    %v4847 = vld [vmem:[#allocation13 + $0x1a8] sm:$0xff]
    %v4848 = vld [vmem:[#allocation13 + $0x1b0] sm:$0xff]
    %v4849 = vld [vmem:[#allocation13 + $0x1b8] sm:$0xff]
    %v4850 = vld [vmem:[#allocation13 + $0x1c0] sm:$0xff]
    %v4851 = vld [vmem:[#allocation13 + $0x1c8] sm:$0xff]
    %v4852 = vld [vmem:[#allocation13 + $0x1d0] sm:$0xff]
    %v4853 = vld [vmem:[#allocation13 + $0x1d8] sm:$0xff]
    %v4854 = vld [vmem:[#allocation13 + $0x1e0] sm:$0xff]
    %v4855 = vld [vmem:[#allocation13 + $0x1e8] sm:$0xff]
    %v4856 = vld [vmem:[#allocation13 + $0x1f0] sm:$0xff]
    %v4857 = vld [vmem:[#allocation13 + $0x1f8] sm:$0xff]
    %v4858 = vld [vmem:[#allocation16] sm:$0xf]
    %v4860 = vlaneseq
    %v4861 = vshrl.u32 %v4860, 7
    %v4862 = vsub.s32 0, %v4861
    %v4863 = vrot.slane %v4858, %v4862
    %v4864 = vlaneseq
    %v4865 = vshrl.u32 %v4864, 7
    %v4866 = vsub.s32 1, %v4865
    %v4867 = vrot.slane %v4858, %v4866
    %v4868 = vlaneseq
    %v4869 = vshrl.u32 %v4868, 7
    %v4870 = vsub.s32 2, %v4869
    %v4871 = vrot.slane %v4858, %v4870
    %v4872 = vlaneseq
    %v4873 = vshrl.u32 %v4872, 7
    %v4874 = vsub.s32 3, %v4873
    %v4875 = vrot.slane %v4858, %v4874
    %4880 = vmatprep.subr.mxu0 %v4795
    %4881 = vmatpush1.msra.mxu0 %v4794
    %4882 = vmatprep.subr.mxu0 %v4799
    %4883 = vmatpush1.msra.mxu0 %v4798
    %4884 = vmatprep.subr.mxu0 %v4803
    %4885 = vmatpush1.msra.mxu0 %v4802
    %4886 = vmatprep.subr.mxu0 %v4807
    %4887 = vmatpush1.msra.mxu0 %v4806
    %4888 = vmatprep.subr.mxu0 %v4811
    %4889 = vmatpush1.msra.mxu0 %v4810
    %4890 = vmatprep.subr.mxu0 %v4815
    %4891 = vmatpush1.msra.mxu0 %v4814
    %4892 = vmatprep.subr.mxu0 %v4819
    %4893 = vmatpush1.msra.mxu0 %v4818
    %4894 = vmatprep.subr.mxu0 %v4823
    %4895 = vmatpush1.msra.mxu0 %v4822
    %4896 = vmatprep.subr.mxu0 %v4827
    %4897 = vmatpush1.msra.mxu0 %v4826
    %4898 = vmatprep.subr.mxu0 %v4831
    %4899 = vmatpush1.msra.mxu0 %v4830
    %4900 = vmatprep.subr.mxu0 %v4835
    %4901 = vmatpush1.msra.mxu0 %v4834
    %4902 = vmatprep.subr.mxu0 %v4839
    %4903 = vmatpush1.msra.mxu0 %v4838
    %4904 = vmatprep.subr.mxu0 %v4843
    %4905 = vmatpush1.msra.mxu0 %v4842
    %4906 = vmatprep.subr.mxu0 %v4847
    %4907 = vmatpush1.msra.mxu0 %v4846
    %4908 = vmatprep.subr.mxu0 %v4851
    %4909 = vmatpush1.msra.mxu0 %v4850
    %4910 = vmatprep.subr.mxu0 %v4855
    %4911 = vmatpush1.msra.mxu0 %v4854
    %4912 = vmatprep.subr.mxu0 0.0
    %4913 = vmatpush1.msra.mxu0 0.0
    %4914 = vmatprep.subr.mxu0 0.0
    %4915 = vmatpush1.msra.mxu0 0.0
    %4916 = vmatprep.subr.mxu0 0.0
    %4917 = vmatpush1.msra.mxu0 0.0
    %4918 = vmatprep.subr.mxu0 0.0
    %4919 = vmatpush1.msra.mxu0 0.0
    %4920 = vmatprep.subr.mxu0 0.0
    %4921 = vmatpush1.msra.mxu0 0.0
    %4922 = vmatprep.subr.mxu0 0.0
    %4923 = vmatpush1.msra.mxu0 0.0
    %4924 = vmatprep.subr.mxu0 0.0
    %4925 = vmatpush1.msra.mxu0 0.0
    %4926 = vmatprep.subr.mxu0 0.0
    %4927 = vmatpush1.msra.mxu0 0.0
    %4928 = vmatprep.subr.mxu0 0.0
    %4929 = vmatpush1.msra.mxu0 0.0
    %4930 = vmatprep.subr.mxu0 0.0
    %4931 = vmatpush1.msra.mxu0 0.0
    %4932 = vmatprep.subr.mxu0 0.0
    %4933 = vmatpush1.msra.mxu0 0.0
    %4934 = vmatprep.subr.mxu0 0.0
    %4935 = vmatpush1.msra.mxu0 0.0
    %4936 = vmatprep.subr.mxu0 0.0
    %4937 = vmatpush1.msra.mxu0 0.0
    %4938 = vmatprep.subr.mxu0 0.0
    %4939 = vmatpush1.msra.mxu0 0.0
    %4940 = vmatprep.subr.mxu0 0.0
    %4941 = vmatpush1.msra.mxu0 0.0
    %4942 = vmatprep.subr.mxu0 0.0
    %4943 = vmatpush1.msra.mxu0 0.0
    %4944 = vmatprep.mubr.f32.mxu0 0.0
    %4945 = vmatmul.mubr.f32.gmra.mrb[0].mxu0 %v4792
    %v4946 = vpop.f32.mrb[0].mxu0
    %v4947 = vadd.f32 %v4863, %v4946
    %v4948 = vpop.f32.mrb[0].mxu0
    %v4949 = vadd.f32 %v4867, %v4948
    %4950 = vdwg.mxu0
    %4951 = vmatprep.subr.mxu0 %v4797
    %4952 = vmatpush1.msra.mxu0 %v4796
    %4953 = vmatprep.subr.mxu0 %v4801
    %4954 = vmatpush1.msra.mxu0 %v4800
    %4955 = vmatprep.subr.mxu0 %v4805
    %4956 = vmatpush1.msra.mxu0 %v4804
    %4957 = vmatprep.subr.mxu0 %v4809
    %4958 = vmatpush1.msra.mxu0 %v4808
    %4959 = vmatprep.subr.mxu0 %v4813
    %4960 = vmatpush1.msra.mxu0 %v4812
    %4961 = vmatprep.subr.mxu0 %v4817
    %4962 = vmatpush1.msra.mxu0 %v4816
    %4963 = vmatprep.subr.mxu0 %v4821
    %4964 = vmatpush1.msra.mxu0 %v4820
    %4965 = vmatprep.subr.mxu0 %v4825
    %4966 = vmatpush1.msra.mxu0 %v4824
    %4967 = vmatprep.subr.mxu0 %v4829
    %4968 = vmatpush1.msra.mxu0 %v4828
    %4969 = vmatprep.subr.mxu0 %v4833
    %4970 = vmatpush1.msra.mxu0 %v4832
    %4971 = vmatprep.subr.mxu0 %v4837
    %4972 = vmatpush1.msra.mxu0 %v4836
    %4973 = vmatprep.subr.mxu0 %v4841
    %4974 = vmatpush1.msra.mxu0 %v4840
    %4975 = vmatprep.subr.mxu0 %v4845
    %4976 = vmatpush1.msra.mxu0 %v4844
    %4977 = vmatprep.subr.mxu0 %v4849
    %4978 = vmatpush1.msra.mxu0 %v4848
    %4979 = vmatprep.subr.mxu0 %v4853
    %4980 = vmatpush1.msra.mxu0 %v4852
    %4981 = vmatprep.subr.mxu0 %v4857
    %4982 = vmatpush1.msra.mxu0 %v4856
    %4983 = vmatprep.subr.mxu0 0.0
    %4984 = vmatpush1.msra.mxu0 0.0
    %4985 = vmatprep.subr.mxu0 0.0
    %4986 = vmatpush1.msra.mxu0 0.0
    %4987 = vmatprep.subr.mxu0 0.0
    %4988 = vmatpush1.msra.mxu0 0.0
    %4989 = vmatprep.subr.mxu0 0.0
    %4990 = vmatpush1.msra.mxu0 0.0
    %4991 = vmatprep.subr.mxu0 0.0
    %4992 = vmatpush1.msra.mxu0 0.0
    %4993 = vmatprep.subr.mxu0 0.0
    %4994 = vmatpush1.msra.mxu0 0.0
    %4995 = vmatprep.subr.mxu0 0.0
    %4996 = vmatpush1.msra.mxu0 0.0
    %4997 = vmatprep.subr.mxu0 0.0
    %4998 = vmatpush1.msra.mxu0 0.0
    %4999 = vmatprep.subr.mxu0 0.0
    %5000 = vmatpush1.msra.mxu0 0.0
    %5001 = vmatprep.subr.mxu0 0.0
    %5002 = vmatpush1.msra.mxu0 0.0
    %5003 = vmatprep.subr.mxu0 0.0
    %5004 = vmatpush1.msra.mxu0 0.0
    %5005 = vmatprep.subr.mxu0 0.0
    %5006 = vmatpush1.msra.mxu0 0.0
    %5007 = vmatprep.subr.mxu0 0.0
    %5008 = vmatpush1.msra.mxu0 0.0
    %5009 = vmatprep.subr.mxu0 0.0
    %5010 = vmatpush1.msra.mxu0 0.0
    %5011 = vmatprep.subr.mxu0 0.0
    %5012 = vmatpush1.msra.mxu0 0.0
    %5013 = vmatprep.subr.mxu0 0.0
    %5014 = vmatpush1.msra.mxu0 0.0
    %5015 = vmatprep.mubr.f32.mxu0 0.0
    %5016 = vmatmul.mubr.f32.gmra.mrb[0].mxu0 %v4792
    %v5017 = vpop.f32.mrb[0].mxu0
    %v5018 = vadd.f32 %v4871, %v5017
    %v5019 = vpop.f32.mrb[0].mxu0
    %v5020 = vadd.f32 %v4875, %v5019
    %5021 = vdwg.mxu0
    %v5022 = vld [vmem:[#allocation15] sm:$0xff]
    %v5023 = vld [vmem:[#allocation15 + $0x8] sm:$0xff]
    %v5024 = vld [vmem:[#allocation15 + $0x10] sm:$0xff]
    %v5025 = vld [vmem:[#allocation15 + $0x18] sm:$0xff]
    %v5026 = vld [vmem:[#allocation15 + $0x20] sm:$0xff]
    %v5027 = vld [vmem:[#allocation15 + $0x28] sm:$0xff]
    %v5028 = vld [vmem:[#allocation15 + $0x30] sm:$0xff]
    %v5029 = vld [vmem:[#allocation15 + $0x38] sm:$0xff]
    %v5030 = vld [vmem:[#allocation15 + $0x40] sm:$0xff]
    %v5031 = vld [vmem:[#allocation15 + $0x48] sm:$0xff]
    %v5032 = vld [vmem:[#allocation15 + $0x50] sm:$0xff]
    %v5033 = vld [vmem:[#allocation15 + $0x58] sm:$0xff]
    %v5034 = vld [vmem:[#allocation15 + $0x60] sm:$0xff]
    %v5035 = vld [vmem:[#allocation15 + $0x68] sm:$0xff]
    %v5036 = vld [vmem:[#allocation15 + $0x70] sm:$0xff]
    %v5037 = vld [vmem:[#allocation15 + $0x78] sm:$0xff]
    %v5038 = vld [vmem:[#allocation15 + $0x80] sm:$0xff]
    %v5039 = vld [vmem:[#allocation15 + $0x88] sm:$0xff]
    %v5040 = vld [vmem:[#allocation15 + $0x90] sm:$0xff]
    %v5041 = vld [vmem:[#allocation15 + $0x98] sm:$0xff]
    %v5042 = vld [vmem:[#allocation15 + $0xa0] sm:$0xff]
    %v5043 = vld [vmem:[#allocation15 + $0xa8] sm:$0xff]
    %v5044 = vld [vmem:[#allocation15 + $0xb0] sm:$0xff]
    %v5045 = vld [vmem:[#allocation15 + $0xb8] sm:$0xff]
    %v5046 = vld [vmem:[#allocation15 + $0xc0] sm:$0xff]
    %v5047 = vld [vmem:[#allocation15 + $0xc8] sm:$0xff]
    %v5048 = vld [vmem:[#allocation15 + $0xd0] sm:$0xff]
    %v5049 = vld [vmem:[#allocation15 + $0xd8] sm:$0xff]
    %v5050 = vld [vmem:[#allocation15 + $0xe0] sm:$0xff]
    %v5051 = vld [vmem:[#allocation15 + $0xe8] sm:$0xff]
    %v5052 = vld [vmem:[#allocation15 + $0xf0] sm:$0xff]
    %v5053 = vld [vmem:[#allocation15 + $0xf8] sm:$0xff]
    %v5054 = vld [vmem:[#allocation15 + $0x100] sm:$0xff]
    %v5055 = vld [vmem:[#allocation15 + $0x108] sm:$0xff]
    %v5056 = vld [vmem:[#allocation15 + $0x110] sm:$0xff]
    %v5057 = vld [vmem:[#allocation15 + $0x118] sm:$0xff]
    %v5058 = vld [vmem:[#allocation15 + $0x120] sm:$0xff]
    %v5059 = vld [vmem:[#allocation15 + $0x128] sm:$0xff]
    %v5060 = vld [vmem:[#allocation15 + $0x130] sm:$0xff]
    %v5061 = vld [vmem:[#allocation15 + $0x138] sm:$0xff]
    %v5062 = vld [vmem:[#allocation15 + $0x140] sm:$0xff]
    %v5063 = vld [vmem:[#allocation15 + $0x148] sm:$0xff]
    %v5064 = vld [vmem:[#allocation15 + $0x150] sm:$0xff]
    %v5065 = vld [vmem:[#allocation15 + $0x158] sm:$0xff]
    %v5066 = vld [vmem:[#allocation15 + $0x160] sm:$0xff]
    %v5067 = vld [vmem:[#allocation15 + $0x168] sm:$0xff]
    %v5068 = vld [vmem:[#allocation15 + $0x170] sm:$0xff]
    %v5069 = vld [vmem:[#allocation15 + $0x178] sm:$0xff]
    %v5070 = vld [vmem:[#allocation15 + $0x180] sm:$0xff]
    %v5071 = vld [vmem:[#allocation15 + $0x188] sm:$0xff]
    %v5072 = vld [vmem:[#allocation15 + $0x190] sm:$0xff]
    %v5073 = vld [vmem:[#allocation15 + $0x198] sm:$0xff]
    %v5074 = vld [vmem:[#allocation15 + $0x1a0] sm:$0xff]
    %v5075 = vld [vmem:[#allocation15 + $0x1a8] sm:$0xff]
    %v5076 = vld [vmem:[#allocation15 + $0x1b0] sm:$0xff]
    %v5077 = vld [vmem:[#allocation15 + $0x1b8] sm:$0xff]
    %v5078 = vld [vmem:[#allocation15 + $0x1c0] sm:$0xff]
    %v5079 = vld [vmem:[#allocation15 + $0x1c8] sm:$0xff]
    %v5080 = vld [vmem:[#allocation15 + $0x1d0] sm:$0xff]
    %v5081 = vld [vmem:[#allocation15 + $0x1d8] sm:$0xff]
    %v5082 = vld [vmem:[#allocation15 + $0x1e0] sm:$0xff]
    %v5083 = vld [vmem:[#allocation15 + $0x1e8] sm:$0xff]
    %v5084 = vld [vmem:[#allocation15 + $0x1f0] sm:$0xff]
    %v5085 = vld [vmem:[#allocation15 + $0x1f8] sm:$0xff]
    %5086 = vmatprep.subr.mxu0 %v5023
    %5087 = vmatpush1.msra.mxu0 %v5022
    %5088 = vmatprep.subr.mxu0 %v5027
    %5089 = vmatpush1.msra.mxu0 %v5026
    %5090 = vmatprep.subr.mxu0 %v5031
    %5091 = vmatpush1.msra.mxu0 %v5030
    %5092 = vmatprep.subr.mxu0 %v5035
    %5093 = vmatpush1.msra.mxu0 %v5034
    %5094 = vmatprep.subr.mxu0 %v5039
    %5095 = vmatpush1.msra.mxu0 %v5038
    %5096 = vmatprep.subr.mxu0 %v5043
    %5097 = vmatpush1.msra.mxu0 %v5042
    %5098 = vmatprep.subr.mxu0 %v5047
    %5099 = vmatpush1.msra.mxu0 %v5046
    %5100 = vmatprep.subr.mxu0 %v5051
    %5101 = vmatpush1.msra.mxu0 %v5050
    %5102 = vmatprep.subr.mxu0 %v5055
    %5103 = vmatpush1.msra.mxu0 %v5054
    %5104 = vmatprep.subr.mxu0 %v5059
    %5105 = vmatpush1.msra.mxu0 %v5058
    %5106 = vmatprep.subr.mxu0 %v5063
    %5107 = vmatpush1.msra.mxu0 %v5062
    %5108 = vmatprep.subr.mxu0 %v5067
    %5109 = vmatpush1.msra.mxu0 %v5066
    %5110 = vmatprep.subr.mxu0 %v5071
    %5111 = vmatpush1.msra.mxu0 %v5070
    %5112 = vmatprep.subr.mxu0 %v5075
    %5113 = vmatpush1.msra.mxu0 %v5074
    %5114 = vmatprep.subr.mxu0 %v5079
    %5115 = vmatpush1.msra.mxu0 %v5078
    %5116 = vmatprep.subr.mxu0 %v5083
    %5117 = vmatpush1.msra.mxu0 %v5082
    %5118 = vmatprep.subr.mxu0 0.0
    %5119 = vmatpush1.msra.mxu0 0.0
    %5120 = vmatprep.subr.mxu0 0.0
    %5121 = vmatpush1.msra.mxu0 0.0
    %5122 = vmatprep.subr.mxu0 0.0
    %5123 = vmatpush1.msra.mxu0 0.0
    %5124 = vmatprep.subr.mxu0 0.0
    %5125 = vmatpush1.msra.mxu0 0.0
    %5126 = vmatprep.subr.mxu0 0.0
    %5127 = vmatpush1.msra.mxu0 0.0
    %5128 = vmatprep.subr.mxu0 0.0
    %5129 = vmatpush1.msra.mxu0 0.0
    %5130 = vmatprep.subr.mxu0 0.0
    %5131 = vmatpush1.msra.mxu0 0.0
    %5132 = vmatprep.subr.mxu0 0.0
    %5133 = vmatpush1.msra.mxu0 0.0
    %5134 = vmatprep.subr.mxu0 0.0
    %5135 = vmatpush1.msra.mxu0 0.0
    %5136 = vmatprep.subr.mxu0 0.0
    %5137 = vmatpush1.msra.mxu0 0.0
    %5138 = vmatprep.subr.mxu0 0.0
    %5139 = vmatpush1.msra.mxu0 0.0
    %5140 = vmatprep.subr.mxu0 0.0
    %5141 = vmatpush1.msra.mxu0 0.0
    %5142 = vmatprep.subr.mxu0 0.0
    %5143 = vmatpush1.msra.mxu0 0.0
    %5144 = vmatprep.subr.mxu0 0.0
    %5145 = vmatpush1.msra.mxu0 0.0
    %5146 = vmatprep.subr.mxu0 0.0
    %5147 = vmatpush1.msra.mxu0 0.0
    %5148 = vmatprep.subr.mxu0 0.0
    %5149 = vmatpush1.msra.mxu0 0.0
    %5150 = vmatprep.mubr.f32.mxu0 0.0
    %5151 = vmatmul.mubr.f32.gmra.mrb[0].mxu0 0.0
    %v5152 = vpop.f32.mrb[0].mxu0
    %v5153 = vadd.f32 0.0, %v5152
    %v5154 = vpop.f32.mrb[0].mxu0
    %v5155 = vadd.f32 0.0, %v5154
    %5156 = vdwg.mxu0
    %5157 = vmatprep.subr.mxu0 %v5025
    %5158 = vmatpush1.msra.mxu0 %v5024
    %5159 = vmatprep.subr.mxu0 %v5029
    %5160 = vmatpush1.msra.mxu0 %v5028
    %5161 = vmatprep.subr.mxu0 %v5033
    %5162 = vmatpush1.msra.mxu0 %v5032
    %5163 = vmatprep.subr.mxu0 %v5037
    %5164 = vmatpush1.msra.mxu0 %v5036
    %5165 = vmatprep.subr.mxu0 %v5041
    %5166 = vmatpush1.msra.mxu0 %v5040
    %5167 = vmatprep.subr.mxu0 %v5045
    %5168 = vmatpush1.msra.mxu0 %v5044
    %5169 = vmatprep.subr.mxu0 %v5049
    %5170 = vmatpush1.msra.mxu0 %v5048
    %5171 = vmatprep.subr.mxu0 %v5053
    %5172 = vmatpush1.msra.mxu0 %v5052
    %5173 = vmatprep.subr.mxu0 %v5057
    %5174 = vmatpush1.msra.mxu0 %v5056
    %5175 = vmatprep.subr.mxu0 %v5061
    %5176 = vmatpush1.msra.mxu0 %v5060
    %5177 = vmatprep.subr.mxu0 %v5065
    %5178 = vmatpush1.msra.mxu0 %v5064
    %5179 = vmatprep.subr.mxu0 %v5069
    %5180 = vmatpush1.msra.mxu0 %v5068
    %5181 = vmatprep.subr.mxu0 %v5073
    %5182 = vmatpush1.msra.mxu0 %v5072
    %5183 = vmatprep.subr.mxu0 %v5077
    %5184 = vmatpush1.msra.mxu0 %v5076
    %5185 = vmatprep.subr.mxu0 %v5081
    %5186 = vmatpush1.msra.mxu0 %v5080
    %5187 = vmatprep.subr.mxu0 %v5085
    %5188 = vmatpush1.msra.mxu0 %v5084
    %5189 = vmatprep.subr.mxu0 0.0
    %5190 = vmatpush1.msra.mxu0 0.0
    %5191 = vmatprep.subr.mxu0 0.0
    %5192 = vmatpush1.msra.mxu0 0.0
    %5193 = vmatprep.subr.mxu0 0.0
    %5194 = vmatpush1.msra.mxu0 0.0
    %5195 = vmatprep.subr.mxu0 0.0
    %5196 = vmatpush1.msra.mxu0 0.0
    %5197 = vmatprep.subr.mxu0 0.0
    %5198 = vmatpush1.msra.mxu0 0.0
    %5199 = vmatprep.subr.mxu0 0.0
    %5200 = vmatpush1.msra.mxu0 0.0
    %5201 = vmatprep.subr.mxu0 0.0
    %5202 = vmatpush1.msra.mxu0 0.0
    %5203 = vmatprep.subr.mxu0 0.0
    %5204 = vmatpush1.msra.mxu0 0.0
    %5205 = vmatprep.subr.mxu0 0.0
    %5206 = vmatpush1.msra.mxu0 0.0
    %5207 = vmatprep.subr.mxu0 0.0
    %5208 = vmatpush1.msra.mxu0 0.0
    %5209 = vmatprep.subr.mxu0 0.0
    %5210 = vmatpush1.msra.mxu0 0.0
    %5211 = vmatprep.subr.mxu0 0.0
    %5212 = vmatpush1.msra.mxu0 0.0
    %5213 = vmatprep.subr.mxu0 0.0
    %5214 = vmatpush1.msra.mxu0 0.0
    %5215 = vmatprep.subr.mxu0 0.0
    %5216 = vmatpush1.msra.mxu0 0.0
    %5217 = vmatprep.subr.mxu0 0.0
    %5218 = vmatpush1.msra.mxu0 0.0
    %5219 = vmatprep.subr.mxu0 0.0
    %5220 = vmatpush1.msra.mxu0 0.0
    %5221 = vmatprep.mubr.f32.mxu0 0.0
    %5222 = vmatmul.mubr.f32.gmra.mrb[0].mxu0 0.0
    %v5223 = vpop.f32.mrb[0].mxu0
    %v5224 = vadd.f32 0.0, %v5223
    %v5225 = vpop.f32.mrb[0].mxu0
    %v5226 = vadd.f32 0.0, %v5225
    %5227 = vdwg.mxu0
    %v5228 = vadd.f32 %v4947, %v5153
    %v5229 = vadd.f32 %v4949, %v5155
    %v5230 = vadd.f32 %v5018, %v5224
    %v5231 = vadd.f32 %v5020, %v5226
    %v5232 = vmul.f32 %v5228, 0.5
    %v5233 = vtanh.pop %v5232
    %v5234 = vadd.f32 %v5233, 1.0
    %v5235 = vmul.f32 %v5234, 0.5
    %v5236 = vmul.f32 %v5229, 0.5
    %v5237 = vtanh.pop %v5236
    %v5238 = vadd.f32 %v5237, 1.0
    %v5239 = vmul.f32 %v5238, 0.5
    %v5240 = vtanh.pop %v5230
    %v5241 = vmul.f32 %v5231, 0.5
    %v5242 = vtanh.pop %v5241
    %v5243 = vadd.f32 %v5242, 1.0
    %v5244 = vmul.f32 %v5243, 0.5
    %v5245 = vmul.f32 %v5239, 0.0
    %v5246 = vmul.f32 %v5235, %v5240
    %v5247 = vadd.f32 %v5245, %v5246
    %v5248 = vtanh.pop %v5247
    %v5249 = vmul.f32 %v5244, %v5248
    %5250 = vst [vmem:[#allocation4] sm:$0x1] %v5249
    %v5251 = vld [vmem:[#allocation15] sm:$0xff]
    %v5252 = vld [vmem:[#allocation15 + $0x8] sm:$0xff]
    %v5253 = vld [vmem:[#allocation15 + $0x10] sm:$0xff]
    %v5254 = vld [vmem:[#allocation15 + $0x18] sm:$0xff]
    %v5255 = vld [vmem:[#allocation15 + $0x20] sm:$0xff]
    %v5256 = vld [vmem:[#allocation15 + $0x28] sm:$0xff]
    %v5257 = vld [vmem:[#allocation15 + $0x30] sm:$0xff]
    %v5258 = vld [vmem:[#allocation15 + $0x38] sm:$0xff]
    %v5259 = vld [vmem:[#allocation15 + $0x40] sm:$0xff]
    %v5260 = vld [vmem:[#allocation15 + $0x48] sm:$0xff]
    %v5261 = vld [vmem:[#allocation15 + $0x50] sm:$0xff]
    %v5262 = vld [vmem:[#allocation15 + $0x58] sm:$0xff]
    %v5263 = vld [vmem:[#allocation15 + $0x60] sm:$0xff]
    %v5264 = vld [vmem:[#allocation15 + $0x68] sm:$0xff]
    %v5265 = vld [vmem:[#allocation15 + $0x70] sm:$0xff]
    %v5266 = vld [vmem:[#allocation15 + $0x78] sm:$0xff]
    %v5267 = vld [vmem:[#allocation15 + $0x80] sm:$0xff]
    %v5268 = vld [vmem:[#allocation15 + $0x88] sm:$0xff]
    %v5269 = vld [vmem:[#allocation15 + $0x90] sm:$0xff]
    %v5270 = vld [vmem:[#allocation15 + $0x98] sm:$0xff]
    %v5271 = vld [vmem:[#allocation15 + $0xa0] sm:$0xff]
    %v5272 = vld [vmem:[#allocation15 + $0xa8] sm:$0xff]
    %v5273 = vld [vmem:[#allocation15 + $0xb0] sm:$0xff]
    %v5274 = vld [vmem:[#allocation15 + $0xb8] sm:$0xff]
    %v5275 = vld [vmem:[#allocation15 + $0xc0] sm:$0xff]
    %v5276 = vld [vmem:[#allocation15 + $0xc8] sm:$0xff]
    %v5277 = vld [vmem:[#allocation15 + $0xd0] sm:$0xff]
    %v5278 = vld [vmem:[#allocation15 + $0xd8] sm:$0xff]
    %v5279 = vld [vmem:[#allocation15 + $0xe0] sm:$0xff]
    %v5280 = vld [vmem:[#allocation15 + $0xe8] sm:$0xff]
    %v5281 = vld [vmem:[#allocation15 + $0xf0] sm:$0xff]
    %v5282 = vld [vmem:[#allocation15 + $0xf8] sm:$0xff]
    %v5283 = vld [vmem:[#allocation15 + $0x100] sm:$0xff]
    %v5284 = vld [vmem:[#allocation15 + $0x108] sm:$0xff]
    %v5285 = vld [vmem:[#allocation15 + $0x110] sm:$0xff]
    %v5286 = vld [vmem:[#allocation15 + $0x118] sm:$0xff]
    %v5287 = vld [vmem:[#allocation15 + $0x120] sm:$0xff]
    %v5288 = vld [vmem:[#allocation15 + $0x128] sm:$0xff]
    %v5289 = vld [vmem:[#allocation15 + $0x130] sm:$0xff]
    %v5290 = vld [vmem:[#allocation15 + $0x138] sm:$0xff]
    %v5291 = vld [vmem:[#allocation15 + $0x140] sm:$0xff]
    %v5292 = vld [vmem:[#allocation15 + $0x148] sm:$0xff]
    %v5293 = vld [vmem:[#allocation15 + $0x150] sm:$0xff]
    %v5294 = vld [vmem:[#allocation15 + $0x158] sm:$0xff]
    %v5295 = vld [vmem:[#allocation15 + $0x160] sm:$0xff]
    %v5296 = vld [vmem:[#allocation15 + $0x168] sm:$0xff]
    %v5297 = vld [vmem:[#allocation15 + $0x170] sm:$0xff]
    %v5298 = vld [vmem:[#allocation15 + $0x178] sm:$0xff]
    %v5299 = vld [vmem:[#allocation15 + $0x180] sm:$0xff]
    %v5300 = vld [vmem:[#allocation15 + $0x188] sm:$0xff]
    %v5301 = vld [vmem:[#allocation15 + $0x190] sm:$0xff]
    %v5302 = vld [vmem:[#allocation15 + $0x198] sm:$0xff]
    %v5303 = vld [vmem:[#allocation15 + $0x1a0] sm:$0xff]
    %v5304 = vld [vmem:[#allocation15 + $0x1a8] sm:$0xff]
    %v5305 = vld [vmem:[#allocation15 + $0x1b0] sm:$0xff]
    %v5306 = vld [vmem:[#allocation15 + $0x1b8] sm:$0xff]
    %v5307 = vld [vmem:[#allocation15 + $0x1c0] sm:$0xff]
    %v5308 = vld [vmem:[#allocation15 + $0x1c8] sm:$0xff]
    %v5309 = vld [vmem:[#allocation15 + $0x1d0] sm:$0xff]
    %v5310 = vld [vmem:[#allocation15 + $0x1d8] sm:$0xff]
    %v5311 = vld [vmem:[#allocation15 + $0x1e0] sm:$0xff]
    %v5312 = vld [vmem:[#allocation15 + $0x1e8] sm:$0xff]
    %v5313 = vld [vmem:[#allocation15 + $0x1f0] sm:$0xff]
    %v5314 = vld [vmem:[#allocation15 + $0x1f8] sm:$0xff]
    %5315 = vmatprep.subr.mxu0 %v5252
    %5316 = vmatpush1.msra.mxu0 %v5251
    %5317 = vmatprep.subr.mxu0 %v5256
    %5318 = vmatpush1.msra.mxu0 %v5255
    %5319 = vmatprep.subr.mxu0 %v5260
    %5320 = vmatpush1.msra.mxu0 %v5259
    %5321 = vmatprep.subr.mxu0 %v5264
    %5322 = vmatpush1.msra.mxu0 %v5263
    %5323 = vmatprep.subr.mxu0 %v5268
    %5324 = vmatpush1.msra.mxu0 %v5267
    %5325 = vmatprep.subr.mxu0 %v5272
    %5326 = vmatpush1.msra.mxu0 %v5271
    %5327 = vmatprep.subr.mxu0 %v5276
    %5328 = vmatpush1.msra.mxu0 %v5275
    %5329 = vmatprep.subr.mxu0 %v5280
    %5330 = vmatpush1.msra.mxu0 %v5279
    %5331 = vmatprep.subr.mxu0 %v5284
    %5332 = vmatpush1.msra.mxu0 %v5283
    %5333 = vmatprep.subr.mxu0 %v5288
    %5334 = vmatpush1.msra.mxu0 %v5287
    %5335 = vmatprep.subr.mxu0 %v5292
    %5336 = vmatpush1.msra.mxu0 %v5291
    %5337 = vmatprep.subr.mxu0 %v5296
    %5338 = vmatpush1.msra.mxu0 %v5295
    %5339 = vmatprep.subr.mxu0 %v5300
    %5340 = vmatpush1.msra.mxu0 %v5299
    %5341 = vmatprep.subr.mxu0 %v5304
    %5342 = vmatpush1.msra.mxu0 %v5303
    %5343 = vmatprep.subr.mxu0 %v5308
    %5344 = vmatpush1.msra.mxu0 %v5307
    %5345 = vmatprep.subr.mxu0 %v5312
    %5346 = vmatpush1.msra.mxu0 %v5311
    %5347 = vmatprep.subr.mxu0 0.0
    %5348 = vmatpush1.msra.mxu0 0.0
    %5349 = vmatprep.subr.mxu0 0.0
    %5350 = vmatpush1.msra.mxu0 0.0
    %5351 = vmatprep.subr.mxu0 0.0
    %5352 = vmatpush1.msra.mxu0 0.0
    %5353 = vmatprep.subr.mxu0 0.0
    %5354 = vmatpush1.msra.mxu0 0.0
    %5355 = vmatprep.subr.mxu0 0.0
    %5356 = vmatpush1.msra.mxu0 0.0
    %5357 = vmatprep.subr.mxu0 0.0
    %5358 = vmatpush1.msra.mxu0 0.0
    %5359 = vmatprep.subr.mxu0 0.0
    %5360 = vmatpush1.msra.mxu0 0.0
    %5361 = vmatprep.subr.mxu0 0.0
    %5362 = vmatpush1.msra.mxu0 0.0
    %5363 = vmatprep.subr.mxu0 0.0
    %5364 = vmatpush1.msra.mxu0 0.0
    %5365 = vmatprep.subr.mxu0 0.0
    %5366 = vmatpush1.msra.mxu0 0.0
    %5367 = vmatprep.subr.mxu0 0.0
    %5368 = vmatpush1.msra.mxu0 0.0
    %5369 = vmatprep.subr.mxu0 0.0
    %5370 = vmatpush1.msra.mxu0 0.0
    %5371 = vmatprep.subr.mxu0 0.0
    %5372 = vmatpush1.msra.mxu0 0.0
    %5373 = vmatprep.subr.mxu0 0.0
    %5374 = vmatpush1.msra.mxu0 0.0
    %5375 = vmatprep.subr.mxu0 0.0
    %5376 = vmatpush1.msra.mxu0 0.0
    %5377 = vmatprep.subr.mxu0 0.0
    %5378 = vmatpush1.msra.mxu0 0.0
    %5379 = vmatprep.mubr.f32.mxu0 0.0
    %5380 = vmatmul.mubr.f32.gmra.mrb[0].mxu0 %v5249
    %v5381 = vpop.f32.mrb[0].mxu0
    %v5382 = vadd.f32 0.0, %v5381
    %v5383 = vpop.f32.mrb[0].mxu0
    %v5384 = vadd.f32 0.0, %v5383
    %5385 = vdwg.mxu0
    %5386 = vmatprep.subr.mxu0 %v5254
    %5387 = vmatpush1.msra.mxu0 %v5253
    %5388 = vmatprep.subr.mxu0 %v5258
    %5389 = vmatpush1.msra.mxu0 %v5257
    %5390 = vmatprep.subr.mxu0 %v5262
    %5391 = vmatpush1.msra.mxu0 %v5261
    %5392 = vmatprep.subr.mxu0 %v5266
    %5393 = vmatpush1.msra.mxu0 %v5265
    %5394 = vmatprep.subr.mxu0 %v5270
    %5395 = vmatpush1.msra.mxu0 %v5269
    %5396 = vmatprep.subr.mxu0 %v5274
    %5397 = vmatpush1.msra.mxu0 %v5273
    %5398 = vmatprep.subr.mxu0 %v5278
    %5399 = vmatpush1.msra.mxu0 %v5277
    %5400 = vmatprep.subr.mxu0 %v5282
    %5401 = vmatpush1.msra.mxu0 %v5281
    %5402 = vmatprep.subr.mxu0 %v5286
    %5403 = vmatpush1.msra.mxu0 %v5285
    %5404 = vmatprep.subr.mxu0 %v5290
    %5405 = vmatpush1.msra.mxu0 %v5289
    %5406 = vmatprep.subr.mxu0 %v5294
    %5407 = vmatpush1.msra.mxu0 %v5293
    %5408 = vmatprep.subr.mxu0 %v5298
    %5409 = vmatpush1.msra.mxu0 %v5297
    %5410 = vmatprep.subr.mxu0 %v5302
    %5411 = vmatpush1.msra.mxu0 %v5301
    %5412 = vmatprep.subr.mxu0 %v5306
    %5413 = vmatpush1.msra.mxu0 %v5305
    %5414 = vmatprep.subr.mxu0 %v5310
    %5415 = vmatpush1.msra.mxu0 %v5309
    %5416 = vmatprep.subr.mxu0 %v5314
    %5417 = vmatpush1.msra.mxu0 %v5313
    %5418 = vmatprep.subr.mxu0 0.0
    %5419 = vmatpush1.msra.mxu0 0.0
    %5420 = vmatprep.subr.mxu0 0.0
    %5421 = vmatpush1.msra.mxu0 0.0
    %5422 = vmatprep.subr.mxu0 0.0
    %5423 = vmatpush1.msra.mxu0 0.0
    %5424 = vmatprep.subr.mxu0 0.0
    %5425 = vmatpush1.msra.mxu0 0.0
    %5426 = vmatprep.subr.mxu0 0.0
    %5427 = vmatpush1.msra.mxu0 0.0
    %5428 = vmatprep.subr.mxu0 0.0
    %5429 = vmatpush1.msra.mxu0 0.0
    %5430 = vmatprep.subr.mxu0 0.0
    %5431 = vmatpush1.msra.mxu0 0.0
    %5432 = vmatprep.subr.mxu0 0.0
    %5433 = vmatpush1.msra.mxu0 0.0
    %5434 = vmatprep.subr.mxu0 0.0
    %5435 = vmatpush1.msra.mxu0 0.0
    %5436 = vmatprep.subr.mxu0 0.0
    %5437 = vmatpush1.msra.mxu0 0.0
    %5438 = vmatprep.subr.mxu0 0.0
    %5439 = vmatpush1.msra.mxu0 0.0
    %5440 = vmatprep.subr.mxu0 0.0
    %5441 = vmatpush1.msra.mxu0 0.0
    %5442 = vmatprep.subr.mxu0 0.0
    %5443 = vmatpush1.msra.mxu0 0.0
    %5444 = vmatprep.subr.mxu0 0.0
    %5445 = vmatpush1.msra.mxu0 0.0
    %5446 = vmatprep.subr.mxu0 0.0
    %5447 = vmatpush1.msra.mxu0 0.0
    %5448 = vmatprep.subr.mxu0 0.0
    %5449 = vmatpush1.msra.mxu0 0.0
    %5450 = vmatprep.mubr.f32.mxu0 0.0
    %5451 = vmatmul.mubr.f32.gmra.mrb[0].mxu0 %v5249
    %v5452 = vpop.f32.mrb[0].mxu0
    %v5453 = vadd.f32 0.0, %v5452
    %v5454 = vpop.f32.mrb[0].mxu0
    %v5455 = vadd.f32 0.0, %v5454
    %5456 = vdwg.mxu0
    %v5461 = vrot.slane %v5382, 7
    %v5462 = vrot.slane %v5384, 7
    %v5463 = vrot.slane %v5453, 7
    %v5464 = vrot.slane %v5455, 7
    %v5469 = vadd.f32 %v4947, %v5461
    %v5470 = vadd.f32 %v4949, %v5462
    %v5471 = vadd.f32 %v5018, %v5463
    %v5472 = vadd.f32 %v5020, %v5464
    %v5473 = vmul.f32 %v5469, 0.5
    %v5474 = vtanh.pop %v5473
    %v5475 = vadd.f32 %v5474, 1.0
    %v5476 = vmul.f32 %v5475, 0.5
    %v5477 = vmul.f32 %v5470, 0.5
    %v5478 = vtanh.pop %v5477
    %v5479 = vadd.f32 %v5478, 1.0
    %v5480 = vmul.f32 %v5479, 0.5
    %v5481 = vtanh.pop %v5471
    %v5482 = vmul.f32 %v5472, 0.5
    %v5483 = vtanh.pop %v5482
    %v5484 = vadd.f32 %v5483, 1.0
    %v5485 = vmul.f32 %v5484, 0.5
    %v5487 = vrot.slane %v5247, 7
    %v5489 = vmul.f32 %v5480, %v5487
    %v5490 = vmul.f32 %v5476, %v5481
    %v5491 = vadd.f32 %v5489, %v5490
    %v5492 = vtanh.pop %v5491
    %v5493 = vmul.f32 %v5485, %v5492
    %5494 = vst [vmem:[#allocation4] sm:$0x2] %v5493
    %v5495 = vld [vmem:[#allocation4] sm:$0xff]
    %s5496 = scalar_lea.vmem [#allocation13], 512
    %v5497 = vld [vmem:[%s5496] sm:$0xff]
    %v5498 = vld [vmem:[%s5496 + $0x8] sm:$0xff]
    %v5499 = vld [vmem:[%s5496 + $0x10] sm:$0xff]
    %v5500 = vld [vmem:[%s5496 + $0x18] sm:$0xff]
    %v5501 = vld [vmem:[%s5496 + $0x20] sm:$0xff]
    %v5502 = vld [vmem:[%s5496 + $0x28] sm:$0xff]
    %v5503 = vld [vmem:[%s5496 + $0x30] sm:$0xff]
    %v5504 = vld [vmem:[%s5496 + $0x38] sm:$0xff]
    %v5505 = vld [vmem:[%s5496 + $0x40] sm:$0xff]
    %v5506 = vld [vmem:[%s5496 + $0x48] sm:$0xff]
    %v5507 = vld [vmem:[%s5496 + $0x50] sm:$0xff]
    %v5508 = vld [vmem:[%s5496 + $0x58] sm:$0xff]
    %v5509 = vld [vmem:[%s5496 + $0x60] sm:$0xff]
    %v5510 = vld [vmem:[%s5496 + $0x68] sm:$0xff]
    %v5511 = vld [vmem:[%s5496 + $0x70] sm:$0xff]
    %v5512 = vld [vmem:[%s5496 + $0x78] sm:$0xff]
    %v5513 = vld [vmem:[%s5496 + $0x80] sm:$0xff]
    %v5514 = vld [vmem:[%s5496 + $0x88] sm:$0xff]
    %v5515 = vld [vmem:[%s5496 + $0x90] sm:$0xff]
    %v5516 = vld [vmem:[%s5496 + $0x98] sm:$0xff]
    %v5517 = vld [vmem:[%s5496 + $0xa0] sm:$0xff]
    %v5518 = vld [vmem:[%s5496 + $0xa8] sm:$0xff]
    %v5519 = vld [vmem:[%s5496 + $0xb0] sm:$0xff]
    %v5520 = vld [vmem:[%s5496 + $0xb8] sm:$0xff]
    %v5521 = vld [vmem:[%s5496 + $0xc0] sm:$0xff]
    %v5522 = vld [vmem:[%s5496 + $0xc8] sm:$0xff]
    %v5523 = vld [vmem:[%s5496 + $0xd0] sm:$0xff]
    %v5524 = vld [vmem:[%s5496 + $0xd8] sm:$0xff]
    %v5525 = vld [vmem:[%s5496 + $0xe0] sm:$0xff]
    %v5526 = vld [vmem:[%s5496 + $0xe8] sm:$0xff]
    %v5527 = vld [vmem:[%s5496 + $0xf0] sm:$0xff]
    %v5528 = vld [vmem:[%s5496 + $0xf8] sm:$0xff]
    %v5529 = vld [vmem:[%s5496 + $0x100] sm:$0xff]
    %v5530 = vld [vmem:[%s5496 + $0x108] sm:$0xff]
    %v5531 = vld [vmem:[%s5496 + $0x110] sm:$0xff]
    %v5532 = vld [vmem:[%s5496 + $0x118] sm:$0xff]
    %v5533 = vld [vmem:[%s5496 + $0x120] sm:$0xff]
    %v5534 = vld [vmem:[%s5496 + $0x128] sm:$0xff]
    %v5535 = vld [vmem:[%s5496 + $0x130] sm:$0xff]
    %v5536 = vld [vmem:[%s5496 + $0x138] sm:$0xff]
    %v5537 = vld [vmem:[%s5496 + $0x140] sm:$0xff]
    %v5538 = vld [vmem:[%s5496 + $0x148] sm:$0xff]
    %v5539 = vld [vmem:[%s5496 + $0x150] sm:$0xff]
    %v5540 = vld [vmem:[%s5496 + $0x158] sm:$0xff]
    %v5541 = vld [vmem:[%s5496 + $0x160] sm:$0xff]
    %v5542 = vld [vmem:[%s5496 + $0x168] sm:$0xff]
    %v5543 = vld [vmem:[%s5496 + $0x170] sm:$0xff]
    %v5544 = vld [vmem:[%s5496 + $0x178] sm:$0xff]
    %v5545 = vld [vmem:[%s5496 + $0x180] sm:$0xff]
    %v5546 = vld [vmem:[%s5496 + $0x188] sm:$0xff]
    %v5547 = vld [vmem:[%s5496 + $0x190] sm:$0xff]
    %v5548 = vld [vmem:[%s5496 + $0x198] sm:$0xff]
    %v5549 = vld [vmem:[%s5496 + $0x1a0] sm:$0xff]
    %v5550 = vld [vmem:[%s5496 + $0x1a8] sm:$0xff]
    %v5551 = vld [vmem:[%s5496 + $0x1b0] sm:$0xff]
    %v5552 = vld [vmem:[%s5496 + $0x1b8] sm:$0xff]
    %v5553 = vld [vmem:[%s5496 + $0x1c0] sm:$0xff]
    %v5554 = vld [vmem:[%s5496 + $0x1c8] sm:$0xff]
    %v5555 = vld [vmem:[%s5496 + $0x1d0] sm:$0xff]
    %v5556 = vld [vmem:[%s5496 + $0x1d8] sm:$0xff]
    %v5557 = vld [vmem:[%s5496 + $0x1e0] sm:$0xff]
    %v5558 = vld [vmem:[%s5496 + $0x1e8] sm:$0xff]
    %v5559 = vld [vmem:[%s5496 + $0x1f0] sm:$0xff]
    %v5560 = vld [vmem:[%s5496 + $0x1f8] sm:$0xff]
    %s5561 = scalar_lea.vmem [#allocation16], 4
    %v5562 = vld [vmem:[%s5561] sm:$0xf]
    %v5564 = vlaneseq
    %v5565 = vshrl.u32 %v5564, 7
    %v5566 = vsub.s32 0, %v5565
    %v5567 = vrot.slane %v5562, %v5566
    %v5568 = vlaneseq
    %v5569 = vshrl.u32 %v5568, 7
    %v5570 = vsub.s32 1, %v5569
    %v5571 = vrot.slane %v5562, %v5570
    %v5572 = vlaneseq
    %v5573 = vshrl.u32 %v5572, 7
    %v5574 = vsub.s32 2, %v5573
    %v5575 = vrot.slane %v5562, %v5574
    %v5576 = vlaneseq
    %v5577 = vshrl.u32 %v5576, 7
    %v5578 = vsub.s32 3, %v5577
    %v5579 = vrot.slane %v5562, %v5578
    %5584 = vmatprep.subr.mxu0 %v5498
    %5585 = vmatpush1.msra.mxu0 %v5497
    %5586 = vmatprep.subr.mxu0 %v5502
    %5587 = vmatpush1.msra.mxu0 %v5501
    %5588 = vmatprep.subr.mxu0 %v5506
    %5589 = vmatpush1.msra.mxu0 %v5505
    %5590 = vmatprep.subr.mxu0 %v5510
    %5591 = vmatpush1.msra.mxu0 %v5509
    %5592 = vmatprep.subr.mxu0 %v5514
    %5593 = vmatpush1.msra.mxu0 %v5513
    %5594 = vmatprep.subr.mxu0 %v5518
    %5595 = vmatpush1.msra.mxu0 %v5517
    %5596 = vmatprep.subr.mxu0 %v5522
    %5597 = vmatpush1.msra.mxu0 %v5521
    %5598 = vmatprep.subr.mxu0 %v5526
    %5599 = vmatpush1.msra.mxu0 %v5525
    %5600 = vmatprep.subr.mxu0 %v5530
    %5601 = vmatpush1.msra.mxu0 %v5529
    %5602 = vmatprep.subr.mxu0 %v5534
    %5603 = vmatpush1.msra.mxu0 %v5533
    %5604 = vmatprep.subr.mxu0 %v5538
    %5605 = vmatpush1.msra.mxu0 %v5537
    %5606 = vmatprep.subr.mxu0 %v5542
    %5607 = vmatpush1.msra.mxu0 %v5541
    %5608 = vmatprep.subr.mxu0 %v5546
    %5609 = vmatpush1.msra.mxu0 %v5545
    %5610 = vmatprep.subr.mxu0 %v5550
    %5611 = vmatpush1.msra.mxu0 %v5549
    %5612 = vmatprep.subr.mxu0 %v5554
    %5613 = vmatpush1.msra.mxu0 %v5553
    %5614 = vmatprep.subr.mxu0 %v5558
    %5615 = vmatpush1.msra.mxu0 %v5557
    %5616 = vmatprep.subr.mxu0 0.0
    %5617 = vmatpush1.msra.mxu0 0.0
    %5618 = vmatprep.subr.mxu0 0.0
    %5619 = vmatpush1.msra.mxu0 0.0
    %5620 = vmatprep.subr.mxu0 0.0
    %5621 = vmatpush1.msra.mxu0 0.0
    %5622 = vmatprep.subr.mxu0 0.0
    %5623 = vmatpush1.msra.mxu0 0.0
    %5624 = vmatprep.subr.mxu0 0.0
    %5625 = vmatpush1.msra.mxu0 0.0
    %5626 = vmatprep.subr.mxu0 0.0
    %5627 = vmatpush1.msra.mxu0 0.0
    %5628 = vmatprep.subr.mxu0 0.0
    %5629 = vmatpush1.msra.mxu0 0.0
    %5630 = vmatprep.subr.mxu0 0.0
    %5631 = vmatpush1.msra.mxu0 0.0
    %5632 = vmatprep.subr.mxu0 0.0
    %5633 = vmatpush1.msra.mxu0 0.0
    %5634 = vmatprep.subr.mxu0 0.0
    %5635 = vmatpush1.msra.mxu0 0.0
    %5636 = vmatprep.subr.mxu0 0.0
    %5637 = vmatpush1.msra.mxu0 0.0
    %5638 = vmatprep.subr.mxu0 0.0
    %5639 = vmatpush1.msra.mxu0 0.0
    %5640 = vmatprep.subr.mxu0 0.0
    %5641 = vmatpush1.msra.mxu0 0.0
    %5642 = vmatprep.subr.mxu0 0.0
    %5643 = vmatpush1.msra.mxu0 0.0
    %5644 = vmatprep.subr.mxu0 0.0
    %5645 = vmatpush1.msra.mxu0 0.0
    %5646 = vmatprep.subr.mxu0 0.0
    %5647 = vmatpush1.msra.mxu0 0.0
    %5648 = vmatprep.mubr.f32.mxu0 0.0
    %5649 = vmatmul.mubr.f32.gmra.mrb[0].mxu0 %v5495
    %v5650 = vpop.f32.mrb[0].mxu0
    %v5651 = vadd.f32 %v5567, %v5650
    %v5652 = vpop.f32.mrb[0].mxu0
    %v5653 = vadd.f32 %v5571, %v5652
    %5654 = vdwg.mxu0
    %5655 = vmatprep.subr.mxu0 %v5500
    %5656 = vmatpush1.msra.mxu0 %v5499
    %5657 = vmatprep.subr.mxu0 %v5504
    %5658 = vmatpush1.msra.mxu0 %v5503
    %5659 = vmatprep.subr.mxu0 %v5508
    %5660 = vmatpush1.msra.mxu0 %v5507
    %5661 = vmatprep.subr.mxu0 %v5512
    %5662 = vmatpush1.msra.mxu0 %v5511
    %5663 = vmatprep.subr.mxu0 %v5516
    %5664 = vmatpush1.msra.mxu0 %v5515
    %5665 = vmatprep.subr.mxu0 %v5520
    %5666 = vmatpush1.msra.mxu0 %v5519
    %5667 = vmatprep.subr.mxu0 %v5524
    %5668 = vmatpush1.msra.mxu0 %v5523
    %5669 = vmatprep.subr.mxu0 %v5528
    %5670 = vmatpush1.msra.mxu0 %v5527
    %5671 = vmatprep.subr.mxu0 %v5532
    %5672 = vmatpush1.msra.mxu0 %v5531
    %5673 = vmatprep.subr.mxu0 %v5536
    %5674 = vmatpush1.msra.mxu0 %v5535
    %5675 = vmatprep.subr.mxu0 %v5540
    %5676 = vmatpush1.msra.mxu0 %v5539
    %5677 = vmatprep.subr.mxu0 %v5544
    %5678 = vmatpush1.msra.mxu0 %v5543
    %5679 = vmatprep.subr.mxu0 %v5548
    %5680 = vmatpush1.msra.mxu0 %v5547
    %5681 = vmatprep.subr.mxu0 %v5552
    %5682 = vmatpush1.msra.mxu0 %v5551
    %5683 = vmatprep.subr.mxu0 %v5556
    %5684 = vmatpush1.msra.mxu0 %v5555
    %5685 = vmatprep.subr.mxu0 %v5560
    %5686 = vmatpush1.msra.mxu0 %v5559
    %5687 = vmatprep.subr.mxu0 0.0
    %5688 = vmatpush1.msra.mxu0 0.0
    %5689 = vmatprep.subr.mxu0 0.0
    %5690 = vmatpush1.msra.mxu0 0.0
    %5691 = vmatprep.subr.mxu0 0.0
    %5692 = vmatpush1.msra.mxu0 0.0
    %5693 = vmatprep.subr.mxu0 0.0
    %5694 = vmatpush1.msra.mxu0 0.0
    %5695 = vmatprep.subr.mxu0 0.0
    %5696 = vmatpush1.msra.mxu0 0.0
    %5697 = vmatprep.subr.mxu0 0.0
    %5698 = vmatpush1.msra.mxu0 0.0
    %5699 = vmatprep.subr.mxu0 0.0
    %5700 = vmatpush1.msra.mxu0 0.0
    %5701 = vmatprep.subr.mxu0 0.0
    %5702 = vmatpush1.msra.mxu0 0.0
    %5703 = vmatprep.subr.mxu0 0.0
    %5704 = vmatpush1.msra.mxu0 0.0
    %5705 = vmatprep.subr.mxu0 0.0
    %5706 = vmatpush1.msra.mxu0 0.0
    %5707 = vmatprep.subr.mxu0 0.0
    %5708 = vmatpush1.msra.mxu0 0.0
    %5709 = vmatprep.subr.mxu0 0.0
    %5710 = vmatpush1.msra.mxu0 0.0
    %5711 = vmatprep.subr.mxu0 0.0
    %5712 = vmatpush1.msra.mxu0 0.0
    %5713 = vmatprep.subr.mxu0 0.0
    %5714 = vmatpush1.msra.mxu0 0.0
    %5715 = vmatprep.subr.mxu0 0.0
    %5716 = vmatpush1.msra.mxu0 0.0
    %5717 = vmatprep.subr.mxu0 0.0
    %5718 = vmatpush1.msra.mxu0 0.0
    %5719 = vmatprep.mubr.f32.mxu0 0.0
    %5720 = vmatmul.mubr.f32.gmra.mrb[0].mxu0 %v5495
    %v5721 = vpop.f32.mrb[0].mxu0
    %v5722 = vadd.f32 %v5575, %v5721
    %v5723 = vpop.f32.mrb[0].mxu0
    %v5724 = vadd.f32 %v5579, %v5723
    %5725 = vdwg.mxu0
    %s5726 = scalar_lea.vmem [#allocation15], 512
    %v5727 = vld [vmem:[%s5726] sm:$0xff]
    %v5728 = vld [vmem:[%s5726 + $0x8] sm:$0xff]
    %v5729 = vld [vmem:[%s5726 + $0x10] sm:$0xff]
    %v5730 = vld [vmem:[%s5726 + $0x18] sm:$0xff]
    %v5731 = vld [vmem:[%s5726 + $0x20] sm:$0xff]
    %v5732 = vld [vmem:[%s5726 + $0x28] sm:$0xff]
    %v5733 = vld [vmem:[%s5726 + $0x30] sm:$0xff]
    %v5734 = vld [vmem:[%s5726 + $0x38] sm:$0xff]
    %v5735 = vld [vmem:[%s5726 + $0x40] sm:$0xff]
    %v5736 = vld [vmem:[%s5726 + $0x48] sm:$0xff]
    %v5737 = vld [vmem:[%s5726 + $0x50] sm:$0xff]
    %v5738 = vld [vmem:[%s5726 + $0x58] sm:$0xff]
    %v5739 = vld [vmem:[%s5726 + $0x60] sm:$0xff]
    %v5740 = vld [vmem:[%s5726 + $0x68] sm:$0xff]
    %v5741 = vld [vmem:[%s5726 + $0x70] sm:$0xff]
    %v5742 = vld [vmem:[%s5726 + $0x78] sm:$0xff]
    %v5743 = vld [vmem:[%s5726 + $0x80] sm:$0xff]
    %v5744 = vld [vmem:[%s5726 + $0x88] sm:$0xff]
    %v5745 = vld [vmem:[%s5726 + $0x90] sm:$0xff]
    %v5746 = vld [vmem:[%s5726 + $0x98] sm:$0xff]
    %v5747 = vld [vmem:[%s5726 + $0xa0] sm:$0xff]
    %v5748 = vld [vmem:[%s5726 + $0xa8] sm:$0xff]
    %v5749 = vld [vmem:[%s5726 + $0xb0] sm:$0xff]
    %v5750 = vld [vmem:[%s5726 + $0xb8] sm:$0xff]
    %v5751 = vld [vmem:[%s5726 + $0xc0] sm:$0xff]
    %v5752 = vld [vmem:[%s5726 + $0xc8] sm:$0xff]
    %v5753 = vld [vmem:[%s5726 + $0xd0] sm:$0xff]
    %v5754 = vld [vmem:[%s5726 + $0xd8] sm:$0xff]
    %v5755 = vld [vmem:[%s5726 + $0xe0] sm:$0xff]
    %v5756 = vld [vmem:[%s5726 + $0xe8] sm:$0xff]
    %v5757 = vld [vmem:[%s5726 + $0xf0] sm:$0xff]
    %v5758 = vld [vmem:[%s5726 + $0xf8] sm:$0xff]
    %v5759 = vld [vmem:[%s5726 + $0x100] sm:$0xff]
    %v5760 = vld [vmem:[%s5726 + $0x108] sm:$0xff]
    %v5761 = vld [vmem:[%s5726 + $0x110] sm:$0xff]
    %v5762 = vld [vmem:[%s5726 + $0x118] sm:$0xff]
    %v5763 = vld [vmem:[%s5726 + $0x120] sm:$0xff]
    %v5764 = vld [vmem:[%s5726 + $0x128] sm:$0xff]
    %v5765 = vld [vmem:[%s5726 + $0x130] sm:$0xff]
    %v5766 = vld [vmem:[%s5726 + $0x138] sm:$0xff]
    %v5767 = vld [vmem:[%s5726 + $0x140] sm:$0xff]
    %v5768 = vld [vmem:[%s5726 + $0x148] sm:$0xff]
    %v5769 = vld [vmem:[%s5726 + $0x150] sm:$0xff]
    %v5770 = vld [vmem:[%s5726 + $0x158] sm:$0xff]
    %v5771 = vld [vmem:[%s5726 + $0x160] sm:$0xff]
    %v5772 = vld [vmem:[%s5726 + $0x168] sm:$0xff]
    %v5773 = vld [vmem:[%s5726 + $0x170] sm:$0xff]
    %v5774 = vld [vmem:[%s5726 + $0x178] sm:$0xff]
    %v5775 = vld [vmem:[%s5726 + $0x180] sm:$0xff]
    %v5776 = vld [vmem:[%s5726 + $0x188] sm:$0xff]
    %v5777 = vld [vmem:[%s5726 + $0x190] sm:$0xff]
    %v5778 = vld [vmem:[%s5726 + $0x198] sm:$0xff]
    %v5779 = vld [vmem:[%s5726 + $0x1a0] sm:$0xff]
    %v5780 = vld [vmem:[%s5726 + $0x1a8] sm:$0xff]
    %v5781 = vld [vmem:[%s5726 + $0x1b0] sm:$0xff]
    %v5782 = vld [vmem:[%s5726 + $0x1b8] sm:$0xff]
    %v5783 = vld [vmem:[%s5726 + $0x1c0] sm:$0xff]
    %v5784 = vld [vmem:[%s5726 + $0x1c8] sm:$0xff]
    %v5785 = vld [vmem:[%s5726 + $0x1d0] sm:$0xff]
    %v5786 = vld [vmem:[%s5726 + $0x1d8] sm:$0xff]
    %v5787 = vld [vmem:[%s5726 + $0x1e0] sm:$0xff]
    %v5788 = vld [vmem:[%s5726 + $0x1e8] sm:$0xff]
    %v5789 = vld [vmem:[%s5726 + $0x1f0] sm:$0xff]
    %v5790 = vld [vmem:[%s5726 + $0x1f8] sm:$0xff]
    %5791 = vmatprep.subr.mxu0 %v5728
    %5792 = vmatpush1.msra.mxu0 %v5727
    %5793 = vmatprep.subr.mxu0 %v5732
    %5794 = vmatpush1.msra.mxu0 %v5731
    %5795 = vmatprep.subr.mxu0 %v5736
    %5796 = vmatpush1.msra.mxu0 %v5735
    %5797 = vmatprep.subr.mxu0 %v5740
    %5798 = vmatpush1.msra.mxu0 %v5739
    %5799 = vmatprep.subr.mxu0 %v5744
    %5800 = vmatpush1.msra.mxu0 %v5743
    %5801 = vmatprep.subr.mxu0 %v5748
    %5802 = vmatpush1.msra.mxu0 %v5747
    %5803 = vmatprep.subr.mxu0 %v5752
    %5804 = vmatpush1.msra.mxu0 %v5751
    %5805 = vmatprep.subr.mxu0 %v5756
    %5806 = vmatpush1.msra.mxu0 %v5755
    %5807 = vmatprep.subr.mxu0 %v5760
    %5808 = vmatpush1.msra.mxu0 %v5759
    %5809 = vmatprep.subr.mxu0 %v5764
    %5810 = vmatpush1.msra.mxu0 %v5763
    %5811 = vmatprep.subr.mxu0 %v5768
    %5812 = vmatpush1.msra.mxu0 %v5767
    %5813 = vmatprep.subr.mxu0 %v5772
    %5814 = vmatpush1.msra.mxu0 %v5771
    %5815 = vmatprep.subr.mxu0 %v5776
    %5816 = vmatpush1.msra.mxu0 %v5775
    %5817 = vmatprep.subr.mxu0 %v5780
    %5818 = vmatpush1.msra.mxu0 %v5779
    %5819 = vmatprep.subr.mxu0 %v5784
    %5820 = vmatpush1.msra.mxu0 %v5783
    %5821 = vmatprep.subr.mxu0 %v5788
    %5822 = vmatpush1.msra.mxu0 %v5787
    %5823 = vmatprep.subr.mxu0 0.0
    %5824 = vmatpush1.msra.mxu0 0.0
    %5825 = vmatprep.subr.mxu0 0.0
    %5826 = vmatpush1.msra.mxu0 0.0
    %5827 = vmatprep.subr.mxu0 0.0
    %5828 = vmatpush1.msra.mxu0 0.0
    %5829 = vmatprep.subr.mxu0 0.0
    %5830 = vmatpush1.msra.mxu0 0.0
    %5831 = vmatprep.subr.mxu0 0.0
    %5832 = vmatpush1.msra.mxu0 0.0
    %5833 = vmatprep.subr.mxu0 0.0
    %5834 = vmatpush1.msra.mxu0 0.0
    %5835 = vmatprep.subr.mxu0 0.0
    %5836 = vmatpush1.msra.mxu0 0.0
    %5837 = vmatprep.subr.mxu0 0.0
    %5838 = vmatpush1.msra.mxu0 0.0
    %5839 = vmatprep.subr.mxu0 0.0
    %5840 = vmatpush1.msra.mxu0 0.0
    %5841 = vmatprep.subr.mxu0 0.0
    %5842 = vmatpush1.msra.mxu0 0.0
    %5843 = vmatprep.subr.mxu0 0.0
    %5844 = vmatpush1.msra.mxu0 0.0
    %5845 = vmatprep.subr.mxu0 0.0
    %5846 = vmatpush1.msra.mxu0 0.0
    %5847 = vmatprep.subr.mxu0 0.0
    %5848 = vmatpush1.msra.mxu0 0.0
    %5849 = vmatprep.subr.mxu0 0.0
    %5850 = vmatpush1.msra.mxu0 0.0
    %5851 = vmatprep.subr.mxu0 0.0
    %5852 = vmatpush1.msra.mxu0 0.0
    %5853 = vmatprep.subr.mxu0 0.0
    %5854 = vmatpush1.msra.mxu0 0.0
    %5855 = vmatprep.mubr.f32.mxu0 0.0
    %5856 = vmatmul.mubr.f32.gmra.mrb[0].mxu0 0.0
    %v5857 = vpop.f32.mrb[0].mxu0
    %v5858 = vadd.f32 0.0, %v5857
    %v5859 = vpop.f32.mrb[0].mxu0
    %v5860 = vadd.f32 0.0, %v5859
    %5861 = vdwg.mxu0
    %5862 = vmatprep.subr.mxu0 %v5730
    %5863 = vmatpush1.msra.mxu0 %v5729
    %5864 = vmatprep.subr.mxu0 %v5734
    %5865 = vmatpush1.msra.mxu0 %v5733
    %5866 = vmatprep.subr.mxu0 %v5738
    %5867 = vmatpush1.msra.mxu0 %v5737
    %5868 = vmatprep.subr.mxu0 %v5742
    %5869 = vmatpush1.msra.mxu0 %v5741
    %5870 = vmatprep.subr.mxu0 %v5746
    %5871 = vmatpush1.msra.mxu0 %v5745
    %5872 = vmatprep.subr.mxu0 %v5750
    %5873 = vmatpush1.msra.mxu0 %v5749
    %5874 = vmatprep.subr.mxu0 %v5754
    %5875 = vmatpush1.msra.mxu0 %v5753
    %5876 = vmatprep.subr.mxu0 %v5758
    %5877 = vmatpush1.msra.mxu0 %v5757
    %5878 = vmatprep.subr.mxu0 %v5762
    %5879 = vmatpush1.msra.mxu0 %v5761
    %5880 = vmatprep.subr.mxu0 %v5766
    %5881 = vmatpush1.msra.mxu0 %v5765
    %5882 = vmatprep.subr.mxu0 %v5770
    %5883 = vmatpush1.msra.mxu0 %v5769
    %5884 = vmatprep.subr.mxu0 %v5774
    %5885 = vmatpush1.msra.mxu0 %v5773
    %5886 = vmatprep.subr.mxu0 %v5778
    %5887 = vmatpush1.msra.mxu0 %v5777
    %5888 = vmatprep.subr.mxu0 %v5782
    %5889 = vmatpush1.msra.mxu0 %v5781
    %5890 = vmatprep.subr.mxu0 %v5786
    %5891 = vmatpush1.msra.mxu0 %v5785
    %5892 = vmatprep.subr.mxu0 %v5790
    %5893 = vmatpush1.msra.mxu0 %v5789
    %5894 = vmatprep.subr.mxu0 0.0
    %5895 = vmatpush1.msra.mxu0 0.0
    %5896 = vmatprep.subr.mxu0 0.0
    %5897 = vmatpush1.msra.mxu0 0.0
    %5898 = vmatprep.subr.mxu0 0.0
    %5899 = vmatpush1.msra.mxu0 0.0
    %5900 = vmatprep.subr.mxu0 0.0
    %5901 = vmatpush1.msra.mxu0 0.0
    %5902 = vmatprep.subr.mxu0 0.0
    %5903 = vmatpush1.msra.mxu0 0.0
    %5904 = vmatprep.subr.mxu0 0.0
    %5905 = vmatpush1.msra.mxu0 0.0
    %5906 = vmatprep.subr.mxu0 0.0
    %5907 = vmatpush1.msra.mxu0 0.0
    %5908 = vmatprep.subr.mxu0 0.0
    %5909 = vmatpush1.msra.mxu0 0.0
    %5910 = vmatprep.subr.mxu0 0.0
    %5911 = vmatpush1.msra.mxu0 0.0
    %5912 = vmatprep.subr.mxu0 0.0
    %5913 = vmatpush1.msra.mxu0 0.0
    %5914 = vmatprep.subr.mxu0 0.0
    %5915 = vmatpush1.msra.mxu0 0.0
    %5916 = vmatprep.subr.mxu0 0.0
    %5917 = vmatpush1.msra.mxu0 0.0
    %5918 = vmatprep.subr.mxu0 0.0
    %5919 = vmatpush1.msra.mxu0 0.0
    %5920 = vmatprep.subr.mxu0 0.0
    %5921 = vmatpush1.msra.mxu0 0.0
    %5922 = vmatprep.subr.mxu0 0.0
    %5923 = vmatpush1.msra.mxu0 0.0
    %5924 = vmatprep.subr.mxu0 0.0
    %5925 = vmatpush1.msra.mxu0 0.0
    %5926 = vmatprep.mubr.f32.mxu0 0.0
    %5927 = vmatmul.mubr.f32.gmra.mrb[0].mxu0 0.0
    %v5928 = vpop.f32.mrb[0].mxu0
    %v5929 = vadd.f32 0.0, %v5928
    %v5930 = vpop.f32.mrb[0].mxu0
    %v5931 = vadd.f32 0.0, %v5930
    %5932 = vdwg.mxu0
    %v5933 = vadd.f32 %v5651, %v5858
    %v5934 = vadd.f32 %v5653, %v5860
    %v5935 = vadd.f32 %v5722, %v5929
    %v5936 = vadd.f32 %v5724, %v5931
    %v5937 = vmul.f32 %v5933, 0.5
    %v5938 = vtanh.pop %v5937
    %v5939 = vadd.f32 %v5938, 1.0
    %v5940 = vmul.f32 %v5939, 0.5
    %v5941 = vmul.f32 %v5934, 0.5
    %v5942 = vtanh.pop %v5941
    %v5943 = vadd.f32 %v5942, 1.0
    %v5944 = vmul.f32 %v5943, 0.5
    %v5945 = vtanh.pop %v5935
    %v5946 = vmul.f32 %v5936, 0.5
    %v5947 = vtanh.pop %v5946
    %v5948 = vadd.f32 %v5947, 1.0
    %v5949 = vmul.f32 %v5948, 0.5
    %v5950 = vmul.f32 %v5944, 0.0
    %v5951 = vmul.f32 %v5940, %v5945
    %v5952 = vadd.f32 %v5950, %v5951
    %v5953 = vtanh.pop %v5952
    %v5954 = vmul.f32 %v5949, %v5953
    %5955 = vst [vmem:[#allocation4] sm:$0x1] %v5954
    %v5956 = vld [vmem:[%s5726] sm:$0xff]
    %v5957 = vld [vmem:[%s5726 + $0x8] sm:$0xff]
    %v5958 = vld [vmem:[%s5726 + $0x10] sm:$0xff]
    %v5959 = vld [vmem:[%s5726 + $0x18] sm:$0xff]
    %v5960 = vld [vmem:[%s5726 + $0x20] sm:$0xff]
    %v5961 = vld [vmem:[%s5726 + $0x28] sm:$0xff]
    %v5962 = vld [vmem:[%s5726 + $0x30] sm:$0xff]
    %v5963 = vld [vmem:[%s5726 + $0x38] sm:$0xff]
    %v5964 = vld [vmem:[%s5726 + $0x40] sm:$0xff]
    %v5965 = vld [vmem:[%s5726 + $0x48] sm:$0xff]
    %v5966 = vld [vmem:[%s5726 + $0x50] sm:$0xff]
    %v5967 = vld [vmem:[%s5726 + $0x58] sm:$0xff]
    %v5968 = vld [vmem:[%s5726 + $0x60] sm:$0xff]
    %v5969 = vld [vmem:[%s5726 + $0x68] sm:$0xff]
    %v5970 = vld [vmem:[%s5726 + $0x70] sm:$0xff]
    %v5971 = vld [vmem:[%s5726 + $0x78] sm:$0xff]
    %v5972 = vld [vmem:[%s5726 + $0x80] sm:$0xff]
    %v5973 = vld [vmem:[%s5726 + $0x88] sm:$0xff]
    %v5974 = vld [vmem:[%s5726 + $0x90] sm:$0xff]
    %v5975 = vld [vmem:[%s5726 + $0x98] sm:$0xff]
    %v5976 = vld [vmem:[%s5726 + $0xa0] sm:$0xff]
    %v5977 = vld [vmem:[%s5726 + $0xa8] sm:$0xff]
    %v5978 = vld [vmem:[%s5726 + $0xb0] sm:$0xff]
    %v5979 = vld [vmem:[%s5726 + $0xb8] sm:$0xff]
    %v5980 = vld [vmem:[%s5726 + $0xc0] sm:$0xff]
    %v5981 = vld [vmem:[%s5726 + $0xc8] sm:$0xff]
    %v5982 = vld [vmem:[%s5726 + $0xd0] sm:$0xff]
    %v5983 = vld [vmem:[%s5726 + $0xd8] sm:$0xff]
    %v5984 = vld [vmem:[%s5726 + $0xe0] sm:$0xff]
    %v5985 = vld [vmem:[%s5726 + $0xe8] sm:$0xff]
    %v5986 = vld [vmem:[%s5726 + $0xf0] sm:$0xff]
    %v5987 = vld [vmem:[%s5726 + $0xf8] sm:$0xff]
    %v5988 = vld [vmem:[%s5726 + $0x100] sm:$0xff]
    %v5989 = vld [vmem:[%s5726 + $0x108] sm:$0xff]
    %v5990 = vld [vmem:[%s5726 + $0x110] sm:$0xff]
    %v5991 = vld [vmem:[%s5726 + $0x118] sm:$0xff]
    %v5992 = vld [vmem:[%s5726 + $0x120] sm:$0xff]
    %v5993 = vld [vmem:[%s5726 + $0x128] sm:$0xff]
    %v5994 = vld [vmem:[%s5726 + $0x130] sm:$0xff]
    %v5995 = vld [vmem:[%s5726 + $0x138] sm:$0xff]
    %v5996 = vld [vmem:[%s5726 + $0x140] sm:$0xff]
    %v5997 = vld [vmem:[%s5726 + $0x148] sm:$0xff]
    %v5998 = vld [vmem:[%s5726 + $0x150] sm:$0xff]
    %v5999 = vld [vmem:[%s5726 + $0x158] sm:$0xff]
    %v6000 = vld [vmem:[%s5726 + $0x160] sm:$0xff]
    %v6001 = vld [vmem:[%s5726 + $0x168] sm:$0xff]
    %v6002 = vld [vmem:[%s5726 + $0x170] sm:$0xff]
    %v6003 = vld [vmem:[%s5726 + $0x178] sm:$0xff]
    %v6004 = vld [vmem:[%s5726 + $0x180] sm:$0xff]
    %v6005 = vld [vmem:[%s5726 + $0x188] sm:$0xff]
    %v6006 = vld [vmem:[%s5726 + $0x190] sm:$0xff]
    %v6007 = vld [vmem:[%s5726 + $0x198] sm:$0xff]
    %v6008 = vld [vmem:[%s5726 + $0x1a0] sm:$0xff]
    %v6009 = vld [vmem:[%s5726 + $0x1a8] sm:$0xff]
    %v6010 = vld [vmem:[%s5726 + $0x1b0] sm:$0xff]
    %v6011 = vld [vmem:[%s5726 + $0x1b8] sm:$0xff]
    %v6012 = vld [vmem:[%s5726 + $0x1c0] sm:$0xff]
    %v6013 = vld [vmem:[%s5726 + $0x1c8] sm:$0xff]
    %v6014 = vld [vmem:[%s5726 + $0x1d0] sm:$0xff]
    %v6015 = vld [vmem:[%s5726 + $0x1d8] sm:$0xff]
    %v6016 = vld [vmem:[%s5726 + $0x1e0] sm:$0xff]
    %v6017 = vld [vmem:[%s5726 + $0x1e8] sm:$0xff]
    %v6018 = vld [vmem:[%s5726 + $0x1f0] sm:$0xff]
    %v6019 = vld [vmem:[%s5726 + $0x1f8] sm:$0xff]
    %6020 = vmatprep.subr.mxu0 %v5957
    %6021 = vmatpush1.msra.mxu0 %v5956
    %6022 = vmatprep.subr.mxu0 %v5961
    %6023 = vmatpush1.msra.mxu0 %v5960
    %6024 = vmatprep.subr.mxu0 %v5965
    %6025 = vmatpush1.msra.mxu0 %v5964
    %6026 = vmatprep.subr.mxu0 %v5969
    %6027 = vmatpush1.msra.mxu0 %v5968
    %6028 = vmatprep.subr.mxu0 %v5973
    %6029 = vmatpush1.msra.mxu0 %v5972
    %6030 = vmatprep.subr.mxu0 %v5977
    %6031 = vmatpush1.msra.mxu0 %v5976
    %6032 = vmatprep.subr.mxu0 %v5981
    %6033 = vmatpush1.msra.mxu0 %v5980
    %6034 = vmatprep.subr.mxu0 %v5985
    %6035 = vmatpush1.msra.mxu0 %v5984
    %6036 = vmatprep.subr.mxu0 %v5989
    %6037 = vmatpush1.msra.mxu0 %v5988
    %6038 = vmatprep.subr.mxu0 %v5993
    %6039 = vmatpush1.msra.mxu0 %v5992
    %6040 = vmatprep.subr.mxu0 %v5997
    %6041 = vmatpush1.msra.mxu0 %v5996
    %6042 = vmatprep.subr.mxu0 %v6001
    %6043 = vmatpush1.msra.mxu0 %v6000
    %6044 = vmatprep.subr.mxu0 %v6005
    %6045 = vmatpush1.msra.mxu0 %v6004
    %6046 = vmatprep.subr.mxu0 %v6009
    %6047 = vmatpush1.msra.mxu0 %v6008
    %6048 = vmatprep.subr.mxu0 %v6013
    %6049 = vmatpush1.msra.mxu0 %v6012
    %6050 = vmatprep.subr.mxu0 %v6017
    %6051 = vmatpush1.msra.mxu0 %v6016
    %6052 = vmatprep.subr.mxu0 0.0
    %6053 = vmatpush1.msra.mxu0 0.0
    %6054 = vmatprep.subr.mxu0 0.0
    %6055 = vmatpush1.msra.mxu0 0.0
    %6056 = vmatprep.subr.mxu0 0.0
    %6057 = vmatpush1.msra.mxu0 0.0
    %6058 = vmatprep.subr.mxu0 0.0
    %6059 = vmatpush1.msra.mxu0 0.0
    %6060 = vmatprep.subr.mxu0 0.0
    %6061 = vmatpush1.msra.mxu0 0.0
    %6062 = vmatprep.subr.mxu0 0.0
    %6063 = vmatpush1.msra.mxu0 0.0
    %6064 = vmatprep.subr.mxu0 0.0
    %6065 = vmatpush1.msra.mxu0 0.0
    %6066 = vmatprep.subr.mxu0 0.0
    %6067 = vmatpush1.msra.mxu0 0.0
    %6068 = vmatprep.subr.mxu0 0.0
    %6069 = vmatpush1.msra.mxu0 0.0
    %6070 = vmatprep.subr.mxu0 0.0
    %6071 = vmatpush1.msra.mxu0 0.0
    %6072 = vmatprep.subr.mxu0 0.0
    %6073 = vmatpush1.msra.mxu0 0.0
    %6074 = vmatprep.subr.mxu0 0.0
    %6075 = vmatpush1.msra.mxu0 0.0
    %6076 = vmatprep.subr.mxu0 0.0
    %6077 = vmatpush1.msra.mxu0 0.0
    %6078 = vmatprep.subr.mxu0 0.0
    %6079 = vmatpush1.msra.mxu0 0.0
    %6080 = vmatprep.subr.mxu0 0.0
    %6081 = vmatpush1.msra.mxu0 0.0
    %6082 = vmatprep.subr.mxu0 0.0
    %6083 = vmatpush1.msra.mxu0 0.0
    %6084 = vmatprep.mubr.f32.mxu0 0.0
    %6085 = vmatmul.mubr.f32.gmra.mrb[0].mxu0 %v5954
    %v6086 = vpop.f32.mrb[0].mxu0
    %v6087 = vadd.f32 0.0, %v6086
    %v6088 = vpop.f32.mrb[0].mxu0
    %v6089 = vadd.f32 0.0, %v6088
    %6090 = vdwg.mxu0
    %6091 = vmatprep.subr.mxu0 %v5959
    %6092 = vmatpush1.msra.mxu0 %v5958
    %6093 = vmatprep.subr.mxu0 %v5963
    %6094 = vmatpush1.msra.mxu0 %v5962
    %6095 = vmatprep.subr.mxu0 %v5967
    %6096 = vmatpush1.msra.mxu0 %v5966
    %6097 = vmatprep.subr.mxu0 %v5971
    %6098 = vmatpush1.msra.mxu0 %v5970
    %6099 = vmatprep.subr.mxu0 %v5975
    %6100 = vmatpush1.msra.mxu0 %v5974
    %6101 = vmatprep.subr.mxu0 %v5979
    %6102 = vmatpush1.msra.mxu0 %v5978
    %6103 = vmatprep.subr.mxu0 %v5983
    %6104 = vmatpush1.msra.mxu0 %v5982
    %6105 = vmatprep.subr.mxu0 %v5987
    %6106 = vmatpush1.msra.mxu0 %v5986
    %6107 = vmatprep.subr.mxu0 %v5991
    %6108 = vmatpush1.msra.mxu0 %v5990
    %6109 = vmatprep.subr.mxu0 %v5995
    %6110 = vmatpush1.msra.mxu0 %v5994
    %6111 = vmatprep.subr.mxu0 %v5999
    %6112 = vmatpush1.msra.mxu0 %v5998
    %6113 = vmatprep.subr.mxu0 %v6003
    %6114 = vmatpush1.msra.mxu0 %v6002
    %6115 = vmatprep.subr.mxu0 %v6007
    %6116 = vmatpush1.msra.mxu0 %v6006
    %6117 = vmatprep.subr.mxu0 %v6011
    %6118 = vmatpush1.msra.mxu0 %v6010
    %6119 = vmatprep.subr.mxu0 %v6015
    %6120 = vmatpush1.msra.mxu0 %v6014
    %6121 = vmatprep.subr.mxu0 %v6019
    %6122 = vmatpush1.msra.mxu0 %v6018
    %6123 = vmatprep.subr.mxu0 0.0
    %6124 = vmatpush1.msra.mxu0 0.0
    %6125 = vmatprep.subr.mxu0 0.0
    %6126 = vmatpush1.msra.mxu0 0.0
    %6127 = vmatprep.subr.mxu0 0.0
    %6128 = vmatpush1.msra.mxu0 0.0
    %6129 = vmatprep.subr.mxu0 0.0
    %6130 = vmatpush1.msra.mxu0 0.0
    %6131 = vmatprep.subr.mxu0 0.0
    %6132 = vmatpush1.msra.mxu0 0.0
    %6133 = vmatprep.subr.mxu0 0.0
    %6134 = vmatpush1.msra.mxu0 0.0
    %6135 = vmatprep.subr.mxu0 0.0
    %6136 = vmatpush1.msra.mxu0 0.0
    %6137 = vmatprep.subr.mxu0 0.0
    %6138 = vmatpush1.msra.mxu0 0.0
    %6139 = vmatprep.subr.mxu0 0.0
    %6140 = vmatpush1.msra.mxu0 0.0
    %6141 = vmatprep.subr.mxu0 0.0
    %6142 = vmatpush1.msra.mxu0 0.0
    %6143 = vmatprep.subr.mxu0 0.0
    %6144 = vmatpush1.msra.mxu0 0.0
    %6145 = vmatprep.subr.mxu0 0.0
    %6146 = vmatpush1.msra.mxu0 0.0
    %6147 = vmatprep.subr.mxu0 0.0
    %6148 = vmatpush1.msra.mxu0 0.0
    %6149 = vmatprep.subr.mxu0 0.0
    %6150 = vmatpush1.msra.mxu0 0.0
    %6151 = vmatprep.subr.mxu0 0.0
    %6152 = vmatpush1.msra.mxu0 0.0
    %6153 = vmatprep.subr.mxu0 0.0
    %6154 = vmatpush1.msra.mxu0 0.0
    %6155 = vmatprep.mubr.f32.mxu0 0.0
    %6156 = vmatmul.mubr.f32.gmra.mrb[0].mxu0 %v5954
    %v6157 = vpop.f32.mrb[0].mxu0
    %v6158 = vadd.f32 0.0, %v6157
    %v6159 = vpop.f32.mrb[0].mxu0
    %v6160 = vadd.f32 0.0, %v6159
    %6161 = vdwg.mxu0
    %v6166 = vrot.slane %v6087, 7
    %v6167 = vrot.slane %v6089, 7
    %v6168 = vrot.slane %v6158, 7
    %v6169 = vrot.slane %v6160, 7
    %v6174 = vadd.f32 %v5651, %v6166
    %v6175 = vadd.f32 %v5653, %v6167
    %v6176 = vadd.f32 %v5722, %v6168
    %v6177 = vadd.f32 %v5724, %v6169
    %v6178 = vmul.f32 %v6174, 0.5
    %v6179 = vtanh.pop %v6178
    %v6180 = vadd.f32 %v6179, 1.0
    %v6181 = vmul.f32 %v6180, 0.5
    %v6182 = vmul.f32 %v6175, 0.5
    %v6183 = vtanh.pop %v6182
    %v6184 = vadd.f32 %v6183, 1.0
    %v6185 = vmul.f32 %v6184, 0.5
    %v6186 = vtanh.pop %v6176
    %v6187 = vmul.f32 %v6177, 0.5
    %v6188 = vtanh.pop %v6187
    %v6189 = vadd.f32 %v6188, 1.0
    %v6190 = vmul.f32 %v6189, 0.5
    %v6192 = vrot.slane %v5952, 7
    %v6194 = vmul.f32 %v6185, %v6192
    %v6195 = vmul.f32 %v6181, %v6186
    %v6196 = vadd.f32 %v6194, %v6195
    %v6197 = vtanh.pop %v6196
    %v6198 = vmul.f32 %v6190, %v6197
    %6199 = vst [vmem:[#allocation4] sm:$0x2] %v6198
    %v6200 = vld [vmem:[#allocation4] sm:$0xff]
    %v6201 = vld [vmem:[#allocation18] sm:$0xff]
    %v6202 = vld [vmem:[#allocation18 + $0x8] sm:$0xff]
    %v6203 = vld [vmem:[#allocation18 + $0x10] sm:$0xff]
    %v6204 = vld [vmem:[#allocation18 + $0x18] sm:$0xff]
    %v6205 = vld [vmem:[#allocation18 + $0x20] sm:$0xff]
    %v6206 = vld [vmem:[#allocation18 + $0x28] sm:$0xff]
    %v6207 = vld [vmem:[#allocation18 + $0x30] sm:$0xff]
    %v6208 = vld [vmem:[#allocation18 + $0x38] sm:$0xff]
    %v6209 = vld [vmem:[#allocation18 + $0x40] sm:$0xff]
    %v6210 = vld [vmem:[#allocation18 + $0x48] sm:$0xff]
    %v6211 = vld [vmem:[#allocation18 + $0x50] sm:$0xff]
    %v6212 = vld [vmem:[#allocation18 + $0x58] sm:$0xff]
    %v6213 = vld [vmem:[#allocation18 + $0x60] sm:$0xff]
    %v6214 = vld [vmem:[#allocation18 + $0x68] sm:$0xff]
    %v6215 = vld [vmem:[#allocation18 + $0x70] sm:$0xff]
    %v6216 = vld [vmem:[#allocation18 + $0x78] sm:$0xff]
    %v6217 = vld [vmem:[%s10] sm:$0x1]
    %v6219 = vlaneseq
    %v6220 = vshrl.u32 %v6219, 7
    %v6221 = vsub.s32 0, %v6220
    %v6222 = vrot.slane %v6217, %v6221
    %6224 = vmatprep.subr.mxu0 0.0
    %6225 = vmatpush1.msra.mxu0 %v6201
    %6226 = vmatprep.subr.mxu0 0.0
    %6227 = vmatpush1.msra.mxu0 %v6202
    %6228 = vmatprep.subr.mxu0 0.0
    %6229 = vmatpush1.msra.mxu0 %v6203
    %6230 = vmatprep.subr.mxu0 0.0
    %6231 = vmatpush1.msra.mxu0 %v6204
    %6232 = vmatprep.subr.mxu0 0.0
    %6233 = vmatpush1.msra.mxu0 %v6205
    %6234 = vmatprep.subr.mxu0 0.0
    %6235 = vmatpush1.msra.mxu0 %v6206
    %6236 = vmatprep.subr.mxu0 0.0
    %6237 = vmatpush1.msra.mxu0 %v6207
    %6238 = vmatprep.subr.mxu0 0.0
    %6239 = vmatpush1.msra.mxu0 %v6208
    %6240 = vmatprep.subr.mxu0 0.0
    %6241 = vmatpush1.msra.mxu0 %v6209
    %6242 = vmatprep.subr.mxu0 0.0
    %6243 = vmatpush1.msra.mxu0 %v6210
    %6244 = vmatprep.subr.mxu0 0.0
    %6245 = vmatpush1.msra.mxu0 %v6211
    %6246 = vmatprep.subr.mxu0 0.0
    %6247 = vmatpush1.msra.mxu0 %v6212
    %6248 = vmatprep.subr.mxu0 0.0
    %6249 = vmatpush1.msra.mxu0 %v6213
    %6250 = vmatprep.subr.mxu0 0.0
    %6251 = vmatpush1.msra.mxu0 %v6214
    %6252 = vmatprep.subr.mxu0 0.0
    %6253 = vmatpush1.msra.mxu0 %v6215
    %6254 = vmatprep.subr.mxu0 0.0
    %6255 = vmatpush1.msra.mxu0 %v6216
    %6256 = vmatprep.subr.mxu0 0.0
    %6257 = vmatpush1.msra.mxu0 0.0
    %6258 = vmatprep.subr.mxu0 0.0
    %6259 = vmatpush1.msra.mxu0 0.0
    %6260 = vmatprep.subr.mxu0 0.0
    %6261 = vmatpush1.msra.mxu0 0.0
    %6262 = vmatprep.subr.mxu0 0.0
    %6263 = vmatpush1.msra.mxu0 0.0
    %6264 = vmatprep.subr.mxu0 0.0
    %6265 = vmatpush1.msra.mxu0 0.0
    %6266 = vmatprep.subr.mxu0 0.0
    %6267 = vmatpush1.msra.mxu0 0.0
    %6268 = vmatprep.subr.mxu0 0.0
    %6269 = vmatpush1.msra.mxu0 0.0
    %6270 = vmatprep.subr.mxu0 0.0
    %6271 = vmatpush1.msra.mxu0 0.0
    %6272 = vmatprep.subr.mxu0 0.0
    %6273 = vmatpush1.msra.mxu0 0.0
    %6274 = vmatprep.subr.mxu0 0.0
    %6275 = vmatpush1.msra.mxu0 0.0
    %6276 = vmatprep.subr.mxu0 0.0
    %6277 = vmatpush1.msra.mxu0 0.0
    %6278 = vmatprep.subr.mxu0 0.0
    %6279 = vmatpush1.msra.mxu0 0.0
    %6280 = vmatprep.subr.mxu0 0.0
    %6281 = vmatpush1.msra.mxu0 0.0
    %6282 = vmatprep.subr.mxu0 0.0
    %6283 = vmatpush1.msra.mxu0 0.0
    %6284 = vmatprep.subr.mxu0 0.0
    %6285 = vmatpush1.msra.mxu0 0.0
    %6286 = vmatprep.subr.mxu0 0.0
    %6287 = vmatpush1.msra.mxu0 0.0
    %6288 = vmatprep.mubr.f32.mxu0 0.0
    %6289 = vmatmul.mubr.f32.gmra.mrb[0].mxu0 %v6200
    %v6290 = vpop.f32.mrb[0].mxu0
    %v6291 = vadd.f32 %v6222, %v6290
    %v6292 = vpop.f32.mrb[0].mxu0
    %6293 = vdwg.mxu0
    %6294 = vst [vmem:[%s11] sm:$0xff] %v6291
    // Predicated region
    $region82: #{attention_lstm_forward.1} parent=1 // pred_check
      _
    $region83: #{attention_lstm_forward.1} parent=1 // pred_check_branch
      %6296 = sbr.rel (0) target = $region85
    $region84: #{attention_lstm_forward.1} parent=1 // pred_region
      _
    $region85: #{attention_lstm_forward.1} parent=1 // pred_fallthru
      _
    // Predicated region
    $region86: #{attention_lstm_forward.1} parent=1 // pred_check
      _
    $region87: #{attention_lstm_forward.1} parent=1 // pred_check_branch
      %6298 = sbr.rel (0) target = $region89
    $region88: #{attention_lstm_forward.1} parent=1 // pred_region
      _
    $region89: #{attention_lstm_forward.1} parent=1 // pred_fallthru
      _
    %6299 = vsyncpa [#allocation6], 1
    %6300 = vsyncpa [#allocation8], 1
    %6301 = vsyncpa [#allocation11], 1
    %6302 = vsyncpa [#allocation14], 1
    %6303 = vsyncpa [#allocation17], 1

</llo_original>
